<compile_context>
chip_gen: v5e
topology: v5e:2x2
jax: 0.10.0
libtpu: 0.0.40
codegen_flags: <defaults>
</compile_context>

<pallas_src>
import functools

import jax
import jax.numpy as jnp
from jax.experimental import pallas as pl
from jax.experimental.pallas import tpu as pltpu

_LN_EPS = 1e-5
_F32 = jnp.float32
_BF16 = jnp.bfloat16


# ----------------------------------------------------------------------------
# In-kernel helpers
# ----------------------------------------------------------------------------

def _ln(x, g, b, eps=_LN_EPS):
    mu = jnp.mean(x, axis=-1, keepdims=True)
    var = jnp.mean((x - mu) * (x - mu), axis=-1, keepdims=True)
    return (x - mu) * jax.lax.rsqrt(var + eps) * g + b


def _gelu(x):
    # TODO(synk): tanh-approx GELU; PyTorch nn.GELU default is the exact erf form.
    c = jnp.float32(0.7978845608028654)  # sqrt(2/pi)
    return 0.5 * x * (1.0 + jnp.tanh(c * (x + 0.044715 * x * x * x)))


def _row_tile(n, max_tile=512):
    """Largest multiple-of-8 row tile <= max_tile that divides n (or n itself)."""
    if n <= max_tile:
        return n
    for t in range(max_tile - max_tile % 8, 7, -8):
        if n % t == 0:
            return t
    return n


# ----------------------------------------------------------------------------
# Pallas kernels
# ----------------------------------------------------------------------------

def _encoder_kernel(spec_ref, w_ref, b_ref, g_ref, bb_ref, wp_ref, bp_ref, o_ref):
    """3 modality (1->E) projections + LayerNorms + concat + (3E->E) memory proj."""
    spec = spec_ref[...].astype(_F32)             # (tm, 3) one column per modality
    w = w_ref[...]                                # (3, E) f32
    b = b_ref[...]                                # (3, E) f32
    g = g_ref[...]                                # (3, E) f32
    bb = bb_ref[...]                              # (3, E) f32
    wp = wp_ref[...]                              # (3E, E) bf16
    E = w.shape[1]
    total = None
    for m in range(3):
        # K=1 "matmul" done as a VPU broadcast multiply instead of the MXU.
        h = spec[:, m:m + 1] * w[m:m + 1, :] + b[m:m + 1, :]          # (tm, E)
        h = _ln(h, g[m:m + 1, :], bb[m:m + 1, :])
        part = jnp.dot(h.astype(_BF16), wp[m * E:(m + 1) * E, :],
                       preferred_element_type=_F32)                   # (tm, E)
        total = part if total is None else total + part
    o_ref[...] = (total + bp_ref[...]).astype(o_ref.dtype)


def _decoder_layer_kernel(x_ref, mem_ref, mask_ref,
                          ln1g_ref, ln1b_ref, wqkv_ref, bqkv_ref, wo1_ref, bo1_ref,
                          ln2g_ref, ln2b_ref, wq_ref, bq_ref, wkv_ref, bkv_ref,
                          wo2_ref, bo2_ref,
                          ln3g_ref, ln3b_ref, w1_ref, b1_ref, w2_ref, b2_ref,
                          o_ref, *, num_heads):
    """Fused pre-LN decoder layer: causal self-attn + cross-attn + GELU MLP.

    x stays in VMEM/vregs across the whole layer; all weight matmuls are bf16
    operands with f32 accumulation; softmax/LN/GELU math is f32.
    """
    x = x_ref[0].astype(_F32)                                          # (T, E)
    mem = mem_ref[0]                                                   # (L, E) bf16
    T, E = x.shape
    H = num_heads
    Dh = E // H

    # ---- causal + key-pad additive bias, built once (hoisted out of head loop)
    row = jax.lax.broadcasted_iota(jnp.int32, (T, T), 0)
    col = jax.lax.broadcasted_iota(jnp.int32, (T, T), 1)
    kpad = (mask_ref[0].astype(_F32) - 1.0) * 1e30                     # (1, T)
    bias = jnp.where(col <= row, kpad, -1e30)                          # (T, T)

    # -------------------- causal self-attention --------------------
    h = _ln(x, ln1g_ref[...], ln1b_ref[...])
    qkv = jnp.dot(h.astype(_BF16), wqkv_ref[...],
                  preferred_element_type=_F32) + bqkv_ref[...]         # (T, 3E)
    parts = []
    for hh in range(H):
        q = qkv[:, hh * Dh:(hh + 1) * Dh]          # 1/sqrt(Dh) folded into weights
        k = qkv[:, E + hh * Dh:E + (hh + 1) * Dh]
        v = qkv[:, 2 * E + hh * Dh:2 * E + (hh + 1) * Dh]
        s = jnp.dot(q, k.T, preferred_element_type=_F32) + bias        # (T, T)
        m = jnp.max(s, axis=-1, keepdims=True)
        p = jnp.exp(s - m)
        p = p * pl.reciprocal(jnp.sum(p, axis=-1, keepdims=True), approx=True)
        parts.append(jnp.dot(p, v, preferred_element_type=_F32))       # (T, Dh)
    ctx = jnp.concatenate(parts, axis=-1)                              # (T, E)
    attn = jnp.dot(ctx.astype(_BF16), wo1_ref[...],
                   preferred_element_type=_F32) + bo1_ref[...]
    x = x + attn

    # -------------------- cross-attention to memory --------------------
    h = _ln(x, ln2g_ref[...], ln2b_ref[...])
    q_all = jnp.dot(h.astype(_BF16), wq_ref[...],
                    preferred_element_type=_F32) + bq_ref[...]         # (T, E)
    kv = jnp.dot(mem, wkv_ref[...],
                 preferred_element_type=_F32) + bkv_ref[...]           # (L, 2E)
    parts = []
    for hh in range(H):
        q = q_all[:, hh * Dh:(hh + 1) * Dh]
        k = kv[:, hh * Dh:(hh + 1) * Dh]
        v = kv[:, E + hh * Dh:E + (hh + 1) * Dh]
        s = jnp.dot(q, k.T, preferred_element_type=_F32)               # (T, L)
        m = jnp.max(s, axis=-1, keepdims=True)
        p = jnp.exp(s - m)
        p = p * pl.reciprocal(jnp.sum(p, axis=-1, keepdims=True), approx=True)
        parts.append(jnp.dot(p, v, preferred_element_type=_F32))       # (T, Dh)
    ctx = jnp.concatenate(parts, axis=-1)                              # (T, E)
    x = x + jnp.dot(ctx.astype(_BF16), wo2_ref[...],
                    preferred_element_type=_F32) + bo2_ref[...]

    # -------------------- GELU MLP --------------------
    h = _ln(x, ln3g_ref[...], ln3b_ref[...])
    h = jnp.dot(h.astype(_BF16), w1_ref[...],
                preferred_element_type=_F32) + b1_ref[...]
    h = _gelu(h)
    h = jnp.dot(h.astype(_BF16), w2_ref[...],
                preferred_element_type=_F32) + b2_ref[...]
    o_ref[0] = (x + h).astype(o_ref.dtype)


def _final_kernel(x_ref, lng_ref, lnb_ref, w_ref, b_ref, o_ref):
    """Final LayerNorm + (row/column tiled, lane-padded) vocab projection."""
    x = x_ref[...].astype(_F32)                                        # (tm, E)
    h = _ln(x, lng_ref[...], lnb_ref[...])
    o_ref[...] = (jnp.dot(h.astype(_BF16), w_ref[...],
                          preferred_element_type=_F32)
                  + b_ref[...]).astype(o_ref.dtype)


# ----------------------------------------------------------------------------
# pallas_call wrappers
# ----------------------------------------------------------------------------

def encoder_forward(spec, enc, mem_proj_w, mem_proj_b):
    N = spec.shape[0]
    E = enc["w"].shape[1]
    tm = _row_tile(N)
    return pl.pallas_call(
        _encoder_kernel,
        out_shape=jax.ShapeDtypeStruct((N, E), _BF16),
        grid=(N // tm,),
        in_specs=[
            pl.BlockSpec((tm, 3), lambda i: (i, 0)),
            pl.BlockSpec((3, E), lambda i: (0, 0)),
            pl.BlockSpec((3, E), lambda i: (0, 0)),
            pl.BlockSpec((3, E), lambda i: (0, 0)),
            pl.BlockSpec((3, E), lambda i: (0, 0)),
            pl.BlockSpec((3 * E, E), lambda i: (0, 0)),
            pl.BlockSpec((1, E), lambda i: (0, 0)),
        ],
        out_specs=pl.BlockSpec((tm, E), lambda i: (i, 0)),
        compiler_params=pltpu.CompilerParams(dimension_semantics=("parallel",)),
    )(spec, enc["w"], enc["b"], enc["ln_g"], enc["ln_b"], mem_proj_w, mem_proj_b)


def decoder_layer(x, mem, mask, lp, num_heads):
    B, T, E = x.shape
    L = mem.shape[1]
    Eh = lp["w1"].shape[1]
    kern = functools.partial(_decoder_layer_kernel, num_heads=num_heads)

    def _c(shape):  # constant (weight) block, same tile every grid step
        return pl.BlockSpec(shape, lambda b: (0, 0))

    in_specs = [
        pl.BlockSpec((1, T, E), lambda b: (b, 0, 0)),       # x
        pl.BlockSpec((1, L, E), lambda b: (b, 0, 0)),       # memory
        pl.BlockSpec((1, 1, T), lambda b: (b, 0, 0)),       # key-pad mask
        _c((1, E)), _c((1, E)),                             # sa LN
        _c((E, 3 * E)), _c((1, 3 * E)),                     # wqkv, bqkv
        _c((E, E)), _c((1, E)),                             # sa out proj
        _c((1, E)), _c((1, E)),                             # ca LN
        _c((E, E)), _c((1, E)),                             # wq, bq
        _c((E, 2 * E)), _c((1, 2 * E)),                     # wkv, bkv
        _c((E, E)), _c((1, E)),                             # ca out proj
        _c((1, E)), _c((1, E)),                             # mlp LN
        _c((E, Eh)), _c((1, Eh)),                           # w1, b1
        _c((Eh, E)), _c((1, E)),                            # w2, b2
    ]
    return pl.pallas_call(
        kern,
        out_shape=jax.ShapeDtypeStruct((B, T, E), x.dtype),
        grid=(B,),
        in_specs=in_specs,
        out_specs=pl.BlockSpec((1, T, E), lambda b: (b, 0, 0)),
        compiler_params=pltpu.CompilerParams(dimension_semantics=("parallel",)),
    )(x, mem, mask,
      lp["sa_ln_g"], lp["sa_ln_b"], lp["wqkv"], lp["bqkv"], lp["wo1"], lp["bo1"],
      lp["ca_ln_g"], lp["ca_ln_b"], lp["wq"], lp["bq"], lp["wkv"], lp["bkv"],
      lp["wo2"], lp["bo2"],
      lp["mlp_ln_g"], lp["mlp_ln_b"], lp["w1"], lp["b1"], lp["w2"], lp["b2"])


def final_projection(x2d, ln_g, ln_b, w, b):
    M, E = x2d.shape
    Vp = w.shape[1]
    tm = _row_tile(M)
    tn = 256 if Vp % 256 == 0 else 128                  # 256-wide tiles fill v6e/v7x MXU
    return pl.pallas_call(
        _final_kernel,
        out_shape=jax.ShapeDtypeStruct((M, Vp), _F32),
        grid=(M // tm, Vp // tn),
        in_specs=[
            pl.BlockSpec((tm, E), lambda i, j: (i, 0)),
            pl.BlockSpec((1, E), lambda i, j: (0, 0)),
            pl.BlockSpec((1, E), lambda i, j: (0, 0)),
            pl.BlockSpec((E, tn), lambda i, j: (0, j)),
            pl.BlockSpec((1, tn), lambda i, j: (0, j)),
        ],
        out_specs=pl.BlockSpec((tm, tn), lambda i, j: (i, j)),
        compiler_params=pltpu.CompilerParams(
            dimension_semantics=("parallel", "parallel")),
    )(x2d, ln_g, ln_b, w, b)


# ----------------------------------------------------------------------------
# Parameters (deterministic synthetic init) — array leaves only (jit-safe)
# ----------------------------------------------------------------------------

def _dense(key, shape, scale=0.02):
    return jax.random.normal(key, shape, _F32) * scale


def init_params(key, *, vocab_size, max_seq_length, embed_dim, num_heads,
                num_layers, resample_size, use_concat=True):
    del resample_size  # spectra arrive already resampled
    E = embed_dim
    Dh = E // num_heads
    scale = 1.0 / float(Dh) ** 0.5
    vocab_pad = ((vocab_size + 255) // 256) * 256        # lane-dense, 256-tileable
    keys = iter(jax.random.split(key, 8 + 12 * num_layers))

    params = {
        # ------- encoder: per-modality linear(1->E)+LN, fused weights -------
        "enc": {
            "w": _dense(next(keys), (3, E)),
            "b": jnp.zeros((3, E), _F32),
            "ln_g": jnp.ones((3, E), _F32),
            "ln_b": jnp.zeros((3, E), _F32),
        },
        "mem_proj_w": _dense(next(keys), (3 * E if use_concat else E, E)).astype(_BF16),
        "mem_proj_b": jnp.zeros((1, E), _F32),
        # ------- decoder -------
        "tok_emb": _dense(next(keys), (vocab_size, E)),
        "pos_emb": _dense(next(keys), (max_seq_length, E)),
        "layers": [],
        "final_ln_g": jnp.ones((1, E), _F32),
        "final_ln_b": jnp.zeros((1, E), _F32),
        "out_w": jnp.pad(_dense(next(keys), (E, vocab_size)),
                         ((0, 0), (0, vocab_pad - vocab_size))).astype(_BF16),
        "out_b": jnp.zeros((1, vocab_pad), _F32),
    }
    for _ in range(num_layers):
        wq = _dense(next(keys), (E, E)) * scale          # fold 1/sqrt(Dh) into q proj
        wk = _dense(next(keys), (E, E))
        wv = _dense(next(keys), (E, E))
        layer = {
            # --- self-attention ---
            "sa_ln_g": jnp.ones((1, E), _F32),
            "sa_ln_b": jnp.zeros((1, E), _F32),
            "wqkv": jnp.concatenate([wq, wk, wv], axis=1).astype(_BF16),   # (E, 3E)
            "bqkv": jnp.zeros((1, 3 * E), _F32),
            "wo1": _dense(next(keys), (E, E)).astype(_BF16),
            "bo1": jnp.zeros((1, E), _F32),
            # --- cross-attention ---
            "ca_ln_g": jnp.ones((1, E), _F32),
            "ca_ln_b": jnp.zeros((1, E), _F32),
            "wq": (_dense(next(keys), (E, E)) * scale).astype(_BF16),
            "bq": jnp.zeros((1, E), _F32),
            "wkv": jnp.concatenate([_dense(next(keys), (E, E)),
                                    _dense(next(keys), (E, E))],
                                   axis=1).astype(_BF16),                  # (E, 2E)
            "bkv": jnp.zeros((1, 2 * E), _F32),
            "wo2": _dense(next(keys), (E, E)).astype(_BF16),
            "bo2": jnp.zeros((1, E), _F32),
            # --- MLP ---
            "mlp_ln_g": jnp.ones((1, E), _F32),
            "mlp_ln_b": jnp.zeros((1, E), _F32),
            "w1": _dense(next(keys), (E, 4 * E)).astype(_BF16),
            "b1": jnp.zeros((1, 4 * E), _F32),
            "w2": _dense(next(keys), (4 * E, E)).astype(_BF16),
            "b2": jnp.zeros((1, E), _F32),
        }
        params["layers"].append(layer)
    return params


# ----------------------------------------------------------------------------
# Forward pass
# ----------------------------------------------------------------------------

def multimodal_to_smiles_forward(params, nmr_data, ir_data, c_nmr_data,
                                 target_seq, target_mask=None, *, num_heads):
    # TODO(synk): the reference MultimodalSpectralEncoder's conv/resampling
    # backbone is unspecified; modality fusion via feature-dim concat
    # (use_concat=True -> 3*embed_dim memory) + a 3E->E projection is kept.
    E = params["tok_emb"].shape[1]
    vocab = params["tok_emb"].shape[0]
    B, L = nmr_data.shape
    T = target_seq.shape[1]
    assert T <= params["pos_emb"].shape[0], "target sequence longer than max_seq_length"

    # ---------------- encoder (single fused kernel, row-tiled grid) ----------------
    spec = jnp.stack([nmr_data, ir_data, c_nmr_data], axis=-1)          # (B, L, 3)
    spec = spec.reshape(B * L, 3).astype(_F32)
    mem = encoder_forward(spec, params["enc"],
                          params["mem_proj_w"], params["mem_proj_b"])   # (B*L, E) bf16
    mem = mem.reshape(B, L, E)

    # ---------------- decoder ----------------
    # TODO(synk): token/positional embedding gathers stay in JAX glue.
    x = jnp.take(params["tok_emb"], target_seq, axis=0) + params["pos_emb"][:T][None, :, :]
    x = x.astype(_BF16)                                                  # (B, T, E)

    if target_mask is None:
        mask = jnp.ones((B, 1, T), _F32)
    else:
        # TODO(synk): exact target_mask semantics of the reference SMILESDecoder
        # are unspecified; interpreted here as a (B, T) key-padding mask (1=keep).
        mask = target_mask.reshape(B, 1, T).astype(_F32)

    for layer in params["layers"]:
        x = decoder_layer(x, mem, mask, layer, num_heads)                # one kernel/layer

    logits = final_projection(x.reshape(B * T, E), params["final_ln_g"],
                              params["final_ln_b"], params["out_w"], params["out_b"])
    return logits[:, :vocab].reshape(B, T, vocab)


# ----------------------------------------------------------------------------
# Demo
# ----------------------------------------------------------------------------

if __name__ == "__main__":
    vocab_size = 50
    max_seq_length = 16
    embed_dim = 32
    num_heads = 4
    num_layers = 2
    resample_size = 64
    B, T = 2, 8

    key = jax.random.PRNGKey(0)
    k_nmr, k_ir, k_cnmr, k_tgt, k_param = jax.random.split(key, 5)

    nmr_data = jax.random.normal(k_nmr, (B, resample_size), jnp.float32)
    ir_data = jax.random.normal(k_ir, (B, resample_size), jnp.float32)
    c_nmr_data = jax.random.normal(k_cnmr, (B, resample_size), jnp.float32)
    target_seq = jax.random.randint(k_tgt, (B, T), 0, vocab_size, jnp.int32)

    params = init_params(k_param, vocab_size=vocab_size,
                         max_seq_length=max_seq_length, embed_dim=embed_dim,
                         num_heads=num_heads, num_layers=num_layers,
                         resample_size=resample_size, use_concat=True)

    fwd = jax.jit(functools.partial(multimodal_to_smiles_forward, num_heads=num_heads))
    logits = fwd(params, nmr_data, ir_data, c_nmr_data, target_seq)
    jax.block_until_ready(logits)

    assert logits.shape == (B, T, vocab_size), logits.shape
    assert bool(jnp.all(jnp.isfinite(logits)))
    print("KERNEL_OK")
</pallas_src>

<mosaic_0001>
module attributes {stable_mosaic.version = 11 : i64} {
  func.func @_encoder_kernel(%arg0: i32, %arg1: memref<128x3xf32, #tpu.memory_space<vmem>>, %arg2: memref<3x32xf32, #tpu.memory_space<vmem>>, %arg3: memref<3x32xf32, #tpu.memory_space<vmem>>, %arg4: memref<3x32xf32, #tpu.memory_space<vmem>>, %arg5: memref<3x32xf32, #tpu.memory_space<vmem>>, %arg6: memref<96x32xbf16, #tpu.memory_space<vmem>>, %arg7: memref<1x32xf32, #tpu.memory_space<vmem>>, %arg8: memref<128x32xbf16, #tpu.memory_space<vmem>>) attributes {dimension_semantics = [#tpu.dimension_semantics<parallel>], iteration_bounds = array<i64: 1>, scalar_prefetch = 0 : i64, scratch_operands = 0 : i64, tpu.core_type = #tpu.core_type<tc>, window_params = [{transform_indices = @transform_0, window_bounds = array<i64: 128, 3>}, {pipeline_mode = #tpu.pipeline_mode<synchronous>, transform_indices = @transform_1, window_bounds = array<i64: 3, 32>}, {pipeline_mode = #tpu.pipeline_mode<synchronous>, transform_indices = @transform_2, window_bounds = array<i64: 3, 32>}, {pipeline_mode = #tpu.pipeline_mode<synchronous>, transform_indices = @transform_3, window_bounds = array<i64: 3, 32>}, {pipeline_mode = #tpu.pipeline_mode<synchronous>, transform_indices = @transform_4, window_bounds = array<i64: 3, 32>}, {pipeline_mode = #tpu.pipeline_mode<synchronous>, transform_indices = @transform_5, window_bounds = array<i64: 96, 32>}, {pipeline_mode = #tpu.pipeline_mode<synchronous>, transform_indices = @transform_6, window_bounds = array<i64: 1, 32>}, {transform_indices = @transform_7, window_bounds = array<i64: 128, 32>}]} {
    %c0 = arith.constant 0 : index
    %c0_0 = arith.constant 0 : index
    %0 = vector.load %arg1[%c0, %c0_0] : memref<128x3xf32, #tpu.memory_space<vmem>>, vector<128x3xf32>
    %c0_1 = arith.constant 0 : index
    %c0_2 = arith.constant 0 : index
    %1 = vector.load %arg2[%c0_1, %c0_2] : memref<3x32xf32, #tpu.memory_space<vmem>>, vector<3x32xf32>
    %c0_3 = arith.constant 0 : index
    %c0_4 = arith.constant 0 : index
    %2 = vector.load %arg3[%c0_3, %c0_4] : memref<3x32xf32, #tpu.memory_space<vmem>>, vector<3x32xf32>
    %c0_5 = arith.constant 0 : index
    %c0_6 = arith.constant 0 : index
    %3 = vector.load %arg4[%c0_5, %c0_6] : memref<3x32xf32, #tpu.memory_space<vmem>>, vector<3x32xf32>
    %c0_7 = arith.constant 0 : index
    %c0_8 = arith.constant 0 : index
    %4 = vector.load %arg5[%c0_7, %c0_8] : memref<3x32xf32, #tpu.memory_space<vmem>>, vector<3x32xf32>
    %c0_9 = arith.constant 0 : index
    %c0_10 = arith.constant 0 : index
    %5 = vector.load %arg6[%c0_9, %c0_10] : memref<96x32xbf16, #tpu.memory_space<vmem>>, vector<96x32xbf16>
    %6 = vector.extract_strided_slice %0 {offsets = [0, 0], sizes = [128, 1], strides = [1, 1]} : vector<128x3xf32> to vector<128x1xf32>
    %7 = vector.extract_strided_slice %1 {offsets = [0, 0], sizes = [1, 32], strides = [1, 1]} : vector<3x32xf32> to vector<1x32xf32>
    %8 = vector.broadcast %6 : vector<128x1xf32> to vector<128x32xf32>
    %9 = vector.broadcast %7 : vector<1x32xf32> to vector<128x32xf32>
    %10 = arith.mulf %8, %9 : vector<128x32xf32>
    %11 = vector.extract_strided_slice %2 {offsets = [0, 0], sizes = [1, 32], strides = [1, 1]} : vector<3x32xf32> to vector<1x32xf32>
    %12 = vector.broadcast %11 : vector<1x32xf32> to vector<128x32xf32>
    %13 = arith.addf %10, %12 : vector<128x32xf32>
    %14 = vector.extract_strided_slice %3 {offsets = [0, 0], sizes = [1, 32], strides = [1, 1]} : vector<3x32xf32> to vector<1x32xf32>
    %15 = vector.extract_strided_slice %4 {offsets = [0, 0], sizes = [1, 32], strides = [1, 1]} : vector<3x32xf32> to vector<1x32xf32>
    %cst = arith.constant dense<0.000000e+00> : vector<128xf32>
    %16 = vector.multi_reduction <add>, %13, %cst [1] : vector<128x32xf32> to vector<128xf32>
    %17 = vector.shape_cast %16 : vector<128xf32> to vector<128x1xf32>
    %cst_11 = arith.constant 3.200000e+01 : f32
    %18 = vector.broadcast %cst_11 : f32 to vector<128x1xf32>
    %19 = arith.divf %17, %18 : vector<128x1xf32>
    %20 = vector.broadcast %19 : vector<128x1xf32> to vector<128x32xf32>
    %21 = arith.subf %13, %20 : vector<128x32xf32>
    %22 = vector.broadcast %19 : vector<128x1xf32> to vector<128x32xf32>
    %23 = arith.subf %13, %22 : vector<128x32xf32>
    %24 = arith.mulf %21, %23 : vector<128x32xf32>
    %cst_12 = arith.constant dense<0.000000e+00> : vector<128xf32>
    %25 = vector.multi_reduction <add>, %24, %cst_12 [1] : vector<128x32xf32> to vector<128xf32>
    %26 = vector.shape_cast %25 : vector<128xf32> to vector<128x1xf32>
    %cst_13 = arith.constant 3.200000e+01 : f32
    %27 = vector.broadcast %cst_13 : f32 to vector<128x1xf32>
    %28 = arith.divf %26, %27 : vector<128x1xf32>
    %29 = vector.broadcast %19 : vector<128x1xf32> to vector<128x32xf32>
    %30 = arith.subf %13, %29 : vector<128x32xf32>
    %cst_14 = arith.constant 9.99999974E-6 : f32
    %31 = vector.broadcast %cst_14 : f32 to vector<128x1xf32>
    %32 = arith.addf %28, %31 : vector<128x1xf32>
    %33 = math.rsqrt %32 : vector<128x1xf32>
    %34 = vector.broadcast %33 : vector<128x1xf32> to vector<128x32xf32>
    %35 = arith.mulf %30, %34 : vector<128x32xf32>
    %36 = vector.broadcast %14 : vector<1x32xf32> to vector<128x32xf32>
    %37 = arith.mulf %35, %36 : vector<128x32xf32>
    %38 = vector.broadcast %15 : vector<1x32xf32> to vector<128x32xf32>
    %39 = arith.addf %37, %38 : vector<128x32xf32>
    %40 = arith.truncf %39 : vector<128x32xf32> to vector<128x32xbf16>
    %41 = vector.extract_strided_slice %5 {offsets = [0, 0], sizes = [32, 32], strides = [1, 1]} : vector<96x32xbf16> to vector<32x32xbf16>
    %cst_15 = arith.constant dense<0.000000e+00> : vector<128x32xf32>
    %42 = tpu.matmul %40, %41, %cst_15 {dimension_numbers = #tpu.dot_dimension_numbers<[1], [0], [0], [1], [0, 0, 1, 1], [], []>} : vector<128x32xbf16>, vector<32x32xbf16>, vector<128x32xf32> -> vector<128x32xf32>
    %43 = vector.extract_strided_slice %0 {offsets = [0, 1], sizes = [128, 1], strides = [1, 1]} : vector<128x3xf32> to vector<128x1xf32>
    %44 = vector.extract_strided_slice %1 {offsets = [1, 0], sizes = [1, 32], strides = [1, 1]} : vector<3x32xf32> to vector<1x32xf32>
    %45 = vector.broadcast %43 : vector<128x1xf32> to vector<128x32xf32>
    %46 = vector.broadcast %44 : vector<1x32xf32> to vector<128x32xf32>
    %47 = arith.mulf %45, %46 : vector<128x32xf32>
    %48 = vector.extract_strided_slice %2 {offsets = [1, 0], sizes = [1, 32], strides = [1, 1]} : vector<3x32xf32> to vector<1x32xf32>
    %49 = vector.broadcast %48 : vector<1x32xf32> to vector<128x32xf32>
    %50 = arith.addf %47, %49 : vector<128x32xf32>
    %51 = vector.extract_strided_slice %3 {offsets = [1, 0], sizes = [1, 32], strides = [1, 1]} : vector<3x32xf32> to vector<1x32xf32>
    %52 = vector.extract_strided_slice %4 {offsets = [1, 0], sizes = [1, 32], strides = [1, 1]} : vector<3x32xf32> to vector<1x32xf32>
    %cst_16 = arith.constant dense<0.000000e+00> : vector<128xf32>
    %53 = vector.multi_reduction <add>, %50, %cst_16 [1] : vector<128x32xf32> to vector<128xf32>
    %54 = vector.shape_cast %53 : vector<128xf32> to vector<128x1xf32>
    %cst_17 = arith.constant 3.200000e+01 : f32
    %55 = vector.broadcast %cst_17 : f32 to vector<128x1xf32>
    %56 = arith.divf %54, %55 : vector<128x1xf32>
    %57 = vector.broadcast %56 : vector<128x1xf32> to vector<128x32xf32>
    %58 = arith.subf %50, %57 : vector<128x32xf32>
    %59 = vector.broadcast %56 : vector<128x1xf32> to vector<128x32xf32>
    %60 = arith.subf %50, %59 : vector<128x32xf32>
    %61 = arith.mulf %58, %60 : vector<128x32xf32>
    %cst_18 = arith.constant dense<0.000000e+00> : vector<128xf32>
    %62 = vector.multi_reduction <add>, %61, %cst_18 [1] : vector<128x32xf32> to vector<128xf32>
    %63 = vector.shape_cast %62 : vector<128xf32> to vector<128x1xf32>
    %cst_19 = arith.constant 3.200000e+01 : f32
    %64 = vector.broadcast %cst_19 : f32 to vector<128x1xf32>
    %65 = arith.divf %63, %64 : vector<128x1xf32>
    %66 = vector.broadcast %56 : vector<128x1xf32> to vector<128x32xf32>
    %67 = arith.subf %50, %66 : vector<128x32xf32>
    %cst_20 = arith.constant 9.99999974E-6 : f32
    %68 = vector.broadcast %cst_20 : f32 to vector<128x1xf32>
    %69 = arith.addf %65, %68 : vector<128x1xf32>
    %70 = math.rsqrt %69 : vector<128x1xf32>
    %71 = vector.broadcast %70 : vector<128x1xf32> to vector<128x32xf32>
    %72 = arith.mulf %67, %71 : vector<128x32xf32>
    %73 = vector.broadcast %51 : vector<1x32xf32> to vector<128x32xf32>
    %74 = arith.mulf %72, %73 : vector<128x32xf32>
    %75 = vector.broadcast %52 : vector<1x32xf32> to vector<128x32xf32>
    %76 = arith.addf %74, %75 : vector<128x32xf32>
    %77 = arith.truncf %76 : vector<128x32xf32> to vector<128x32xbf16>
    %78 = vector.extract_strided_slice %5 {offsets = [32, 0], sizes = [32, 32], strides = [1, 1]} : vector<96x32xbf16> to vector<32x32xbf16>
    %cst_21 = arith.constant dense<0.000000e+00> : vector<128x32xf32>
    %79 = tpu.matmul %77, %78, %cst_21 {dimension_numbers = #tpu.dot_dimension_numbers<[1], [0], [0], [1], [0, 0, 1, 1], [], []>} : vector<128x32xbf16>, vector<32x32xbf16>, vector<128x32xf32> -> vector<128x32xf32>
    %80 = arith.addf %42, %79 : vector<128x32xf32>
    %81 = vector.extract_strided_slice %0 {offsets = [0, 2], sizes = [128, 1], strides = [1, 1]} : vector<128x3xf32> to vector<128x1xf32>
    %82 = vector.extract_strided_slice %1 {offsets = [2, 0], sizes = [1, 32], strides = [1, 1]} : vector<3x32xf32> to vector<1x32xf32>
    %83 = vector.broadcast %81 : vector<128x1xf32> to vector<128x32xf32>
    %84 = vector.broadcast %82 : vector<1x32xf32> to vector<128x32xf32>
    %85 = arith.mulf %83, %84 : vector<128x32xf32>
    %86 = vector.extract_strided_slice %2 {offsets = [2, 0], sizes = [1, 32], strides = [1, 1]} : vector<3x32xf32> to vector<1x32xf32>
    %87 = vector.broadcast %86 : vector<1x32xf32> to vector<128x32xf32>
    %88 = arith.addf %85, %87 : vector<128x32xf32>
    %89 = vector.extract_strided_slice %3 {offsets = [2, 0], sizes = [1, 32], strides = [1, 1]} : vector<3x32xf32> to vector<1x32xf32>
    %90 = vector.extract_strided_slice %4 {offsets = [2, 0], sizes = [1, 32], strides = [1, 1]} : vector<3x32xf32> to vector<1x32xf32>
    %cst_22 = arith.constant dense<0.000000e+00> : vector<128xf32>
    %91 = vector.multi_reduction <add>, %88, %cst_22 [1] : vector<128x32xf32> to vector<128xf32>
    %92 = vector.shape_cast %91 : vector<128xf32> to vector<128x1xf32>
    %cst_23 = arith.constant 3.200000e+01 : f32
    %93 = vector.broadcast %cst_23 : f32 to vector<128x1xf32>
    %94 = arith.divf %92, %93 : vector<128x1xf32>
    %95 = vector.broadcast %94 : vector<128x1xf32> to vector<128x32xf32>
    %96 = arith.subf %88, %95 : vector<128x32xf32>
    %97 = vector.broadcast %94 : vector<128x1xf32> to vector<128x32xf32>
    %98 = arith.subf %88, %97 : vector<128x32xf32>
    %99 = arith.mulf %96, %98 : vector<128x32xf32>
    %cst_24 = arith.constant dense<0.000000e+00> : vector<128xf32>
    %100 = vector.multi_reduction <add>, %99, %cst_24 [1] : vector<128x32xf32> to vector<128xf32>
    %101 = vector.shape_cast %100 : vector<128xf32> to vector<128x1xf32>
    %cst_25 = arith.constant 3.200000e+01 : f32
    %102 = vector.broadcast %cst_25 : f32 to vector<128x1xf32>
    %103 = arith.divf %101, %102 : vector<128x1xf32>
    %104 = vector.broadcast %94 : vector<128x1xf32> to vector<128x32xf32>
    %105 = arith.subf %88, %104 : vector<128x32xf32>
    %cst_26 = arith.constant 9.99999974E-6 : f32
    %106 = vector.broadcast %cst_26 : f32 to vector<128x1xf32>
    %107 = arith.addf %103, %106 : vector<128x1xf32>
    %108 = math.rsqrt %107 : vector<128x1xf32>
    %109 = vector.broadcast %108 : vector<128x1xf32> to vector<128x32xf32>
    %110 = arith.mulf %105, %109 : vector<128x32xf32>
    %111 = vector.broadcast %89 : vector<1x32xf32> to vector<128x32xf32>
    %112 = arith.mulf %110, %111 : vector<128x32xf32>
    %113 = vector.broadcast %90 : vector<1x32xf32> to vector<128x32xf32>
    %114 = arith.addf %112, %113 : vector<128x32xf32>
    %115 = arith.truncf %114 : vector<128x32xf32> to vector<128x32xbf16>
    %116 = vector.extract_strided_slice %5 {offsets = [64, 0], sizes = [32, 32], strides = [1, 1]} : vector<96x32xbf16> to vector<32x32xbf16>
    %cst_27 = arith.constant dense<0.000000e+00> : vector<128x32xf32>
    %117 = tpu.matmul %115, %116, %cst_27 {dimension_numbers = #tpu.dot_dimension_numbers<[1], [0], [0], [1], [0, 0, 1, 1], [], []>} : vector<128x32xbf16>, vector<32x32xbf16>, vector<128x32xf32> -> vector<128x32xf32>
    %118 = arith.addf %80, %117 : vector<128x32xf32>
    %c0_28 = arith.constant 0 : index
    %c0_29 = arith.constant 0 : index
    %119 = vector.load %arg7[%c0_28, %c0_29] : memref<1x32xf32, #tpu.memory_space<vmem>>, vector<1x32xf32>
    %120 = vector.broadcast %119 : vector<1x32xf32> to vector<128x32xf32>
    %121 = arith.addf %118, %120 : vector<128x32xf32>
    %122 = arith.truncf %121 : vector<128x32xf32> to vector<128x32xbf16>
    %c0_30 = arith.constant 0 : index
    %c0_31 = arith.constant 0 : index
    %123 = vector.load %arg8[%c0_30, %c0_31] : memref<128x32xbf16, #tpu.memory_space<vmem>>, vector<128x32xbf16>
    tpu.vector_store %arg8[%c0_30, %c0_31], %122 {strides = array<i32>} : memref<128x32xbf16, #tpu.memory_space<vmem>>, vector<128x32xbf16>,
    return
  }
  func.func @transform_0(%arg0: i32) -> (i32, i32) {
    %c0_i32 = arith.constant 0 : i32
    %c0_i32_0 = arith.constant 0 : i32
    return %arg0, %c0_i32 : i32, i32
  }
  func.func @transform_1(%arg0: i32) -> (i32, i32) {
    %c0_i32 = arith.constant 0 : i32
    %c0_i32_0 = arith.constant 0 : i32
    %c0_i32_1 = arith.constant 0 : i32
    return %c0_i32, %c0_i32_0 : i32, i32
  }
  func.func @transform_2(%arg0: i32) -> (i32, i32) {
    %c0_i32 = arith.constant 0 : i32
    %c0_i32_0 = arith.constant 0 : i32
    %c0_i32_1 = arith.constant 0 : i32
    return %c0_i32, %c0_i32_0 : i32, i32
  }
  func.func @transform_3(%arg0: i32) -> (i32, i32) {
    %c0_i32 = arith.constant 0 : i32
    %c0_i32_0 = arith.constant 0 : i32
    %c0_i32_1 = arith.constant 0 : i32
    return %c0_i32, %c0_i32_0 : i32, i32
  }
  func.func @transform_4(%arg0: i32) -> (i32, i32) {
    %c0_i32 = arith.constant 0 : i32
    %c0_i32_0 = arith.constant 0 : i32
    %c0_i32_1 = arith.constant 0 : i32
    return %c0_i32, %c0_i32_0 : i32, i32
  }
  func.func @transform_5(%arg0: i32) -> (i32, i32) {
    %c0_i32 = arith.constant 0 : i32
    %c0_i32_0 = arith.constant 0 : i32
    %c0_i32_1 = arith.constant 0 : i32
    return %c0_i32, %c0_i32_0 : i32, i32
  }
  func.func @transform_6(%arg0: i32) -> (i32, i32) {
    %c0_i32 = arith.constant 0 : i32
    %c0_i32_0 = arith.constant 0 : i32
    %c0_i32_1 = arith.constant 0 : i32
    return %c0_i32, %c0_i32_0 : i32, i32
  }
  func.func @transform_7(%arg0: i32) -> (i32, i32) {
    %c0_i32 = arith.constant 0 : i32
    %c0_i32_0 = arith.constant 0 : i32
    return %arg0, %c0_i32 : i32, i32
  }
}

module attributes {stable_mosaic.version = 11 : i64} {
  func.func @_final_kernel(%arg0: i32, %arg1: i32, %arg2: memref<16x32xbf16, #tpu.memory_space<vmem>>, %arg3: memref<1x32xf32, #tpu.memory_space<vmem>>, %arg4: memref<1x32xf32, #tpu.memory_space<vmem>>, %arg5: memref<32x256xbf16, #tpu.memory_space<vmem>>, %arg6: memref<1x256xf32, #tpu.memory_space<vmem>>, %arg7: memref<16x256xf32, #tpu.memory_space<vmem>>) attributes {dimension_semantics = [#tpu.dimension_semantics<parallel>, #tpu.dimension_semantics<parallel>], iteration_bounds = array<i64: 1, 1>, scalar_prefetch = 0 : i64, scratch_operands = 0 : i64, tpu.core_type = #tpu.core_type<tc>, window_params = [{transform_indices = @transform_0, window_bounds = array<i64: 16, 32>}, {pipeline_mode = #tpu.pipeline_mode<synchronous>, transform_indices = @transform_1, window_bounds = array<i64: 1, 32>}, {pipeline_mode = #tpu.pipeline_mode<synchronous>, transform_indices = @transform_2, window_bounds = array<i64: 1, 32>}, {transform_indices = @transform_3, window_bounds = array<i64: 32, 256>}, {transform_indices = @transform_4, window_bounds = array<i64: 1, 256>}, {transform_indices = @transform_5, window_bounds = array<i64: 16, 256>}]} {
    %c0 = arith.constant 0 : index
    %c0_0 = arith.constant 0 : index
    %0 = vector.load %arg2[%c0, %c0_0] : memref<16x32xbf16, #tpu.memory_space<vmem>>, vector<16x32xbf16>
    %1 = arith.extf %0 : vector<16x32xbf16> to vector<16x32xf32>
    %c0_1 = arith.constant 0 : index
    %c0_2 = arith.constant 0 : index
    %2 = vector.load %arg3[%c0_1, %c0_2] : memref<1x32xf32, #tpu.memory_space<vmem>>, vector<1x32xf32>
    %c0_3 = arith.constant 0 : index
    %c0_4 = arith.constant 0 : index
    %3 = vector.load %arg4[%c0_3, %c0_4] : memref<1x32xf32, #tpu.memory_space<vmem>>, vector<1x32xf32>
    %cst = arith.constant dense<0.000000e+00> : vector<16xf32>
    %4 = vector.multi_reduction <add>, %1, %cst [1] : vector<16x32xf32> to vector<16xf32>
    %5 = vector.shape_cast %4 : vector<16xf32> to vector<16x1xf32>
    %cst_5 = arith.constant 3.200000e+01 : f32
    %6 = vector.broadcast %cst_5 : f32 to vector<16x1xf32>
    %7 = arith.divf %5, %6 : vector<16x1xf32>
    %8 = vector.broadcast %7 : vector<16x1xf32> to vector<16x32xf32>
    %9 = arith.subf %1, %8 : vector<16x32xf32>
    %10 = vector.broadcast %7 : vector<16x1xf32> to vector<16x32xf32>
    %11 = arith.subf %1, %10 : vector<16x32xf32>
    %12 = arith.mulf %9, %11 : vector<16x32xf32>
    %cst_6 = arith.constant dense<0.000000e+00> : vector<16xf32>
    %13 = vector.multi_reduction <add>, %12, %cst_6 [1] : vector<16x32xf32> to vector<16xf32>
    %14 = vector.shape_cast %13 : vector<16xf32> to vector<16x1xf32>
    %cst_7 = arith.constant 3.200000e+01 : f32
    %15 = vector.broadcast %cst_7 : f32 to vector<16x1xf32>
    %16 = arith.divf %14, %15 : vector<16x1xf32>
    %17 = vector.broadcast %7 : vector<16x1xf32> to vector<16x32xf32>
    %18 = arith.subf %1, %17 : vector<16x32xf32>
    %cst_8 = arith.constant 9.99999974E-6 : f32
    %19 = vector.broadcast %cst_8 : f32 to vector<16x1xf32>
    %20 = arith.addf %16, %19 : vector<16x1xf32>
    %21 = math.rsqrt %20 : vector<16x1xf32>
    %22 = vector.broadcast %21 : vector<16x1xf32> to vector<16x32xf32>
    %23 = arith.mulf %18, %22 : vector<16x32xf32>
    %24 = vector.broadcast %2 : vector<1x32xf32> to vector<16x32xf32>
    %25 = arith.mulf %23, %24 : vector<16x32xf32>
    %26 = vector.broadcast %3 : vector<1x32xf32> to vector<16x32xf32>
    %27 = arith.addf %25, %26 : vector<16x32xf32>
    %28 = arith.truncf %27 : vector<16x32xf32> to vector<16x32xbf16>
    %c0_9 = arith.constant 0 : index
    %c0_10 = arith.constant 0 : index
    %29 = vector.load %arg5[%c0_9, %c0_10] : memref<32x256xbf16, #tpu.memory_space<vmem>>, vector<32x256xbf16>
    %cst_11 = arith.constant dense<0.000000e+00> : vector<16x256xf32>
    %30 = tpu.matmul %28, %29, %cst_11 {dimension_numbers = #tpu.dot_dimension_numbers<[1], [0], [0], [1], [0, 0, 1, 1], [], []>} : vector<16x32xbf16>, vector<32x256xbf16>, vector<16x256xf32> -> vector<16x256xf32>
    %c0_12 = arith.constant 0 : index
    %c0_13 = arith.constant 0 : index
    %31 = vector.load %arg6[%c0_12, %c0_13] : memref<1x256xf32, #tpu.memory_space<vmem>>, vector<1x256xf32>
    %32 = vector.broadcast %31 : vector<1x256xf32> to vector<16x256xf32>
    %33 = arith.addf %30, %32 : vector<16x256xf32>
    %c0_14 = arith.constant 0 : index
    %c0_15 = arith.constant 0 : index
    %34 = vector.load %arg7[%c0_14, %c0_15] : memref<16x256xf32, #tpu.memory_space<vmem>>, vector<16x256xf32>
    tpu.vector_store %arg7[%c0_14, %c0_15], %33 {strides = array<i32>} : memref<16x256xf32, #tpu.memory_space<vmem>>, vector<16x256xf32>,
    return
  }
  func.func @transform_0(%arg0: i32, %arg1: i32) -> (i32, i32) {
    %c0_i32 = arith.constant 0 : i32
    %c0_i32_0 = arith.constant 0 : i32
    return %arg0, %c0_i32 : i32, i32
  }
  func.func @transform_1(%arg0: i32, %arg1: i32) -> (i32, i32) {
    %c0_i32 = arith.constant 0 : i32
    %c0_i32_0 = arith.constant 0 : i32
    %c0_i32_1 = arith.constant 0 : i32
    return %c0_i32, %c0_i32_0 : i32, i32
  }
  func.func @transform_2(%arg0: i32, %arg1: i32) -> (i32, i32) {
    %c0_i32 = arith.constant 0 : i32
    %c0_i32_0 = arith.constant 0 : i32
    %c0_i32_1 = arith.constant 0 : i32
    return %c0_i32, %c0_i32_0 : i32, i32
  }
  func.func @transform_3(%arg0: i32, %arg1: i32) -> (i32, i32) {
    %c0_i32 = arith.constant 0 : i32
    %c0_i32_0 = arith.constant 0 : i32
    return %c0_i32, %arg1 : i32, i32
  }
  func.func @transform_4(%arg0: i32, %arg1: i32) -> (i32, i32) {
    %c0_i32 = arith.constant 0 : i32
    %c0_i32_0 = arith.constant 0 : i32
    return %c0_i32, %arg1 : i32, i32
  }
  func.func @transform_5(%arg0: i32, %arg1: i32) -> (i32, i32) {
    %c0_i32 = arith.constant 0 : i32
    return %arg0, %arg1 : i32, i32
  }
}

module attributes {stable_mosaic.version = 11 : i64} {
  func.func @_decoder_layer_kernel(%arg0: i32, %arg1: memref<1x8x32xbf16, #tpu.memory_space<vmem>>, %arg2: memref<1x64x32xbf16, #tpu.memory_space<vmem>>, %arg3: memref<1x1x8xf32, #tpu.memory_space<vmem>>, %arg4: memref<1x32xf32, #tpu.memory_space<vmem>>, %arg5: memref<1x32xf32, #tpu.memory_space<vmem>>, %arg6: memref<32x96xbf16, #tpu.memory_space<vmem>>, %arg7: memref<1x96xf32, #tpu.memory_space<vmem>>, %arg8: memref<32x32xbf16, #tpu.memory_space<vmem>>, %arg9: memref<1x32xf32, #tpu.memory_space<vmem>>, %arg10: memref<1x32xf32, #tpu.memory_space<vmem>>, %arg11: memref<1x32xf32, #tpu.memory_space<vmem>>, %arg12: memref<32x32xbf16, #tpu.memory_space<vmem>>, %arg13: memref<1x32xf32, #tpu.memory_space<vmem>>, %arg14: memref<32x64xbf16, #tpu.memory_space<vmem>>, %arg15: memref<1x64xf32, #tpu.memory_space<vmem>>, %arg16: memref<32x32xbf16, #tpu.memory_space<vmem>>, %arg17: memref<1x32xf32, #tpu.memory_space<vmem>>, %arg18: memref<1x32xf32, #tpu.memory_space<vmem>>, %arg19: memref<1x32xf32, #tpu.memory_space<vmem>>, %arg20: memref<32x128xbf16, #tpu.memory_space<vmem>>, %arg21: memref<1x128xf32, #tpu.memory_space<vmem>>, %arg22: memref<128x32xbf16, #tpu.memory_space<vmem>>, %arg23: memref<1x32xf32, #tpu.memory_space<vmem>>, %arg24: memref<1x8x32xbf16, #tpu.memory_space<vmem>>) attributes {dimension_semantics = [#tpu.dimension_semantics<parallel>], iteration_bounds = array<i64: 2>, scalar_prefetch = 0 : i64, scratch_operands = 0 : i64, tpu.core_type = #tpu.core_type<tc>, window_params = [{transform_indices = @transform_0, window_bounds = array<i64: 1, 8, 32>}, {transform_indices = @transform_1, window_bounds = array<i64: 1, 64, 32>}, {transform_indices = @transform_2, window_bounds = array<i64: 1, 1, 8>}, {pipeline_mode = #tpu.pipeline_mode<synchronous>, transform_indices = @transform_3, window_bounds = array<i64: 1, 32>}, {pipeline_mode = #tpu.pipeline_mode<synchronous>, transform_indices = @transform_4, window_bounds = array<i64: 1, 32>}, {pipeline_mode = #tpu.pipeline_mode<synchronous>, transform_indices = @transform_5, window_bounds = array<i64: 32, 96>}, {pipeline_mode = #tpu.pipeline_mode<synchronous>, transform_indices = @transform_6, window_bounds = array<i64: 1, 96>}, {pipeline_mode = #tpu.pipeline_mode<synchronous>, transform_indices = @transform_7, window_bounds = array<i64: 32, 32>}, {pipeline_mode = #tpu.pipeline_mode<synchronous>, transform_indices = @transform_8, window_bounds = array<i64: 1, 32>}, {pipeline_mode = #tpu.pipeline_mode<synchronous>, transform_indices = @transform_9, window_bounds = array<i64: 1, 32>}, {pipeline_mode = #tpu.pipeline_mode<synchronous>, transform_indices = @transform_10, window_bounds = array<i64: 1, 32>}, {pipeline_mode = #tpu.pipeline_mode<synchronous>, transform_indices = @transform_11, window_bounds = array<i64: 32, 32>}, {pipeline_mode = #tpu.pipeline_mode<synchronous>, transform_indices = @transform_12, window_bounds = array<i64: 1, 32>}, {pipeline_mode = #tpu.pipeline_mode<synchronous>, transform_indices = @transform_13, window_bounds = array<i64: 32, 64>}, {pipeline_mode = #tpu.pipeline_mode<synchronous>, transform_indices = @transform_14, window_bounds = array<i64: 1, 64>}, {pipeline_mode = #tpu.pipeline_mode<synchronous>, transform_indices = @transform_15, window_bounds = array<i64: 32, 32>}, {pipeline_mode = #tpu.pipeline_mode<synchronous>, transform_indices = @transform_16, window_bounds = array<i64: 1, 32>}, {pipeline_mode = #tpu.pipeline_mode<synchronous>, transform_indices = @transform_17, window_bounds = array<i64: 1, 32>}, {pipeline_mode = #tpu.pipeline_mode<synchronous>, transform_indices = @transform_18, window_bounds = array<i64: 1, 32>}, {pipeline_mode = #tpu.pipeline_mode<synchronous>, transform_indices = @transform_19, window_bounds = array<i64: 32, 128>}, {pipeline_mode = #tpu.pipeline_mode<synchronous>, transform_indices = @transform_20, window_bounds = array<i64: 1, 128>}, {pipeline_mode = #tpu.pipeline_mode<synchronous>, transform_indices = @transform_21, window_bounds = array<i64: 128, 32>}, {pipeline_mode = #tpu.pipeline_mode<synchronous>, transform_indices = @transform_22, window_bounds = array<i64: 1, 32>}, {transform_indices = @transform_23, window_bounds = array<i64: 1, 8, 32>}]} {
    %c0 = arith.constant 0 : index
    %c0_0 = arith.constant 0 : index
    %c0_1 = arith.constant 0 : index
    %0 = vector.load %arg1[%c0, %c0_0, %c0_1] : memref<1x8x32xbf16, #tpu.memory_space<vmem>>, vector<1x8x32xbf16>
    %1 = vector.shape_cast %0 : vector<1x8x32xbf16> to vector<8x32xbf16>
    %2 = arith.extf %1 : vector<8x32xbf16> to vector<8x32xf32>
    %c0_2 = arith.constant 0 : index
    %c0_3 = arith.constant 0 : index
    %c0_4 = arith.constant 0 : index
    %3 = vector.load %arg2[%c0_2, %c0_3, %c0_4] : memref<1x64x32xbf16, #tpu.memory_space<vmem>>, vector<1x64x32xbf16>
    %4 = vector.shape_cast %3 : vector<1x64x32xbf16> to vector<64x32xbf16>
    %5 = tpu.iota {dimensions = array<i32: 0>} : vector<8x8xi32>
    %6 = tpu.iota {dimensions = array<i32: 1>} : vector<8x8xi32>
    %c0_5 = arith.constant 0 : index
    %c0_6 = arith.constant 0 : index
    %c0_7 = arith.constant 0 : index
    %7 = vector.load %arg3[%c0_5, %c0_6, %c0_7] : memref<1x1x8xf32, #tpu.memory_space<vmem>>, vector<1x1x8xf32>
    %8 = vector.shape_cast %7 : vector<1x1x8xf32> to vector<1x8xf32>
    %cst = arith.constant 1.000000e+00 : f32
    %9 = vector.broadcast %cst : f32 to vector<1x8xf32>
    %10 = arith.subf %8, %9 : vector<1x8xf32>
    %cst_8 = arith.constant 1.000000e+30 : f32
    %11 = vector.broadcast %cst_8 : f32 to vector<1x8xf32>
    %12 = arith.mulf %10, %11 : vector<1x8xf32>
    %13 = arith.cmpi sle, %6, %5 : vector<8x8xi32>
    %cst_9 = arith.constant -1.000000e+30 : f32
    %14 = vector.shape_cast %12 : vector<1x8xf32> to vector<1x8xf32>
    %15 = vector.broadcast %14 : vector<1x8xf32> to vector<8x8xf32>
    %16 = vector.broadcast %cst_9 : f32 to vector<8x8xf32>
    %17 = arith.select %13, %15, %16 : vector<8x8xi1>, vector<8x8xf32>
    %c0_10 = arith.constant 0 : index
    %c0_11 = arith.constant 0 : index
    %18 = vector.load %arg4[%c0_10, %c0_11] : memref<1x32xf32, #tpu.memory_space<vmem>>, vector<1x32xf32>
    %c0_12 = arith.constant 0 : index
    %c0_13 = arith.constant 0 : index
    %19 = vector.load %arg5[%c0_12, %c0_13] : memref<1x32xf32, #tpu.memory_space<vmem>>, vector<1x32xf32>
    %cst_14 = arith.constant dense<0.000000e+00> : vector<8xf32>
    %20 = vector.multi_reduction <add>, %2, %cst_14 [1] : vector<8x32xf32> to vector<8xf32>
    %21 = vector.shape_cast %20 : vector<8xf32> to vector<8x1xf32>
    %cst_15 = arith.constant 3.200000e+01 : f32
    %22 = vector.broadcast %cst_15 : f32 to vector<8x1xf32>
    %23 = arith.divf %21, %22 : vector<8x1xf32>
    %24 = vector.broadcast %23 : vector<8x1xf32> to vector<8x32xf32>
    %25 = arith.subf %2, %24 : vector<8x32xf32>
    %26 = vector.broadcast %23 : vector<8x1xf32> to vector<8x32xf32>
    %27 = arith.subf %2, %26 : vector<8x32xf32>
    %28 = arith.mulf %25, %27 : vector<8x32xf32>
    %cst_16 = arith.constant dense<0.000000e+00> : vector<8xf32>
    %29 = vector.multi_reduction <add>, %28, %cst_16 [1] : vector<8x32xf32> to vector<8xf32>
    %30 = vector.shape_cast %29 : vector<8xf32> to vector<8x1xf32>
    %cst_17 = arith.constant 3.200000e+01 : f32
    %31 = vector.broadcast %cst_17 : f32 to vector<8x1xf32>
    %32 = arith.divf %30, %31 : vector<8x1xf32>
    %33 = vector.broadcast %23 : vector<8x1xf32> to vector<8x32xf32>
    %34 = arith.subf %2, %33 : vector<8x32xf32>
    %cst_18 = arith.constant 9.99999974E-6 : f32
    %35 = vector.broadcast %cst_18 : f32 to vector<8x1xf32>
    %36 = arith.addf %32, %35 : vector<8x1xf32>
    %37 = math.rsqrt %36 : vector<8x1xf32>
    %38 = vector.broadcast %37 : vector<8x1xf32> to vector<8x32xf32>
    %39 = arith.mulf %34, %38 : vector<8x32xf32>
    %40 = vector.broadcast %18 : vector<1x32xf32> to vector<8x32xf32>
    %41 = arith.mulf %39, %40 : vector<8x32xf32>
    %42 = vector.broadcast %19 : vector<1x32xf32> to vector<8x32xf32>
    %43 = arith.addf %41, %42 : vector<8x32xf32>
    %44 = arith.truncf %43 : vector<8x32xf32> to vector<8x32xbf16>
    %c0_19 = arith.constant 0 : index
    %c0_20 = arith.constant 0 : index
    %45 = vector.load %arg6[%c0_19, %c0_20] : memref<32x96xbf16, #tpu.memory_space<vmem>>, vector<32x96xbf16>
    %cst_21 = arith.constant dense<0.000000e+00> : vector<8x96xf32>
    %46 = tpu.matmul %44, %45, %cst_21 {dimension_numbers = #tpu.dot_dimension_numbers<[1], [0], [0], [1], [0, 0, 1, 1], [], []>} : vector<8x32xbf16>, vector<32x96xbf16>, vector<8x96xf32> -> vector<8x96xf32>
    %c0_22 = arith.constant 0 : index
    %c0_23 = arith.constant 0 : index
    %47 = vector.load %arg7[%c0_22, %c0_23] : memref<1x96xf32, #tpu.memory_space<vmem>>, vector<1x96xf32>
    %48 = vector.broadcast %47 : vector<1x96xf32> to vector<8x96xf32>
    %49 = arith.addf %46, %48 : vector<8x96xf32>
    %50 = vector.extract_strided_slice %49 {offsets = [0, 0], sizes = [8, 8], strides = [1, 1]} : vector<8x96xf32> to vector<8x8xf32>
    %51 = vector.extract_strided_slice %49 {offsets = [0, 32], sizes = [8, 8], strides = [1, 1]} : vector<8x96xf32> to vector<8x8xf32>
    %52 = vector.extract_strided_slice %49 {offsets = [0, 64], sizes = [8, 8], strides = [1, 1]} : vector<8x96xf32> to vector<8x8xf32>
    %53 = tpu.transpose %51, [1, 0] : vector<8x8xf32> -> vector<8x8xf32>
    %cst_24 = arith.constant dense<0.000000e+00> : vector<8x8xf32>
    %54 = tpu.matmul %50, %53, %cst_24 {dimension_numbers = #tpu.dot_dimension_numbers<[1], [0], [0], [1], [0, 0, 1, 1], [], []>} : vector<8x8xf32>, vector<8x8xf32>, vector<8x8xf32> -> vector<8x8xf32>
    %55 = arith.addf %54, %17 : vector<8x8xf32>
    %cst_25 = arith.constant dense<0xFF800000> : vector<8xf32>
    %56 = vector.multi_reduction <maximumf>, %55, %cst_25 [1] : vector<8x8xf32> to vector<8xf32>
    %57 = vector.shape_cast %56 : vector<8xf32> to vector<8x1xf32>
    %58 = vector.broadcast %57 : vector<8x1xf32> to vector<8x8xf32>
    %59 = arith.subf %55, %58 : vector<8x8xf32>
    %60 = math.exp %59 : vector<8x8xf32>
    %cst_26 = arith.constant dense<0.000000e+00> : vector<8xf32>
    %61 = vector.multi_reduction <add>, %60, %cst_26 [1] : vector<8x8xf32> to vector<8xf32>
    %62 = vector.shape_cast %61 : vector<8xf32> to vector<8x1xf32>
    %63 = tpu.reciprocal %62 {approx = true} : vector<8x1xf32> -> vector<8x1xf32>
    %64 = vector.broadcast %63 : vector<8x1xf32> to vector<8x8xf32>
    %65 = arith.mulf %60, %64 : vector<8x8xf32>
    %cst_27 = arith.constant dense<0.000000e+00> : vector<8x8xf32>
    %66 = tpu.matmul %65, %52, %cst_27 {dimension_numbers = #tpu.dot_dimension_numbers<[1], [0], [0], [1], [0, 0, 1, 1], [], []>} : vector<8x8xf32>, vector<8x8xf32>, vector<8x8xf32> -> vector<8x8xf32>
    %67 = vector.extract_strided_slice %49 {offsets = [0, 8], sizes = [8, 8], strides = [1, 1]} : vector<8x96xf32> to vector<8x8xf32>
    %68 = vector.extract_strided_slice %49 {offsets = [0, 40], sizes = [8, 8], strides = [1, 1]} : vector<8x96xf32> to vector<8x8xf32>
    %69 = vector.extract_strided_slice %49 {offsets = [0, 72], sizes = [8, 8], strides = [1, 1]} : vector<8x96xf32> to vector<8x8xf32>
    %70 = tpu.transpose %68, [1, 0] : vector<8x8xf32> -> vector<8x8xf32>
    %cst_28 = arith.constant dense<0.000000e+00> : vector<8x8xf32>
    %71 = tpu.matmul %67, %70, %cst_28 {dimension_numbers = #tpu.dot_dimension_numbers<[1], [0], [0], [1], [0, 0, 1, 1], [], []>} : vector<8x8xf32>, vector<8x8xf32>, vector<8x8xf32> -> vector<8x8xf32>
    %72 = arith.addf %71, %17 : vector<8x8xf32>
    %cst_29 = arith.constant dense<0xFF800000> : vector<8xf32>
    %73 = vector.multi_reduction <maximumf>, %72, %cst_29 [1] : vector<8x8xf32> to vector<8xf32>
    %74 = vector.shape_cast %73 : vector<8xf32> to vector<8x1xf32>
    %75 = vector.broadcast %74 : vector<8x1xf32> to vector<8x8xf32>
    %76 = arith.subf %72, %75 : vector<8x8xf32>
    %77 = math.exp %76 : vector<8x8xf32>
    %cst_30 = arith.constant dense<0.000000e+00> : vector<8xf32>
    %78 = vector.multi_reduction <add>, %77, %cst_30 [1] : vector<8x8xf32> to vector<8xf32>
    %79 = vector.shape_cast %78 : vector<8xf32> to vector<8x1xf32>
    %80 = tpu.reciprocal %79 {approx = true} : vector<8x1xf32> -> vector<8x1xf32>
    %81 = vector.broadcast %80 : vector<8x1xf32> to vector<8x8xf32>
    %82 = arith.mulf %77, %81 : vector<8x8xf32>
    %cst_31 = arith.constant dense<0.000000e+00> : vector<8x8xf32>
    %83 = tpu.matmul %82, %69, %cst_31 {dimension_numbers = #tpu.dot_dimension_numbers<[1], [0], [0], [1], [0, 0, 1, 1], [], []>} : vector<8x8xf32>, vector<8x8xf32>, vector<8x8xf32> -> vector<8x8xf32>
    %84 = vector.extract_strided_slice %49 {offsets = [0, 16], sizes = [8, 8], strides = [1, 1]} : vector<8x96xf32> to vector<8x8xf32>
    %85 = vector.extract_strided_slice %49 {offsets = [0, 48], sizes = [8, 8], strides = [1, 1]} : vector<8x96xf32> to vector<8x8xf32>
    %86 = vector.extract_strided_slice %49 {offsets = [0, 80], sizes = [8, 8], strides = [1, 1]} : vector<8x96xf32> to vector<8x8xf32>
    %87 = tpu.transpose %85, [1, 0] : vector<8x8xf32> -> vector<8x8xf32>
    %cst_32 = arith.constant dense<0.000000e+00> : vector<8x8xf32>
    %88 = tpu.matmul %84, %87, %cst_32 {dimension_numbers = #tpu.dot_dimension_numbers<[1], [0], [0], [1], [0, 0, 1, 1], [], []>} : vector<8x8xf32>, vector<8x8xf32>, vector<8x8xf32> -> vector<8x8xf32>
    %89 = arith.addf %88, %17 : vector<8x8xf32>
    %cst_33 = arith.constant dense<0xFF800000> : vector<8xf32>
    %90 = vector.multi_reduction <maximumf>, %89, %cst_33 [1] : vector<8x8xf32> to vector<8xf32>
    %91 = vector.shape_cast %90 : vector<8xf32> to vector<8x1xf32>
    %92 = vector.broadcast %91 : vector<8x1xf32> to vector<8x8xf32>
    %93 = arith.subf %89, %92 : vector<8x8xf32>
    %94 = math.exp %93 : vector<8x8xf32>
    %cst_34 = arith.constant dense<0.000000e+00> : vector<8xf32>
    %95 = vector.multi_reduction <add>, %94, %cst_34 [1] : vector<8x8xf32> to vector<8xf32>
    %96 = vector.shape_cast %95 : vector<8xf32> to vector<8x1xf32>
    %97 = tpu.reciprocal %96 {approx = true} : vector<8x1xf32> -> vector<8x1xf32>
    %98 = vector.broadcast %97 : vector<8x1xf32> to vector<8x8xf32>
    %99 = arith.mulf %94, %98 : vector<8x8xf32>
    %cst_35 = arith.constant dense<0.000000e+00> : vector<8x8xf32>
    %100 = tpu.matmul %99, %86, %cst_35 {dimension_numbers = #tpu.dot_dimension_numbers<[1], [0], [0], [1], [0, 0, 1, 1], [], []>} : vector<8x8xf32>, vector<8x8xf32>, vector<8x8xf32> -> vector<8x8xf32>
    %101 = vector.extract_strided_slice %49 {offsets = [0, 24], sizes = [8, 8], strides = [1, 1]} : vector<8x96xf32> to vector<8x8xf32>
    %102 = vector.extract_strided_slice %49 {offsets = [0, 56], sizes = [8, 8], strides = [1, 1]} : vector<8x96xf32> to vector<8x8xf32>
    %103 = vector.extract_strided_slice %49 {offsets = [0, 88], sizes = [8, 8], strides = [1, 1]} : vector<8x96xf32> to vector<8x8xf32>
    %104 = tpu.transpose %102, [1, 0] : vector<8x8xf32> -> vector<8x8xf32>
    %cst_36 = arith.constant dense<0.000000e+00> : vector<8x8xf32>
    %105 = tpu.matmul %101, %104, %cst_36 {dimension_numbers = #tpu.dot_dimension_numbers<[1], [0], [0], [1], [0, 0, 1, 1], [], []>} : vector<8x8xf32>, vector<8x8xf32>, vector<8x8xf32> -> vector<8x8xf32>
    %106 = arith.addf %105, %17 : vector<8x8xf32>
    %cst_37 = arith.constant dense<0xFF800000> : vector<8xf32>
    %107 = vector.multi_reduction <maximumf>, %106, %cst_37 [1] : vector<8x8xf32> to vector<8xf32>
    %108 = vector.shape_cast %107 : vector<8xf32> to vector<8x1xf32>
    %109 = vector.broadcast %108 : vector<8x1xf32> to vector<8x8xf32>
    %110 = arith.subf %106, %109 : vector<8x8xf32>
    %111 = math.exp %110 : vector<8x8xf32>
    %cst_38 = arith.constant dense<0.000000e+00> : vector<8xf32>
    %112 = vector.multi_reduction <add>, %111, %cst_38 [1] : vector<8x8xf32> to vector<8xf32>
    %113 = vector.shape_cast %112 : vector<8xf32> to vector<8x1xf32>
    %114 = tpu.reciprocal %113 {approx = true} : vector<8x1xf32> -> vector<8x1xf32>
    %115 = vector.broadcast %114 : vector<8x1xf32> to vector<8x8xf32>
    %116 = arith.mulf %111, %115 : vector<8x8xf32>
    %cst_39 = arith.constant dense<0.000000e+00> : vector<8x8xf32>
    %117 = tpu.matmul %116, %103, %cst_39 {dimension_numbers = #tpu.dot_dimension_numbers<[1], [0], [0], [1], [0, 0, 1, 1], [], []>} : vector<8x8xf32>, vector<8x8xf32>, vector<8x8xf32> -> vector<8x8xf32>
    %118 = tpu.concatenate %66, %83, %100, %117 in 1 : vector<8x8xf32>, vector<8x8xf32>, vector<8x8xf32>, vector<8x8xf32> -> vector<8x32xf32>
    %119 = arith.truncf %118 : vector<8x32xf32> to vector<8x32xbf16>
    %c0_40 = arith.constant 0 : index
    %c0_41 = arith.constant 0 : index
    %120 = vector.load %arg8[%c0_40, %c0_41] : memref<32x32xbf16, #tpu.memory_space<vmem>>, vector<32x32xbf16>
    %cst_42 = arith.constant dense<0.000000e+00> : vector<8x32xf32>
    %121 = tpu.matmul %119, %120, %cst_42 {dimension_numbers = #tpu.dot_dimension_numbers<[1], [0], [0], [1], [0, 0, 1, 1], [], []>} : vector<8x32xbf16>, vector<32x32xbf16>, vector<8x32xf32> -> vector<8x32xf32>
    %c0_43 = arith.constant 0 : index
    %c0_44 = arith.constant 0 : index
    %122 = vector.load %arg9[%c0_43, %c0_44] : memref<1x32xf32, #tpu.memory_space<vmem>>, vector<1x32xf32>
    %123 = vector.broadcast %122 : vector<1x32xf32> to vector<8x32xf32>
    %124 = arith.addf %121, %123 : vector<8x32xf32>
    %125 = arith.addf %2, %124 : vector<8x32xf32>
    %c0_45 = arith.constant 0 : index
    %c0_46 = arith.constant 0 : index
    %126 = vector.load %arg10[%c0_45, %c0_46] : memref<1x32xf32, #tpu.memory_space<vmem>>, vector<1x32xf32>
    %c0_47 = arith.constant 0 : index
    %c0_48 = arith.constant 0 : index
    %127 = vector.load %arg11[%c0_47, %c0_48] : memref<1x32xf32, #tpu.memory_space<vmem>>, vector<1x32xf32>
    %cst_49 = arith.constant dense<0.000000e+00> : vector<8xf32>
    %128 = vector.multi_reduction <add>, %125, %cst_49 [1] : vector<8x32xf32> to vector<8xf32>
    %129 = vector.shape_cast %128 : vector<8xf32> to vector<8x1xf32>
    %cst_50 = arith.constant 3.200000e+01 : f32
    %130 = vector.broadcast %cst_50 : f32 to vector<8x1xf32>
    %131 = arith.divf %129, %130 : vector<8x1xf32>
    %132 = vector.broadcast %131 : vector<8x1xf32> to vector<8x32xf32>
    %133 = arith.subf %125, %132 : vector<8x32xf32>
    %134 = vector.broadcast %131 : vector<8x1xf32> to vector<8x32xf32>
    %135 = arith.subf %125, %134 : vector<8x32xf32>
    %136 = arith.mulf %133, %135 : vector<8x32xf32>
    %cst_51 = arith.constant dense<0.000000e+00> : vector<8xf32>
    %137 = vector.multi_reduction <add>, %136, %cst_51 [1] : vector<8x32xf32> to vector<8xf32>
    %138 = vector.shape_cast %137 : vector<8xf32> to vector<8x1xf32>
    %cst_52 = arith.constant 3.200000e+01 : f32
    %139 = vector.broadcast %cst_52 : f32 to vector<8x1xf32>
    %140 = arith.divf %138, %139 : vector<8x1xf32>
    %141 = vector.broadcast %131 : vector<8x1xf32> to vector<8x32xf32>
    %142 = arith.subf %125, %141 : vector<8x32xf32>
    %cst_53 = arith.constant 9.99999974E-6 : f32
    %143 = vector.broadcast %cst_53 : f32 to vector<8x1xf32>
    %144 = arith.addf %140, %143 : vector<8x1xf32>
    %145 = math.rsqrt %144 : vector<8x1xf32>
    %146 = vector.broadcast %145 : vector<8x1xf32> to vector<8x32xf32>
    %147 = arith.mulf %142, %146 : vector<8x32xf32>
    %148 = vector.broadcast %126 : vector<1x32xf32> to vector<8x32xf32>
    %149 = arith.mulf %147, %148 : vector<8x32xf32>
    %150 = vector.broadcast %127 : vector<1x32xf32> to vector<8x32xf32>
    %151 = arith.addf %149, %150 : vector<8x32xf32>
    %152 = arith.truncf %151 : vector<8x32xf32> to vector<8x32xbf16>
    %c0_54 = arith.constant 0 : index
    %c0_55 = arith.constant 0 : index
    %153 = vector.load %arg12[%c0_54, %c0_55] : memref<32x32xbf16, #tpu.memory_space<vmem>>, vector<32x32xbf16>
    %cst_56 = arith.constant dense<0.000000e+00> : vector<8x32xf32>
    %154 = tpu.matmul %152, %153, %cst_56 {dimension_numbers = #tpu.dot_dimension_numbers<[1], [0], [0], [1], [0, 0, 1, 1], [], []>} : vector<8x32xbf16>, vector<32x32xbf16>, vector<8x32xf32> -> vector<8x32xf32>
    %c0_57 = arith.constant 0 : index
    %c0_58 = arith.constant 0 : index
    %155 = vector.load %arg13[%c0_57, %c0_58] : memref<1x32xf32, #tpu.memory_space<vmem>>, vector<1x32xf32>
    %156 = vector.broadcast %155 : vector<1x32xf32> to vector<8x32xf32>
    %157 = arith.addf %154, %156 : vector<8x32xf32>
    %c0_59 = arith.constant 0 : index
    %c0_60 = arith.constant 0 : index
    %158 = vector.load %arg14[%c0_59, %c0_60] : memref<32x64xbf16, #tpu.memory_space<vmem>>, vector<32x64xbf16>
    %cst_61 = arith.constant dense<0.000000e+00> : vector<64x64xf32>
    %159 = tpu.matmul %4, %158, %cst_61 {dimension_numbers = #tpu.dot_dimension_numbers<[1], [0], [0], [1], [0, 0, 1, 1], [], []>} : vector<64x32xbf16>, vector<32x64xbf16>, vector<64x64xf32> -> vector<64x64xf32>
    %c0_62 = arith.constant 0 : index
    %c0_63 = arith.constant 0 : index
    %160 = vector.load %arg15[%c0_62, %c0_63] : memref<1x64xf32, #tpu.memory_space<vmem>>, vector<1x64xf32>
    %161 = vector.broadcast %160 : vector<1x64xf32> to vector<64x64xf32>
    %162 = arith.addf %159, %161 : vector<64x64xf32>
    %163 = vector.extract_strided_slice %157 {offsets = [0, 0], sizes = [8, 8], strides = [1, 1]} : vector<8x32xf32> to vector<8x8xf32>
    %164 = vector.extract_strided_slice %162 {offsets = [0, 0], sizes = [64, 8], strides = [1, 1]} : vector<64x64xf32> to vector<64x8xf32>
    %165 = vector.extract_strided_slice %162 {offsets = [0, 32], sizes = [64, 8], strides = [1, 1]} : vector<64x64xf32> to vector<64x8xf32>
    %166 = tpu.transpose %164, [1, 0] : vector<64x8xf32> -> vector<8x64xf32>
    %cst_64 = arith.constant dense<0.000000e+00> : vector<8x64xf32>
    %167 = tpu.matmul %163, %166, %cst_64 {dimension_numbers = #tpu.dot_dimension_numbers<[1], [0], [0], [1], [0, 0, 1, 1], [], []>} : vector<8x8xf32>, vector<8x64xf32>, vector<8x64xf32> -> vector<8x64xf32>
    %cst_65 = arith.constant dense<0xFF800000> : vector<8xf32>
    %168 = vector.multi_reduction <maximumf>, %167, %cst_65 [1] : vector<8x64xf32> to vector<8xf32>
    %169 = vector.shape_cast %168 : vector<8xf32> to vector<8x1xf32>
    %170 = vector.broadcast %169 : vector<8x1xf32> to vector<8x64xf32>
    %171 = arith.subf %167, %170 : vector<8x64xf32>
    %172 = math.exp %171 : vector<8x64xf32>
    %cst_66 = arith.constant dense<0.000000e+00> : vector<8xf32>
    %173 = vector.multi_reduction <add>, %172, %cst_66 [1] : vector<8x64xf32> to vector<8xf32>
    %174 = vector.shape_cast %173 : vector<8xf32> to vector<8x1xf32>
    %175 = tpu.reciprocal %174 {approx = true} : vector<8x1xf32> -> vector<8x1xf32>
    %176 = vector.broadcast %175 : vector<8x1xf32> to vector<8x64xf32>
    %177 = arith.mulf %172, %176 : vector<8x64xf32>
    %cst_67 = arith.constant dense<0.000000e+00> : vector<8x8xf32>
    %178 = tpu.matmul %177, %165, %cst_67 {dimension_numbers = #tpu.dot_dimension_numbers<[1], [0], [0], [1], [0, 0, 1, 1], [], []>} : vector<8x64xf32>, vector<64x8xf32>, vector<8x8xf32> -> vector<8x8xf32>
    %179 = vector.extract_strided_slice %157 {offsets = [0, 8], sizes = [8, 8], strides = [1, 1]} : vector<8x32xf32> to vector<8x8xf32>
    %180 = vector.extract_strided_slice %162 {offsets = [0, 8], sizes = [64, 8], strides = [1, 1]} : vector<64x64xf32> to vector<64x8xf32>
    %181 = vector.extract_strided_slice %162 {offsets = [0, 40], sizes = [64, 8], strides = [1, 1]} : vector<64x64xf32> to vector<64x8xf32>
    %182 = tpu.transpose %180, [1, 0] : vector<64x8xf32> -> vector<8x64xf32>
    %cst_68 = arith.constant dense<0.000000e+00> : vector<8x64xf32>
    %183 = tpu.matmul %179, %182, %cst_68 {dimension_numbers = #tpu.dot_dimension_numbers<[1], [0], [0], [1], [0, 0, 1, 1], [], []>} : vector<8x8xf32>, vector<8x64xf32>, vector<8x64xf32> -> vector<8x64xf32>
    %cst_69 = arith.constant dense<0xFF800000> : vector<8xf32>
    %184 = vector.multi_reduction <maximumf>, %183, %cst_69 [1] : vector<8x64xf32> to vector<8xf32>
    %185 = vector.shape_cast %184 : vector<8xf32> to vector<8x1xf32>
    %186 = vector.broadcast %185 : vector<8x1xf32> to vector<8x64xf32>
    %187 = arith.subf %183, %186 : vector<8x64xf32>
    %188 = math.exp %187 : vector<8x64xf32>
    %cst_70 = arith.constant dense<0.000000e+00> : vector<8xf32>
    %189 = vector.multi_reduction <add>, %188, %cst_70 [1] : vector<8x64xf32> to vector<8xf32>
    %190 = vector.shape_cast %189 : vector<8xf32> to vector<8x1xf32>
    %191 = tpu.reciprocal %190 {approx = true} : vector<8x1xf32> -> vector<8x1xf32>
    %192 = vector.broadcast %191 : vector<8x1xf32> to vector<8x64xf32>
    %193 = arith.mulf %188, %192 : vector<8x64xf32>
    %cst_71 = arith.constant dense<0.000000e+00> : vector<8x8xf32>
    %194 = tpu.matmul %193, %181, %cst_71 {dimension_numbers = #tpu.dot_dimension_numbers<[1], [0], [0], [1], [0, 0, 1, 1], [], []>} : vector<8x64xf32>, vector<64x8xf32>, vector<8x8xf32> -> vector<8x8xf32>
    %195 = vector.extract_strided_slice %157 {offsets = [0, 16], sizes = [8, 8], strides = [1, 1]} : vector<8x32xf32> to vector<8x8xf32>
    %196 = vector.extract_strided_slice %162 {offsets = [0, 16], sizes = [64, 8], strides = [1, 1]} : vector<64x64xf32> to vector<64x8xf32>
    %197 = vector.extract_strided_slice %162 {offsets = [0, 48], sizes = [64, 8], strides = [1, 1]} : vector<64x64xf32> to vector<64x8xf32>
    %198 = tpu.transpose %196, [1, 0] : vector<64x8xf32> -> vector<8x64xf32>
    %cst_72 = arith.constant dense<0.000000e+00> : vector<8x64xf32>
    %199 = tpu.matmul %195, %198, %cst_72 {dimension_numbers = #tpu.dot_dimension_numbers<[1], [0], [0], [1], [0, 0, 1, 1], [], []>} : vector<8x8xf32>, vector<8x64xf32>, vector<8x64xf32> -> vector<8x64xf32>
    %cst_73 = arith.constant dense<0xFF800000> : vector<8xf32>
    %200 = vector.multi_reduction <maximumf>, %199, %cst_73 [1] : vector<8x64xf32> to vector<8xf32>
    %201 = vector.shape_cast %200 : vector<8xf32> to vector<8x1xf32>
    %202 = vector.broadcast %201 : vector<8x1xf32> to vector<8x64xf32>
    %203 = arith.subf %199, %202 : vector<8x64xf32>
    %204 = math.exp %203 : vector<8x64xf32>
    %cst_74 = arith.constant dense<0.000000e+00> : vector<8xf32>
    %205 = vector.multi_reduction <add>, %204, %cst_74 [1] : vector<8x64xf32> to vector<8xf32>
    %206 = vector.shape_cast %205 : vector<8xf32> to vector<8x1xf32>
    %207 = tpu.reciprocal %206 {approx = true} : vector<8x1xf32> -> vector<8x1xf32>
    %208 = vector.broadcast %207 : vector<8x1xf32> to vector<8x64xf32>
    %209 = arith.mulf %204, %208 : vector<8x64xf32>
    %cst_75 = arith.constant dense<0.000000e+00> : vector<8x8xf32>
    %210 = tpu.matmul %209, %197, %cst_75 {dimension_numbers = #tpu.dot_dimension_numbers<[1], [0], [0], [1], [0, 0, 1, 1], [], []>} : vector<8x64xf32>, vector<64x8xf32>, vector<8x8xf32> -> vector<8x8xf32>
    %211 = vector.extract_strided_slice %157 {offsets = [0, 24], sizes = [8, 8], strides = [1, 1]} : vector<8x32xf32> to vector<8x8xf32>
    %212 = vector.extract_strided_slice %162 {offsets = [0, 24], sizes = [64, 8], strides = [1, 1]} : vector<64x64xf32> to vector<64x8xf32>
    %213 = vector.extract_strided_slice %162 {offsets = [0, 56], sizes = [64, 8], strides = [1, 1]} : vector<64x64xf32> to vector<64x8xf32>
    %214 = tpu.transpose %212, [1, 0] : vector<64x8xf32> -> vector<8x64xf32>
    %cst_76 = arith.constant dense<0.000000e+00> : vector<8x64xf32>
    %215 = tpu.matmul %211, %214, %cst_76 {dimension_numbers = #tpu.dot_dimension_numbers<[1], [0], [0], [1], [0, 0, 1, 1], [], []>} : vector<8x8xf32>, vector<8x64xf32>, vector<8x64xf32> -> vector<8x64xf32>
    %cst_77 = arith.constant dense<0xFF800000> : vector<8xf32>
    %216 = vector.multi_reduction <maximumf>, %215, %cst_77 [1] : vector<8x64xf32> to vector<8xf32>
    %217 = vector.shape_cast %216 : vector<8xf32> to vector<8x1xf32>
    %218 = vector.broadcast %217 : vector<8x1xf32> to vector<8x64xf32>
    %219 = arith.subf %215, %218 : vector<8x64xf32>
    %220 = math.exp %219 : vector<8x64xf32>
    %cst_78 = arith.constant dense<0.000000e+00> : vector<8xf32>
    %221 = vector.multi_reduction <add>, %220, %cst_78 [1] : vector<8x64xf32> to vector<8xf32>
    %222 = vector.shape_cast %221 : vector<8xf32> to vector<8x1xf32>
    %223 = tpu.reciprocal %222 {approx = true} : vector<8x1xf32> -> vector<8x1xf32>
    %224 = vector.broadcast %223 : vector<8x1xf32> to vector<8x64xf32>
    %225 = arith.mulf %220, %224 : vector<8x64xf32>
    %cst_79 = arith.constant dense<0.000000e+00> : vector<8x8xf32>
    %226 = tpu.matmul %225, %213, %cst_79 {dimension_numbers = #tpu.dot_dimension_numbers<[1], [0], [0], [1], [0, 0, 1, 1], [], []>} : vector<8x64xf32>, vector<64x8xf32>, vector<8x8xf32> -> vector<8x8xf32>
    %227 = tpu.concatenate %178, %194, %210, %226 in 1 : vector<8x8xf32>, vector<8x8xf32>, vector<8x8xf32>, vector<8x8xf32> -> vector<8x32xf32>
    %228 = arith.truncf %227 : vector<8x32xf32> to vector<8x32xbf16>
    %c0_80 = arith.constant 0 : index
    %c0_81 = arith.constant 0 : index
    %229 = vector.load %arg16[%c0_80, %c0_81] : memref<32x32xbf16, #tpu.memory_space<vmem>>, vector<32x32xbf16>
    %cst_82 = arith.constant dense<0.000000e+00> : vector<8x32xf32>
    %230 = tpu.matmul %228, %229, %cst_82 {dimension_numbers = #tpu.dot_dimension_numbers<[1], [0], [0], [1], [0, 0, 1, 1], [], []>} : vector<8x32xbf16>, vector<32x32xbf16>, vector<8x32xf32> -> vector<8x32xf32>
    %231 = arith.addf %125, %230 : vector<8x32xf32>
    %c0_83 = arith.constant 0 : index
    %c0_84 = arith.constant 0 : index
    %232 = vector.load %arg17[%c0_83, %c0_84] : memref<1x32xf32, #tpu.memory_space<vmem>>, vector<1x32xf32>
    %233 = vector.broadcast %232 : vector<1x32xf32> to vector<8x32xf32>
    %234 = arith.addf %231, %233 : vector<8x32xf32>
    %c0_85 = arith.constant 0 : index
    %c0_86 = arith.constant 0 : index
    %235 = vector.load %arg18[%c0_85, %c0_86] : memref<1x32xf32, #tpu.memory_space<vmem>>, vector<1x32xf32>
    %c0_87 = arith.constant 0 : index
    %c0_88 = arith.constant 0 : index
    %236 = vector.load %arg19[%c0_87, %c0_88] : memref<1x32xf32, #tpu.memory_space<vmem>>, vector<1x32xf32>
    %cst_89 = arith.constant dense<0.000000e+00> : vector<8xf32>
    %237 = vector.multi_reduction <add>, %234, %cst_89 [1] : vector<8x32xf32> to vector<8xf32>
    %238 = vector.shape_cast %237 : vector<8xf32> to vector<8x1xf32>
    %cst_90 = arith.constant 3.200000e+01 : f32
    %239 = vector.broadcast %cst_90 : f32 to vector<8x1xf32>
    %240 = arith.divf %238, %239 : vector<8x1xf32>
    %241 = vector.broadcast %240 : vector<8x1xf32> to vector<8x32xf32>
    %242 = arith.subf %234, %241 : vector<8x32xf32>
    %243 = vector.broadcast %240 : vector<8x1xf32> to vector<8x32xf32>
    %244 = arith.subf %234, %243 : vector<8x32xf32>
    %245 = arith.mulf %242, %244 : vector<8x32xf32>
    %cst_91 = arith.constant dense<0.000000e+00> : vector<8xf32>
    %246 = vector.multi_reduction <add>, %245, %cst_91 [1] : vector<8x32xf32> to vector<8xf32>
    %247 = vector.shape_cast %246 : vector<8xf32> to vector<8x1xf32>
    %cst_92 = arith.constant 3.200000e+01 : f32
    %248 = vector.broadcast %cst_92 : f32 to vector<8x1xf32>
    %249 = arith.divf %247, %248 : vector<8x1xf32>
    %250 = vector.broadcast %240 : vector<8x1xf32> to vector<8x32xf32>
    %251 = arith.subf %234, %250 : vector<8x32xf32>
    %cst_93 = arith.constant 9.99999974E-6 : f32
    %252 = vector.broadcast %cst_93 : f32 to vector<8x1xf32>
    %253 = arith.addf %249, %252 : vector<8x1xf32>
    %254 = math.rsqrt %253 : vector<8x1xf32>
    %255 = vector.broadcast %254 : vector<8x1xf32> to vector<8x32xf32>
    %256 = arith.mulf %251, %255 : vector<8x32xf32>
    %257 = vector.broadcast %235 : vector<1x32xf32> to vector<8x32xf32>
    %258 = arith.mulf %256, %257 : vector<8x32xf32>
    %259 = vector.broadcast %236 : vector<1x32xf32> to vector<8x32xf32>
    %260 = arith.addf %258, %259 : vector<8x32xf32>
    %261 = arith.truncf %260 : vector<8x32xf32> to vector<8x32xbf16>
    %c0_94 = arith.constant 0 : index
    %c0_95 = arith.constant 0 : index
    %262 = vector.load %arg20[%c0_94, %c0_95] : memref<32x128xbf16, #tpu.memory_space<vmem>>, vector<32x128xbf16>
    %cst_96 = arith.constant dense<0.000000e+00> : vector<8x128xf32>
    %263 = tpu.matmul %261, %262, %cst_96 {dimension_numbers = #tpu.dot_dimension_numbers<[1], [0], [0], [1], [0, 0, 1, 1], [], []>} : vector<8x32xbf16>, vector<32x128xbf16>, vector<8x128xf32> -> vector<8x128xf32>
    %c0_97 = arith.constant 0 : index
    %c0_98 = arith.constant 0 : index
    %264 = vector.load %arg21[%c0_97, %c0_98] : memref<1x128xf32, #tpu.memory_space<vmem>>, vector<1x128xf32>
    %265 = vector.broadcast %264 : vector<1x128xf32> to vector<8x128xf32>
    %266 = arith.addf %263, %265 : vector<8x128xf32>
    %cst_99 = arith.constant 5.000000e-01 : f32
    %267 = vector.broadcast %cst_99 : f32 to vector<8x128xf32>
    %268 = arith.mulf %267, %266 : vector<8x128xf32>
    %cst_100 = arith.constant 4.471500e-02 : f32
    %269 = vector.broadcast %cst_100 : f32 to vector<8x128xf32>
    %270 = arith.mulf %269, %266 : vector<8x128xf32>
    %271 = arith.mulf %270, %266 : vector<8x128xf32>
    %272 = arith.mulf %271, %266 : vector<8x128xf32>
    %273 = arith.addf %266, %272 : vector<8x128xf32>
    %cst_101 = arith.constant 0.797884583 : f32
    %274 = vector.broadcast %cst_101 : f32 to vector<8x128xf32>
    %275 = arith.mulf %274, %273 : vector<8x128xf32>
    %276 = math.tanh %275 : vector<8x128xf32>
    %cst_102 = arith.constant 1.000000e+00 : f32
    %277 = vector.broadcast %cst_102 : f32 to vector<8x128xf32>
    %278 = arith.addf %277, %276 : vector<8x128xf32>
    %279 = arith.mulf %268, %278 : vector<8x128xf32>
    %280 = arith.truncf %279 : vector<8x128xf32> to vector<8x128xbf16>
    %c0_103 = arith.constant 0 : index
    %c0_104 = arith.constant 0 : index
    %281 = vector.load %arg22[%c0_103, %c0_104] : memref<128x32xbf16, #tpu.memory_space<vmem>>, vector<128x32xbf16>
    %cst_105 = arith.constant dense<0.000000e+00> : vector<8x32xf32>
    %282 = tpu.matmul %280, %281, %cst_105 {dimension_numbers = #tpu.dot_dimension_numbers<[1], [0], [0], [1], [0, 0, 1, 1], [], []>} : vector<8x128xbf16>, vector<128x32xbf16>, vector<8x32xf32> -> vector<8x32xf32>
    %c0_106 = arith.constant 0 : index
    %c0_107 = arith.constant 0 : index
    %283 = vector.load %arg23[%c0_106, %c0_107] : memref<1x32xf32, #tpu.memory_space<vmem>>, vector<1x32xf32>
    %284 = vector.broadcast %283 : vector<1x32xf32> to vector<8x32xf32>
    %285 = arith.addf %282, %284 : vector<8x32xf32>
    %286 = arith.addf %234, %285 : vector<8x32xf32>
    %287 = arith.truncf %286 : vector<8x32xf32> to vector<8x32xbf16>
    %c0_108 = arith.constant 0 : index
    %c0_109 = arith.constant 0 : index
    %c0_110 = arith.constant 0 : index
    %288 = vector.load %arg24[%c0_108, %c0_109, %c0_110] : memref<1x8x32xbf16, #tpu.memory_space<vmem>>, vector<1x8x32xbf16>
    %289 = vector.shape_cast %288 : vector<1x8x32xbf16> to vector<8x32xbf16>
    %290 = vector.shape_cast %287 : vector<8x32xbf16> to vector<1x8x32xbf16>
    tpu.vector_store %arg24[%c0_108, %c0_109, %c0_110], %290 {strides = array<i32>} : memref<1x8x32xbf16, #tpu.memory_space<vmem>>, vector<1x8x32xbf16>,
    return
  }
  func.func @transform_0(%arg0: i32) -> (i32, i32, i32) {
    %c0_i32 = arith.constant 0 : i32
    %c0_i32_0 = arith.constant 0 : i32
    %c0_i32_1 = arith.constant 0 : i32
    return %arg0, %c0_i32, %c0_i32_0 : i32, i32, i32
  }
  func.func @transform_1(%arg0: i32) -> (i32, i32, i32) {
    %c0_i32 = arith.constant 0 : i32
    %c0_i32_0 = arith.constant 0 : i32
    %c0_i32_1 = arith.constant 0 : i32
    return %arg0, %c0_i32, %c0_i32_0 : i32, i32, i32
  }
  func.func @transform_2(%arg0: i32) -> (i32, i32, i32) {
    %c0_i32 = arith.constant 0 : i32
    %c0_i32_0 = arith.constant 0 : i32
    %c0_i32_1 = arith.constant 0 : i32
    return %arg0, %c0_i32, %c0_i32_0 : i32, i32, i32
  }
  func.func @transform_3(%arg0: i32) -> (i32, i32) {
    %c0_i32 = arith.constant 0 : i32
    %c0_i32_0 = arith.constant 0 : i32
    %c0_i32_1 = arith.constant 0 : i32
    return %c0_i32, %c0_i32_0 : i32, i32
  }
  func.func @transform_4(%arg0: i32) -> (i32, i32) {
    %c0_i32 = arith.constant 0 : i32
    %c0_i32_0 = arith.constant 0 : i32
    %c0_i32_1 = arith.constant 0 : i32
    return %c0_i32, %c0_i32_0 : i32, i32
  }
  func.func @transform_5(%arg0: i32) -> (i32, i32) {
    %c0_i32 = arith.constant 0 : i32
    %c0_i32_0 = arith.constant 0 : i32
    %c0_i32_1 = arith.constant 0 : i32
    return %c0_i32, %c0_i32_0 : i32, i32
  }
  func.func @transform_6(%arg0: i32) -> (i32, i32) {
    %c0_i32 = arith.constant 0 : i32
    %c0_i32_0 = arith.constant 0 : i32
    %c0_i32_1 = arith.constant 0 : i32
    return %c0_i32, %c0_i32_0 : i32, i32
  }
  func.func @transform_7(%arg0: i32) -> (i32, i32) {
    %c0_i32 = arith.constant 0 : i32
    %c0_i32_0 = arith.constant 0 : i32
    %c0_i32_1 = arith.constant 0 : i32
    return %c0_i32, %c0_i32_0 : i32, i32
  }
  func.func @transform_8(%arg0: i32) -> (i32, i32) {
    %c0_i32 = arith.constant 0 : i32
    %c0_i32_0 = arith.constant 0 : i32
    %c0_i32_1 = arith.constant 0 : i32
    return %c0_i32, %c0_i32_0 : i32, i32
  }
  func.func @transform_9(%arg0: i32) -> (i32, i32) {
    %c0_i32 = arith.constant 0 : i32
    %c0_i32_0 = arith.constant 0 : i32
    %c0_i32_1 = arith.constant 0 : i32
    return %c0_i32, %c0_i32_0 : i32, i32
  }
  func.func @transform_10(%arg0: i32) -> (i32, i32) {
    %c0_i32 = arith.constant 0 : i32
    %c0_i32_0 = arith.constant 0 : i32
    %c0_i32_1 = arith.constant 0 : i32
    return %c0_i32, %c0_i32_0 : i32, i32
  }
  func.func @transform_11(%arg0: i32) -> (i32, i32) {
    %c0_i32 = arith.constant 0 : i32
    %c0_i32_0 = arith.constant 0 : i32
    %c0_i32_1 = arith.constant 0 : i32
    return %c0_i32, %c0_i32_0 : i32, i32
  }
  func.func @transform_12(%arg0: i32) -> (i32, i32) {
    %c0_i32 = arith.constant 0 : i32
    %c0_i32_0 = arith.constant 0 : i32
    %c0_i32_1 = arith.constant 0 : i32
    return %c0_i32, %c0_i32_0 : i32, i32
  }
  func.func @transform_13(%arg0: i32) -> (i32, i32) {
    %c0_i32 = arith.constant 0 : i32
    %c0_i32_0 = arith.constant 0 : i32
    %c0_i32_1 = arith.constant 0 : i32
    return %c0_i32, %c0_i32_0 : i32, i32
  }
  func.func @transform_14(%arg0: i32) -> (i32, i32) {
    %c0_i32 = arith.constant 0 : i32
    %c0_i32_0 = arith.constant 0 : i32
    %c0_i32_1 = arith.constant 0 : i32
    return %c0_i32, %c0_i32_0 : i32, i32
  }
  func.func @transform_15(%arg0: i32) -> (i32, i32) {
    %c0_i32 = arith.constant 0 : i32
    %c0_i32_0 = arith.constant 0 : i32
    %c0_i32_1 = arith.constant 0 : i32
    return %c0_i32, %c0_i32_0 : i32, i32
  }
  func.func @transform_16(%arg0: i32) -> (i32, i32) {
    %c0_i32 = arith.constant 0 : i32
    %c0_i32_0 = arith.constant 0 : i32
    %c0_i32_1 = arith.constant 0 : i32
    return %c0_i32, %c0_i32_0 : i32, i32
  }
  func.func @transform_17(%arg0: i32) -> (i32, i32) {
    %c0_i32 = arith.constant 0 : i32
    %c0_i32_0 = arith.constant 0 : i32
    %c0_i32_1 = arith.constant 0 : i32
    return %c0_i32, %c0_i32_0 : i32, i32
  }
  func.func @transform_18(%arg0: i32) -> (i32, i32) {
    %c0_i32 = arith.constant 0 : i32
    %c0_i32_0 = arith.constant 0 : i32
    %c0_i32_1 = arith.constant 0 : i32
    return %c0_i32, %c0_i32_0 : i32, i32
  }
  func.func @transform_19(%arg0: i32) -> (i32, i32) {
    %c0_i32 = arith.constant 0 : i32
    %c0_i32_0 = arith.constant 0 : i32
    %c0_i32_1 = arith.constant 0 : i32
    return %c0_i32, %c0_i32_0 : i32, i32
  }
  func.func @transform_20(%arg0: i32) -> (i32, i32) {
    %c0_i32 = arith.constant 0 : i32
    %c0_i32_0 = arith.constant 0 : i32
    %c0_i32_1 = arith.constant 0 : i32
    return %c0_i32, %c0_i32_0 : i32, i32
  }
  func.func @transform_21(%arg0: i32) -> (i32, i32) {
    %c0_i32 = arith.constant 0 : i32
    %c0_i32_0 = arith.constant 0 : i32
    %c0_i32_1 = arith.constant 0 : i32
    return %c0_i32, %c0_i32_0 : i32, i32
  }
  func.func @transform_22(%arg0: i32) -> (i32, i32) {
    %c0_i32 = arith.constant 0 : i32
    %c0_i32_0 = arith.constant 0 : i32
    %c0_i32_1 = arith.constant 0 : i32
    return %c0_i32, %c0_i32_0 : i32, i32
  }
  func.func @transform_23(%arg0: i32) -> (i32, i32, i32) {
    %c0_i32 = arith.constant 0 : i32
    %c0_i32_0 = arith.constant 0 : i32
    %c0_i32_1 = arith.constant 0 : i32
    return %arg0, %c0_i32, %c0_i32_0 : i32, i32, i32
  }
}

module attributes {stable_mosaic.version = 11 : i64} {
  func.func @_decoder_layer_kernel(%arg0: i32, %arg1: memref<1x8x32xbf16, #tpu.memory_space<vmem>>, %arg2: memref<1x64x32xbf16, #tpu.memory_space<vmem>>, %arg3: memref<1x1x8xf32, #tpu.memory_space<vmem>>, %arg4: memref<1x32xf32, #tpu.memory_space<vmem>>, %arg5: memref<1x32xf32, #tpu.memory_space<vmem>>, %arg6: memref<32x96xbf16, #tpu.memory_space<vmem>>, %arg7: memref<1x96xf32, #tpu.memory_space<vmem>>, %arg8: memref<32x32xbf16, #tpu.memory_space<vmem>>, %arg9: memref<1x32xf32, #tpu.memory_space<vmem>>, %arg10: memref<1x32xf32, #tpu.memory_space<vmem>>, %arg11: memref<1x32xf32, #tpu.memory_space<vmem>>, %arg12: memref<32x32xbf16, #tpu.memory_space<vmem>>, %arg13: memref<1x32xf32, #tpu.memory_space<vmem>>, %arg14: memref<32x64xbf16, #tpu.memory_space<vmem>>, %arg15: memref<1x64xf32, #tpu.memory_space<vmem>>, %arg16: memref<32x32xbf16, #tpu.memory_space<vmem>>, %arg17: memref<1x32xf32, #tpu.memory_space<vmem>>, %arg18: memref<1x32xf32, #tpu.memory_space<vmem>>, %arg19: memref<1x32xf32, #tpu.memory_space<vmem>>, %arg20: memref<32x128xbf16, #tpu.memory_space<vmem>>, %arg21: memref<1x128xf32, #tpu.memory_space<vmem>>, %arg22: memref<128x32xbf16, #tpu.memory_space<vmem>>, %arg23: memref<1x32xf32, #tpu.memory_space<vmem>>, %arg24: memref<1x8x32xbf16, #tpu.memory_space<vmem>>) attributes {dimension_semantics = [#tpu.dimension_semantics<parallel>], iteration_bounds = array<i64: 2>, scalar_prefetch = 0 : i64, scratch_operands = 0 : i64, tpu.core_type = #tpu.core_type<tc>, window_params = [{transform_indices = @transform_0, window_bounds = array<i64: 1, 8, 32>}, {transform_indices = @transform_1, window_bounds = array<i64: 1, 64, 32>}, {transform_indices = @transform_2, window_bounds = array<i64: 1, 1, 8>}, {pipeline_mode = #tpu.pipeline_mode<synchronous>, transform_indices = @transform_3, window_bounds = array<i64: 1, 32>}, {pipeline_mode = #tpu.pipeline_mode<synchronous>, transform_indices = @transform_4, window_bounds = array<i64: 1, 32>}, {pipeline_mode = #tpu.pipeline_mode<synchronous>, transform_indices = @transform_5, window_bounds = array<i64: 32, 96>}, {pipeline_mode = #tpu.pipeline_mode<synchronous>, transform_indices = @transform_6, window_bounds = array<i64: 1, 96>}, {pipeline_mode = #tpu.pipeline_mode<synchronous>, transform_indices = @transform_7, window_bounds = array<i64: 32, 32>}, {pipeline_mode = #tpu.pipeline_mode<synchronous>, transform_indices = @transform_8, window_bounds = array<i64: 1, 32>}, {pipeline_mode = #tpu.pipeline_mode<synchronous>, transform_indices = @transform_9, window_bounds = array<i64: 1, 32>}, {pipeline_mode = #tpu.pipeline_mode<synchronous>, transform_indices = @transform_10, window_bounds = array<i64: 1, 32>}, {pipeline_mode = #tpu.pipeline_mode<synchronous>, transform_indices = @transform_11, window_bounds = array<i64: 32, 32>}, {pipeline_mode = #tpu.pipeline_mode<synchronous>, transform_indices = @transform_12, window_bounds = array<i64: 1, 32>}, {pipeline_mode = #tpu.pipeline_mode<synchronous>, transform_indices = @transform_13, window_bounds = array<i64: 32, 64>}, {pipeline_mode = #tpu.pipeline_mode<synchronous>, transform_indices = @transform_14, window_bounds = array<i64: 1, 64>}, {pipeline_mode = #tpu.pipeline_mode<synchronous>, transform_indices = @transform_15, window_bounds = array<i64: 32, 32>}, {pipeline_mode = #tpu.pipeline_mode<synchronous>, transform_indices = @transform_16, window_bounds = array<i64: 1, 32>}, {pipeline_mode = #tpu.pipeline_mode<synchronous>, transform_indices = @transform_17, window_bounds = array<i64: 1, 32>}, {pipeline_mode = #tpu.pipeline_mode<synchronous>, transform_indices = @transform_18, window_bounds = array<i64: 1, 32>}, {pipeline_mode = #tpu.pipeline_mode<synchronous>, transform_indices = @transform_19, window_bounds = array<i64: 32, 128>}, {pipeline_mode = #tpu.pipeline_mode<synchronous>, transform_indices = @transform_20, window_bounds = array<i64: 1, 128>}, {pipeline_mode = #tpu.pipeline_mode<synchronous>, transform_indices = @transform_21, window_bounds = array<i64: 128, 32>}, {pipeline_mode = #tpu.pipeline_mode<synchronous>, transform_indices = @transform_22, window_bounds = array<i64: 1, 32>}, {transform_indices = @transform_23, window_bounds = array<i64: 1, 8, 32>}]} {
    %c0 = arith.constant 0 : index
    %c0_0 = arith.constant 0 : index
    %c0_1 = arith.constant 0 : index
    %0 = vector.load %arg1[%c0, %c0_0, %c0_1] : memref<1x8x32xbf16, #tpu.memory_space<vmem>>, vector<1x8x32xbf16>
    %1 = vector.shape_cast %0 : vector<1x8x32xbf16> to vector<8x32xbf16>
    %2 = arith.extf %1 : vector<8x32xbf16> to vector<8x32xf32>
    %c0_2 = arith.constant 0 : index
    %c0_3 = arith.constant 0 : index
    %c0_4 = arith.constant 0 : index
    %3 = vector.load %arg2[%c0_2, %c0_3, %c0_4] : memref<1x64x32xbf16, #tpu.memory_space<vmem>>, vector<1x64x32xbf16>
    %4 = vector.shape_cast %3 : vector<1x64x32xbf16> to vector<64x32xbf16>
    %5 = tpu.iota {dimensions = array<i32: 0>} : vector<8x8xi32>
    %6 = tpu.iota {dimensions = array<i32: 1>} : vector<8x8xi32>
    %c0_5 = arith.constant 0 : index
    %c0_6 = arith.constant 0 : index
    %c0_7 = arith.constant 0 : index
    %7 = vector.load %arg3[%c0_5, %c0_6, %c0_7] : memref<1x1x8xf32, #tpu.memory_space<vmem>>, vector<1x1x8xf32>
    %8 = vector.shape_cast %7 : vector<1x1x8xf32> to vector<1x8xf32>
    %cst = arith.constant 1.000000e+00 : f32
    %9 = vector.broadcast %cst : f32 to vector<1x8xf32>
    %10 = arith.subf %8, %9 : vector<1x8xf32>
    %cst_8 = arith.constant 1.000000e+30 : f32
    %11 = vector.broadcast %cst_8 : f32 to vector<1x8xf32>
    %12 = arith.mulf %10, %11 : vector<1x8xf32>
    %13 = arith.cmpi sle, %6, %5 : vector<8x8xi32>
    %cst_9 = arith.constant -1.000000e+30 : f32
    %14 = vector.shape_cast %12 : vector<1x8xf32> to vector<1x8xf32>
    %15 = vector.broadcast %14 : vector<1x8xf32> to vector<8x8xf32>
    %16 = vector.broadcast %cst_9 : f32 to vector<8x8xf32>
    %17 = arith.select %13, %15, %16 : vector<8x8xi1>, vector<8x8xf32>
    %c0_10 = arith.constant 0 : index
    %c0_11 = arith.constant 0 : index
    %18 = vector.load %arg4[%c0_10, %c0_11] : memref<1x32xf32, #tpu.memory_space<vmem>>, vector<1x32xf32>
    %c0_12 = arith.constant 0 : index
    %c0_13 = arith.constant 0 : index
    %19 = vector.load %arg5[%c0_12, %c0_13] : memref<1x32xf32, #tpu.memory_space<vmem>>, vector<1x32xf32>
    %cst_14 = arith.constant dense<0.000000e+00> : vector<8xf32>
    %20 = vector.multi_reduction <add>, %2, %cst_14 [1] : vector<8x32xf32> to vector<8xf32>
    %21 = vector.shape_cast %20 : vector<8xf32> to vector<8x1xf32>
    %cst_15 = arith.constant 3.200000e+01 : f32
    %22 = vector.broadcast %cst_15 : f32 to vector<8x1xf32>
    %23 = arith.divf %21, %22 : vector<8x1xf32>
    %24 = vector.broadcast %23 : vector<8x1xf32> to vector<8x32xf32>
    %25 = arith.subf %2, %24 : vector<8x32xf32>
    %26 = vector.broadcast %23 : vector<8x1xf32> to vector<8x32xf32>
    %27 = arith.subf %2, %26 : vector<8x32xf32>
    %28 = arith.mulf %25, %27 : vector<8x32xf32>
    %cst_16 = arith.constant dense<0.000000e+00> : vector<8xf32>
    %29 = vector.multi_reduction <add>, %28, %cst_16 [1] : vector<8x32xf32> to vector<8xf32>
    %30 = vector.shape_cast %29 : vector<8xf32> to vector<8x1xf32>
    %cst_17 = arith.constant 3.200000e+01 : f32
    %31 = vector.broadcast %cst_17 : f32 to vector<8x1xf32>
    %32 = arith.divf %30, %31 : vector<8x1xf32>
    %33 = vector.broadcast %23 : vector<8x1xf32> to vector<8x32xf32>
    %34 = arith.subf %2, %33 : vector<8x32xf32>
    %cst_18 = arith.constant 9.99999974E-6 : f32
    %35 = vector.broadcast %cst_18 : f32 to vector<8x1xf32>
    %36 = arith.addf %32, %35 : vector<8x1xf32>
    %37 = math.rsqrt %36 : vector<8x1xf32>
    %38 = vector.broadcast %37 : vector<8x1xf32> to vector<8x32xf32>
    %39 = arith.mulf %34, %38 : vector<8x32xf32>
    %40 = vector.broadcast %18 : vector<1x32xf32> to vector<8x32xf32>
    %41 = arith.mulf %39, %40 : vector<8x32xf32>
    %42 = vector.broadcast %19 : vector<1x32xf32> to vector<8x32xf32>
    %43 = arith.addf %41, %42 : vector<8x32xf32>
    %44 = arith.truncf %43 : vector<8x32xf32> to vector<8x32xbf16>
    %c0_19 = arith.constant 0 : index
    %c0_20 = arith.constant 0 : index
    %45 = vector.load %arg6[%c0_19, %c0_20] : memref<32x96xbf16, #tpu.memory_space<vmem>>, vector<32x96xbf16>
    %cst_21 = arith.constant dense<0.000000e+00> : vector<8x96xf32>
    %46 = tpu.matmul %44, %45, %cst_21 {dimension_numbers = #tpu.dot_dimension_numbers<[1], [0], [0], [1], [0, 0, 1, 1], [], []>} : vector<8x32xbf16>, vector<32x96xbf16>, vector<8x96xf32> -> vector<8x96xf32>
    %c0_22 = arith.constant 0 : index
    %c0_23 = arith.constant 0 : index
    %47 = vector.load %arg7[%c0_22, %c0_23] : memref<1x96xf32, #tpu.memory_space<vmem>>, vector<1x96xf32>
    %48 = vector.broadcast %47 : vector<1x96xf32> to vector<8x96xf32>
    %49 = arith.addf %46, %48 : vector<8x96xf32>
    %50 = vector.extract_strided_slice %49 {offsets = [0, 0], sizes = [8, 8], strides = [1, 1]} : vector<8x96xf32> to vector<8x8xf32>
    %51 = vector.extract_strided_slice %49 {offsets = [0, 32], sizes = [8, 8], strides = [1, 1]} : vector<8x96xf32> to vector<8x8xf32>
    %52 = vector.extract_strided_slice %49 {offsets = [0, 64], sizes = [8, 8], strides = [1, 1]} : vector<8x96xf32> to vector<8x8xf32>
    %53 = tpu.transpose %51, [1, 0] : vector<8x8xf32> -> vector<8x8xf32>
    %cst_24 = arith.constant dense<0.000000e+00> : vector<8x8xf32>
    %54 = tpu.matmul %50, %53, %cst_24 {dimension_numbers = #tpu.dot_dimension_numbers<[1], [0], [0], [1], [0, 0, 1, 1], [], []>} : vector<8x8xf32>, vector<8x8xf32>, vector<8x8xf32> -> vector<8x8xf32>
    %55 = arith.addf %54, %17 : vector<8x8xf32>
    %cst_25 = arith.constant dense<0xFF800000> : vector<8xf32>
    %56 = vector.multi_reduction <maximumf>, %55, %cst_25 [1] : vector<8x8xf32> to vector<8xf32>
    %57 = vector.shape_cast %56 : vector<8xf32> to vector<8x1xf32>
    %58 = vector.broadcast %57 : vector<8x1xf32> to vector<8x8xf32>
    %59 = arith.subf %55, %58 : vector<8x8xf32>
    %60 = math.exp %59 : vector<8x8xf32>
    %cst_26 = arith.constant dense<0.000000e+00> : vector<8xf32>
    %61 = vector.multi_reduction <add>, %60, %cst_26 [1] : vector<8x8xf32> to vector<8xf32>
    %62 = vector.shape_cast %61 : vector<8xf32> to vector<8x1xf32>
    %63 = tpu.reciprocal %62 {approx = true} : vector<8x1xf32> -> vector<8x1xf32>
    %64 = vector.broadcast %63 : vector<8x1xf32> to vector<8x8xf32>
    %65 = arith.mulf %60, %64 : vector<8x8xf32>
    %cst_27 = arith.constant dense<0.000000e+00> : vector<8x8xf32>
    %66 = tpu.matmul %65, %52, %cst_27 {dimension_numbers = #tpu.dot_dimension_numbers<[1], [0], [0], [1], [0, 0, 1, 1], [], []>} : vector<8x8xf32>, vector<8x8xf32>, vector<8x8xf32> -> vector<8x8xf32>
    %67 = vector.extract_strided_slice %49 {offsets = [0, 8], sizes = [8, 8], strides = [1, 1]} : vector<8x96xf32> to vector<8x8xf32>
    %68 = vector.extract_strided_slice %49 {offsets = [0, 40], sizes = [8, 8], strides = [1, 1]} : vector<8x96xf32> to vector<8x8xf32>
    %69 = vector.extract_strided_slice %49 {offsets = [0, 72], sizes = [8, 8], strides = [1, 1]} : vector<8x96xf32> to vector<8x8xf32>
    %70 = tpu.transpose %68, [1, 0] : vector<8x8xf32> -> vector<8x8xf32>
    %cst_28 = arith.constant dense<0.000000e+00> : vector<8x8xf32>
    %71 = tpu.matmul %67, %70, %cst_28 {dimension_numbers = #tpu.dot_dimension_numbers<[1], [0], [0], [1], [0, 0, 1, 1], [], []>} : vector<8x8xf32>, vector<8x8xf32>, vector<8x8xf32> -> vector<8x8xf32>
    %72 = arith.addf %71, %17 : vector<8x8xf32>
    %cst_29 = arith.constant dense<0xFF800000> : vector<8xf32>
    %73 = vector.multi_reduction <maximumf>, %72, %cst_29 [1] : vector<8x8xf32> to vector<8xf32>
    %74 = vector.shape_cast %73 : vector<8xf32> to vector<8x1xf32>
    %75 = vector.broadcast %74 : vector<8x1xf32> to vector<8x8xf32>
    %76 = arith.subf %72, %75 : vector<8x8xf32>
    %77 = math.exp %76 : vector<8x8xf32>
    %cst_30 = arith.constant dense<0.000000e+00> : vector<8xf32>
    %78 = vector.multi_reduction <add>, %77, %cst_30 [1] : vector<8x8xf32> to vector<8xf32>
    %79 = vector.shape_cast %78 : vector<8xf32> to vector<8x1xf32>
    %80 = tpu.reciprocal %79 {approx = true} : vector<8x1xf32> -> vector<8x1xf32>
    %81 = vector.broadcast %80 : vector<8x1xf32> to vector<8x8xf32>
    %82 = arith.mulf %77, %81 : vector<8x8xf32>
    %cst_31 = arith.constant dense<0.000000e+00> : vector<8x8xf32>
    %83 = tpu.matmul %82, %69, %cst_31 {dimension_numbers = #tpu.dot_dimension_numbers<[1], [0], [0], [1], [0, 0, 1, 1], [], []>} : vector<8x8xf32>, vector<8x8xf32>, vector<8x8xf32> -> vector<8x8xf32>
    %84 = vector.extract_strided_slice %49 {offsets = [0, 16], sizes = [8, 8], strides = [1, 1]} : vector<8x96xf32> to vector<8x8xf32>
    %85 = vector.extract_strided_slice %49 {offsets = [0, 48], sizes = [8, 8], strides = [1, 1]} : vector<8x96xf32> to vector<8x8xf32>
    %86 = vector.extract_strided_slice %49 {offsets = [0, 80], sizes = [8, 8], strides = [1, 1]} : vector<8x96xf32> to vector<8x8xf32>
    %87 = tpu.transpose %85, [1, 0] : vector<8x8xf32> -> vector<8x8xf32>
    %cst_32 = arith.constant dense<0.000000e+00> : vector<8x8xf32>
    %88 = tpu.matmul %84, %87, %cst_32 {dimension_numbers = #tpu.dot_dimension_numbers<[1], [0], [0], [1], [0, 0, 1, 1], [], []>} : vector<8x8xf32>, vector<8x8xf32>, vector<8x8xf32> -> vector<8x8xf32>
    %89 = arith.addf %88, %17 : vector<8x8xf32>
    %cst_33 = arith.constant dense<0xFF800000> : vector<8xf32>
    %90 = vector.multi_reduction <maximumf>, %89, %cst_33 [1] : vector<8x8xf32> to vector<8xf32>
    %91 = vector.shape_cast %90 : vector<8xf32> to vector<8x1xf32>
    %92 = vector.broadcast %91 : vector<8x1xf32> to vector<8x8xf32>
    %93 = arith.subf %89, %92 : vector<8x8xf32>
    %94 = math.exp %93 : vector<8x8xf32>
    %cst_34 = arith.constant dense<0.000000e+00> : vector<8xf32>
    %95 = vector.multi_reduction <add>, %94, %cst_34 [1] : vector<8x8xf32> to vector<8xf32>
    %96 = vector.shape_cast %95 : vector<8xf32> to vector<8x1xf32>
    %97 = tpu.reciprocal %96 {approx = true} : vector<8x1xf32> -> vector<8x1xf32>
    %98 = vector.broadcast %97 : vector<8x1xf32> to vector<8x8xf32>
    %99 = arith.mulf %94, %98 : vector<8x8xf32>
    %cst_35 = arith.constant dense<0.000000e+00> : vector<8x8xf32>
    %100 = tpu.matmul %99, %86, %cst_35 {dimension_numbers = #tpu.dot_dimension_numbers<[1], [0], [0], [1], [0, 0, 1, 1], [], []>} : vector<8x8xf32>, vector<8x8xf32>, vector<8x8xf32> -> vector<8x8xf32>
    %101 = vector.extract_strided_slice %49 {offsets = [0, 24], sizes = [8, 8], strides = [1, 1]} : vector<8x96xf32> to vector<8x8xf32>
    %102 = vector.extract_strided_slice %49 {offsets = [0, 56], sizes = [8, 8], strides = [1, 1]} : vector<8x96xf32> to vector<8x8xf32>
    %103 = vector.extract_strided_slice %49 {offsets = [0, 88], sizes = [8, 8], strides = [1, 1]} : vector<8x96xf32> to vector<8x8xf32>
    %104 = tpu.transpose %102, [1, 0] : vector<8x8xf32> -> vector<8x8xf32>
    %cst_36 = arith.constant dense<0.000000e+00> : vector<8x8xf32>
    %105 = tpu.matmul %101, %104, %cst_36 {dimension_numbers = #tpu.dot_dimension_numbers<[1], [0], [0], [1], [0, 0, 1, 1], [], []>} : vector<8x8xf32>, vector<8x8xf32>, vector<8x8xf32> -> vector<8x8xf32>
    %106 = arith.addf %105, %17 : vector<8x8xf32>
    %cst_37 = arith.constant dense<0xFF800000> : vector<8xf32>
    %107 = vector.multi_reduction <maximumf>, %106, %cst_37 [1] : vector<8x8xf32> to vector<8xf32>
    %108 = vector.shape_cast %107 : vector<8xf32> to vector<8x1xf32>
    %109 = vector.broadcast %108 : vector<8x1xf32> to vector<8x8xf32>
    %110 = arith.subf %106, %109 : vector<8x8xf32>
    %111 = math.exp %110 : vector<8x8xf32>
    %cst_38 = arith.constant dense<0.000000e+00> : vector<8xf32>
    %112 = vector.multi_reduction <add>, %111, %cst_38 [1] : vector<8x8xf32> to vector<8xf32>
    %113 = vector.shape_cast %112 : vector<8xf32> to vector<8x1xf32>
    %114 = tpu.reciprocal %113 {approx = true} : vector<8x1xf32> -> vector<8x1xf32>
    %115 = vector.broadcast %114 : vector<8x1xf32> to vector<8x8xf32>
    %116 = arith.mulf %111, %115 : vector<8x8xf32>
    %cst_39 = arith.constant dense<0.000000e+00> : vector<8x8xf32>
    %117 = tpu.matmul %116, %103, %cst_39 {dimension_numbers = #tpu.dot_dimension_numbers<[1], [0], [0], [1], [0, 0, 1, 1], [], []>} : vector<8x8xf32>, vector<8x8xf32>, vector<8x8xf32> -> vector<8x8xf32>
    %118 = tpu.concatenate %66, %83, %100, %117 in 1 : vector<8x8xf32>, vector<8x8xf32>, vector<8x8xf32>, vector<8x8xf32> -> vector<8x32xf32>
    %119 = arith.truncf %118 : vector<8x32xf32> to vector<8x32xbf16>
    %c0_40 = arith.constant 0 : index
    %c0_41 = arith.constant 0 : index
    %120 = vector.load %arg8[%c0_40, %c0_41] : memref<32x32xbf16, #tpu.memory_space<vmem>>, vector<32x32xbf16>
    %cst_42 = arith.constant dense<0.000000e+00> : vector<8x32xf32>
    %121 = tpu.matmul %119, %120, %cst_42 {dimension_numbers = #tpu.dot_dimension_numbers<[1], [0], [0], [1], [0, 0, 1, 1], [], []>} : vector<8x32xbf16>, vector<32x32xbf16>, vector<8x32xf32> -> vector<8x32xf32>
    %c0_43 = arith.constant 0 : index
    %c0_44 = arith.constant 0 : index
    %122 = vector.load %arg9[%c0_43, %c0_44] : memref<1x32xf32, #tpu.memory_space<vmem>>, vector<1x32xf32>
    %123 = vector.broadcast %122 : vector<1x32xf32> to vector<8x32xf32>
    %124 = arith.addf %121, %123 : vector<8x32xf32>
    %125 = arith.addf %2, %124 : vector<8x32xf32>
    %c0_45 = arith.constant 0 : index
    %c0_46 = arith.constant 0 : index
    %126 = vector.load %arg10[%c0_45, %c0_46] : memref<1x32xf32, #tpu.memory_space<vmem>>, vector<1x32xf32>
    %c0_47 = arith.constant 0 : index
    %c0_48 = arith.constant 0 : index
    %127 = vector.load %arg11[%c0_47, %c0_48] : memref<1x32xf32, #tpu.memory_space<vmem>>, vector<1x32xf32>
    %cst_49 = arith.constant dense<0.000000e+00> : vector<8xf32>
    %128 = vector.multi_reduction <add>, %125, %cst_49 [1] : vector<8x32xf32> to vector<8xf32>
    %129 = vector.shape_cast %128 : vector<8xf32> to vector<8x1xf32>
    %cst_50 = arith.constant 3.200000e+01 : f32
    %130 = vector.broadcast %cst_50 : f32 to vector<8x1xf32>
    %131 = arith.divf %129, %130 : vector<8x1xf32>
    %132 = vector.broadcast %131 : vector<8x1xf32> to vector<8x32xf32>
    %133 = arith.subf %125, %132 : vector<8x32xf32>
    %134 = vector.broadcast %131 : vector<8x1xf32> to vector<8x32xf32>
    %135 = arith.subf %125, %134 : vector<8x32xf32>
    %136 = arith.mulf %133, %135 : vector<8x32xf32>
    %cst_51 = arith.constant dense<0.000000e+00> : vector<8xf32>
    %137 = vector.multi_reduction <add>, %136, %cst_51 [1] : vector<8x32xf32> to vector<8xf32>
    %138 = vector.shape_cast %137 : vector<8xf32> to vector<8x1xf32>
    %cst_52 = arith.constant 3.200000e+01 : f32
    %139 = vector.broadcast %cst_52 : f32 to vector<8x1xf32>
    %140 = arith.divf %138, %139 : vector<8x1xf32>
    %141 = vector.broadcast %131 : vector<8x1xf32> to vector<8x32xf32>
    %142 = arith.subf %125, %141 : vector<8x32xf32>
    %cst_53 = arith.constant 9.99999974E-6 : f32
    %143 = vector.broadcast %cst_53 : f32 to vector<8x1xf32>
    %144 = arith.addf %140, %143 : vector<8x1xf32>
    %145 = math.rsqrt %144 : vector<8x1xf32>
    %146 = vector.broadcast %145 : vector<8x1xf32> to vector<8x32xf32>
    %147 = arith.mulf %142, %146 : vector<8x32xf32>
    %148 = vector.broadcast %126 : vector<1x32xf32> to vector<8x32xf32>
    %149 = arith.mulf %147, %148 : vector<8x32xf32>
    %150 = vector.broadcast %127 : vector<1x32xf32> to vector<8x32xf32>
    %151 = arith.addf %149, %150 : vector<8x32xf32>
    %152 = arith.truncf %151 : vector<8x32xf32> to vector<8x32xbf16>
    %c0_54 = arith.constant 0 : index
    %c0_55 = arith.constant 0 : index
    %153 = vector.load %arg12[%c0_54, %c0_55] : memref<32x32xbf16, #tpu.memory_space<vmem>>, vector<32x32xbf16>
    %cst_56 = arith.constant dense<0.000000e+00> : vector<8x32xf32>
    %154 = tpu.matmul %152, %153, %cst_56 {dimension_numbers = #tpu.dot_dimension_numbers<[1], [0], [0], [1], [0, 0, 1, 1], [], []>} : vector<8x32xbf16>, vector<32x32xbf16>, vector<8x32xf32> -> vector<8x32xf32>
    %c0_57 = arith.constant 0 : index
    %c0_58 = arith.constant 0 : index
    %155 = vector.load %arg13[%c0_57, %c0_58] : memref<1x32xf32, #tpu.memory_space<vmem>>, vector<1x32xf32>
    %156 = vector.broadcast %155 : vector<1x32xf32> to vector<8x32xf32>
    %157 = arith.addf %154, %156 : vector<8x32xf32>
    %c0_59 = arith.constant 0 : index
    %c0_60 = arith.constant 0 : index
    %158 = vector.load %arg14[%c0_59, %c0_60] : memref<32x64xbf16, #tpu.memory_space<vmem>>, vector<32x64xbf16>
    %cst_61 = arith.constant dense<0.000000e+00> : vector<64x64xf32>
    %159 = tpu.matmul %4, %158, %cst_61 {dimension_numbers = #tpu.dot_dimension_numbers<[1], [0], [0], [1], [0, 0, 1, 1], [], []>} : vector<64x32xbf16>, vector<32x64xbf16>, vector<64x64xf32> -> vector<64x64xf32>
    %c0_62 = arith.constant 0 : index
    %c0_63 = arith.constant 0 : index
    %160 = vector.load %arg15[%c0_62, %c0_63] : memref<1x64xf32, #tpu.memory_space<vmem>>, vector<1x64xf32>
    %161 = vector.broadcast %160 : vector<1x64xf32> to vector<64x64xf32>
    %162 = arith.addf %159, %161 : vector<64x64xf32>
    %163 = vector.extract_strided_slice %157 {offsets = [0, 0], sizes = [8, 8], strides = [1, 1]} : vector<8x32xf32> to vector<8x8xf32>
    %164 = vector.extract_strided_slice %162 {offsets = [0, 0], sizes = [64, 8], strides = [1, 1]} : vector<64x64xf32> to vector<64x8xf32>
    %165 = vector.extract_strided_slice %162 {offsets = [0, 32], sizes = [64, 8], strides = [1, 1]} : vector<64x64xf32> to vector<64x8xf32>
    %166 = tpu.transpose %164, [1, 0] : vector<64x8xf32> -> vector<8x64xf32>
    %cst_64 = arith.constant dense<0.000000e+00> : vector<8x64xf32>
    %167 = tpu.matmul %163, %166, %cst_64 {dimension_numbers = #tpu.dot_dimension_numbers<[1], [0], [0], [1], [0, 0, 1, 1], [], []>} : vector<8x8xf32>, vector<8x64xf32>, vector<8x64xf32> -> vector<8x64xf32>
    %cst_65 = arith.constant dense<0xFF800000> : vector<8xf32>
    %168 = vector.multi_reduction <maximumf>, %167, %cst_65 [1] : vector<8x64xf32> to vector<8xf32>
    %169 = vector.shape_cast %168 : vector<8xf32> to vector<8x1xf32>
    %170 = vector.broadcast %169 : vector<8x1xf32> to vector<8x64xf32>
    %171 = arith.subf %167, %170 : vector<8x64xf32>
    %172 = math.exp %171 : vector<8x64xf32>
    %cst_66 = arith.constant dense<0.000000e+00> : vector<8xf32>
    %173 = vector.multi_reduction <add>, %172, %cst_66 [1] : vector<8x64xf32> to vector<8xf32>
    %174 = vector.shape_cast %173 : vector<8xf32> to vector<8x1xf32>
    %175 = tpu.reciprocal %174 {approx = true} : vector<8x1xf32> -> vector<8x1xf32>
    %176 = vector.broadcast %175 : vector<8x1xf32> to vector<8x64xf32>
    %177 = arith.mulf %172, %176 : vector<8x64xf32>
    %cst_67 = arith.constant dense<0.000000e+00> : vector<8x8xf32>
    %178 = tpu.matmul %177, %165, %cst_67 {dimension_numbers = #tpu.dot_dimension_numbers<[1], [0], [0], [1], [0, 0, 1, 1], [], []>} : vector<8x64xf32>, vector<64x8xf32>, vector<8x8xf32> -> vector<8x8xf32>
    %179 = vector.extract_strided_slice %157 {offsets = [0, 8], sizes = [8, 8], strides = [1, 1]} : vector<8x32xf32> to vector<8x8xf32>
    %180 = vector.extract_strided_slice %162 {offsets = [0, 8], sizes = [64, 8], strides = [1, 1]} : vector<64x64xf32> to vector<64x8xf32>
    %181 = vector.extract_strided_slice %162 {offsets = [0, 40], sizes = [64, 8], strides = [1, 1]} : vector<64x64xf32> to vector<64x8xf32>
    %182 = tpu.transpose %180, [1, 0] : vector<64x8xf32> -> vector<8x64xf32>
    %cst_68 = arith.constant dense<0.000000e+00> : vector<8x64xf32>
    %183 = tpu.matmul %179, %182, %cst_68 {dimension_numbers = #tpu.dot_dimension_numbers<[1], [0], [0], [1], [0, 0, 1, 1], [], []>} : vector<8x8xf32>, vector<8x64xf32>, vector<8x64xf32> -> vector<8x64xf32>
    %cst_69 = arith.constant dense<0xFF800000> : vector<8xf32>
    %184 = vector.multi_reduction <maximumf>, %183, %cst_69 [1] : vector<8x64xf32> to vector<8xf32>
    %185 = vector.shape_cast %184 : vector<8xf32> to vector<8x1xf32>
    %186 = vector.broadcast %185 : vector<8x1xf32> to vector<8x64xf32>
    %187 = arith.subf %183, %186 : vector<8x64xf32>
    %188 = math.exp %187 : vector<8x64xf32>
    %cst_70 = arith.constant dense<0.000000e+00> : vector<8xf32>
    %189 = vector.multi_reduction <add>, %188, %cst_70 [1] : vector<8x64xf32> to vector<8xf32>
    %190 = vector.shape_cast %189 : vector<8xf32> to vector<8x1xf32>
    %191 = tpu.reciprocal %190 {approx = true} : vector<8x1xf32> -> vector<8x1xf32>
    %192 = vector.broadcast %191 : vector<8x1xf32> to vector<8x64xf32>
    %193 = arith.mulf %188, %192 : vector<8x64xf32>
    %cst_71 = arith.constant dense<0.000000e+00> : vector<8x8xf32>
    %194 = tpu.matmul %193, %181, %cst_71 {dimension_numbers = #tpu.dot_dimension_numbers<[1], [0], [0], [1], [0, 0, 1, 1], [], []>} : vector<8x64xf32>, vector<64x8xf32>, vector<8x8xf32> -> vector<8x8xf32>
    %195 = vector.extract_strided_slice %157 {offsets = [0, 16], sizes = [8, 8], strides = [1, 1]} : vector<8x32xf32> to vector<8x8xf32>
    %196 = vector.extract_strided_slice %162 {offsets = [0, 16], sizes = [64, 8], strides = [1, 1]} : vector<64x64xf32> to vector<64x8xf32>
    %197 = vector.extract_strided_slice %162 {offsets = [0, 48], sizes = [64, 8], strides = [1, 1]} : vector<64x64xf32> to vector<64x8xf32>
    %198 = tpu.transpose %196, [1, 0] : vector<64x8xf32> -> vector<8x64xf32>
    %cst_72 = arith.constant dense<0.000000e+00> : vector<8x64xf32>
    %199 = tpu.matmul %195, %198, %cst_72 {dimension_numbers = #tpu.dot_dimension_numbers<[1], [0], [0], [1], [0, 0, 1, 1], [], []>} : vector<8x8xf32>, vector<8x64xf32>, vector<8x64xf32> -> vector<8x64xf32>
    %cst_73 = arith.constant dense<0xFF800000> : vector<8xf32>
    %200 = vector.multi_reduction <maximumf>, %199, %cst_73 [1] : vector<8x64xf32> to vector<8xf32>
    %201 = vector.shape_cast %200 : vector<8xf32> to vector<8x1xf32>
    %202 = vector.broadcast %201 : vector<8x1xf32> to vector<8x64xf32>
    %203 = arith.subf %199, %202 : vector<8x64xf32>
    %204 = math.exp %203 : vector<8x64xf32>
    %cst_74 = arith.constant dense<0.000000e+00> : vector<8xf32>
    %205 = vector.multi_reduction <add>, %204, %cst_74 [1] : vector<8x64xf32> to vector<8xf32>
    %206 = vector.shape_cast %205 : vector<8xf32> to vector<8x1xf32>
    %207 = tpu.reciprocal %206 {approx = true} : vector<8x1xf32> -> vector<8x1xf32>
    %208 = vector.broadcast %207 : vector<8x1xf32> to vector<8x64xf32>
    %209 = arith.mulf %204, %208 : vector<8x64xf32>
    %cst_75 = arith.constant dense<0.000000e+00> : vector<8x8xf32>
    %210 = tpu.matmul %209, %197, %cst_75 {dimension_numbers = #tpu.dot_dimension_numbers<[1], [0], [0], [1], [0, 0, 1, 1], [], []>} : vector<8x64xf32>, vector<64x8xf32>, vector<8x8xf32> -> vector<8x8xf32>
    %211 = vector.extract_strided_slice %157 {offsets = [0, 24], sizes = [8, 8], strides = [1, 1]} : vector<8x32xf32> to vector<8x8xf32>
    %212 = vector.extract_strided_slice %162 {offsets = [0, 24], sizes = [64, 8], strides = [1, 1]} : vector<64x64xf32> to vector<64x8xf32>
    %213 = vector.extract_strided_slice %162 {offsets = [0, 56], sizes = [64, 8], strides = [1, 1]} : vector<64x64xf32> to vector<64x8xf32>
    %214 = tpu.transpose %212, [1, 0] : vector<64x8xf32> -> vector<8x64xf32>
    %cst_76 = arith.constant dense<0.000000e+00> : vector<8x64xf32>
    %215 = tpu.matmul %211, %214, %cst_76 {dimension_numbers = #tpu.dot_dimension_numbers<[1], [0], [0], [1], [0, 0, 1, 1], [], []>} : vector<8x8xf32>, vector<8x64xf32>, vector<8x64xf32> -> vector<8x64xf32>
    %cst_77 = arith.constant dense<0xFF800000> : vector<8xf32>
    %216 = vector.multi_reduction <maximumf>, %215, %cst_77 [1] : vector<8x64xf32> to vector<8xf32>
    %217 = vector.shape_cast %216 : vector<8xf32> to vector<8x1xf32>
    %218 = vector.broadcast %217 : vector<8x1xf32> to vector<8x64xf32>
    %219 = arith.subf %215, %218 : vector<8x64xf32>
    %220 = math.exp %219 : vector<8x64xf32>
    %cst_78 = arith.constant dense<0.000000e+00> : vector<8xf32>
    %221 = vector.multi_reduction <add>, %220, %cst_78 [1] : vector<8x64xf32> to vector<8xf32>
    %222 = vector.shape_cast %221 : vector<8xf32> to vector<8x1xf32>
    %223 = tpu.reciprocal %222 {approx = true} : vector<8x1xf32> -> vector<8x1xf32>
    %224 = vector.broadcast %223 : vector<8x1xf32> to vector<8x64xf32>
    %225 = arith.mulf %220, %224 : vector<8x64xf32>
    %cst_79 = arith.constant dense<0.000000e+00> : vector<8x8xf32>
    %226 = tpu.matmul %225, %213, %cst_79 {dimension_numbers = #tpu.dot_dimension_numbers<[1], [0], [0], [1], [0, 0, 1, 1], [], []>} : vector<8x64xf32>, vector<64x8xf32>, vector<8x8xf32> -> vector<8x8xf32>
    %227 = tpu.concatenate %178, %194, %210, %226 in 1 : vector<8x8xf32>, vector<8x8xf32>, vector<8x8xf32>, vector<8x8xf32> -> vector<8x32xf32>
    %228 = arith.truncf %227 : vector<8x32xf32> to vector<8x32xbf16>
    %c0_80 = arith.constant 0 : index
    %c0_81 = arith.constant 0 : index
    %229 = vector.load %arg16[%c0_80, %c0_81] : memref<32x32xbf16, #tpu.memory_space<vmem>>, vector<32x32xbf16>
    %cst_82 = arith.constant dense<0.000000e+00> : vector<8x32xf32>
    %230 = tpu.matmul %228, %229, %cst_82 {dimension_numbers = #tpu.dot_dimension_numbers<[1], [0], [0], [1], [0, 0, 1, 1], [], []>} : vector<8x32xbf16>, vector<32x32xbf16>, vector<8x32xf32> -> vector<8x32xf32>
    %231 = arith.addf %125, %230 : vector<8x32xf32>
    %c0_83 = arith.constant 0 : index
    %c0_84 = arith.constant 0 : index
    %232 = vector.load %arg17[%c0_83, %c0_84] : memref<1x32xf32, #tpu.memory_space<vmem>>, vector<1x32xf32>
    %233 = vector.broadcast %232 : vector<1x32xf32> to vector<8x32xf32>
    %234 = arith.addf %231, %233 : vector<8x32xf32>
    %c0_85 = arith.constant 0 : index
    %c0_86 = arith.constant 0 : index
    %235 = vector.load %arg18[%c0_85, %c0_86] : memref<1x32xf32, #tpu.memory_space<vmem>>, vector<1x32xf32>
    %c0_87 = arith.constant 0 : index
    %c0_88 = arith.constant 0 : index
    %236 = vector.load %arg19[%c0_87, %c0_88] : memref<1x32xf32, #tpu.memory_space<vmem>>, vector<1x32xf32>
    %cst_89 = arith.constant dense<0.000000e+00> : vector<8xf32>
    %237 = vector.multi_reduction <add>, %234, %cst_89 [1] : vector<8x32xf32> to vector<8xf32>
    %238 = vector.shape_cast %237 : vector<8xf32> to vector<8x1xf32>
    %cst_90 = arith.constant 3.200000e+01 : f32
    %239 = vector.broadcast %cst_90 : f32 to vector<8x1xf32>
    %240 = arith.divf %238, %239 : vector<8x1xf32>
    %241 = vector.broadcast %240 : vector<8x1xf32> to vector<8x32xf32>
    %242 = arith.subf %234, %241 : vector<8x32xf32>
    %243 = vector.broadcast %240 : vector<8x1xf32> to vector<8x32xf32>
    %244 = arith.subf %234, %243 : vector<8x32xf32>
    %245 = arith.mulf %242, %244 : vector<8x32xf32>
    %cst_91 = arith.constant dense<0.000000e+00> : vector<8xf32>
    %246 = vector.multi_reduction <add>, %245, %cst_91 [1] : vector<8x32xf32> to vector<8xf32>
    %247 = vector.shape_cast %246 : vector<8xf32> to vector<8x1xf32>
    %cst_92 = arith.constant 3.200000e+01 : f32
    %248 = vector.broadcast %cst_92 : f32 to vector<8x1xf32>
    %249 = arith.divf %247, %248 : vector<8x1xf32>
    %250 = vector.broadcast %240 : vector<8x1xf32> to vector<8x32xf32>
    %251 = arith.subf %234, %250 : vector<8x32xf32>
    %cst_93 = arith.constant 9.99999974E-6 : f32
    %252 = vector.broadcast %cst_93 : f32 to vector<8x1xf32>
    %253 = arith.addf %249, %252 : vector<8x1xf32>
    %254 = math.rsqrt %253 : vector<8x1xf32>
    %255 = vector.broadcast %254 : vector<8x1xf32> to vector<8x32xf32>
    %256 = arith.mulf %251, %255 : vector<8x32xf32>
    %257 = vector.broadcast %235 : vector<1x32xf32> to vector<8x32xf32>
    %258 = arith.mulf %256, %257 : vector<8x32xf32>
    %259 = vector.broadcast %236 : vector<1x32xf32> to vector<8x32xf32>
    %260 = arith.addf %258, %259 : vector<8x32xf32>
    %261 = arith.truncf %260 : vector<8x32xf32> to vector<8x32xbf16>
    %c0_94 = arith.constant 0 : index
    %c0_95 = arith.constant 0 : index
    %262 = vector.load %arg20[%c0_94, %c0_95] : memref<32x128xbf16, #tpu.memory_space<vmem>>, vector<32x128xbf16>
    %cst_96 = arith.constant dense<0.000000e+00> : vector<8x128xf32>
    %263 = tpu.matmul %261, %262, %cst_96 {dimension_numbers = #tpu.dot_dimension_numbers<[1], [0], [0], [1], [0, 0, 1, 1], [], []>} : vector<8x32xbf16>, vector<32x128xbf16>, vector<8x128xf32> -> vector<8x128xf32>
    %c0_97 = arith.constant 0 : index
    %c0_98 = arith.constant 0 : index
    %264 = vector.load %arg21[%c0_97, %c0_98] : memref<1x128xf32, #tpu.memory_space<vmem>>, vector<1x128xf32>
    %265 = vector.broadcast %264 : vector<1x128xf32> to vector<8x128xf32>
    %266 = arith.addf %263, %265 : vector<8x128xf32>
    %cst_99 = arith.constant 5.000000e-01 : f32
    %267 = vector.broadcast %cst_99 : f32 to vector<8x128xf32>
    %268 = arith.mulf %267, %266 : vector<8x128xf32>
    %cst_100 = arith.constant 4.471500e-02 : f32
    %269 = vector.broadcast %cst_100 : f32 to vector<8x128xf32>
    %270 = arith.mulf %269, %266 : vector<8x128xf32>
    %271 = arith.mulf %270, %266 : vector<8x128xf32>
    %272 = arith.mulf %271, %266 : vector<8x128xf32>
    %273 = arith.addf %266, %272 : vector<8x128xf32>
    %cst_101 = arith.constant 0.797884583 : f32
    %274 = vector.broadcast %cst_101 : f32 to vector<8x128xf32>
    %275 = arith.mulf %274, %273 : vector<8x128xf32>
    %276 = math.tanh %275 : vector<8x128xf32>
    %cst_102 = arith.constant 1.000000e+00 : f32
    %277 = vector.broadcast %cst_102 : f32 to vector<8x128xf32>
    %278 = arith.addf %277, %276 : vector<8x128xf32>
    %279 = arith.mulf %268, %278 : vector<8x128xf32>
    %280 = arith.truncf %279 : vector<8x128xf32> to vector<8x128xbf16>
    %c0_103 = arith.constant 0 : index
    %c0_104 = arith.constant 0 : index
    %281 = vector.load %arg22[%c0_103, %c0_104] : memref<128x32xbf16, #tpu.memory_space<vmem>>, vector<128x32xbf16>
    %cst_105 = arith.constant dense<0.000000e+00> : vector<8x32xf32>
    %282 = tpu.matmul %280, %281, %cst_105 {dimension_numbers = #tpu.dot_dimension_numbers<[1], [0], [0], [1], [0, 0, 1, 1], [], []>} : vector<8x128xbf16>, vector<128x32xbf16>, vector<8x32xf32> -> vector<8x32xf32>
    %c0_106 = arith.constant 0 : index
    %c0_107 = arith.constant 0 : index
    %283 = vector.load %arg23[%c0_106, %c0_107] : memref<1x32xf32, #tpu.memory_space<vmem>>, vector<1x32xf32>
    %284 = vector.broadcast %283 : vector<1x32xf32> to vector<8x32xf32>
    %285 = arith.addf %282, %284 : vector<8x32xf32>
    %286 = arith.addf %234, %285 : vector<8x32xf32>
    %287 = arith.truncf %286 : vector<8x32xf32> to vector<8x32xbf16>
    %c0_108 = arith.constant 0 : index
    %c0_109 = arith.constant 0 : index
    %c0_110 = arith.constant 0 : index
    %288 = vector.load %arg24[%c0_108, %c0_109, %c0_110] : memref<1x8x32xbf16, #tpu.memory_space<vmem>>, vector<1x8x32xbf16>
    %289 = vector.shape_cast %288 : vector<1x8x32xbf16> to vector<8x32xbf16>
    %290 = vector.shape_cast %287 : vector<8x32xbf16> to vector<1x8x32xbf16>
    tpu.vector_store %arg24[%c0_108, %c0_109, %c0_110], %290 {strides = array<i32>} : memref<1x8x32xbf16, #tpu.memory_space<vmem>>, vector<1x8x32xbf16>,
    return
  }
  func.func @transform_0(%arg0: i32) -> (i32, i32, i32) {
    %c0_i32 = arith.constant 0 : i32
    %c0_i32_0 = arith.constant 0 : i32
    %c0_i32_1 = arith.constant 0 : i32
    return %arg0, %c0_i32, %c0_i32_0 : i32, i32, i32
  }
  func.func @transform_1(%arg0: i32) -> (i32, i32, i32) {
    %c0_i32 = arith.constant 0 : i32
    %c0_i32_0 = arith.constant 0 : i32
    %c0_i32_1 = arith.constant 0 : i32
    return %arg0, %c0_i32, %c0_i32_0 : i32, i32, i32
  }
  func.func @transform_2(%arg0: i32) -> (i32, i32, i32) {
    %c0_i32 = arith.constant 0 : i32
    %c0_i32_0 = arith.constant 0 : i32
    %c0_i32_1 = arith.constant 0 : i32
    return %arg0, %c0_i32, %c0_i32_0 : i32, i32, i32
  }
  func.func @transform_3(%arg0: i32) -> (i32, i32) {
    %c0_i32 = arith.constant 0 : i32
    %c0_i32_0 = arith.constant 0 : i32
    %c0_i32_1 = arith.constant 0 : i32
    return %c0_i32, %c0_i32_0 : i32, i32
  }
  func.func @transform_4(%arg0: i32) -> (i32, i32) {
    %c0_i32 = arith.constant 0 : i32
    %c0_i32_0 = arith.constant 0 : i32
    %c0_i32_1 = arith.constant 0 : i32
    return %c0_i32, %c0_i32_0 : i32, i32
  }
  func.func @transform_5(%arg0: i32) -> (i32, i32) {
    %c0_i32 = arith.constant 0 : i32
    %c0_i32_0 = arith.constant 0 : i32
    %c0_i32_1 = arith.constant 0 : i32
    return %c0_i32, %c0_i32_0 : i32, i32
  }
  func.func @transform_6(%arg0: i32) -> (i32, i32) {
    %c0_i32 = arith.constant 0 : i32
    %c0_i32_0 = arith.constant 0 : i32
    %c0_i32_1 = arith.constant 0 : i32
    return %c0_i32, %c0_i32_0 : i32, i32
  }
  func.func @transform_7(%arg0: i32) -> (i32, i32) {
    %c0_i32 = arith.constant 0 : i32
    %c0_i32_0 = arith.constant 0 : i32
    %c0_i32_1 = arith.constant 0 : i32
    return %c0_i32, %c0_i32_0 : i32, i32
  }
  func.func @transform_8(%arg0: i32) -> (i32, i32) {
    %c0_i32 = arith.constant 0 : i32
    %c0_i32_0 = arith.constant 0 : i32
    %c0_i32_1 = arith.constant 0 : i32
    return %c0_i32, %c0_i32_0 : i32, i32
  }
  func.func @transform_9(%arg0: i32) -> (i32, i32) {
    %c0_i32 = arith.constant 0 : i32
    %c0_i32_0 = arith.constant 0 : i32
    %c0_i32_1 = arith.constant 0 : i32
    return %c0_i32, %c0_i32_0 : i32, i32
  }
  func.func @transform_10(%arg0: i32) -> (i32, i32) {
    %c0_i32 = arith.constant 0 : i32
    %c0_i32_0 = arith.constant 0 : i32
    %c0_i32_1 = arith.constant 0 : i32
    return %c0_i32, %c0_i32_0 : i32, i32
  }
  func.func @transform_11(%arg0: i32) -> (i32, i32) {
    %c0_i32 = arith.constant 0 : i32
    %c0_i32_0 = arith.constant 0 : i32
    %c0_i32_1 = arith.constant 0 : i32
    return %c0_i32, %c0_i32_0 : i32, i32
  }
  func.func @transform_12(%arg0: i32) -> (i32, i32) {
    %c0_i32 = arith.constant 0 : i32
    %c0_i32_0 = arith.constant 0 : i32
    %c0_i32_1 = arith.constant 0 : i32
    return %c0_i32, %c0_i32_0 : i32, i32
  }
  func.func @transform_13(%arg0: i32) -> (i32, i32) {
    %c0_i32 = arith.constant 0 : i32
    %c0_i32_0 = arith.constant 0 : i32
    %c0_i32_1 = arith.constant 0 : i32
    return %c0_i32, %c0_i32_0 : i32, i32
  }
  func.func @transform_14(%arg0: i32) -> (i32, i32) {
    %c0_i32 = arith.constant 0 : i32
    %c0_i32_0 = arith.constant 0 : i32
    %c0_i32_1 = arith.constant 0 : i32
    return %c0_i32, %c0_i32_0 : i32, i32
  }
  func.func @transform_15(%arg0: i32) -> (i32, i32) {
    %c0_i32 = arith.constant 0 : i32
    %c0_i32_0 = arith.constant 0 : i32
    %c0_i32_1 = arith.constant 0 : i32
    return %c0_i32, %c0_i32_0 : i32, i32
  }
  func.func @transform_16(%arg0: i32) -> (i32, i32) {
    %c0_i32 = arith.constant 0 : i32
    %c0_i32_0 = arith.constant 0 : i32
    %c0_i32_1 = arith.constant 0 : i32
    return %c0_i32, %c0_i32_0 : i32, i32
  }
  func.func @transform_17(%arg0: i32) -> (i32, i32) {
    %c0_i32 = arith.constant 0 : i32
    %c0_i32_0 = arith.constant 0 : i32
    %c0_i32_1 = arith.constant 0 : i32
    return %c0_i32, %c0_i32_0 : i32, i32
  }
  func.func @transform_18(%arg0: i32) -> (i32, i32) {
    %c0_i32 = arith.constant 0 : i32
    %c0_i32_0 = arith.constant 0 : i32
    %c0_i32_1 = arith.constant 0 : i32
    return %c0_i32, %c0_i32_0 : i32, i32
  }
  func.func @transform_19(%arg0: i32) -> (i32, i32) {
    %c0_i32 = arith.constant 0 : i32
    %c0_i32_0 = arith.constant 0 : i32
    %c0_i32_1 = arith.constant 0 : i32
    return %c0_i32, %c0_i32_0 : i32, i32
  }
  func.func @transform_20(%arg0: i32) -> (i32, i32) {
    %c0_i32 = arith.constant 0 : i32
    %c0_i32_0 = arith.constant 0 : i32
    %c0_i32_1 = arith.constant 0 : i32
    return %c0_i32, %c0_i32_0 : i32, i32
  }
  func.func @transform_21(%arg0: i32) -> (i32, i32) {
    %c0_i32 = arith.constant 0 : i32
    %c0_i32_0 = arith.constant 0 : i32
    %c0_i32_1 = arith.constant 0 : i32
    return %c0_i32, %c0_i32_0 : i32, i32
  }
  func.func @transform_22(%arg0: i32) -> (i32, i32) {
    %c0_i32 = arith.constant 0 : i32
    %c0_i32_0 = arith.constant 0 : i32
    %c0_i32_1 = arith.constant 0 : i32
    return %c0_i32, %c0_i32_0 : i32, i32
  }
  func.func @transform_23(%arg0: i32) -> (i32, i32, i32) {
    %c0_i32 = arith.constant 0 : i32
    %c0_i32_0 = arith.constant 0 : i32
    %c0_i32_1 = arith.constant 0 : i32
    return %arg0, %c0_i32, %c0_i32_0 : i32, i32, i32
  }
}

</mosaic_0001>

<llo_original>
// kernel: multimodal_to_smiles_forward.7
$region0: #{multimodal_to_smiles_forward.7}
  #allocation0 [shape = 'u32[]', space=smem, size = 0x4, offset = 0x4, fixed_abs, tag = 'smem constant byte address 0x4 - core index']
  #allocation1 [shape = 'u32[72,128]{1,0:T(1,128)}', space=vmem, size = 0x9000, scoped, tag = 'internal scratch']
  %s0 = inlined_call_operand.vmem [shape: bf16[16,32], index: 0, kind: input, shape index: {}]
  %s1 = inlined_call_operand.vmem [shape: f32[1,32], index: 1, kind: input, shape index: {}]
  %s2 = inlined_call_operand.hbm [shape: f32[1,32], index: 2, kind: input, shape index: {}]
  %s3 = inlined_call_operand.vmem [shape: bf16[32,256], index: 3, kind: input, shape index: {}]
  %s4 = inlined_call_operand.vmem [shape: f32[1,256], index: 4, kind: input, shape index: {}]
  %s5 = inlined_call_operand.vmem [shape: f32[16,256], index: 5, kind: output, shape index: {}]
  %s6 = sld [smem:[#allocation0]]
  $region34: #{multimodal_to_smiles_forward.7} parent=0
    _
  %s8 = ssub.s32 1, %s6
  %s9 = scalar_select 0, %s8, %s6
  $region1: #{multimodal_to_smiles_forward.7} parent=0
    #allocation2 [shape = 'u8[512]{0}', space=vmem, size = 0x400, scoped, tag = 'input window, operand 2, single buffered']
    #allocation3 [shape = 's32[1]{0}', space=sflag, size = 0x4, scoped, tag = 'scoped memory for multimodal_to_smiles_forward.7']
    %10 = vsyncpa [#allocation3], 0
    // Predicated region
    $region2: #{multimodal_to_smiles_forward.7} parent=1 // pred_check
      _
    $region3: #{multimodal_to_smiles_forward.7} parent=1 // pred_check_branch
      %12 = sbr.rel (0) target = $region5
    $region4: #{multimodal_to_smiles_forward.7} parent=1 // pred_region
      _
    $region5: #{multimodal_to_smiles_forward.7} parent=1 // pred_fallthru
      _
    // Predicated region
    $region6: #{multimodal_to_smiles_forward.7} parent=1 // pred_check
      _
    $region7: #{multimodal_to_smiles_forward.7} parent=1 // pred_check_branch
      %14 = sbr.rel (0) target = $region9
    $region8: #{multimodal_to_smiles_forward.7} parent=1 // pred_region
      _
    $region9: #{multimodal_to_smiles_forward.7} parent=1 // pred_fallthru
      _
    // Predicated region
    $region10: #{multimodal_to_smiles_forward.7} parent=1 // pred_check
      _
    $region11: #{multimodal_to_smiles_forward.7} parent=1 // pred_check_branch
      %16 = sbr.rel (0) target = $region13
    $region12: #{multimodal_to_smiles_forward.7} parent=1 // pred_region
      %18 = vsyncadd [#allocation3], 0
      %s20 = sshll.u32 %s2, 4
      %s21 = int_to_ptr.hbm [resolvable:$true] %s20
      %s22 = sshll.u32 [#allocation2], 4
      %s23 = int_to_ptr.vmem [resolvable:$true] %s22
      %25 = dma.hbm_to_vmem [thread:$0]  %s21, 16, %s23, [#allocation3]
    $region13: #{multimodal_to_smiles_forward.7} parent=1 // pred_fallthru
      _
    // Predicated region
    $region14: #{multimodal_to_smiles_forward.7} parent=1 // pred_check
      _
    $region15: #{multimodal_to_smiles_forward.7} parent=1 // pred_check_branch
      %27 = sbr.rel (0) target = $region17
    $region16: #{multimodal_to_smiles_forward.7} parent=1 // pred_region
      _
    $region17: #{multimodal_to_smiles_forward.7} parent=1 // pred_fallthru
      _
    // Predicated region
    $region18: #{multimodal_to_smiles_forward.7} parent=1 // pred_check
      _
    $region19: #{multimodal_to_smiles_forward.7} parent=1 // pred_check_branch
      %29 = sbr.rel (0) target = $region21
    $region20: #{multimodal_to_smiles_forward.7} parent=1 // pred_region
      _
    $region21: #{multimodal_to_smiles_forward.7} parent=1 // pred_fallthru
      _
    // Predicated region
    $region22: #{multimodal_to_smiles_forward.7} parent=1 // pred_check
      _
    $region23: #{multimodal_to_smiles_forward.7} parent=1 // pred_check_branch
      %31 = sbr.rel (0) target = $region25
    $region24: #{multimodal_to_smiles_forward.7} parent=1 // pred_region
      %33 = dma.done [#allocation3], 16
    $region25: #{multimodal_to_smiles_forward.7} parent=1 // pred_fallthru
      _
    %v35 = vld [vmem:[%s0] sm:$0xf]
    %v36 = vld [vmem:[%s0 + $0x4] sm:$0xf]
    %v37 = vunpack.c.l.bf16 %v35
    %v38 = vunpack.c.l.bf16 %v36
    %v39 = vld [vmem:[%s1] sm:$0x1]
    %v40 = vld [vmem:[#allocation2] sm:$0x1]
    %vm41 = vcmask 261120
    %v42 = vsel %vm41, %v37, 0.0
    %43 = vadd.xlane.f32.xlu0 %v42
    %v44 = vpop.xlane.xlu0 %43
    %v45 = vsel %vm41, %v38, 0.0
    %46 = vadd.xlane.f32.xlu0 %v45
    %v47 = vpop.xlane.xlu0 %46
    %v48 = vrcp.pop 32.0
    %v49 = vmul.f32 32.0, %v48
    %v50 = vsub.f32 1.0, %v49
    %v51 = vmul.f32 %v48, %v50
    %v52 = vadd.f32 %v48, %v51
    %vm53 = vweird.f32 %v48
    %v54 = vsel %vm53, %v48, %v52
    %v55 = vmul.f32 %v44, %v54
    %v56 = vmul.f32 %v47, %v54
    %v57 = vsub.f32 %v37, %v55
    %v58 = vsub.f32 %v38, %v56
    %v59 = vmul.f32 %v57, %v57
    %v60 = vmul.f32 %v58, %v58
    %v61 = vsel %vm41, %v59, 0.0
    %62 = vadd.xlane.f32.xlu0 %v61
    %v63 = vpop.xlane.xlu0 %62
    %v64 = vsel %vm41, %v60, 0.0
    %65 = vadd.xlane.f32.xlu0 %v64
    %v66 = vpop.xlane.xlu0 %65
    %v67 = vmul.f32 %v63, %v54
    %v68 = vmul.f32 %v66, %v54
    %v69 = vadd.f32 %v67, 1e-05
    %v70 = vadd.f32 %v68, 1e-05
    %v71 = vrsqrt.pop %v69
    %v72 = vmul.f32 %v71, %v69
    %v73 = vmul.f32 %v72, %v71
    %v74 = vmul.f32 0.5, %v73
    %v75 = vsub.f32 1.5, %v74
    %v76 = vmul.f32 %v71, %v75
    %vm77 = vweird.f32 %v69
    %vm78 = vweird.f32 %v71
    %vm79 = vmor %vm77, %vm78
    %v80 = vsel %vm79, %v71, %v76
    %v81 = vrsqrt.pop %v70
    %v82 = vmul.f32 %v81, %v70
    %v83 = vmul.f32 %v82, %v81
    %v84 = vmul.f32 0.5, %v83
    %v85 = vsub.f32 1.5, %v84
    %v86 = vmul.f32 %v81, %v85
    %vm87 = vweird.f32 %v70
    %vm88 = vweird.f32 %v81
    %vm89 = vmor %vm87, %vm88
    %v90 = vsel %vm89, %v81, %v86
    %v91 = vmul.f32 %v57, %v80
    %v92 = vmul.f32 %v58, %v90
    %v94 = vperm.slane %v39, 0
    %v96 = vmul.f32 %v91, %v94
    %v97 = vmul.f32 %v92, %v94
    %v99 = vperm.slane %v40, 0
    %v101 = vadd.f32 %v96, %v99
    %v102 = vadd.f32 %v97, %v99
    %v103 = vpack.c.bf16 %v102, %v101
    %v104 = vld [vmem:[%s3] sm:$0xff]
    %v105 = vld [vmem:[%s3 + $0x8] sm:$0xff]
    %v106 = vld [vmem:[%s3 + $0x10] sm:$0xff]
    %v107 = vld [vmem:[%s3 + $0x18] sm:$0xff]
    %v108 = vld [vmem:[%s4] sm:$0x3]
    %v110 = vperm.slane %v108, 0
    %v111 = vperm.slane %v108, 1
    %v118 = vunpack.c.l.b16 %v104
    %v119 = vunpack.c.h.b16 %v104
    %v120 = vunpack.c.l.b16 %v105
    %v121 = vunpack.c.h.b16 %v105
    %v122 = vunpack.c.l.b16 %v106
    %v123 = vunpack.c.h.b16 %v106
    %v124 = vunpack.c.l.b16 %v107
    %v125 = vunpack.c.h.b16 %v107
    %v126 = vpack.c.b16 %v120, %v118
    %v127 = vpack.c.b16 %v121, %v119
    %v128 = vpack.c.b16 %v124, %v122
    %v129 = vpack.c.b16 %v125, %v123
    %v135 = vsel %vm41, %v103, 0
    %137 = vmatpush.bf16.msra.mxu0 0
    %138 = vmatpush.bf16.msra.mxu0 0
    %139 = vmatpush.bf16.msra.mxu0 0
    %140 = vmatpush.bf16.msra.mxu0 0
    %141 = vmatpush.bf16.msra.mxu0 0
    %142 = vmatpush.bf16.msra.mxu0 0
    %143 = vmatpush.bf16.msra.mxu0 %v128
    %144 = vmatpush.bf16.msra.mxu0 %v126
    %145 = vmatmul.bf16.gmra.mxu0 %v135
    %v146 = vpop.f32.mrf.mxu0
    %v147 = vadd.f32 %v110, %v146
    %v148 = vpop.f32.mrf.mxu0
    %v149 = vadd.f32 %v110, %v148
    %150 = vdwg.mxu0
    %151 = vmatpush.bf16.msra.mxu0 0
    %152 = vmatpush.bf16.msra.mxu0 0
    %153 = vmatpush.bf16.msra.mxu0 0
    %154 = vmatpush.bf16.msra.mxu0 0
    %155 = vmatpush.bf16.msra.mxu0 0
    %156 = vmatpush.bf16.msra.mxu0 0
    %157 = vmatpush.bf16.msra.mxu0 %v129
    %158 = vmatpush.bf16.msra.mxu0 %v127
    %159 = vmatmul.bf16.gmra.mxu0 %v135
    %v160 = vpop.f32.mrf.mxu0
    %v161 = vadd.f32 %v111, %v160
    %v162 = vpop.f32.mrf.mxu0
    %v163 = vadd.f32 %v111, %v162
    %164 = vdwg.mxu0
    %165 = vst [vmem:[%s5] sm:$0xff] %v147
    %166 = vst [vmem:[%s5 + $0x8] sm:$0xff] %v161
    %167 = vst [vmem:[%s5 + $0x10] sm:$0xff] %v149
    %168 = vst [vmem:[%s5 + $0x18] sm:$0xff] %v163
    // Predicated region
    $region26: #{multimodal_to_smiles_forward.7} parent=1 // pred_check
      _
    $region27: #{multimodal_to_smiles_forward.7} parent=1 // pred_check_branch
      %170 = sbr.rel (0) target = $region29
    $region28: #{multimodal_to_smiles_forward.7} parent=1 // pred_region
      _
    $region29: #{multimodal_to_smiles_forward.7} parent=1 // pred_fallthru
      _
    // Predicated region
    $region30: #{multimodal_to_smiles_forward.7} parent=1 // pred_check
      _
    $region31: #{multimodal_to_smiles_forward.7} parent=1 // pred_check_branch
      %172 = sbr.rel (0) target = $region33
    $region32: #{multimodal_to_smiles_forward.7} parent=1 // pred_region
      _
    $region33: #{multimodal_to_smiles_forward.7} parent=1 // pred_fallthru
      _
    %173 = vsyncpa [#allocation3], 1

// kernel: multimodal_to_smiles_forward.4
$region0: #{multimodal_to_smiles_forward.4}
  #allocation0 [shape = 'u32[]', space=smem, size = 0x4, offset = 0x4, fixed_abs, tag = 'smem constant byte address 0x4 - core index']
  #allocation1 [shape = 'u32[72,128]{1,0:T(1,128)}', space=vmem, size = 0x9000, scoped, tag = 'internal scratch']
  %s0 = inlined_call_operand.vmem [shape: f32[128,3], index: 0, kind: input, shape index: {}]
  %s1 = inlined_call_operand.vmem [shape: f32[3,32], index: 1, kind: input, shape index: {}]
  %s2 = inlined_call_operand.vmem [shape: f32[3,32], index: 2, kind: input, shape index: {}]
  %s3 = inlined_call_operand.vmem [shape: f32[3,32], index: 3, kind: input, shape index: {}]
  %s4 = inlined_call_operand.vmem [shape: f32[3,32], index: 4, kind: input, shape index: {}]
  %s5 = inlined_call_operand.vmem [shape: bf16[96,32], index: 5, kind: input, shape index: {}]
  %s6 = inlined_call_operand.vmem [shape: f32[1,32], index: 6, kind: input, shape index: {}]
  %s7 = inlined_call_operand.vmem [shape: bf16[128,32], index: 7, kind: output, shape index: {}]
  %s8 = sld [smem:[#allocation0]]
  $region38: #{multimodal_to_smiles_forward.4} parent=0
    _
  %s10 = ssub.s32 1, %s8
  %s11 = scalar_select 0, %s10, %s8
  // Predicated region
  $region2: #{multimodal_to_smiles_forward.4} parent=0 // pred_check
    _
  $region3: #{multimodal_to_smiles_forward.4} parent=0 // pred_check_branch
    %13 = sbr.rel (0) target = $region5
  $region4: #{multimodal_to_smiles_forward.4} parent=0 // pred_region
    _
  $region5: #{multimodal_to_smiles_forward.4} parent=0 // pred_fallthru
    _
  // Predicated region
  $region6: #{multimodal_to_smiles_forward.4} parent=0 // pred_check
    _
  $region7: #{multimodal_to_smiles_forward.4} parent=0 // pred_check_branch
    %15 = sbr.rel (0) target = $region9
  $region8: #{multimodal_to_smiles_forward.4} parent=0 // pred_region
    _
  $region9: #{multimodal_to_smiles_forward.4} parent=0 // pred_fallthru
    _
  // Predicated region
  $region10: #{multimodal_to_smiles_forward.4} parent=0 // pred_check
    _
  $region11: #{multimodal_to_smiles_forward.4} parent=0 // pred_check_branch
    %17 = sbr.rel (0) target = $region13
  $region12: #{multimodal_to_smiles_forward.4} parent=0 // pred_region
    _
  $region13: #{multimodal_to_smiles_forward.4} parent=0 // pred_fallthru
    _
  // Predicated region
  $region14: #{multimodal_to_smiles_forward.4} parent=0 // pred_check
    _
  $region15: #{multimodal_to_smiles_forward.4} parent=0 // pred_check_branch
    %19 = sbr.rel (0) target = $region17
  $region16: #{multimodal_to_smiles_forward.4} parent=0 // pred_region
    _
  $region17: #{multimodal_to_smiles_forward.4} parent=0 // pred_fallthru
    _
  // Predicated region
  $region18: #{multimodal_to_smiles_forward.4} parent=0 // pred_check
    _
  $region19: #{multimodal_to_smiles_forward.4} parent=0 // pred_check_branch
    %21 = sbr.rel (0) target = $region21
  $region20: #{multimodal_to_smiles_forward.4} parent=0 // pred_region
    _
  $region21: #{multimodal_to_smiles_forward.4} parent=0 // pred_fallthru
    _
  // Predicated region
  $region22: #{multimodal_to_smiles_forward.4} parent=0 // pred_check
    _
  $region23: #{multimodal_to_smiles_forward.4} parent=0 // pred_check_branch
    %23 = sbr.rel (0) target = $region25
  $region24: #{multimodal_to_smiles_forward.4} parent=0 // pred_region
    _
  $region25: #{multimodal_to_smiles_forward.4} parent=0 // pred_fallthru
    _
  // Predicated region
  $region26: #{multimodal_to_smiles_forward.4} parent=0 // pred_check
    _
  $region27: #{multimodal_to_smiles_forward.4} parent=0 // pred_check_branch
    %25 = sbr.rel (0) target = $region29
  $region28: #{multimodal_to_smiles_forward.4} parent=0 // pred_region
    _
  $region29: #{multimodal_to_smiles_forward.4} parent=0 // pred_fallthru
    _
  %v27 = vld [vmem:[%s0] sm:$0xff]
  %v28 = vld [vmem:[%s0 + $0x8] sm:$0xff]
  %v29 = vld [vmem:[%s0 + $0x10] sm:$0xff]
  %v30 = vld [vmem:[%s0 + $0x18] sm:$0xff]
  %v31 = vld [vmem:[%s0 + $0x20] sm:$0xff]
  %v32 = vld [vmem:[%s0 + $0x28] sm:$0xff]
  %v33 = vld [vmem:[%s0 + $0x30] sm:$0xff]
  %v34 = vld [vmem:[%s0 + $0x38] sm:$0xff]
  %v35 = vld [vmem:[%s0 + $0x40] sm:$0xff]
  %v36 = vld [vmem:[%s0 + $0x48] sm:$0xff]
  %v37 = vld [vmem:[%s0 + $0x50] sm:$0xff]
  %v38 = vld [vmem:[%s0 + $0x58] sm:$0xff]
  %v39 = vld [vmem:[%s0 + $0x60] sm:$0xff]
  %v40 = vld [vmem:[%s0 + $0x68] sm:$0xff]
  %v41 = vld [vmem:[%s0 + $0x70] sm:$0xff]
  %v42 = vld [vmem:[%s0 + $0x78] sm:$0xff]
  %v43 = vld [vmem:[%s1] sm:$0x7]
  %v44 = vld [vmem:[%s2] sm:$0x7]
  %v45 = vld [vmem:[%s3] sm:$0x7]
  %v46 = vld [vmem:[%s4] sm:$0x7]
  %v47 = vld [vmem:[%s5] sm:$0xf]
  %v48 = vld [vmem:[%s5 + $0x4] sm:$0xf]
  %v49 = vld [vmem:[%s5 + $0x8] sm:$0xf]
  %v50 = vld [vmem:[%s5 + $0xc] sm:$0xf]
  %v51 = vld [vmem:[%s5 + $0x10] sm:$0xf]
  %v52 = vld [vmem:[%s5 + $0x14] sm:$0xf]
  %v53 = vld [vmem:[%s5 + $0x18] sm:$0xf]
  %v54 = vld [vmem:[%s5 + $0x1c] sm:$0xf]
  %v55 = vld [vmem:[%s5 + $0x20] sm:$0xf]
  %v56 = vld [vmem:[%s5 + $0x24] sm:$0xf]
  %v57 = vld [vmem:[%s5 + $0x28] sm:$0xf]
  %v58 = vld [vmem:[%s5 + $0x2c] sm:$0xf]
  %60 = vset.pattern.permute.xlu0 0
  %61 = vperm.xlu0 %60, %v27
  %v62 = vpop.permute.xlu0 %61
  %65 = vset.pattern.permute.xlu0 0
  %66 = vperm.xlu0 %65, %v28
  %v67 = vpop.permute.xlu0 %66
  %70 = vset.pattern.permute.xlu0 0
  %71 = vperm.xlu0 %70, %v29
  %v72 = vpop.permute.xlu0 %71
  %75 = vset.pattern.permute.xlu0 0
  %76 = vperm.xlu0 %75, %v30
  %v77 = vpop.permute.xlu0 %76
  %80 = vset.pattern.permute.xlu0 0
  %81 = vperm.xlu0 %80, %v31
  %v82 = vpop.permute.xlu0 %81
  %85 = vset.pattern.permute.xlu0 0
  %86 = vperm.xlu0 %85, %v32
  %v87 = vpop.permute.xlu0 %86
  %90 = vset.pattern.permute.xlu0 0
  %91 = vperm.xlu0 %90, %v33
  %v92 = vpop.permute.xlu0 %91
  %95 = vset.pattern.permute.xlu0 0
  %96 = vperm.xlu0 %95, %v34
  %v97 = vpop.permute.xlu0 %96
  %100 = vset.pattern.permute.xlu0 0
  %101 = vperm.xlu0 %100, %v35
  %v102 = vpop.permute.xlu0 %101
  %105 = vset.pattern.permute.xlu0 0
  %106 = vperm.xlu0 %105, %v36
  %v107 = vpop.permute.xlu0 %106
  %110 = vset.pattern.permute.xlu0 0
  %111 = vperm.xlu0 %110, %v37
  %v112 = vpop.permute.xlu0 %111
  %115 = vset.pattern.permute.xlu0 0
  %116 = vperm.xlu0 %115, %v38
  %v117 = vpop.permute.xlu0 %116
  %120 = vset.pattern.permute.xlu0 0
  %121 = vperm.xlu0 %120, %v39
  %v122 = vpop.permute.xlu0 %121
  %125 = vset.pattern.permute.xlu0 0
  %126 = vperm.xlu0 %125, %v40
  %v127 = vpop.permute.xlu0 %126
  %130 = vset.pattern.permute.xlu0 0
  %131 = vperm.xlu0 %130, %v41
  %v132 = vpop.permute.xlu0 %131
  %135 = vset.pattern.permute.xlu0 0
  %136 = vperm.xlu0 %135, %v42
  %v137 = vpop.permute.xlu0 %136
  %v139 = vperm.slane %v43, 0
  %v140 = vmul.f32 %v62, %v139
  %v141 = vmul.f32 %v67, %v139
  %v142 = vmul.f32 %v72, %v139
  %v143 = vmul.f32 %v77, %v139
  %v144 = vmul.f32 %v82, %v139
  %v145 = vmul.f32 %v87, %v139
  %v146 = vmul.f32 %v92, %v139
  %v147 = vmul.f32 %v97, %v139
  %v148 = vmul.f32 %v102, %v139
  %v149 = vmul.f32 %v107, %v139
  %v150 = vmul.f32 %v112, %v139
  %v151 = vmul.f32 %v117, %v139
  %v152 = vmul.f32 %v122, %v139
  %v153 = vmul.f32 %v127, %v139
  %v154 = vmul.f32 %v132, %v139
  %v155 = vmul.f32 %v137, %v139
  %v156 = vperm.slane %v44, 0
  %v157 = vadd.f32 %v140, %v156
  %v158 = vadd.f32 %v141, %v156
  %v159 = vadd.f32 %v142, %v156
  %v160 = vadd.f32 %v143, %v156
  %v161 = vadd.f32 %v144, %v156
  %v162 = vadd.f32 %v145, %v156
  %v163 = vadd.f32 %v146, %v156
  %v164 = vadd.f32 %v147, %v156
  %v165 = vadd.f32 %v148, %v156
  %v166 = vadd.f32 %v149, %v156
  %v167 = vadd.f32 %v150, %v156
  %v168 = vadd.f32 %v151, %v156
  %v169 = vadd.f32 %v152, %v156
  %v170 = vadd.f32 %v153, %v156
  %v171 = vadd.f32 %v154, %v156
  %v172 = vadd.f32 %v155, %v156
  %vm173 = vcmask 261120
  %v174 = vsel %vm173, %v157, 0.0
  %175 = vadd.xlane.f32.xlu0 %v174
  %v176 = vpop.xlane.xlu0 %175
  %v177 = vsel %vm173, %v158, 0.0
  %178 = vadd.xlane.f32.xlu0 %v177
  %v179 = vpop.xlane.xlu0 %178
  %v180 = vsel %vm173, %v159, 0.0
  %181 = vadd.xlane.f32.xlu0 %v180
  %v182 = vpop.xlane.xlu0 %181
  %v183 = vsel %vm173, %v160, 0.0
  %184 = vadd.xlane.f32.xlu0 %v183
  %v185 = vpop.xlane.xlu0 %184
  %v186 = vsel %vm173, %v161, 0.0
  %187 = vadd.xlane.f32.xlu0 %v186
  %v188 = vpop.xlane.xlu0 %187
  %v189 = vsel %vm173, %v162, 0.0
  %190 = vadd.xlane.f32.xlu0 %v189
  %v191 = vpop.xlane.xlu0 %190
  %v192 = vsel %vm173, %v163, 0.0
  %193 = vadd.xlane.f32.xlu0 %v192
  %v194 = vpop.xlane.xlu0 %193
  %v195 = vsel %vm173, %v164, 0.0
  %196 = vadd.xlane.f32.xlu0 %v195
  %v197 = vpop.xlane.xlu0 %196
  %v198 = vsel %vm173, %v165, 0.0
  %199 = vadd.xlane.f32.xlu0 %v198
  %v200 = vpop.xlane.xlu0 %199
  %v201 = vsel %vm173, %v166, 0.0
  %202 = vadd.xlane.f32.xlu0 %v201
  %v203 = vpop.xlane.xlu0 %202
  %v204 = vsel %vm173, %v167, 0.0
  %205 = vadd.xlane.f32.xlu0 %v204
  %v206 = vpop.xlane.xlu0 %205
  %v207 = vsel %vm173, %v168, 0.0
  %208 = vadd.xlane.f32.xlu0 %v207
  %v209 = vpop.xlane.xlu0 %208
  %v210 = vsel %vm173, %v169, 0.0
  %211 = vadd.xlane.f32.xlu0 %v210
  %v212 = vpop.xlane.xlu0 %211
  %v213 = vsel %vm173, %v170, 0.0
  %214 = vadd.xlane.f32.xlu0 %v213
  %v215 = vpop.xlane.xlu0 %214
  %v216 = vsel %vm173, %v171, 0.0
  %217 = vadd.xlane.f32.xlu0 %v216
  %v218 = vpop.xlane.xlu0 %217
  %v219 = vsel %vm173, %v172, 0.0
  %220 = vadd.xlane.f32.xlu0 %v219
  %v221 = vpop.xlane.xlu0 %220
  %v222 = vrcp.pop 32.0
  %v223 = vmul.f32 32.0, %v222
  %v224 = vsub.f32 1.0, %v223
  %v225 = vmul.f32 %v222, %v224
  %v226 = vadd.f32 %v222, %v225
  %vm227 = vweird.f32 %v222
  %v228 = vsel %vm227, %v222, %v226
  %v229 = vmul.f32 %v176, %v228
  %v230 = vmul.f32 %v179, %v228
  %v231 = vmul.f32 %v182, %v228
  %v232 = vmul.f32 %v185, %v228
  %v233 = vmul.f32 %v188, %v228
  %v234 = vmul.f32 %v191, %v228
  %v235 = vmul.f32 %v194, %v228
  %v236 = vmul.f32 %v197, %v228
  %v237 = vmul.f32 %v200, %v228
  %v238 = vmul.f32 %v203, %v228
  %v239 = vmul.f32 %v206, %v228
  %v240 = vmul.f32 %v209, %v228
  %v241 = vmul.f32 %v212, %v228
  %v242 = vmul.f32 %v215, %v228
  %v243 = vmul.f32 %v218, %v228
  %v244 = vmul.f32 %v221, %v228
  %v245 = vsub.f32 %v157, %v229
  %v246 = vsub.f32 %v158, %v230
  %v247 = vsub.f32 %v159, %v231
  %v248 = vsub.f32 %v160, %v232
  %v249 = vsub.f32 %v161, %v233
  %v250 = vsub.f32 %v162, %v234
  %v251 = vsub.f32 %v163, %v235
  %v252 = vsub.f32 %v164, %v236
  %v253 = vsub.f32 %v165, %v237
  %v254 = vsub.f32 %v166, %v238
  %v255 = vsub.f32 %v167, %v239
  %v256 = vsub.f32 %v168, %v240
  %v257 = vsub.f32 %v169, %v241
  %v258 = vsub.f32 %v170, %v242
  %v259 = vsub.f32 %v171, %v243
  %v260 = vsub.f32 %v172, %v244
  %v261 = vmul.f32 %v245, %v245
  %v262 = vmul.f32 %v246, %v246
  %v263 = vmul.f32 %v247, %v247
  %v264 = vmul.f32 %v248, %v248
  %v265 = vmul.f32 %v249, %v249
  %v266 = vmul.f32 %v250, %v250
  %v267 = vmul.f32 %v251, %v251
  %v268 = vmul.f32 %v252, %v252
  %v269 = vmul.f32 %v253, %v253
  %v270 = vmul.f32 %v254, %v254
  %v271 = vmul.f32 %v255, %v255
  %v272 = vmul.f32 %v256, %v256
  %v273 = vmul.f32 %v257, %v257
  %v274 = vmul.f32 %v258, %v258
  %v275 = vmul.f32 %v259, %v259
  %v276 = vmul.f32 %v260, %v260
  %v277 = vsel %vm173, %v261, 0.0
  %278 = vadd.xlane.f32.xlu0 %v277
  %v279 = vpop.xlane.xlu0 %278
  %v280 = vsel %vm173, %v262, 0.0
  %281 = vadd.xlane.f32.xlu0 %v280
  %v282 = vpop.xlane.xlu0 %281
  %v283 = vsel %vm173, %v263, 0.0
  %284 = vadd.xlane.f32.xlu0 %v283
  %v285 = vpop.xlane.xlu0 %284
  %v286 = vsel %vm173, %v264, 0.0
  %287 = vadd.xlane.f32.xlu0 %v286
  %v288 = vpop.xlane.xlu0 %287
  %v289 = vsel %vm173, %v265, 0.0
  %290 = vadd.xlane.f32.xlu0 %v289
  %v291 = vpop.xlane.xlu0 %290
  %v292 = vsel %vm173, %v266, 0.0
  %293 = vadd.xlane.f32.xlu0 %v292
  %v294 = vpop.xlane.xlu0 %293
  %v295 = vsel %vm173, %v267, 0.0
  %296 = vadd.xlane.f32.xlu0 %v295
  %v297 = vpop.xlane.xlu0 %296
  %v298 = vsel %vm173, %v268, 0.0
  %299 = vadd.xlane.f32.xlu0 %v298
  %v300 = vpop.xlane.xlu0 %299
  %v301 = vsel %vm173, %v269, 0.0
  %302 = vadd.xlane.f32.xlu0 %v301
  %v303 = vpop.xlane.xlu0 %302
  %v304 = vsel %vm173, %v270, 0.0
  %305 = vadd.xlane.f32.xlu0 %v304
  %v306 = vpop.xlane.xlu0 %305
  %v307 = vsel %vm173, %v271, 0.0
  %308 = vadd.xlane.f32.xlu0 %v307
  %v309 = vpop.xlane.xlu0 %308
  %v310 = vsel %vm173, %v272, 0.0
  %311 = vadd.xlane.f32.xlu0 %v310
  %v312 = vpop.xlane.xlu0 %311
  %v313 = vsel %vm173, %v273, 0.0
  %314 = vadd.xlane.f32.xlu0 %v313
  %v315 = vpop.xlane.xlu0 %314
  %v316 = vsel %vm173, %v274, 0.0
  %317 = vadd.xlane.f32.xlu0 %v316
  %v318 = vpop.xlane.xlu0 %317
  %v319 = vsel %vm173, %v275, 0.0
  %320 = vadd.xlane.f32.xlu0 %v319
  %v321 = vpop.xlane.xlu0 %320
  %v322 = vsel %vm173, %v276, 0.0
  %323 = vadd.xlane.f32.xlu0 %v322
  %v324 = vpop.xlane.xlu0 %323
  %v325 = vmul.f32 %v279, %v228
  %v326 = vmul.f32 %v282, %v228
  %v327 = vmul.f32 %v285, %v228
  %v328 = vmul.f32 %v288, %v228
  %v329 = vmul.f32 %v291, %v228
  %v330 = vmul.f32 %v294, %v228
  %v331 = vmul.f32 %v297, %v228
  %v332 = vmul.f32 %v300, %v228
  %v333 = vmul.f32 %v303, %v228
  %v334 = vmul.f32 %v306, %v228
  %v335 = vmul.f32 %v309, %v228
  %v336 = vmul.f32 %v312, %v228
  %v337 = vmul.f32 %v315, %v228
  %v338 = vmul.f32 %v318, %v228
  %v339 = vmul.f32 %v321, %v228
  %v340 = vmul.f32 %v324, %v228
  %v341 = vadd.f32 %v325, 1e-05
  %v342 = vadd.f32 %v326, 1e-05
  %v343 = vadd.f32 %v327, 1e-05
  %v344 = vadd.f32 %v328, 1e-05
  %v345 = vadd.f32 %v329, 1e-05
  %v346 = vadd.f32 %v330, 1e-05
  %v347 = vadd.f32 %v331, 1e-05
  %v348 = vadd.f32 %v332, 1e-05
  %v349 = vadd.f32 %v333, 1e-05
  %v350 = vadd.f32 %v334, 1e-05
  %v351 = vadd.f32 %v335, 1e-05
  %v352 = vadd.f32 %v336, 1e-05
  %v353 = vadd.f32 %v337, 1e-05
  %v354 = vadd.f32 %v338, 1e-05
  %v355 = vadd.f32 %v339, 1e-05
  %v356 = vadd.f32 %v340, 1e-05
  %v357 = vrsqrt.pop %v341
  %v358 = vmul.f32 %v357, %v341
  %v359 = vmul.f32 %v358, %v357
  %v360 = vmul.f32 0.5, %v359
  %v361 = vsub.f32 1.5, %v360
  %v362 = vmul.f32 %v357, %v361
  %vm363 = vweird.f32 %v341
  %vm364 = vweird.f32 %v357
  %vm365 = vmor %vm363, %vm364
  %v366 = vsel %vm365, %v357, %v362
  %v367 = vrsqrt.pop %v342
  %v368 = vmul.f32 %v367, %v342
  %v369 = vmul.f32 %v368, %v367
  %v370 = vmul.f32 0.5, %v369
  %v371 = vsub.f32 1.5, %v370
  %v372 = vmul.f32 %v367, %v371
  %vm373 = vweird.f32 %v342
  %vm374 = vweird.f32 %v367
  %vm375 = vmor %vm373, %vm374
  %v376 = vsel %vm375, %v367, %v372
  %v377 = vrsqrt.pop %v343
  %v378 = vmul.f32 %v377, %v343
  %v379 = vmul.f32 %v378, %v377
  %v380 = vmul.f32 0.5, %v379
  %v381 = vsub.f32 1.5, %v380
  %v382 = vmul.f32 %v377, %v381
  %vm383 = vweird.f32 %v343
  %vm384 = vweird.f32 %v377
  %vm385 = vmor %vm383, %vm384
  %v386 = vsel %vm385, %v377, %v382
  %v387 = vrsqrt.pop %v344
  %v388 = vmul.f32 %v387, %v344
  %v389 = vmul.f32 %v388, %v387
  %v390 = vmul.f32 0.5, %v389
  %v391 = vsub.f32 1.5, %v390
  %v392 = vmul.f32 %v387, %v391
  %vm393 = vweird.f32 %v344
  %vm394 = vweird.f32 %v387
  %vm395 = vmor %vm393, %vm394
  %v396 = vsel %vm395, %v387, %v392
  %v397 = vrsqrt.pop %v345
  %v398 = vmul.f32 %v397, %v345
  %v399 = vmul.f32 %v398, %v397
  %v400 = vmul.f32 0.5, %v399
  %v401 = vsub.f32 1.5, %v400
  %v402 = vmul.f32 %v397, %v401
  %vm403 = vweird.f32 %v345
  %vm404 = vweird.f32 %v397
  %vm405 = vmor %vm403, %vm404
  %v406 = vsel %vm405, %v397, %v402
  %v407 = vrsqrt.pop %v346
  %v408 = vmul.f32 %v407, %v346
  %v409 = vmul.f32 %v408, %v407
  %v410 = vmul.f32 0.5, %v409
  %v411 = vsub.f32 1.5, %v410
  %v412 = vmul.f32 %v407, %v411
  %vm413 = vweird.f32 %v346
  %vm414 = vweird.f32 %v407
  %vm415 = vmor %vm413, %vm414
  %v416 = vsel %vm415, %v407, %v412
  %v417 = vrsqrt.pop %v347
  %v418 = vmul.f32 %v417, %v347
  %v419 = vmul.f32 %v418, %v417
  %v420 = vmul.f32 0.5, %v419
  %v421 = vsub.f32 1.5, %v420
  %v422 = vmul.f32 %v417, %v421
  %vm423 = vweird.f32 %v347
  %vm424 = vweird.f32 %v417
  %vm425 = vmor %vm423, %vm424
  %v426 = vsel %vm425, %v417, %v422
  %v427 = vrsqrt.pop %v348
  %v428 = vmul.f32 %v427, %v348
  %v429 = vmul.f32 %v428, %v427
  %v430 = vmul.f32 0.5, %v429
  %v431 = vsub.f32 1.5, %v430
  %v432 = vmul.f32 %v427, %v431
  %vm433 = vweird.f32 %v348
  %vm434 = vweird.f32 %v427
  %vm435 = vmor %vm433, %vm434
  %v436 = vsel %vm435, %v427, %v432
  %v437 = vrsqrt.pop %v349
  %v438 = vmul.f32 %v437, %v349
  %v439 = vmul.f32 %v438, %v437
  %v440 = vmul.f32 0.5, %v439
  %v441 = vsub.f32 1.5, %v440
  %v442 = vmul.f32 %v437, %v441
  %vm443 = vweird.f32 %v349
  %vm444 = vweird.f32 %v437
  %vm445 = vmor %vm443, %vm444
  %v446 = vsel %vm445, %v437, %v442
  %v447 = vrsqrt.pop %v350
  %v448 = vmul.f32 %v447, %v350
  %v449 = vmul.f32 %v448, %v447
  %v450 = vmul.f32 0.5, %v449
  %v451 = vsub.f32 1.5, %v450
  %v452 = vmul.f32 %v447, %v451
  %vm453 = vweird.f32 %v350
  %vm454 = vweird.f32 %v447
  %vm455 = vmor %vm453, %vm454
  %v456 = vsel %vm455, %v447, %v452
  %v457 = vrsqrt.pop %v351
  %v458 = vmul.f32 %v457, %v351
  %v459 = vmul.f32 %v458, %v457
  %v460 = vmul.f32 0.5, %v459
  %v461 = vsub.f32 1.5, %v460
  %v462 = vmul.f32 %v457, %v461
  %vm463 = vweird.f32 %v351
  %vm464 = vweird.f32 %v457
  %vm465 = vmor %vm463, %vm464
  %v466 = vsel %vm465, %v457, %v462
  %v467 = vrsqrt.pop %v352
  %v468 = vmul.f32 %v467, %v352
  %v469 = vmul.f32 %v468, %v467
  %v470 = vmul.f32 0.5, %v469
  %v471 = vsub.f32 1.5, %v470
  %v472 = vmul.f32 %v467, %v471
  %vm473 = vweird.f32 %v352
  %vm474 = vweird.f32 %v467
  %vm475 = vmor %vm473, %vm474
  %v476 = vsel %vm475, %v467, %v472
  %v477 = vrsqrt.pop %v353
  %v478 = vmul.f32 %v477, %v353
  %v479 = vmul.f32 %v478, %v477
  %v480 = vmul.f32 0.5, %v479
  %v481 = vsub.f32 1.5, %v480
  %v482 = vmul.f32 %v477, %v481
  %vm483 = vweird.f32 %v353
  %vm484 = vweird.f32 %v477
  %vm485 = vmor %vm483, %vm484
  %v486 = vsel %vm485, %v477, %v482
  %v487 = vrsqrt.pop %v354
  %v488 = vmul.f32 %v487, %v354
  %v489 = vmul.f32 %v488, %v487
  %v490 = vmul.f32 0.5, %v489
  %v491 = vsub.f32 1.5, %v490
  %v492 = vmul.f32 %v487, %v491
  %vm493 = vweird.f32 %v354
  %vm494 = vweird.f32 %v487
  %vm495 = vmor %vm493, %vm494
  %v496 = vsel %vm495, %v487, %v492
  %v497 = vrsqrt.pop %v355
  %v498 = vmul.f32 %v497, %v355
  %v499 = vmul.f32 %v498, %v497
  %v500 = vmul.f32 0.5, %v499
  %v501 = vsub.f32 1.5, %v500
  %v502 = vmul.f32 %v497, %v501
  %vm503 = vweird.f32 %v355
  %vm504 = vweird.f32 %v497
  %vm505 = vmor %vm503, %vm504
  %v506 = vsel %vm505, %v497, %v502
  %v507 = vrsqrt.pop %v356
  %v508 = vmul.f32 %v507, %v356
  %v509 = vmul.f32 %v508, %v507
  %v510 = vmul.f32 0.5, %v509
  %v511 = vsub.f32 1.5, %v510
  %v512 = vmul.f32 %v507, %v511
  %vm513 = vweird.f32 %v356
  %vm514 = vweird.f32 %v507
  %vm515 = vmor %vm513, %vm514
  %v516 = vsel %vm515, %v507, %v512
  %v517 = vmul.f32 %v245, %v366
  %v518 = vmul.f32 %v246, %v376
  %v519 = vmul.f32 %v247, %v386
  %v520 = vmul.f32 %v248, %v396
  %v521 = vmul.f32 %v249, %v406
  %v522 = vmul.f32 %v250, %v416
  %v523 = vmul.f32 %v251, %v426
  %v524 = vmul.f32 %v252, %v436
  %v525 = vmul.f32 %v253, %v446
  %v526 = vmul.f32 %v254, %v456
  %v527 = vmul.f32 %v255, %v466
  %v528 = vmul.f32 %v256, %v476
  %v529 = vmul.f32 %v257, %v486
  %v530 = vmul.f32 %v258, %v496
  %v531 = vmul.f32 %v259, %v506
  %v532 = vmul.f32 %v260, %v516
  %v533 = vperm.slane %v45, 0
  %v534 = vmul.f32 %v517, %v533
  %v535 = vmul.f32 %v518, %v533
  %v536 = vmul.f32 %v519, %v533
  %v537 = vmul.f32 %v520, %v533
  %v538 = vmul.f32 %v521, %v533
  %v539 = vmul.f32 %v522, %v533
  %v540 = vmul.f32 %v523, %v533
  %v541 = vmul.f32 %v524, %v533
  %v542 = vmul.f32 %v525, %v533
  %v543 = vmul.f32 %v526, %v533
  %v544 = vmul.f32 %v527, %v533
  %v545 = vmul.f32 %v528, %v533
  %v546 = vmul.f32 %v529, %v533
  %v547 = vmul.f32 %v530, %v533
  %v548 = vmul.f32 %v531, %v533
  %v549 = vmul.f32 %v532, %v533
  %v550 = vperm.slane %v46, 0
  %v551 = vadd.f32 %v534, %v550
  %v552 = vadd.f32 %v535, %v550
  %v553 = vadd.f32 %v536, %v550
  %v554 = vadd.f32 %v537, %v550
  %v555 = vadd.f32 %v538, %v550
  %v556 = vadd.f32 %v539, %v550
  %v557 = vadd.f32 %v540, %v550
  %v558 = vadd.f32 %v541, %v550
  %v559 = vadd.f32 %v542, %v550
  %v560 = vadd.f32 %v543, %v550
  %v561 = vadd.f32 %v544, %v550
  %v562 = vadd.f32 %v545, %v550
  %v563 = vadd.f32 %v546, %v550
  %v564 = vadd.f32 %v547, %v550
  %v565 = vadd.f32 %v548, %v550
  %v566 = vadd.f32 %v549, %v550
  %v567 = vpack.c.bf16 %v552, %v551
  %v568 = vpack.c.bf16 %v554, %v553
  %v569 = vpack.c.bf16 %v556, %v555
  %v570 = vpack.c.bf16 %v558, %v557
  %v571 = vpack.c.bf16 %v560, %v559
  %v572 = vpack.c.bf16 %v562, %v561
  %v573 = vpack.c.bf16 %v564, %v563
  %v574 = vpack.c.bf16 %v566, %v565
  %575 = vset.pattern.permute.xlu0 1
  %576 = vperm.xlu0 %575, %v27
  %v577 = vpop.permute.xlu0 %576
  %579 = vset.pattern.permute.xlu0 1
  %580 = vperm.xlu0 %579, %v28
  %v581 = vpop.permute.xlu0 %580
  %583 = vset.pattern.permute.xlu0 1
  %584 = vperm.xlu0 %583, %v29
  %v585 = vpop.permute.xlu0 %584
  %587 = vset.pattern.permute.xlu0 1
  %588 = vperm.xlu0 %587, %v30
  %v589 = vpop.permute.xlu0 %588
  %591 = vset.pattern.permute.xlu0 1
  %592 = vperm.xlu0 %591, %v31
  %v593 = vpop.permute.xlu0 %592
  %595 = vset.pattern.permute.xlu0 1
  %596 = vperm.xlu0 %595, %v32
  %v597 = vpop.permute.xlu0 %596
  %599 = vset.pattern.permute.xlu0 1
  %600 = vperm.xlu0 %599, %v33
  %v601 = vpop.permute.xlu0 %600
  %603 = vset.pattern.permute.xlu0 1
  %604 = vperm.xlu0 %603, %v34
  %v605 = vpop.permute.xlu0 %604
  %607 = vset.pattern.permute.xlu0 1
  %608 = vperm.xlu0 %607, %v35
  %v609 = vpop.permute.xlu0 %608
  %611 = vset.pattern.permute.xlu0 1
  %612 = vperm.xlu0 %611, %v36
  %v613 = vpop.permute.xlu0 %612
  %615 = vset.pattern.permute.xlu0 1
  %616 = vperm.xlu0 %615, %v37
  %v617 = vpop.permute.xlu0 %616
  %619 = vset.pattern.permute.xlu0 1
  %620 = vperm.xlu0 %619, %v38
  %v621 = vpop.permute.xlu0 %620
  %623 = vset.pattern.permute.xlu0 1
  %624 = vperm.xlu0 %623, %v39
  %v625 = vpop.permute.xlu0 %624
  %627 = vset.pattern.permute.xlu0 1
  %628 = vperm.xlu0 %627, %v40
  %v629 = vpop.permute.xlu0 %628
  %631 = vset.pattern.permute.xlu0 1
  %632 = vperm.xlu0 %631, %v41
  %v633 = vpop.permute.xlu0 %632
  %635 = vset.pattern.permute.xlu0 1
  %636 = vperm.xlu0 %635, %v42
  %v637 = vpop.permute.xlu0 %636
  %v639 = vperm.slane %v43, 1
  %v640 = vmul.f32 %v577, %v639
  %v641 = vmul.f32 %v581, %v639
  %v642 = vmul.f32 %v585, %v639
  %v643 = vmul.f32 %v589, %v639
  %v644 = vmul.f32 %v593, %v639
  %v645 = vmul.f32 %v597, %v639
  %v646 = vmul.f32 %v601, %v639
  %v647 = vmul.f32 %v605, %v639
  %v648 = vmul.f32 %v609, %v639
  %v649 = vmul.f32 %v613, %v639
  %v650 = vmul.f32 %v617, %v639
  %v651 = vmul.f32 %v621, %v639
  %v652 = vmul.f32 %v625, %v639
  %v653 = vmul.f32 %v629, %v639
  %v654 = vmul.f32 %v633, %v639
  %v655 = vmul.f32 %v637, %v639
  %v656 = vperm.slane %v44, 1
  %v657 = vadd.f32 %v640, %v656
  %v658 = vadd.f32 %v641, %v656
  %v659 = vadd.f32 %v642, %v656
  %v660 = vadd.f32 %v643, %v656
  %v661 = vadd.f32 %v644, %v656
  %v662 = vadd.f32 %v645, %v656
  %v663 = vadd.f32 %v646, %v656
  %v664 = vadd.f32 %v647, %v656
  %v665 = vadd.f32 %v648, %v656
  %v666 = vadd.f32 %v649, %v656
  %v667 = vadd.f32 %v650, %v656
  %v668 = vadd.f32 %v651, %v656
  %v669 = vadd.f32 %v652, %v656
  %v670 = vadd.f32 %v653, %v656
  %v671 = vadd.f32 %v654, %v656
  %v672 = vadd.f32 %v655, %v656
  %v673 = vsel %vm173, %v657, 0.0
  %674 = vadd.xlane.f32.xlu0 %v673
  %v675 = vpop.xlane.xlu0 %674
  %v676 = vsel %vm173, %v658, 0.0
  %677 = vadd.xlane.f32.xlu0 %v676
  %v678 = vpop.xlane.xlu0 %677
  %v679 = vsel %vm173, %v659, 0.0
  %680 = vadd.xlane.f32.xlu0 %v679
  %v681 = vpop.xlane.xlu0 %680
  %v682 = vsel %vm173, %v660, 0.0
  %683 = vadd.xlane.f32.xlu0 %v682
  %v684 = vpop.xlane.xlu0 %683
  %v685 = vsel %vm173, %v661, 0.0
  %686 = vadd.xlane.f32.xlu0 %v685
  %v687 = vpop.xlane.xlu0 %686
  %v688 = vsel %vm173, %v662, 0.0
  %689 = vadd.xlane.f32.xlu0 %v688
  %v690 = vpop.xlane.xlu0 %689
  %v691 = vsel %vm173, %v663, 0.0
  %692 = vadd.xlane.f32.xlu0 %v691
  %v693 = vpop.xlane.xlu0 %692
  %v694 = vsel %vm173, %v664, 0.0
  %695 = vadd.xlane.f32.xlu0 %v694
  %v696 = vpop.xlane.xlu0 %695
  %v697 = vsel %vm173, %v665, 0.0
  %698 = vadd.xlane.f32.xlu0 %v697
  %v699 = vpop.xlane.xlu0 %698
  %v700 = vsel %vm173, %v666, 0.0
  %701 = vadd.xlane.f32.xlu0 %v700
  %v702 = vpop.xlane.xlu0 %701
  %v703 = vsel %vm173, %v667, 0.0
  %704 = vadd.xlane.f32.xlu0 %v703
  %v705 = vpop.xlane.xlu0 %704
  %v706 = vsel %vm173, %v668, 0.0
  %707 = vadd.xlane.f32.xlu0 %v706
  %v708 = vpop.xlane.xlu0 %707
  %v709 = vsel %vm173, %v669, 0.0
  %710 = vadd.xlane.f32.xlu0 %v709
  %v711 = vpop.xlane.xlu0 %710
  %v712 = vsel %vm173, %v670, 0.0
  %713 = vadd.xlane.f32.xlu0 %v712
  %v714 = vpop.xlane.xlu0 %713
  %v715 = vsel %vm173, %v671, 0.0
  %716 = vadd.xlane.f32.xlu0 %v715
  %v717 = vpop.xlane.xlu0 %716
  %v718 = vsel %vm173, %v672, 0.0
  %719 = vadd.xlane.f32.xlu0 %v718
  %v720 = vpop.xlane.xlu0 %719
  %v721 = vmul.f32 %v675, %v228
  %v722 = vmul.f32 %v678, %v228
  %v723 = vmul.f32 %v681, %v228
  %v724 = vmul.f32 %v684, %v228
  %v725 = vmul.f32 %v687, %v228
  %v726 = vmul.f32 %v690, %v228
  %v727 = vmul.f32 %v693, %v228
  %v728 = vmul.f32 %v696, %v228
  %v729 = vmul.f32 %v699, %v228
  %v730 = vmul.f32 %v702, %v228
  %v731 = vmul.f32 %v705, %v228
  %v732 = vmul.f32 %v708, %v228
  %v733 = vmul.f32 %v711, %v228
  %v734 = vmul.f32 %v714, %v228
  %v735 = vmul.f32 %v717, %v228
  %v736 = vmul.f32 %v720, %v228
  %v737 = vsub.f32 %v657, %v721
  %v738 = vsub.f32 %v658, %v722
  %v739 = vsub.f32 %v659, %v723
  %v740 = vsub.f32 %v660, %v724
  %v741 = vsub.f32 %v661, %v725
  %v742 = vsub.f32 %v662, %v726
  %v743 = vsub.f32 %v663, %v727
  %v744 = vsub.f32 %v664, %v728
  %v745 = vsub.f32 %v665, %v729
  %v746 = vsub.f32 %v666, %v730
  %v747 = vsub.f32 %v667, %v731
  %v748 = vsub.f32 %v668, %v732
  %v749 = vsub.f32 %v669, %v733
  %v750 = vsub.f32 %v670, %v734
  %v751 = vsub.f32 %v671, %v735
  %v752 = vsub.f32 %v672, %v736
  %v753 = vmul.f32 %v737, %v737
  %v754 = vmul.f32 %v738, %v738
  %v755 = vmul.f32 %v739, %v739
  %v756 = vmul.f32 %v740, %v740
  %v757 = vmul.f32 %v741, %v741
  %v758 = vmul.f32 %v742, %v742
  %v759 = vmul.f32 %v743, %v743
  %v760 = vmul.f32 %v744, %v744
  %v761 = vmul.f32 %v745, %v745
  %v762 = vmul.f32 %v746, %v746
  %v763 = vmul.f32 %v747, %v747
  %v764 = vmul.f32 %v748, %v748
  %v765 = vmul.f32 %v749, %v749
  %v766 = vmul.f32 %v750, %v750
  %v767 = vmul.f32 %v751, %v751
  %v768 = vmul.f32 %v752, %v752
  %v769 = vsel %vm173, %v753, 0.0
  %770 = vadd.xlane.f32.xlu0 %v769
  %v771 = vpop.xlane.xlu0 %770
  %v772 = vsel %vm173, %v754, 0.0
  %773 = vadd.xlane.f32.xlu0 %v772
  %v774 = vpop.xlane.xlu0 %773
  %v775 = vsel %vm173, %v755, 0.0
  %776 = vadd.xlane.f32.xlu0 %v775
  %v777 = vpop.xlane.xlu0 %776
  %v778 = vsel %vm173, %v756, 0.0
  %779 = vadd.xlane.f32.xlu0 %v778
  %v780 = vpop.xlane.xlu0 %779
  %v781 = vsel %vm173, %v757, 0.0
  %782 = vadd.xlane.f32.xlu0 %v781
  %v783 = vpop.xlane.xlu0 %782
  %v784 = vsel %vm173, %v758, 0.0
  %785 = vadd.xlane.f32.xlu0 %v784
  %v786 = vpop.xlane.xlu0 %785
  %v787 = vsel %vm173, %v759, 0.0
  %788 = vadd.xlane.f32.xlu0 %v787
  %v789 = vpop.xlane.xlu0 %788
  %v790 = vsel %vm173, %v760, 0.0
  %791 = vadd.xlane.f32.xlu0 %v790
  %v792 = vpop.xlane.xlu0 %791
  %v793 = vsel %vm173, %v761, 0.0
  %794 = vadd.xlane.f32.xlu0 %v793
  %v795 = vpop.xlane.xlu0 %794
  %v796 = vsel %vm173, %v762, 0.0
  %797 = vadd.xlane.f32.xlu0 %v796
  %v798 = vpop.xlane.xlu0 %797
  %v799 = vsel %vm173, %v763, 0.0
  %800 = vadd.xlane.f32.xlu0 %v799
  %v801 = vpop.xlane.xlu0 %800
  %v802 = vsel %vm173, %v764, 0.0
  %803 = vadd.xlane.f32.xlu0 %v802
  %v804 = vpop.xlane.xlu0 %803
  %v805 = vsel %vm173, %v765, 0.0
  %806 = vadd.xlane.f32.xlu0 %v805
  %v807 = vpop.xlane.xlu0 %806
  %v808 = vsel %vm173, %v766, 0.0
  %809 = vadd.xlane.f32.xlu0 %v808
  %v810 = vpop.xlane.xlu0 %809
  %v811 = vsel %vm173, %v767, 0.0
  %812 = vadd.xlane.f32.xlu0 %v811
  %v813 = vpop.xlane.xlu0 %812
  %v814 = vsel %vm173, %v768, 0.0
  %815 = vadd.xlane.f32.xlu0 %v814
  %v816 = vpop.xlane.xlu0 %815
  %v817 = vmul.f32 %v771, %v228
  %v818 = vmul.f32 %v774, %v228
  %v819 = vmul.f32 %v777, %v228
  %v820 = vmul.f32 %v780, %v228
  %v821 = vmul.f32 %v783, %v228
  %v822 = vmul.f32 %v786, %v228
  %v823 = vmul.f32 %v789, %v228
  %v824 = vmul.f32 %v792, %v228
  %v825 = vmul.f32 %v795, %v228
  %v826 = vmul.f32 %v798, %v228
  %v827 = vmul.f32 %v801, %v228
  %v828 = vmul.f32 %v804, %v228
  %v829 = vmul.f32 %v807, %v228
  %v830 = vmul.f32 %v810, %v228
  %v831 = vmul.f32 %v813, %v228
  %v832 = vmul.f32 %v816, %v228
  %v833 = vadd.f32 %v817, 1e-05
  %v834 = vadd.f32 %v818, 1e-05
  %v835 = vadd.f32 %v819, 1e-05
  %v836 = vadd.f32 %v820, 1e-05
  %v837 = vadd.f32 %v821, 1e-05
  %v838 = vadd.f32 %v822, 1e-05
  %v839 = vadd.f32 %v823, 1e-05
  %v840 = vadd.f32 %v824, 1e-05
  %v841 = vadd.f32 %v825, 1e-05
  %v842 = vadd.f32 %v826, 1e-05
  %v843 = vadd.f32 %v827, 1e-05
  %v844 = vadd.f32 %v828, 1e-05
  %v845 = vadd.f32 %v829, 1e-05
  %v846 = vadd.f32 %v830, 1e-05
  %v847 = vadd.f32 %v831, 1e-05
  %v848 = vadd.f32 %v832, 1e-05
  %v849 = vrsqrt.pop %v833
  %v850 = vmul.f32 %v849, %v833
  %v851 = vmul.f32 %v850, %v849
  %v852 = vmul.f32 0.5, %v851
  %v853 = vsub.f32 1.5, %v852
  %v854 = vmul.f32 %v849, %v853
  %vm855 = vweird.f32 %v833
  %vm856 = vweird.f32 %v849
  %vm857 = vmor %vm855, %vm856
  %v858 = vsel %vm857, %v849, %v854
  %v859 = vrsqrt.pop %v834
  %v860 = vmul.f32 %v859, %v834
  %v861 = vmul.f32 %v860, %v859
  %v862 = vmul.f32 0.5, %v861
  %v863 = vsub.f32 1.5, %v862
  %v864 = vmul.f32 %v859, %v863
  %vm865 = vweird.f32 %v834
  %vm866 = vweird.f32 %v859
  %vm867 = vmor %vm865, %vm866
  %v868 = vsel %vm867, %v859, %v864
  %v869 = vrsqrt.pop %v835
  %v870 = vmul.f32 %v869, %v835
  %v871 = vmul.f32 %v870, %v869
  %v872 = vmul.f32 0.5, %v871
  %v873 = vsub.f32 1.5, %v872
  %v874 = vmul.f32 %v869, %v873
  %vm875 = vweird.f32 %v835
  %vm876 = vweird.f32 %v869
  %vm877 = vmor %vm875, %vm876
  %v878 = vsel %vm877, %v869, %v874
  %v879 = vrsqrt.pop %v836
  %v880 = vmul.f32 %v879, %v836
  %v881 = vmul.f32 %v880, %v879
  %v882 = vmul.f32 0.5, %v881
  %v883 = vsub.f32 1.5, %v882
  %v884 = vmul.f32 %v879, %v883
  %vm885 = vweird.f32 %v836
  %vm886 = vweird.f32 %v879
  %vm887 = vmor %vm885, %vm886
  %v888 = vsel %vm887, %v879, %v884
  %v889 = vrsqrt.pop %v837
  %v890 = vmul.f32 %v889, %v837
  %v891 = vmul.f32 %v890, %v889
  %v892 = vmul.f32 0.5, %v891
  %v893 = vsub.f32 1.5, %v892
  %v894 = vmul.f32 %v889, %v893
  %vm895 = vweird.f32 %v837
  %vm896 = vweird.f32 %v889
  %vm897 = vmor %vm895, %vm896
  %v898 = vsel %vm897, %v889, %v894
  %v899 = vrsqrt.pop %v838
  %v900 = vmul.f32 %v899, %v838
  %v901 = vmul.f32 %v900, %v899
  %v902 = vmul.f32 0.5, %v901
  %v903 = vsub.f32 1.5, %v902
  %v904 = vmul.f32 %v899, %v903
  %vm905 = vweird.f32 %v838
  %vm906 = vweird.f32 %v899
  %vm907 = vmor %vm905, %vm906
  %v908 = vsel %vm907, %v899, %v904
  %v909 = vrsqrt.pop %v839
  %v910 = vmul.f32 %v909, %v839
  %v911 = vmul.f32 %v910, %v909
  %v912 = vmul.f32 0.5, %v911
  %v913 = vsub.f32 1.5, %v912
  %v914 = vmul.f32 %v909, %v913
  %vm915 = vweird.f32 %v839
  %vm916 = vweird.f32 %v909
  %vm917 = vmor %vm915, %vm916
  %v918 = vsel %vm917, %v909, %v914
  %v919 = vrsqrt.pop %v840
  %v920 = vmul.f32 %v919, %v840
  %v921 = vmul.f32 %v920, %v919
  %v922 = vmul.f32 0.5, %v921
  %v923 = vsub.f32 1.5, %v922
  %v924 = vmul.f32 %v919, %v923
  %vm925 = vweird.f32 %v840
  %vm926 = vweird.f32 %v919
  %vm927 = vmor %vm925, %vm926
  %v928 = vsel %vm927, %v919, %v924
  %v929 = vrsqrt.pop %v841
  %v930 = vmul.f32 %v929, %v841
  %v931 = vmul.f32 %v930, %v929
  %v932 = vmul.f32 0.5, %v931
  %v933 = vsub.f32 1.5, %v932
  %v934 = vmul.f32 %v929, %v933
  %vm935 = vweird.f32 %v841
  %vm936 = vweird.f32 %v929
  %vm937 = vmor %vm935, %vm936
  %v938 = vsel %vm937, %v929, %v934
  %v939 = vrsqrt.pop %v842
  %v940 = vmul.f32 %v939, %v842
  %v941 = vmul.f32 %v940, %v939
  %v942 = vmul.f32 0.5, %v941
  %v943 = vsub.f32 1.5, %v942
  %v944 = vmul.f32 %v939, %v943
  %vm945 = vweird.f32 %v842
  %vm946 = vweird.f32 %v939
  %vm947 = vmor %vm945, %vm946
  %v948 = vsel %vm947, %v939, %v944
  %v949 = vrsqrt.pop %v843
  %v950 = vmul.f32 %v949, %v843
  %v951 = vmul.f32 %v950, %v949
  %v952 = vmul.f32 0.5, %v951
  %v953 = vsub.f32 1.5, %v952
  %v954 = vmul.f32 %v949, %v953
  %vm955 = vweird.f32 %v843
  %vm956 = vweird.f32 %v949
  %vm957 = vmor %vm955, %vm956
  %v958 = vsel %vm957, %v949, %v954
  %v959 = vrsqrt.pop %v844
  %v960 = vmul.f32 %v959, %v844
  %v961 = vmul.f32 %v960, %v959
  %v962 = vmul.f32 0.5, %v961
  %v963 = vsub.f32 1.5, %v962
  %v964 = vmul.f32 %v959, %v963
  %vm965 = vweird.f32 %v844
  %vm966 = vweird.f32 %v959
  %vm967 = vmor %vm965, %vm966
  %v968 = vsel %vm967, %v959, %v964
  %v969 = vrsqrt.pop %v845
  %v970 = vmul.f32 %v969, %v845
  %v971 = vmul.f32 %v970, %v969
  %v972 = vmul.f32 0.5, %v971
  %v973 = vsub.f32 1.5, %v972
  %v974 = vmul.f32 %v969, %v973
  %vm975 = vweird.f32 %v845
  %vm976 = vweird.f32 %v969
  %vm977 = vmor %vm975, %vm976
  %v978 = vsel %vm977, %v969, %v974
  %v979 = vrsqrt.pop %v846
  %v980 = vmul.f32 %v979, %v846
  %v981 = vmul.f32 %v980, %v979
  %v982 = vmul.f32 0.5, %v981
  %v983 = vsub.f32 1.5, %v982
  %v984 = vmul.f32 %v979, %v983
  %vm985 = vweird.f32 %v846
  %vm986 = vweird.f32 %v979
  %vm987 = vmor %vm985, %vm986
  %v988 = vsel %vm987, %v979, %v984
  %v989 = vrsqrt.pop %v847
  %v990 = vmul.f32 %v989, %v847
  %v991 = vmul.f32 %v990, %v989
  %v992 = vmul.f32 0.5, %v991
  %v993 = vsub.f32 1.5, %v992
  %v994 = vmul.f32 %v989, %v993
  %vm995 = vweird.f32 %v847
  %vm996 = vweird.f32 %v989
  %vm997 = vmor %vm995, %vm996
  %v998 = vsel %vm997, %v989, %v994
  %v999 = vrsqrt.pop %v848
  %v1000 = vmul.f32 %v999, %v848
  %v1001 = vmul.f32 %v1000, %v999
  %v1002 = vmul.f32 0.5, %v1001
  %v1003 = vsub.f32 1.5, %v1002
  %v1004 = vmul.f32 %v999, %v1003
  %vm1005 = vweird.f32 %v848
  %vm1006 = vweird.f32 %v999
  %vm1007 = vmor %vm1005, %vm1006
  %v1008 = vsel %vm1007, %v999, %v1004
  %v1009 = vmul.f32 %v737, %v858
  %v1010 = vmul.f32 %v738, %v868
  %v1011 = vmul.f32 %v739, %v878
  %v1012 = vmul.f32 %v740, %v888
  %v1013 = vmul.f32 %v741, %v898
  %v1014 = vmul.f32 %v742, %v908
  %v1015 = vmul.f32 %v743, %v918
  %v1016 = vmul.f32 %v744, %v928
  %v1017 = vmul.f32 %v745, %v938
  %v1018 = vmul.f32 %v746, %v948
  %v1019 = vmul.f32 %v747, %v958
  %v1020 = vmul.f32 %v748, %v968
  %v1021 = vmul.f32 %v749, %v978
  %v1022 = vmul.f32 %v750, %v988
  %v1023 = vmul.f32 %v751, %v998
  %v1024 = vmul.f32 %v752, %v1008
  %v1025 = vperm.slane %v45, 1
  %v1026 = vmul.f32 %v1009, %v1025
  %v1027 = vmul.f32 %v1010, %v1025
  %v1028 = vmul.f32 %v1011, %v1025
  %v1029 = vmul.f32 %v1012, %v1025
  %v1030 = vmul.f32 %v1013, %v1025
  %v1031 = vmul.f32 %v1014, %v1025
  %v1032 = vmul.f32 %v1015, %v1025
  %v1033 = vmul.f32 %v1016, %v1025
  %v1034 = vmul.f32 %v1017, %v1025
  %v1035 = vmul.f32 %v1018, %v1025
  %v1036 = vmul.f32 %v1019, %v1025
  %v1037 = vmul.f32 %v1020, %v1025
  %v1038 = vmul.f32 %v1021, %v1025
  %v1039 = vmul.f32 %v1022, %v1025
  %v1040 = vmul.f32 %v1023, %v1025
  %v1041 = vmul.f32 %v1024, %v1025
  %v1042 = vperm.slane %v46, 1
  %v1043 = vadd.f32 %v1026, %v1042
  %v1044 = vadd.f32 %v1027, %v1042
  %v1045 = vadd.f32 %v1028, %v1042
  %v1046 = vadd.f32 %v1029, %v1042
  %v1047 = vadd.f32 %v1030, %v1042
  %v1048 = vadd.f32 %v1031, %v1042
  %v1049 = vadd.f32 %v1032, %v1042
  %v1050 = vadd.f32 %v1033, %v1042
  %v1051 = vadd.f32 %v1034, %v1042
  %v1052 = vadd.f32 %v1035, %v1042
  %v1053 = vadd.f32 %v1036, %v1042
  %v1054 = vadd.f32 %v1037, %v1042
  %v1055 = vadd.f32 %v1038, %v1042
  %v1056 = vadd.f32 %v1039, %v1042
  %v1057 = vadd.f32 %v1040, %v1042
  %v1058 = vadd.f32 %v1041, %v1042
  %v1059 = vpack.c.bf16 %v1044, %v1043
  %v1060 = vpack.c.bf16 %v1046, %v1045
  %v1061 = vpack.c.bf16 %v1048, %v1047
  %v1062 = vpack.c.bf16 %v1050, %v1049
  %v1063 = vpack.c.bf16 %v1052, %v1051
  %v1064 = vpack.c.bf16 %v1054, %v1053
  %v1065 = vpack.c.bf16 %v1056, %v1055
  %v1066 = vpack.c.bf16 %v1058, %v1057
  %v1071 = vunpack.c.l.b16 %v51
  %v1072 = vunpack.c.l.b16 %v52
  %v1073 = vunpack.c.l.b16 %v53
  %v1074 = vunpack.c.l.b16 %v54
  %v1075 = vpack.c.b16 %v1072, %v1071
  %v1076 = vpack.c.b16 %v1074, %v1073
  %v1080 = vsel %vm173, %v1059, 0
  %v1083 = vsel %vm173, %v1060, 0
  %v1086 = vsel %vm173, %v1061, 0
  %v1089 = vsel %vm173, %v1062, 0
  %v1092 = vsel %vm173, %v1063, 0
  %v1095 = vsel %vm173, %v1064, 0
  %v1098 = vsel %vm173, %v1065, 0
  %v1101 = vsel %vm173, %v1066, 0
  %1103 = vmatpush.bf16.msra.mxu0 0
  %1104 = vmatpush.bf16.msra.mxu0 0
  %1105 = vmatpush.bf16.msra.mxu0 0
  %1106 = vmatpush.bf16.msra.mxu0 0
  %1107 = vmatpush.bf16.msra.mxu0 0
  %1108 = vmatpush.bf16.msra.mxu0 0
  %1109 = vmatpush.bf16.msra.mxu0 %v1076
  %1110 = vmatpush.bf16.msra.mxu0 %v1075
  %1111 = vmatmul.bf16.gmra.mxu0 %v1080
  %v1112 = vpop.f32.mrf.mxu0
  %v1113 = vadd.f32 0.0, %v1112
  %v1114 = vpop.f32.mrf.mxu0
  %v1115 = vadd.f32 0.0, %v1114
  %1116 = vmatmul.bf16.gmra.mxu0 %v1083
  %v1117 = vpop.f32.mrf.mxu0
  %v1118 = vadd.f32 0.0, %v1117
  %v1119 = vpop.f32.mrf.mxu0
  %v1120 = vadd.f32 0.0, %v1119
  %1121 = vmatmul.bf16.gmra.mxu0 %v1086
  %v1122 = vpop.f32.mrf.mxu0
  %v1123 = vadd.f32 0.0, %v1122
  %v1124 = vpop.f32.mrf.mxu0
  %v1125 = vadd.f32 0.0, %v1124
  %1126 = vmatmul.bf16.gmra.mxu0 %v1089
  %v1127 = vpop.f32.mrf.mxu0
  %v1128 = vadd.f32 0.0, %v1127
  %v1129 = vpop.f32.mrf.mxu0
  %v1130 = vadd.f32 0.0, %v1129
  %1131 = vmatmul.bf16.gmra.mxu0 %v1092
  %v1132 = vpop.f32.mrf.mxu0
  %v1133 = vadd.f32 0.0, %v1132
  %v1134 = vpop.f32.mrf.mxu0
  %v1135 = vadd.f32 0.0, %v1134
  %1136 = vmatmul.bf16.gmra.mxu0 %v1095
  %v1137 = vpop.f32.mrf.mxu0
  %v1138 = vadd.f32 0.0, %v1137
  %v1139 = vpop.f32.mrf.mxu0
  %v1140 = vadd.f32 0.0, %v1139
  %1141 = vmatmul.bf16.gmra.mxu0 %v1098
  %v1142 = vpop.f32.mrf.mxu0
  %v1143 = vadd.f32 0.0, %v1142
  %v1144 = vpop.f32.mrf.mxu0
  %v1145 = vadd.f32 0.0, %v1144
  %1146 = vmatmul.bf16.gmra.mxu0 %v1101
  %v1147 = vpop.f32.mrf.mxu0
  %v1148 = vadd.f32 0.0, %v1147
  %v1149 = vpop.f32.mrf.mxu0
  %v1150 = vadd.f32 0.0, %v1149
  %1151 = vdwg.mxu0
  %v1156 = vunpack.c.l.b16 %v47
  %v1157 = vunpack.c.l.b16 %v48
  %v1158 = vunpack.c.l.b16 %v49
  %v1159 = vunpack.c.l.b16 %v50
  %v1160 = vpack.c.b16 %v1157, %v1156
  %v1161 = vpack.c.b16 %v1159, %v1158
  %v1165 = vsel %vm173, %v567, 0
  %v1168 = vsel %vm173, %v568, 0
  %v1171 = vsel %vm173, %v569, 0
  %v1174 = vsel %vm173, %v570, 0
  %v1177 = vsel %vm173, %v571, 0
  %v1180 = vsel %vm173, %v572, 0
  %v1183 = vsel %vm173, %v573, 0
  %v1186 = vsel %vm173, %v574, 0
  %1188 = vmatpush.bf16.msra.mxu0 0
  %1189 = vmatpush.bf16.msra.mxu0 0
  %1190 = vmatpush.bf16.msra.mxu0 0
  %1191 = vmatpush.bf16.msra.mxu0 0
  %1192 = vmatpush.bf16.msra.mxu0 0
  %1193 = vmatpush.bf16.msra.mxu0 0
  %1194 = vmatpush.bf16.msra.mxu0 %v1161
  %1195 = vmatpush.bf16.msra.mxu0 %v1160
  %1196 = vmatmul.bf16.gmra.mxu0 %v1165
  %v1197 = vpop.f32.mrf.mxu0
  %v1198 = vadd.f32 %v1113, %v1197
  %v1199 = vpop.f32.mrf.mxu0
  %v1200 = vadd.f32 %v1115, %v1199
  %1201 = vmatmul.bf16.gmra.mxu0 %v1168
  %v1202 = vpop.f32.mrf.mxu0
  %v1203 = vadd.f32 %v1118, %v1202
  %v1204 = vpop.f32.mrf.mxu0
  %v1205 = vadd.f32 %v1120, %v1204
  %1206 = vmatmul.bf16.gmra.mxu0 %v1171
  %v1207 = vpop.f32.mrf.mxu0
  %v1208 = vadd.f32 %v1123, %v1207
  %v1209 = vpop.f32.mrf.mxu0
  %v1210 = vadd.f32 %v1125, %v1209
  %1211 = vmatmul.bf16.gmra.mxu0 %v1174
  %v1212 = vpop.f32.mrf.mxu0
  %v1213 = vadd.f32 %v1128, %v1212
  %v1214 = vpop.f32.mrf.mxu0
  %v1215 = vadd.f32 %v1130, %v1214
  %1216 = vmatmul.bf16.gmra.mxu0 %v1177
  %v1217 = vpop.f32.mrf.mxu0
  %v1218 = vadd.f32 %v1133, %v1217
  %v1219 = vpop.f32.mrf.mxu0
  %v1220 = vadd.f32 %v1135, %v1219
  %1221 = vmatmul.bf16.gmra.mxu0 %v1180
  %v1222 = vpop.f32.mrf.mxu0
  %v1223 = vadd.f32 %v1138, %v1222
  %v1224 = vpop.f32.mrf.mxu0
  %v1225 = vadd.f32 %v1140, %v1224
  %1226 = vmatmul.bf16.gmra.mxu0 %v1183
  %v1227 = vpop.f32.mrf.mxu0
  %v1228 = vadd.f32 %v1143, %v1227
  %v1229 = vpop.f32.mrf.mxu0
  %v1230 = vadd.f32 %v1145, %v1229
  %1231 = vmatmul.bf16.gmra.mxu0 %v1186
  %v1232 = vpop.f32.mrf.mxu0
  %v1233 = vadd.f32 %v1148, %v1232
  %v1234 = vpop.f32.mrf.mxu0
  %v1235 = vadd.f32 %v1150, %v1234
  %1236 = vdwg.mxu0
  %1237 = vset.pattern.permute.xlu0 2
  %1238 = vperm.xlu0 %1237, %v27
  %v1239 = vpop.permute.xlu0 %1238
  %1241 = vset.pattern.permute.xlu0 2
  %1242 = vperm.xlu0 %1241, %v28
  %v1243 = vpop.permute.xlu0 %1242
  %1245 = vset.pattern.permute.xlu0 2
  %1246 = vperm.xlu0 %1245, %v29
  %v1247 = vpop.permute.xlu0 %1246
  %1249 = vset.pattern.permute.xlu0 2
  %1250 = vperm.xlu0 %1249, %v30
  %v1251 = vpop.permute.xlu0 %1250
  %1253 = vset.pattern.permute.xlu0 2
  %1254 = vperm.xlu0 %1253, %v31
  %v1255 = vpop.permute.xlu0 %1254
  %1257 = vset.pattern.permute.xlu0 2
  %1258 = vperm.xlu0 %1257, %v32
  %v1259 = vpop.permute.xlu0 %1258
  %1261 = vset.pattern.permute.xlu0 2
  %1262 = vperm.xlu0 %1261, %v33
  %v1263 = vpop.permute.xlu0 %1262
  %1265 = vset.pattern.permute.xlu0 2
  %1266 = vperm.xlu0 %1265, %v34
  %v1267 = vpop.permute.xlu0 %1266
  %1269 = vset.pattern.permute.xlu0 2
  %1270 = vperm.xlu0 %1269, %v35
  %v1271 = vpop.permute.xlu0 %1270
  %1273 = vset.pattern.permute.xlu0 2
  %1274 = vperm.xlu0 %1273, %v36
  %v1275 = vpop.permute.xlu0 %1274
  %1277 = vset.pattern.permute.xlu0 2
  %1278 = vperm.xlu0 %1277, %v37
  %v1279 = vpop.permute.xlu0 %1278
  %1281 = vset.pattern.permute.xlu0 2
  %1282 = vperm.xlu0 %1281, %v38
  %v1283 = vpop.permute.xlu0 %1282
  %1285 = vset.pattern.permute.xlu0 2
  %1286 = vperm.xlu0 %1285, %v39
  %v1287 = vpop.permute.xlu0 %1286
  %1289 = vset.pattern.permute.xlu0 2
  %1290 = vperm.xlu0 %1289, %v40
  %v1291 = vpop.permute.xlu0 %1290
  %1293 = vset.pattern.permute.xlu0 2
  %1294 = vperm.xlu0 %1293, %v41
  %v1295 = vpop.permute.xlu0 %1294
  %1297 = vset.pattern.permute.xlu0 2
  %1298 = vperm.xlu0 %1297, %v42
  %v1299 = vpop.permute.xlu0 %1298
  %v1301 = vperm.slane %v43, 2
  %v1302 = vmul.f32 %v1239, %v1301
  %v1303 = vmul.f32 %v1243, %v1301
  %v1304 = vmul.f32 %v1247, %v1301
  %v1305 = vmul.f32 %v1251, %v1301
  %v1306 = vmul.f32 %v1255, %v1301
  %v1307 = vmul.f32 %v1259, %v1301
  %v1308 = vmul.f32 %v1263, %v1301
  %v1309 = vmul.f32 %v1267, %v1301
  %v1310 = vmul.f32 %v1271, %v1301
  %v1311 = vmul.f32 %v1275, %v1301
  %v1312 = vmul.f32 %v1279, %v1301
  %v1313 = vmul.f32 %v1283, %v1301
  %v1314 = vmul.f32 %v1287, %v1301
  %v1315 = vmul.f32 %v1291, %v1301
  %v1316 = vmul.f32 %v1295, %v1301
  %v1317 = vmul.f32 %v1299, %v1301
  %v1318 = vperm.slane %v44, 2
  %v1319 = vadd.f32 %v1302, %v1318
  %v1320 = vadd.f32 %v1303, %v1318
  %v1321 = vadd.f32 %v1304, %v1318
  %v1322 = vadd.f32 %v1305, %v1318
  %v1323 = vadd.f32 %v1306, %v1318
  %v1324 = vadd.f32 %v1307, %v1318
  %v1325 = vadd.f32 %v1308, %v1318
  %v1326 = vadd.f32 %v1309, %v1318
  %v1327 = vadd.f32 %v1310, %v1318
  %v1328 = vadd.f32 %v1311, %v1318
  %v1329 = vadd.f32 %v1312, %v1318
  %v1330 = vadd.f32 %v1313, %v1318
  %v1331 = vadd.f32 %v1314, %v1318
  %v1332 = vadd.f32 %v1315, %v1318
  %v1333 = vadd.f32 %v1316, %v1318
  %v1334 = vadd.f32 %v1317, %v1318
  %v1335 = vsel %vm173, %v1319, 0.0
  %1336 = vadd.xlane.f32.xlu0 %v1335
  %v1337 = vpop.xlane.xlu0 %1336
  %v1338 = vsel %vm173, %v1320, 0.0
  %1339 = vadd.xlane.f32.xlu0 %v1338
  %v1340 = vpop.xlane.xlu0 %1339
  %v1341 = vsel %vm173, %v1321, 0.0
  %1342 = vadd.xlane.f32.xlu0 %v1341
  %v1343 = vpop.xlane.xlu0 %1342
  %v1344 = vsel %vm173, %v1322, 0.0
  %1345 = vadd.xlane.f32.xlu0 %v1344
  %v1346 = vpop.xlane.xlu0 %1345
  %v1347 = vsel %vm173, %v1323, 0.0
  %1348 = vadd.xlane.f32.xlu0 %v1347
  %v1349 = vpop.xlane.xlu0 %1348
  %v1350 = vsel %vm173, %v1324, 0.0
  %1351 = vadd.xlane.f32.xlu0 %v1350
  %v1352 = vpop.xlane.xlu0 %1351
  %v1353 = vsel %vm173, %v1325, 0.0
  %1354 = vadd.xlane.f32.xlu0 %v1353
  %v1355 = vpop.xlane.xlu0 %1354
  %v1356 = vsel %vm173, %v1326, 0.0
  %1357 = vadd.xlane.f32.xlu0 %v1356
  %v1358 = vpop.xlane.xlu0 %1357
  %v1359 = vsel %vm173, %v1327, 0.0
  %1360 = vadd.xlane.f32.xlu0 %v1359
  %v1361 = vpop.xlane.xlu0 %1360
  %v1362 = vsel %vm173, %v1328, 0.0
  %1363 = vadd.xlane.f32.xlu0 %v1362
  %v1364 = vpop.xlane.xlu0 %1363
  %v1365 = vsel %vm173, %v1329, 0.0
  %1366 = vadd.xlane.f32.xlu0 %v1365
  %v1367 = vpop.xlane.xlu0 %1366
  %v1368 = vsel %vm173, %v1330, 0.0
  %1369 = vadd.xlane.f32.xlu0 %v1368
  %v1370 = vpop.xlane.xlu0 %1369
  %v1371 = vsel %vm173, %v1331, 0.0
  %1372 = vadd.xlane.f32.xlu0 %v1371
  %v1373 = vpop.xlane.xlu0 %1372
  %v1374 = vsel %vm173, %v1332, 0.0
  %1375 = vadd.xlane.f32.xlu0 %v1374
  %v1376 = vpop.xlane.xlu0 %1375
  %v1377 = vsel %vm173, %v1333, 0.0
  %1378 = vadd.xlane.f32.xlu0 %v1377
  %v1379 = vpop.xlane.xlu0 %1378
  %v1380 = vsel %vm173, %v1334, 0.0
  %1381 = vadd.xlane.f32.xlu0 %v1380
  %v1382 = vpop.xlane.xlu0 %1381
  %v1383 = vmul.f32 %v1337, %v228
  %v1384 = vmul.f32 %v1340, %v228
  %v1385 = vmul.f32 %v1343, %v228
  %v1386 = vmul.f32 %v1346, %v228
  %v1387 = vmul.f32 %v1349, %v228
  %v1388 = vmul.f32 %v1352, %v228
  %v1389 = vmul.f32 %v1355, %v228
  %v1390 = vmul.f32 %v1358, %v228
  %v1391 = vmul.f32 %v1361, %v228
  %v1392 = vmul.f32 %v1364, %v228
  %v1393 = vmul.f32 %v1367, %v228
  %v1394 = vmul.f32 %v1370, %v228
  %v1395 = vmul.f32 %v1373, %v228
  %v1396 = vmul.f32 %v1376, %v228
  %v1397 = vmul.f32 %v1379, %v228
  %v1398 = vmul.f32 %v1382, %v228
  %v1399 = vsub.f32 %v1319, %v1383
  %v1400 = vsub.f32 %v1320, %v1384
  %v1401 = vsub.f32 %v1321, %v1385
  %v1402 = vsub.f32 %v1322, %v1386
  %v1403 = vsub.f32 %v1323, %v1387
  %v1404 = vsub.f32 %v1324, %v1388
  %v1405 = vsub.f32 %v1325, %v1389
  %v1406 = vsub.f32 %v1326, %v1390
  %v1407 = vsub.f32 %v1327, %v1391
  %v1408 = vsub.f32 %v1328, %v1392
  %v1409 = vsub.f32 %v1329, %v1393
  %v1410 = vsub.f32 %v1330, %v1394
  %v1411 = vsub.f32 %v1331, %v1395
  %v1412 = vsub.f32 %v1332, %v1396
  %v1413 = vsub.f32 %v1333, %v1397
  %v1414 = vsub.f32 %v1334, %v1398
  %v1415 = vmul.f32 %v1399, %v1399
  %v1416 = vmul.f32 %v1400, %v1400
  %v1417 = vmul.f32 %v1401, %v1401
  %v1418 = vmul.f32 %v1402, %v1402
  %v1419 = vmul.f32 %v1403, %v1403
  %v1420 = vmul.f32 %v1404, %v1404
  %v1421 = vmul.f32 %v1405, %v1405
  %v1422 = vmul.f32 %v1406, %v1406
  %v1423 = vmul.f32 %v1407, %v1407
  %v1424 = vmul.f32 %v1408, %v1408
  %v1425 = vmul.f32 %v1409, %v1409
  %v1426 = vmul.f32 %v1410, %v1410
  %v1427 = vmul.f32 %v1411, %v1411
  %v1428 = vmul.f32 %v1412, %v1412
  %v1429 = vmul.f32 %v1413, %v1413
  %v1430 = vmul.f32 %v1414, %v1414
  %v1431 = vsel %vm173, %v1415, 0.0
  %1432 = vadd.xlane.f32.xlu0 %v1431
  %v1433 = vpop.xlane.xlu0 %1432
  %v1434 = vsel %vm173, %v1416, 0.0
  %1435 = vadd.xlane.f32.xlu0 %v1434
  %v1436 = vpop.xlane.xlu0 %1435
  %v1437 = vsel %vm173, %v1417, 0.0
  %1438 = vadd.xlane.f32.xlu0 %v1437
  %v1439 = vpop.xlane.xlu0 %1438
  %v1440 = vsel %vm173, %v1418, 0.0
  %1441 = vadd.xlane.f32.xlu0 %v1440
  %v1442 = vpop.xlane.xlu0 %1441
  %v1443 = vsel %vm173, %v1419, 0.0
  %1444 = vadd.xlane.f32.xlu0 %v1443
  %v1445 = vpop.xlane.xlu0 %1444
  %v1446 = vsel %vm173, %v1420, 0.0
  %1447 = vadd.xlane.f32.xlu0 %v1446
  %v1448 = vpop.xlane.xlu0 %1447
  %v1449 = vsel %vm173, %v1421, 0.0
  %1450 = vadd.xlane.f32.xlu0 %v1449
  %v1451 = vpop.xlane.xlu0 %1450
  %v1452 = vsel %vm173, %v1422, 0.0
  %1453 = vadd.xlane.f32.xlu0 %v1452
  %v1454 = vpop.xlane.xlu0 %1453
  %v1455 = vsel %vm173, %v1423, 0.0
  %1456 = vadd.xlane.f32.xlu0 %v1455
  %v1457 = vpop.xlane.xlu0 %1456
  %v1458 = vsel %vm173, %v1424, 0.0
  %1459 = vadd.xlane.f32.xlu0 %v1458
  %v1460 = vpop.xlane.xlu0 %1459
  %v1461 = vsel %vm173, %v1425, 0.0
  %1462 = vadd.xlane.f32.xlu0 %v1461
  %v1463 = vpop.xlane.xlu0 %1462
  %v1464 = vsel %vm173, %v1426, 0.0
  %1465 = vadd.xlane.f32.xlu0 %v1464
  %v1466 = vpop.xlane.xlu0 %1465
  %v1467 = vsel %vm173, %v1427, 0.0
  %1468 = vadd.xlane.f32.xlu0 %v1467
  %v1469 = vpop.xlane.xlu0 %1468
  %v1470 = vsel %vm173, %v1428, 0.0
  %1471 = vadd.xlane.f32.xlu0 %v1470
  %v1472 = vpop.xlane.xlu0 %1471
  %v1473 = vsel %vm173, %v1429, 0.0
  %1474 = vadd.xlane.f32.xlu0 %v1473
  %v1475 = vpop.xlane.xlu0 %1474
  %v1476 = vsel %vm173, %v1430, 0.0
  %1477 = vadd.xlane.f32.xlu0 %v1476
  %v1478 = vpop.xlane.xlu0 %1477
  %v1479 = vmul.f32 %v1433, %v228
  %v1480 = vmul.f32 %v1436, %v228
  %v1481 = vmul.f32 %v1439, %v228
  %v1482 = vmul.f32 %v1442, %v228
  %v1483 = vmul.f32 %v1445, %v228
  %v1484 = vmul.f32 %v1448, %v228
  %v1485 = vmul.f32 %v1451, %v228
  %v1486 = vmul.f32 %v1454, %v228
  %v1487 = vmul.f32 %v1457, %v228
  %v1488 = vmul.f32 %v1460, %v228
  %v1489 = vmul.f32 %v1463, %v228
  %v1490 = vmul.f32 %v1466, %v228
  %v1491 = vmul.f32 %v1469, %v228
  %v1492 = vmul.f32 %v1472, %v228
  %v1493 = vmul.f32 %v1475, %v228
  %v1494 = vmul.f32 %v1478, %v228
  %v1495 = vadd.f32 %v1479, 1e-05
  %v1496 = vadd.f32 %v1480, 1e-05
  %v1497 = vadd.f32 %v1481, 1e-05
  %v1498 = vadd.f32 %v1482, 1e-05
  %v1499 = vadd.f32 %v1483, 1e-05
  %v1500 = vadd.f32 %v1484, 1e-05
  %v1501 = vadd.f32 %v1485, 1e-05
  %v1502 = vadd.f32 %v1486, 1e-05
  %v1503 = vadd.f32 %v1487, 1e-05
  %v1504 = vadd.f32 %v1488, 1e-05
  %v1505 = vadd.f32 %v1489, 1e-05
  %v1506 = vadd.f32 %v1490, 1e-05
  %v1507 = vadd.f32 %v1491, 1e-05
  %v1508 = vadd.f32 %v1492, 1e-05
  %v1509 = vadd.f32 %v1493, 1e-05
  %v1510 = vadd.f32 %v1494, 1e-05
  %v1511 = vrsqrt.pop %v1495
  %v1512 = vmul.f32 %v1511, %v1495
  %v1513 = vmul.f32 %v1512, %v1511
  %v1514 = vmul.f32 0.5, %v1513
  %v1515 = vsub.f32 1.5, %v1514
  %v1516 = vmul.f32 %v1511, %v1515
  %vm1517 = vweird.f32 %v1495
  %vm1518 = vweird.f32 %v1511
  %vm1519 = vmor %vm1517, %vm1518
  %v1520 = vsel %vm1519, %v1511, %v1516
  %v1521 = vrsqrt.pop %v1496
  %v1522 = vmul.f32 %v1521, %v1496
  %v1523 = vmul.f32 %v1522, %v1521
  %v1524 = vmul.f32 0.5, %v1523
  %v1525 = vsub.f32 1.5, %v1524
  %v1526 = vmul.f32 %v1521, %v1525
  %vm1527 = vweird.f32 %v1496
  %vm1528 = vweird.f32 %v1521
  %vm1529 = vmor %vm1527, %vm1528
  %v1530 = vsel %vm1529, %v1521, %v1526
  %v1531 = vrsqrt.pop %v1497
  %v1532 = vmul.f32 %v1531, %v1497
  %v1533 = vmul.f32 %v1532, %v1531
  %v1534 = vmul.f32 0.5, %v1533
  %v1535 = vsub.f32 1.5, %v1534
  %v1536 = vmul.f32 %v1531, %v1535
  %vm1537 = vweird.f32 %v1497
  %vm1538 = vweird.f32 %v1531
  %vm1539 = vmor %vm1537, %vm1538
  %v1540 = vsel %vm1539, %v1531, %v1536
  %v1541 = vrsqrt.pop %v1498
  %v1542 = vmul.f32 %v1541, %v1498
  %v1543 = vmul.f32 %v1542, %v1541
  %v1544 = vmul.f32 0.5, %v1543
  %v1545 = vsub.f32 1.5, %v1544
  %v1546 = vmul.f32 %v1541, %v1545
  %vm1547 = vweird.f32 %v1498
  %vm1548 = vweird.f32 %v1541
  %vm1549 = vmor %vm1547, %vm1548
  %v1550 = vsel %vm1549, %v1541, %v1546
  %v1551 = vrsqrt.pop %v1499
  %v1552 = vmul.f32 %v1551, %v1499
  %v1553 = vmul.f32 %v1552, %v1551
  %v1554 = vmul.f32 0.5, %v1553
  %v1555 = vsub.f32 1.5, %v1554
  %v1556 = vmul.f32 %v1551, %v1555
  %vm1557 = vweird.f32 %v1499
  %vm1558 = vweird.f32 %v1551
  %vm1559 = vmor %vm1557, %vm1558
  %v1560 = vsel %vm1559, %v1551, %v1556
  %v1561 = vrsqrt.pop %v1500
  %v1562 = vmul.f32 %v1561, %v1500
  %v1563 = vmul.f32 %v1562, %v1561
  %v1564 = vmul.f32 0.5, %v1563
  %v1565 = vsub.f32 1.5, %v1564
  %v1566 = vmul.f32 %v1561, %v1565
  %vm1567 = vweird.f32 %v1500
  %vm1568 = vweird.f32 %v1561
  %vm1569 = vmor %vm1567, %vm1568
  %v1570 = vsel %vm1569, %v1561, %v1566
  %v1571 = vrsqrt.pop %v1501
  %v1572 = vmul.f32 %v1571, %v1501
  %v1573 = vmul.f32 %v1572, %v1571
  %v1574 = vmul.f32 0.5, %v1573
  %v1575 = vsub.f32 1.5, %v1574
  %v1576 = vmul.f32 %v1571, %v1575
  %vm1577 = vweird.f32 %v1501
  %vm1578 = vweird.f32 %v1571
  %vm1579 = vmor %vm1577, %vm1578
  %v1580 = vsel %vm1579, %v1571, %v1576
  %v1581 = vrsqrt.pop %v1502
  %v1582 = vmul.f32 %v1581, %v1502
  %v1583 = vmul.f32 %v1582, %v1581
  %v1584 = vmul.f32 0.5, %v1583
  %v1585 = vsub.f32 1.5, %v1584
  %v1586 = vmul.f32 %v1581, %v1585
  %vm1587 = vweird.f32 %v1502
  %vm1588 = vweird.f32 %v1581
  %vm1589 = vmor %vm1587, %vm1588
  %v1590 = vsel %vm1589, %v1581, %v1586
  %v1591 = vrsqrt.pop %v1503
  %v1592 = vmul.f32 %v1591, %v1503
  %v1593 = vmul.f32 %v1592, %v1591
  %v1594 = vmul.f32 0.5, %v1593
  %v1595 = vsub.f32 1.5, %v1594
  %v1596 = vmul.f32 %v1591, %v1595
  %vm1597 = vweird.f32 %v1503
  %vm1598 = vweird.f32 %v1591
  %vm1599 = vmor %vm1597, %vm1598
  %v1600 = vsel %vm1599, %v1591, %v1596
  %v1601 = vrsqrt.pop %v1504
  %v1602 = vmul.f32 %v1601, %v1504
  %v1603 = vmul.f32 %v1602, %v1601
  %v1604 = vmul.f32 0.5, %v1603
  %v1605 = vsub.f32 1.5, %v1604
  %v1606 = vmul.f32 %v1601, %v1605
  %vm1607 = vweird.f32 %v1504
  %vm1608 = vweird.f32 %v1601
  %vm1609 = vmor %vm1607, %vm1608
  %v1610 = vsel %vm1609, %v1601, %v1606
  %v1611 = vrsqrt.pop %v1505
  %v1612 = vmul.f32 %v1611, %v1505
  %v1613 = vmul.f32 %v1612, %v1611
  %v1614 = vmul.f32 0.5, %v1613
  %v1615 = vsub.f32 1.5, %v1614
  %v1616 = vmul.f32 %v1611, %v1615
  %vm1617 = vweird.f32 %v1505
  %vm1618 = vweird.f32 %v1611
  %vm1619 = vmor %vm1617, %vm1618
  %v1620 = vsel %vm1619, %v1611, %v1616
  %v1621 = vrsqrt.pop %v1506
  %v1622 = vmul.f32 %v1621, %v1506
  %v1623 = vmul.f32 %v1622, %v1621
  %v1624 = vmul.f32 0.5, %v1623
  %v1625 = vsub.f32 1.5, %v1624
  %v1626 = vmul.f32 %v1621, %v1625
  %vm1627 = vweird.f32 %v1506
  %vm1628 = vweird.f32 %v1621
  %vm1629 = vmor %vm1627, %vm1628
  %v1630 = vsel %vm1629, %v1621, %v1626
  %v1631 = vrsqrt.pop %v1507
  %v1632 = vmul.f32 %v1631, %v1507
  %v1633 = vmul.f32 %v1632, %v1631
  %v1634 = vmul.f32 0.5, %v1633
  %v1635 = vsub.f32 1.5, %v1634
  %v1636 = vmul.f32 %v1631, %v1635
  %vm1637 = vweird.f32 %v1507
  %vm1638 = vweird.f32 %v1631
  %vm1639 = vmor %vm1637, %vm1638
  %v1640 = vsel %vm1639, %v1631, %v1636
  %v1641 = vrsqrt.pop %v1508
  %v1642 = vmul.f32 %v1641, %v1508
  %v1643 = vmul.f32 %v1642, %v1641
  %v1644 = vmul.f32 0.5, %v1643
  %v1645 = vsub.f32 1.5, %v1644
  %v1646 = vmul.f32 %v1641, %v1645
  %vm1647 = vweird.f32 %v1508
  %vm1648 = vweird.f32 %v1641
  %vm1649 = vmor %vm1647, %vm1648
  %v1650 = vsel %vm1649, %v1641, %v1646
  %v1651 = vrsqrt.pop %v1509
  %v1652 = vmul.f32 %v1651, %v1509
  %v1653 = vmul.f32 %v1652, %v1651
  %v1654 = vmul.f32 0.5, %v1653
  %v1655 = vsub.f32 1.5, %v1654
  %v1656 = vmul.f32 %v1651, %v1655
  %vm1657 = vweird.f32 %v1509
  %vm1658 = vweird.f32 %v1651
  %vm1659 = vmor %vm1657, %vm1658
  %v1660 = vsel %vm1659, %v1651, %v1656
  %v1661 = vrsqrt.pop %v1510
  %v1662 = vmul.f32 %v1661, %v1510
  %v1663 = vmul.f32 %v1662, %v1661
  %v1664 = vmul.f32 0.5, %v1663
  %v1665 = vsub.f32 1.5, %v1664
  %v1666 = vmul.f32 %v1661, %v1665
  %vm1667 = vweird.f32 %v1510
  %vm1668 = vweird.f32 %v1661
  %vm1669 = vmor %vm1667, %vm1668
  %v1670 = vsel %vm1669, %v1661, %v1666
  %v1671 = vmul.f32 %v1399, %v1520
  %v1672 = vmul.f32 %v1400, %v1530
  %v1673 = vmul.f32 %v1401, %v1540
  %v1674 = vmul.f32 %v1402, %v1550
  %v1675 = vmul.f32 %v1403, %v1560
  %v1676 = vmul.f32 %v1404, %v1570
  %v1677 = vmul.f32 %v1405, %v1580
  %v1678 = vmul.f32 %v1406, %v1590
  %v1679 = vmul.f32 %v1407, %v1600
  %v1680 = vmul.f32 %v1408, %v1610
  %v1681 = vmul.f32 %v1409, %v1620
  %v1682 = vmul.f32 %v1410, %v1630
  %v1683 = vmul.f32 %v1411, %v1640
  %v1684 = vmul.f32 %v1412, %v1650
  %v1685 = vmul.f32 %v1413, %v1660
  %v1686 = vmul.f32 %v1414, %v1670
  %v1687 = vperm.slane %v45, 2
  %v1688 = vmul.f32 %v1671, %v1687
  %v1689 = vmul.f32 %v1672, %v1687
  %v1690 = vmul.f32 %v1673, %v1687
  %v1691 = vmul.f32 %v1674, %v1687
  %v1692 = vmul.f32 %v1675, %v1687
  %v1693 = vmul.f32 %v1676, %v1687
  %v1694 = vmul.f32 %v1677, %v1687
  %v1695 = vmul.f32 %v1678, %v1687
  %v1696 = vmul.f32 %v1679, %v1687
  %v1697 = vmul.f32 %v1680, %v1687
  %v1698 = vmul.f32 %v1681, %v1687
  %v1699 = vmul.f32 %v1682, %v1687
  %v1700 = vmul.f32 %v1683, %v1687
  %v1701 = vmul.f32 %v1684, %v1687
  %v1702 = vmul.f32 %v1685, %v1687
  %v1703 = vmul.f32 %v1686, %v1687
  %v1704 = vperm.slane %v46, 2
  %v1705 = vadd.f32 %v1688, %v1704
  %v1706 = vadd.f32 %v1689, %v1704
  %v1707 = vadd.f32 %v1690, %v1704
  %v1708 = vadd.f32 %v1691, %v1704
  %v1709 = vadd.f32 %v1692, %v1704
  %v1710 = vadd.f32 %v1693, %v1704
  %v1711 = vadd.f32 %v1694, %v1704
  %v1712 = vadd.f32 %v1695, %v1704
  %v1713 = vadd.f32 %v1696, %v1704
  %v1714 = vadd.f32 %v1697, %v1704
  %v1715 = vadd.f32 %v1698, %v1704
  %v1716 = vadd.f32 %v1699, %v1704
  %v1717 = vadd.f32 %v1700, %v1704
  %v1718 = vadd.f32 %v1701, %v1704
  %v1719 = vadd.f32 %v1702, %v1704
  %v1720 = vadd.f32 %v1703, %v1704
  %v1721 = vpack.c.bf16 %v1706, %v1705
  %v1722 = vpack.c.bf16 %v1708, %v1707
  %v1723 = vpack.c.bf16 %v1710, %v1709
  %v1724 = vpack.c.bf16 %v1712, %v1711
  %v1725 = vpack.c.bf16 %v1714, %v1713
  %v1726 = vpack.c.bf16 %v1716, %v1715
  %v1727 = vpack.c.bf16 %v1718, %v1717
  %v1728 = vpack.c.bf16 %v1720, %v1719
  %v1733 = vunpack.c.l.b16 %v55
  %v1734 = vunpack.c.l.b16 %v56
  %v1735 = vunpack.c.l.b16 %v57
  %v1736 = vunpack.c.l.b16 %v58
  %v1737 = vpack.c.b16 %v1734, %v1733
  %v1738 = vpack.c.b16 %v1736, %v1735
  %v1742 = vsel %vm173, %v1721, 0
  %v1745 = vsel %vm173, %v1722, 0
  %v1748 = vsel %vm173, %v1723, 0
  %v1751 = vsel %vm173, %v1724, 0
  %v1754 = vsel %vm173, %v1725, 0
  %v1757 = vsel %vm173, %v1726, 0
  %v1760 = vsel %vm173, %v1727, 0
  %v1763 = vsel %vm173, %v1728, 0
  %1765 = vmatpush.bf16.msra.mxu0 0
  %1766 = vmatpush.bf16.msra.mxu0 0
  %1767 = vmatpush.bf16.msra.mxu0 0
  %1768 = vmatpush.bf16.msra.mxu0 0
  %1769 = vmatpush.bf16.msra.mxu0 0
  %1770 = vmatpush.bf16.msra.mxu0 0
  %1771 = vmatpush.bf16.msra.mxu0 %v1738
  %1772 = vmatpush.bf16.msra.mxu0 %v1737
  %1773 = vmatmul.bf16.gmra.mxu0 %v1742
  %v1774 = vpop.f32.mrf.mxu0
  %v1775 = vadd.f32 0.0, %v1774
  %v1776 = vpop.f32.mrf.mxu0
  %v1777 = vadd.f32 0.0, %v1776
  %1778 = vmatmul.bf16.gmra.mxu0 %v1745
  %v1779 = vpop.f32.mrf.mxu0
  %v1780 = vadd.f32 0.0, %v1779
  %v1781 = vpop.f32.mrf.mxu0
  %v1782 = vadd.f32 0.0, %v1781
  %1783 = vmatmul.bf16.gmra.mxu0 %v1748
  %v1784 = vpop.f32.mrf.mxu0
  %v1785 = vadd.f32 0.0, %v1784
  %v1786 = vpop.f32.mrf.mxu0
  %v1787 = vadd.f32 0.0, %v1786
  %1788 = vmatmul.bf16.gmra.mxu0 %v1751
  %v1789 = vpop.f32.mrf.mxu0
  %v1790 = vadd.f32 0.0, %v1789
  %v1791 = vpop.f32.mrf.mxu0
  %v1792 = vadd.f32 0.0, %v1791
  %1793 = vmatmul.bf16.gmra.mxu0 %v1754
  %v1794 = vpop.f32.mrf.mxu0
  %v1795 = vadd.f32 0.0, %v1794
  %v1796 = vpop.f32.mrf.mxu0
  %v1797 = vadd.f32 0.0, %v1796
  %1798 = vmatmul.bf16.gmra.mxu0 %v1757
  %v1799 = vpop.f32.mrf.mxu0
  %v1800 = vadd.f32 0.0, %v1799
  %v1801 = vpop.f32.mrf.mxu0
  %v1802 = vadd.f32 0.0, %v1801
  %1803 = vmatmul.bf16.gmra.mxu0 %v1760
  %v1804 = vpop.f32.mrf.mxu0
  %v1805 = vadd.f32 0.0, %v1804
  %v1806 = vpop.f32.mrf.mxu0
  %v1807 = vadd.f32 0.0, %v1806
  %1808 = vmatmul.bf16.gmra.mxu0 %v1763
  %v1809 = vpop.f32.mrf.mxu0
  %v1810 = vadd.f32 0.0, %v1809
  %v1811 = vpop.f32.mrf.mxu0
  %v1812 = vadd.f32 0.0, %v1811
  %1813 = vdwg.mxu0
  %v1814 = vadd.f32 %v1198, %v1775
  %v1815 = vadd.f32 %v1200, %v1777
  %v1816 = vadd.f32 %v1203, %v1780
  %v1817 = vadd.f32 %v1205, %v1782
  %v1818 = vadd.f32 %v1208, %v1785
  %v1819 = vadd.f32 %v1210, %v1787
  %v1820 = vadd.f32 %v1213, %v1790
  %v1821 = vadd.f32 %v1215, %v1792
  %v1822 = vadd.f32 %v1218, %v1795
  %v1823 = vadd.f32 %v1220, %v1797
  %v1824 = vadd.f32 %v1223, %v1800
  %v1825 = vadd.f32 %v1225, %v1802
  %v1826 = vadd.f32 %v1228, %v1805
  %v1827 = vadd.f32 %v1230, %v1807
  %v1828 = vadd.f32 %v1233, %v1810
  %v1829 = vadd.f32 %v1235, %v1812
  %v1830 = vld [vmem:[%s6] sm:$0x1]
  %v1832 = vperm.slane %v1830, 0
  %v1834 = vadd.f32 %v1814, %v1832
  %v1835 = vadd.f32 %v1815, %v1832
  %v1836 = vadd.f32 %v1816, %v1832
  %v1837 = vadd.f32 %v1817, %v1832
  %v1838 = vadd.f32 %v1818, %v1832
  %v1839 = vadd.f32 %v1819, %v1832
  %v1840 = vadd.f32 %v1820, %v1832
  %v1841 = vadd.f32 %v1821, %v1832
  %v1842 = vadd.f32 %v1822, %v1832
  %v1843 = vadd.f32 %v1823, %v1832
  %v1844 = vadd.f32 %v1824, %v1832
  %v1845 = vadd.f32 %v1825, %v1832
  %v1846 = vadd.f32 %v1826, %v1832
  %v1847 = vadd.f32 %v1827, %v1832
  %v1848 = vadd.f32 %v1828, %v1832
  %v1849 = vadd.f32 %v1829, %v1832
  %v1850 = vpack.c.bf16 %v1834, %v1834
  %v1851 = vpack.c.bf16 %v1835, %v1835
  %v1852 = vpack.c.bf16 %v1836, %v1836
  %v1853 = vpack.c.bf16 %v1837, %v1837
  %v1854 = vpack.c.bf16 %v1838, %v1838
  %v1855 = vpack.c.bf16 %v1839, %v1839
  %v1856 = vpack.c.bf16 %v1840, %v1840
  %v1857 = vpack.c.bf16 %v1841, %v1841
  %v1858 = vpack.c.bf16 %v1842, %v1842
  %v1859 = vpack.c.bf16 %v1843, %v1843
  %v1860 = vpack.c.bf16 %v1844, %v1844
  %v1861 = vpack.c.bf16 %v1845, %v1845
  %v1862 = vpack.c.bf16 %v1846, %v1846
  %v1863 = vpack.c.bf16 %v1847, %v1847
  %v1864 = vpack.c.bf16 %v1848, %v1848
  %v1865 = vpack.c.bf16 %v1849, %v1849
  %vm1866 = vcmask 257024
  %1867 = vst.msk [vmem:[%s7] sm:$0xf] %vm1866, %v1850
  %1868 = vst.msk [vmem:[%s7 + $0x4] sm:$0xf] %vm1866, %v1851
  %1869 = vst.msk [vmem:[%s7 + $0x8] sm:$0xf] %vm1866, %v1852
  %1870 = vst.msk [vmem:[%s7 + $0xc] sm:$0xf] %vm1866, %v1853
  %1871 = vst.msk [vmem:[%s7 + $0x10] sm:$0xf] %vm1866, %v1854
  %1872 = vst.msk [vmem:[%s7 + $0x14] sm:$0xf] %vm1866, %v1855
  %1873 = vst.msk [vmem:[%s7 + $0x18] sm:$0xf] %vm1866, %v1856
  %1874 = vst.msk [vmem:[%s7 + $0x1c] sm:$0xf] %vm1866, %v1857
  %1875 = vst.msk [vmem:[%s7 + $0x20] sm:$0xf] %vm1866, %v1858
  %1876 = vst.msk [vmem:[%s7 + $0x24] sm:$0xf] %vm1866, %v1859
  %1877 = vst.msk [vmem:[%s7 + $0x28] sm:$0xf] %vm1866, %v1860
  %1878 = vst.msk [vmem:[%s7 + $0x2c] sm:$0xf] %vm1866, %v1861
  %1879 = vst.msk [vmem:[%s7 + $0x30] sm:$0xf] %vm1866, %v1862
  %1880 = vst.msk [vmem:[%s7 + $0x34] sm:$0xf] %vm1866, %v1863
  %1881 = vst.msk [vmem:[%s7 + $0x38] sm:$0xf] %vm1866, %v1864
  %1882 = vst.msk [vmem:[%s7 + $0x3c] sm:$0xf] %vm1866, %v1865
  // Predicated region
  $region30: #{multimodal_to_smiles_forward.4} parent=0 // pred_check
    _
  $region31: #{multimodal_to_smiles_forward.4} parent=0 // pred_check_branch
    %1884 = sbr.rel (0) target = $region33
  $region32: #{multimodal_to_smiles_forward.4} parent=0 // pred_region
    _
  $region33: #{multimodal_to_smiles_forward.4} parent=0 // pred_fallthru
    _
  // Predicated region
  $region34: #{multimodal_to_smiles_forward.4} parent=0 // pred_check
    _
  $region35: #{multimodal_to_smiles_forward.4} parent=0 // pred_check_branch
    %1886 = sbr.rel (0) target = $region37
  $region36: #{multimodal_to_smiles_forward.4} parent=0 // pred_region
    _
  $region37: #{multimodal_to_smiles_forward.4} parent=0 // pred_fallthru
    _

// kernel: multimodal_to_smiles_forward.6
$region0: #{multimodal_to_smiles_forward.6}
  #allocation0 [shape = 'u32[]', space=smem, size = 0x4, offset = 0x4, fixed_abs, tag = 'smem constant byte address 0x4 - core index']
  #allocation1 [shape = 'u32[72,128]{1,0:T(1,128)}', space=vmem, size = 0x9000, scoped, tag = 'internal scratch']
  %s0 = inlined_call_operand.vmem [shape: bf16[2,8,32], index: 0, kind: input, shape index: {}]
  %s1 = inlined_call_operand.vmem [shape: bf16[2,64,32], index: 1, kind: input, shape index: {}]
  %s2 = inlined_call_operand.vmem [shape: f32[2,1,8], index: 2, kind: input, shape index: {}]
  %s3 = inlined_call_operand.vmem [shape: f32[1,32], index: 3, kind: input, shape index: {}]
  %s4 = inlined_call_operand.vmem [shape: f32[1,32], index: 4, kind: input, shape index: {}]
  %s5 = inlined_call_operand.vmem [shape: bf16[32,96], index: 5, kind: input, shape index: {}]
  %s6 = inlined_call_operand.vmem [shape: f32[1,96], index: 6, kind: input, shape index: {}]
  %s7 = inlined_call_operand.vmem [shape: bf16[32,32], index: 7, kind: input, shape index: {}]
  %s8 = inlined_call_operand.vmem [shape: f32[1,32], index: 8, kind: input, shape index: {}]
  %s9 = inlined_call_operand.vmem [shape: f32[1,32], index: 9, kind: input, shape index: {}]
  %s10 = inlined_call_operand.vmem [shape: f32[1,32], index: 10, kind: input, shape index: {}]
  %s11 = inlined_call_operand.vmem [shape: bf16[32,32], index: 11, kind: input, shape index: {}]
  %s12 = inlined_call_operand.vmem [shape: f32[1,32], index: 12, kind: input, shape index: {}]
  %s13 = inlined_call_operand.vmem [shape: bf16[32,64], index: 13, kind: input, shape index: {}]
  %s14 = inlined_call_operand.vmem [shape: f32[1,64], index: 14, kind: input, shape index: {}]
  %s15 = inlined_call_operand.vmem [shape: bf16[32,32], index: 15, kind: input, shape index: {}]
  %s16 = inlined_call_operand.vmem [shape: f32[1,32], index: 16, kind: input, shape index: {}]
  %s17 = inlined_call_operand.vmem [shape: f32[1,32], index: 17, kind: input, shape index: {}]
  %s18 = inlined_call_operand.hbm [shape: f32[1,32], index: 18, kind: input, shape index: {}]
  %s19 = inlined_call_operand.vmem [shape: bf16[32,128], index: 19, kind: input, shape index: {}]
  %s20 = inlined_call_operand.hbm [shape: f32[1,128], index: 20, kind: input, shape index: {}]
  %s21 = inlined_call_operand.vmem [shape: bf16[128,32], index: 21, kind: input, shape index: {}]
  %s22 = inlined_call_operand.hbm [shape: f32[1,32], index: 22, kind: input, shape index: {}]
  %s23 = inlined_call_operand.vmem [shape: bf16[2,8,32], index: 23, kind: output, shape index: {}]
  %s24 = sld [smem:[#allocation0]]
  $region137: #{multimodal_to_smiles_forward.6} parent=0
    _
  %s26 = ssub.s32 1, %s24
  %s27 = scalar_select 0, %s26, %s24
  $region1: #{multimodal_to_smiles_forward.6} parent=0
    #allocation2 [shape = 'u8[512]{0}', space=vmem, size = 0x400, scoped, tag = 'input window, operand 18, single buffered']
    #allocation3 [shape = 's32[2]{0}', space=sflag, size = 0x8, scoped, tag = 'scoped memory for multimodal_to_smiles_forward.6']
    #allocation4 [shape = 'u8[512]{0}', space=vmem, size = 0x400, scoped, tag = 'input window, operand 20, single buffered']
    #allocation5 [shape = 's32[1]{0}', space=sflag, size = 0x4, scoped, tag = 'scoped memory for multimodal_to_smiles_forward.6']
    #allocation6 [shape = 'u8[512]{0}', space=vmem, size = 0x400, scoped, tag = 'input window, operand 22, single buffered']
    %28 = vsyncpa [#allocation3], 0
    %29 = vsyncpa [#allocation5], 0
    loop: start=0, step=1, limit=4
    $region2: #{multimodal_to_smiles_forward.6} parent=1 // loop_pre_header
      _
    $region3: #{multimodal_to_smiles_forward.6} parent=1 // loop_header
      %s31 = sphi 0, %s35
      %p32 = scmp.ge.s32.totalorder %s31, 4
      %s41 = sphi 0, %s43
      %s44 = sphi 0, %s41
      %s45 = sphi 0, %s44
      %s61 = sphi 0, %s45
      %s67 = sphi 0, %s69
      %s70 = sphi 0, %s67
      %s71 = sphi 0, %s70
      %s87 = sphi 0, %s71
      %s93 = sphi 0, %s95
      %s96 = sphi 0, %s93
      %s97 = sphi 0, %s96
      %s113 = sphi 0, %s97
      %s117 = sphi 0, %s117
      %s119 = sphi 0, %s117
      %s120 = sphi 0, %s119
      %s134 = sphi 0, %s120
      %s138 = sphi 0, %s138
      %s140 = sphi 0, %s138
      %s141 = sphi 0, %s140
      %s155 = sphi 0, %s141
      %s159 = sphi 0, %s159
      %s161 = sphi 0, %s159
      %s162 = sphi 0, %s161
      %s176 = sphi 0, %s162
      %s180 = sphi 0, %s180
      %s182 = sphi 0, %s180
      %s183 = sphi 0, %s182
      %s197 = sphi 0, %s183
      %s201 = sphi 0, %s201
      %s203 = sphi 0, %s201
      %s204 = sphi 0, %s203
      %s218 = sphi 0, %s204
      %s222 = sphi 0, %s222
      %s224 = sphi 0, %s222
      %s225 = sphi 0, %s224
      %s239 = sphi 0, %s225
      %s243 = sphi 0, %s243
      %s245 = sphi 0, %s243
      %s246 = sphi 0, %s245
      %s260 = sphi 0, %s246
      %s264 = sphi 0, %s264
      %s266 = sphi 0, %s264
      %s267 = sphi 0, %s266
      %s281 = sphi 0, %s267
      %s285 = sphi 0, %s285
      %s287 = sphi 0, %s285
      %s288 = sphi 0, %s287
      %s302 = sphi 0, %s288
      %s306 = sphi 0, %s306
      %s308 = sphi 0, %s306
      %s309 = sphi 0, %s308
      %s323 = sphi 0, %s309
      %s327 = sphi 0, %s327
      %s329 = sphi 0, %s327
      %s330 = sphi 0, %s329
      %s344 = sphi 0, %s330
      %s348 = sphi 0, %s348
      %s350 = sphi 0, %s348
      %s351 = sphi 0, %s350
      %s365 = sphi 0, %s351
      %s369 = sphi 0, %s369
      %s371 = sphi 0, %s369
      %s372 = sphi 0, %s371
      %s386 = sphi 0, %s372
      %s390 = sphi 0, %s390
      %s392 = sphi 0, %s390
      %s393 = sphi 0, %s392
      %s407 = sphi 0, %s393
      %s411 = sphi 0, %s411
      %s413 = sphi 0, %s411
      %s414 = sphi 0, %s413
      %s428 = sphi 0, %s414
      %s432 = sphi 0, %s432
      %s434 = sphi 0, %s432
      %s435 = sphi 0, %s434
      %s449 = sphi 0, %s435
      %s453 = sphi 0, %s453
      %s455 = sphi 0, %s453
      %s456 = sphi 0, %s455
      %s470 = sphi 0, %s456
      %s474 = sphi 0, %s474
      %s476 = sphi 0, %s474
      %s477 = sphi 0, %s476
      %s491 = sphi 0, %s477
      %s495 = sphi 0, %s495
      %s497 = sphi 0, %s495
      %s498 = sphi 0, %s497
      %s512 = sphi 0, %s498
      %s516 = sphi 0, %s516
      %s518 = sphi 0, %s516
      %s519 = sphi 0, %s518
      %s533 = sphi 0, %s519
      %s539 = sphi 0, %s541
      %s542 = sphi 0, %s539
      %s543 = sphi 0, %s542
      %s559 = sphi 0, %s543
    $region4: #{multimodal_to_smiles_forward.6} parent=1 // loop_header_branch
      %34 = sbr.rel (%p32) target = $region8
    $region5: #{multimodal_to_smiles_forward.6} parent=1 // loop_body
      %s36 = ssub.s32 %s31, 1
      %s37 = ssub.s32 %s31, 2
      %s38 = sadd.s32 %s31, 1
      %s39 = ssub.s32 %s31, %s38
      %p40 = scmp.eq.s32.totalorder %s39, 0
      %s42 = sadd.s32 %s41, 1
      %s43 = scalar_select %p40, %s41, %s42
      %p46 = pneg %p40
      %p47 = scmp.eq.s32.totalorder %s31, 1
      %p48 = por %p46, %p47
      %p49 = scmp.ne.s32.totalorder %s41, %s44
      %p50 = scmp.eq.s32.totalorder %s31, 0
      %p51 = por %p49, %p50
      %p52 = scmp.ne.s32.totalorder %s41, %s44
      %p53 = scmp.eq.s32.totalorder %s36, 1
      %p54 = por %p52, %p53
      %p55 = scmp.ne.s32.totalorder %s44, %s45
      %p56 = scmp.eq.s32.totalorder %s36, 0
      %p57 = por %p55, %p56
      %p58 = scmp.ne.s32.totalorder %s44, %s45
      %p59 = scmp.eq.s32.totalorder %s37, 1
      %p60 = por %p58, %p59
      %p62 = scmp.ne.s32.totalorder %s45, %s61
      %p63 = scmp.eq.s32.totalorder %s37, 0
      %p64 = por %p62, %p63
      %s65 = ssub.s32 %s31, %s38
      %p66 = scmp.eq.s32.totalorder %s65, 0
      %s68 = sadd.s32 %s67, 1
      %s69 = scalar_select %p66, %s67, %s68
      %p72 = pneg %p66
      %p73 = scmp.eq.s32.totalorder %s31, 1
      %p74 = por %p72, %p73
      %p75 = scmp.ne.s32.totalorder %s67, %s70
      %p76 = scmp.eq.s32.totalorder %s31, 0
      %p77 = por %p75, %p76
      %p78 = scmp.ne.s32.totalorder %s67, %s70
      %p79 = scmp.eq.s32.totalorder %s36, 1
      %p80 = por %p78, %p79
      %p81 = scmp.ne.s32.totalorder %s70, %s71
      %p82 = scmp.eq.s32.totalorder %s36, 0
      %p83 = por %p81, %p82
      %p84 = scmp.ne.s32.totalorder %s70, %s71
      %p85 = scmp.eq.s32.totalorder %s37, 1
      %p86 = por %p84, %p85
      %p88 = scmp.ne.s32.totalorder %s71, %s87
      %p89 = scmp.eq.s32.totalorder %s37, 0
      %p90 = por %p88, %p89
      %s91 = ssub.s32 %s31, %s38
      %p92 = scmp.eq.s32.totalorder %s91, 0
      %s94 = sadd.s32 %s93, 1
      %s95 = scalar_select %p92, %s93, %s94
      %p98 = pneg %p92
      %p99 = scmp.eq.s32.totalorder %s31, 1
      %p100 = por %p98, %p99
      %p101 = scmp.ne.s32.totalorder %s93, %s96
      %p102 = scmp.eq.s32.totalorder %s31, 0
      %p103 = por %p101, %p102
      %p104 = scmp.ne.s32.totalorder %s93, %s96
      %p105 = scmp.eq.s32.totalorder %s36, 1
      %p106 = por %p104, %p105
      %p107 = scmp.ne.s32.totalorder %s96, %s97
      %p108 = scmp.eq.s32.totalorder %s36, 0
      %p109 = por %p107, %p108
      %p110 = scmp.ne.s32.totalorder %s96, %s97
      %p111 = scmp.eq.s32.totalorder %s37, 1
      %p112 = por %p110, %p111
      %p114 = scmp.ne.s32.totalorder %s97, %s113
      %p115 = scmp.eq.s32.totalorder %s37, 0
      %p116 = por %p114, %p115
      %s118 = sadd.s32 %s117, 1
      %p121 = scmp.eq.s32.totalorder %s31, 1
      %p122 = scmp.ne.s32.totalorder %s117, %s119
      %p123 = scmp.eq.s32.totalorder %s31, 0
      %p124 = por %p122, %p123
      %p125 = scmp.ne.s32.totalorder %s117, %s119
      %p126 = scmp.eq.s32.totalorder %s36, 1
      %p127 = por %p125, %p126
      %p128 = scmp.ne.s32.totalorder %s119, %s120
      %p129 = scmp.eq.s32.totalorder %s36, 0
      %p130 = por %p128, %p129
      %p131 = scmp.ne.s32.totalorder %s119, %s120
      %p132 = scmp.eq.s32.totalorder %s37, 1
      %p133 = por %p131, %p132
      %p135 = scmp.ne.s32.totalorder %s120, %s134
      %p136 = scmp.eq.s32.totalorder %s37, 0
      %p137 = por %p135, %p136
      %s139 = sadd.s32 %s138, 1
      %p142 = scmp.eq.s32.totalorder %s31, 1
      %p143 = scmp.ne.s32.totalorder %s138, %s140
      %p144 = scmp.eq.s32.totalorder %s31, 0
      %p145 = por %p143, %p144
      %p146 = scmp.ne.s32.totalorder %s138, %s140
      %p147 = scmp.eq.s32.totalorder %s36, 1
      %p148 = por %p146, %p147
      %p149 = scmp.ne.s32.totalorder %s140, %s141
      %p150 = scmp.eq.s32.totalorder %s36, 0
      %p151 = por %p149, %p150
      %p152 = scmp.ne.s32.totalorder %s140, %s141
      %p153 = scmp.eq.s32.totalorder %s37, 1
      %p154 = por %p152, %p153
      %p156 = scmp.ne.s32.totalorder %s141, %s155
      %p157 = scmp.eq.s32.totalorder %s37, 0
      %p158 = por %p156, %p157
      %s160 = sadd.s32 %s159, 1
      %p163 = scmp.eq.s32.totalorder %s31, 1
      %p164 = scmp.ne.s32.totalorder %s159, %s161
      %p165 = scmp.eq.s32.totalorder %s31, 0
      %p166 = por %p164, %p165
      %p167 = scmp.ne.s32.totalorder %s159, %s161
      %p168 = scmp.eq.s32.totalorder %s36, 1
      %p169 = por %p167, %p168
      %p170 = scmp.ne.s32.totalorder %s161, %s162
      %p171 = scmp.eq.s32.totalorder %s36, 0
      %p172 = por %p170, %p171
      %p173 = scmp.ne.s32.totalorder %s161, %s162
      %p174 = scmp.eq.s32.totalorder %s37, 1
      %p175 = por %p173, %p174
      %p177 = scmp.ne.s32.totalorder %s162, %s176
      %p178 = scmp.eq.s32.totalorder %s37, 0
      %p179 = por %p177, %p178
      %s181 = sadd.s32 %s180, 1
      %p184 = scmp.eq.s32.totalorder %s31, 1
      %p185 = scmp.ne.s32.totalorder %s180, %s182
      %p186 = scmp.eq.s32.totalorder %s31, 0
      %p187 = por %p185, %p186
      %p188 = scmp.ne.s32.totalorder %s180, %s182
      %p189 = scmp.eq.s32.totalorder %s36, 1
      %p190 = por %p188, %p189
      %p191 = scmp.ne.s32.totalorder %s182, %s183
      %p192 = scmp.eq.s32.totalorder %s36, 0
      %p193 = por %p191, %p192
      %p194 = scmp.ne.s32.totalorder %s182, %s183
      %p195 = scmp.eq.s32.totalorder %s37, 1
      %p196 = por %p194, %p195
      %p198 = scmp.ne.s32.totalorder %s183, %s197
      %p199 = scmp.eq.s32.totalorder %s37, 0
      %p200 = por %p198, %p199
      %s202 = sadd.s32 %s201, 1
      %p205 = scmp.eq.s32.totalorder %s31, 1
      %p206 = scmp.ne.s32.totalorder %s201, %s203
      %p207 = scmp.eq.s32.totalorder %s31, 0
      %p208 = por %p206, %p207
      %p209 = scmp.ne.s32.totalorder %s201, %s203
      %p210 = scmp.eq.s32.totalorder %s36, 1
      %p211 = por %p209, %p210
      %p212 = scmp.ne.s32.totalorder %s203, %s204
      %p213 = scmp.eq.s32.totalorder %s36, 0
      %p214 = por %p212, %p213
      %p215 = scmp.ne.s32.totalorder %s203, %s204
      %p216 = scmp.eq.s32.totalorder %s37, 1
      %p217 = por %p215, %p216
      %p219 = scmp.ne.s32.totalorder %s204, %s218
      %p220 = scmp.eq.s32.totalorder %s37, 0
      %p221 = por %p219, %p220
      %s223 = sadd.s32 %s222, 1
      %p226 = scmp.eq.s32.totalorder %s31, 1
      %p227 = scmp.ne.s32.totalorder %s222, %s224
      %p228 = scmp.eq.s32.totalorder %s31, 0
      %p229 = por %p227, %p228
      %p230 = scmp.ne.s32.totalorder %s222, %s224
      %p231 = scmp.eq.s32.totalorder %s36, 1
      %p232 = por %p230, %p231
      %p233 = scmp.ne.s32.totalorder %s224, %s225
      %p234 = scmp.eq.s32.totalorder %s36, 0
      %p235 = por %p233, %p234
      %p236 = scmp.ne.s32.totalorder %s224, %s225
      %p237 = scmp.eq.s32.totalorder %s37, 1
      %p238 = por %p236, %p237
      %p240 = scmp.ne.s32.totalorder %s225, %s239
      %p241 = scmp.eq.s32.totalorder %s37, 0
      %p242 = por %p240, %p241
      %s244 = sadd.s32 %s243, 1
      %p247 = scmp.eq.s32.totalorder %s31, 1
      %p248 = scmp.ne.s32.totalorder %s243, %s245
      %p249 = scmp.eq.s32.totalorder %s31, 0
      %p250 = por %p248, %p249
      %p251 = scmp.ne.s32.totalorder %s243, %s245
      %p252 = scmp.eq.s32.totalorder %s36, 1
      %p253 = por %p251, %p252
      %p254 = scmp.ne.s32.totalorder %s245, %s246
      %p255 = scmp.eq.s32.totalorder %s36, 0
      %p256 = por %p254, %p255
      %p257 = scmp.ne.s32.totalorder %s245, %s246
      %p258 = scmp.eq.s32.totalorder %s37, 1
      %p259 = por %p257, %p258
      %p261 = scmp.ne.s32.totalorder %s246, %s260
      %p262 = scmp.eq.s32.totalorder %s37, 0
      %p263 = por %p261, %p262
      %s265 = sadd.s32 %s264, 1
      %p268 = scmp.eq.s32.totalorder %s31, 1
      %p269 = scmp.ne.s32.totalorder %s264, %s266
      %p270 = scmp.eq.s32.totalorder %s31, 0
      %p271 = por %p269, %p270
      %p272 = scmp.ne.s32.totalorder %s264, %s266
      %p273 = scmp.eq.s32.totalorder %s36, 1
      %p274 = por %p272, %p273
      %p275 = scmp.ne.s32.totalorder %s266, %s267
      %p276 = scmp.eq.s32.totalorder %s36, 0
      %p277 = por %p275, %p276
      %p278 = scmp.ne.s32.totalorder %s266, %s267
      %p279 = scmp.eq.s32.totalorder %s37, 1
      %p280 = por %p278, %p279
      %p282 = scmp.ne.s32.totalorder %s267, %s281
      %p283 = scmp.eq.s32.totalorder %s37, 0
      %p284 = por %p282, %p283
      %s286 = sadd.s32 %s285, 1
      %p289 = scmp.eq.s32.totalorder %s31, 1
      %p290 = scmp.ne.s32.totalorder %s285, %s287
      %p291 = scmp.eq.s32.totalorder %s31, 0
      %p292 = por %p290, %p291
      %p293 = scmp.ne.s32.totalorder %s285, %s287
      %p294 = scmp.eq.s32.totalorder %s36, 1
      %p295 = por %p293, %p294
      %p296 = scmp.ne.s32.totalorder %s287, %s288
      %p297 = scmp.eq.s32.totalorder %s36, 0
      %p298 = por %p296, %p297
      %p299 = scmp.ne.s32.totalorder %s287, %s288
      %p300 = scmp.eq.s32.totalorder %s37, 1
      %p301 = por %p299, %p300
      %p303 = scmp.ne.s32.totalorder %s288, %s302
      %p304 = scmp.eq.s32.totalorder %s37, 0
      %p305 = por %p303, %p304
      %s307 = sadd.s32 %s306, 1
      %p310 = scmp.eq.s32.totalorder %s31, 1
      %p311 = scmp.ne.s32.totalorder %s306, %s308
      %p312 = scmp.eq.s32.totalorder %s31, 0
      %p313 = por %p311, %p312
      %p314 = scmp.ne.s32.totalorder %s306, %s308
      %p315 = scmp.eq.s32.totalorder %s36, 1
      %p316 = por %p314, %p315
      %p317 = scmp.ne.s32.totalorder %s308, %s309
      %p318 = scmp.eq.s32.totalorder %s36, 0
      %p319 = por %p317, %p318
      %p320 = scmp.ne.s32.totalorder %s308, %s309
      %p321 = scmp.eq.s32.totalorder %s37, 1
      %p322 = por %p320, %p321
      %p324 = scmp.ne.s32.totalorder %s309, %s323
      %p325 = scmp.eq.s32.totalorder %s37, 0
      %p326 = por %p324, %p325
      %s328 = sadd.s32 %s327, 1
      %p331 = scmp.eq.s32.totalorder %s31, 1
      %p332 = scmp.ne.s32.totalorder %s327, %s329
      %p333 = scmp.eq.s32.totalorder %s31, 0
      %p334 = por %p332, %p333
      %p335 = scmp.ne.s32.totalorder %s327, %s329
      %p336 = scmp.eq.s32.totalorder %s36, 1
      %p337 = por %p335, %p336
      %p338 = scmp.ne.s32.totalorder %s329, %s330
      %p339 = scmp.eq.s32.totalorder %s36, 0
      %p340 = por %p338, %p339
      %p341 = scmp.ne.s32.totalorder %s329, %s330
      %p342 = scmp.eq.s32.totalorder %s37, 1
      %p343 = por %p341, %p342
      %p345 = scmp.ne.s32.totalorder %s330, %s344
      %p346 = scmp.eq.s32.totalorder %s37, 0
      %p347 = por %p345, %p346
      %s349 = sadd.s32 %s348, 1
      %p352 = scmp.eq.s32.totalorder %s31, 1
      %p353 = scmp.ne.s32.totalorder %s348, %s350
      %p354 = scmp.eq.s32.totalorder %s31, 0
      %p355 = por %p353, %p354
      %p356 = scmp.ne.s32.totalorder %s348, %s350
      %p357 = scmp.eq.s32.totalorder %s36, 1
      %p358 = por %p356, %p357
      %p359 = scmp.ne.s32.totalorder %s350, %s351
      %p360 = scmp.eq.s32.totalorder %s36, 0
      %p361 = por %p359, %p360
      %p362 = scmp.ne.s32.totalorder %s350, %s351
      %p363 = scmp.eq.s32.totalorder %s37, 1
      %p364 = por %p362, %p363
      %p366 = scmp.ne.s32.totalorder %s351, %s365
      %p367 = scmp.eq.s32.totalorder %s37, 0
      %p368 = por %p366, %p367
      %s370 = sadd.s32 %s369, 1
      %p373 = scmp.eq.s32.totalorder %s31, 1
      %p374 = scmp.ne.s32.totalorder %s369, %s371
      %p375 = scmp.eq.s32.totalorder %s31, 0
      %p376 = por %p374, %p375
      %p377 = scmp.ne.s32.totalorder %s369, %s371
      %p378 = scmp.eq.s32.totalorder %s36, 1
      %p379 = por %p377, %p378
      %p380 = scmp.ne.s32.totalorder %s371, %s372
      %p381 = scmp.eq.s32.totalorder %s36, 0
      %p382 = por %p380, %p381
      %p383 = scmp.ne.s32.totalorder %s371, %s372
      %p384 = scmp.eq.s32.totalorder %s37, 1
      %p385 = por %p383, %p384
      %p387 = scmp.ne.s32.totalorder %s372, %s386
      %p388 = scmp.eq.s32.totalorder %s37, 0
      %p389 = por %p387, %p388
      %s391 = sadd.s32 %s390, 1
      %p394 = scmp.eq.s32.totalorder %s31, 1
      %p395 = scmp.ne.s32.totalorder %s390, %s392
      %p396 = scmp.eq.s32.totalorder %s31, 0
      %p397 = por %p395, %p396
      %p398 = scmp.ne.s32.totalorder %s390, %s392
      %p399 = scmp.eq.s32.totalorder %s36, 1
      %p400 = por %p398, %p399
      %p401 = scmp.ne.s32.totalorder %s392, %s393
      %p402 = scmp.eq.s32.totalorder %s36, 0
      %p403 = por %p401, %p402
      %p404 = scmp.ne.s32.totalorder %s392, %s393
      %p405 = scmp.eq.s32.totalorder %s37, 1
      %p406 = por %p404, %p405
      %p408 = scmp.ne.s32.totalorder %s393, %s407
      %p409 = scmp.eq.s32.totalorder %s37, 0
      %p410 = por %p408, %p409
      %s412 = sadd.s32 %s411, 1
      %p415 = scmp.eq.s32.totalorder %s31, 1
      %p416 = scmp.ne.s32.totalorder %s411, %s413
      %p417 = scmp.eq.s32.totalorder %s31, 0
      %p418 = por %p416, %p417
      %p419 = scmp.ne.s32.totalorder %s411, %s413
      %p420 = scmp.eq.s32.totalorder %s36, 1
      %p421 = por %p419, %p420
      %p422 = scmp.ne.s32.totalorder %s413, %s414
      %p423 = scmp.eq.s32.totalorder %s36, 0
      %p424 = por %p422, %p423
      %p425 = scmp.ne.s32.totalorder %s413, %s414
      %p426 = scmp.eq.s32.totalorder %s37, 1
      %p427 = por %p425, %p426
      %p429 = scmp.ne.s32.totalorder %s414, %s428
      %p430 = scmp.eq.s32.totalorder %s37, 0
      %p431 = por %p429, %p430
      %s433 = sadd.s32 %s432, 1
      %p436 = scmp.eq.s32.totalorder %s31, 1
      %p437 = scmp.ne.s32.totalorder %s432, %s434
      %p438 = scmp.eq.s32.totalorder %s31, 0
      %p439 = por %p437, %p438
      %p440 = scmp.ne.s32.totalorder %s432, %s434
      %p441 = scmp.eq.s32.totalorder %s36, 1
      %p442 = por %p440, %p441
      %p443 = scmp.ne.s32.totalorder %s434, %s435
      %p444 = scmp.eq.s32.totalorder %s36, 0
      %p445 = por %p443, %p444
      %p446 = scmp.ne.s32.totalorder %s434, %s435
      %p447 = scmp.eq.s32.totalorder %s37, 1
      %p448 = por %p446, %p447
      %p450 = scmp.ne.s32.totalorder %s435, %s449
      %p451 = scmp.eq.s32.totalorder %s37, 0
      %p452 = por %p450, %p451
      %s454 = sadd.s32 %s453, 1
      %p457 = scmp.eq.s32.totalorder %s31, 1
      %p458 = scmp.ne.s32.totalorder %s453, %s455
      %p459 = scmp.eq.s32.totalorder %s31, 0
      %p460 = por %p458, %p459
      %p461 = scmp.ne.s32.totalorder %s453, %s455
      %p462 = scmp.eq.s32.totalorder %s36, 1
      %p463 = por %p461, %p462
      %p464 = scmp.ne.s32.totalorder %s455, %s456
      %p465 = scmp.eq.s32.totalorder %s36, 0
      %p466 = por %p464, %p465
      %p467 = scmp.ne.s32.totalorder %s455, %s456
      %p468 = scmp.eq.s32.totalorder %s37, 1
      %p469 = por %p467, %p468
      %p471 = scmp.ne.s32.totalorder %s456, %s470
      %p472 = scmp.eq.s32.totalorder %s37, 0
      %p473 = por %p471, %p472
      %s475 = sadd.s32 %s474, 1
      %p478 = scmp.eq.s32.totalorder %s31, 1
      %p479 = scmp.ne.s32.totalorder %s474, %s476
      %p480 = scmp.eq.s32.totalorder %s31, 0
      %p481 = por %p479, %p480
      %p482 = scmp.ne.s32.totalorder %s474, %s476
      %p483 = scmp.eq.s32.totalorder %s36, 1
      %p484 = por %p482, %p483
      %p485 = scmp.ne.s32.totalorder %s476, %s477
      %p486 = scmp.eq.s32.totalorder %s36, 0
      %p487 = por %p485, %p486
      %p488 = scmp.ne.s32.totalorder %s476, %s477
      %p489 = scmp.eq.s32.totalorder %s37, 1
      %p490 = por %p488, %p489
      %p492 = scmp.ne.s32.totalorder %s477, %s491
      %p493 = scmp.eq.s32.totalorder %s37, 0
      %p494 = por %p492, %p493
      %s496 = sadd.s32 %s495, 1
      %p499 = scmp.eq.s32.totalorder %s31, 1
      %p500 = scmp.ne.s32.totalorder %s495, %s497
      %p501 = scmp.eq.s32.totalorder %s31, 0
      %p502 = por %p500, %p501
      %p503 = scmp.ne.s32.totalorder %s495, %s497
      %p504 = scmp.eq.s32.totalorder %s36, 1
      %p505 = por %p503, %p504
      %p506 = scmp.ne.s32.totalorder %s497, %s498
      %p507 = scmp.eq.s32.totalorder %s36, 0
      %p508 = por %p506, %p507
      %p509 = scmp.ne.s32.totalorder %s497, %s498
      %p510 = scmp.eq.s32.totalorder %s37, 1
      %p511 = por %p509, %p510
      %p513 = scmp.ne.s32.totalorder %s498, %s512
      %p514 = scmp.eq.s32.totalorder %s37, 0
      %p515 = por %p513, %p514
      %s517 = sadd.s32 %s516, 1
      %p520 = scmp.eq.s32.totalorder %s31, 1
      %p521 = scmp.ne.s32.totalorder %s516, %s518
      %p522 = scmp.eq.s32.totalorder %s31, 0
      %p523 = por %p521, %p522
      %p524 = scmp.ne.s32.totalorder %s516, %s518
      %p525 = scmp.eq.s32.totalorder %s36, 1
      %p526 = por %p524, %p525
      %p527 = scmp.ne.s32.totalorder %s518, %s519
      %p528 = scmp.eq.s32.totalorder %s36, 0
      %p529 = por %p527, %p528
      %p530 = scmp.ne.s32.totalorder %s518, %s519
      %p531 = scmp.eq.s32.totalorder %s37, 1
      %p532 = por %p530, %p531
      %p534 = scmp.ne.s32.totalorder %s519, %s533
      %p535 = scmp.eq.s32.totalorder %s37, 0
      %p536 = por %p534, %p535
      %s537 = ssub.s32 %s31, %s38
      %p538 = scmp.eq.s32.totalorder %s537, 0
      %s540 = sadd.s32 %s539, 1
      %s541 = scalar_select %p538, %s539, %s540
      %p544 = pneg %p538
      %p545 = scmp.eq.s32.totalorder %s31, 1
      %p546 = por %p544, %p545
      %p547 = scmp.ne.s32.totalorder %s539, %s542
      %p548 = scmp.eq.s32.totalorder %s31, 0
      %p549 = por %p547, %p548
      %p550 = scmp.ne.s32.totalorder %s539, %s542
      %p551 = scmp.eq.s32.totalorder %s36, 1
      %p552 = por %p550, %p551
      %p553 = scmp.ne.s32.totalorder %s542, %s543
      %p554 = scmp.eq.s32.totalorder %s36, 0
      %p555 = por %p553, %p554
      %p556 = scmp.ne.s32.totalorder %s542, %s543
      %p557 = scmp.eq.s32.totalorder %s37, 1
      %p558 = por %p556, %p557
      %p560 = scmp.ne.s32.totalorder %s543, %s559
      %p561 = scmp.eq.s32.totalorder %s37, 0
      %p562 = por %p560, %p561
      %p563 = scmp.le.s32.totalorder 1, %s31
      %p564 = scmp.lt.s32.totalorder %s31, 3
      %p565 = pnand %p563, %p564
      %p566 = pneg %p565
      // Predicated region
      $region9: #{multimodal_to_smiles_forward.6} parent=5 // pred_check
        _
      $region10: #{multimodal_to_smiles_forward.6} parent=5 // pred_check_branch
        %568 = sbr.rel (%p565) target = $region12
      $region11: #{multimodal_to_smiles_forward.6} parent=5 // pred_region
        %s569 = ssub.s32 %s31, 1
        // Predicated region
        $region13: #{multimodal_to_smiles_forward.6} parent=11 // pred_check
          %p570 = pneg %p130
        $region14: #{multimodal_to_smiles_forward.6} parent=11 // pred_check_branch
          %572 = sbr.rel (%p570) target = $region16
        $region15: #{multimodal_to_smiles_forward.6} parent=11 // pred_region
          _
        $region16: #{multimodal_to_smiles_forward.6} parent=11 // pred_fallthru
          _
        // Predicated region
        $region17: #{multimodal_to_smiles_forward.6} parent=11 // pred_check
          %p573 = pneg %p151
        $region18: #{multimodal_to_smiles_forward.6} parent=11 // pred_check_branch
          %575 = sbr.rel (%p573) target = $region20
        $region19: #{multimodal_to_smiles_forward.6} parent=11 // pred_region
          _
        $region20: #{multimodal_to_smiles_forward.6} parent=11 // pred_fallthru
          _
        // Predicated region
        $region21: #{multimodal_to_smiles_forward.6} parent=11 // pred_check
          %p576 = pneg %p172
        $region22: #{multimodal_to_smiles_forward.6} parent=11 // pred_check_branch
          %578 = sbr.rel (%p576) target = $region24
        $region23: #{multimodal_to_smiles_forward.6} parent=11 // pred_region
          _
        $region24: #{multimodal_to_smiles_forward.6} parent=11 // pred_fallthru
          _
        // Predicated region
        $region25: #{multimodal_to_smiles_forward.6} parent=11 // pred_check
          %p579 = pneg %p193
        $region26: #{multimodal_to_smiles_forward.6} parent=11 // pred_check_branch
          %581 = sbr.rel (%p579) target = $region28
        $region27: #{multimodal_to_smiles_forward.6} parent=11 // pred_region
          _
        $region28: #{multimodal_to_smiles_forward.6} parent=11 // pred_fallthru
          _
        // Predicated region
        $region29: #{multimodal_to_smiles_forward.6} parent=11 // pred_check
          %p582 = pneg %p214
        $region30: #{multimodal_to_smiles_forward.6} parent=11 // pred_check_branch
          %584 = sbr.rel (%p582) target = $region32
        $region31: #{multimodal_to_smiles_forward.6} parent=11 // pred_region
          _
        $region32: #{multimodal_to_smiles_forward.6} parent=11 // pred_fallthru
          _
        // Predicated region
        $region33: #{multimodal_to_smiles_forward.6} parent=11 // pred_check
          %p585 = pneg %p235
        $region34: #{multimodal_to_smiles_forward.6} parent=11 // pred_check_branch
          %587 = sbr.rel (%p585) target = $region36
        $region35: #{multimodal_to_smiles_forward.6} parent=11 // pred_region
          _
        $region36: #{multimodal_to_smiles_forward.6} parent=11 // pred_fallthru
          _
        // Predicated region
        $region37: #{multimodal_to_smiles_forward.6} parent=11 // pred_check
          %p588 = pneg %p256
        $region38: #{multimodal_to_smiles_forward.6} parent=11 // pred_check_branch
          %590 = sbr.rel (%p588) target = $region40
        $region39: #{multimodal_to_smiles_forward.6} parent=11 // pred_region
          _
        $region40: #{multimodal_to_smiles_forward.6} parent=11 // pred_fallthru
          _
        // Predicated region
        $region41: #{multimodal_to_smiles_forward.6} parent=11 // pred_check
          %p591 = pneg %p277
        $region42: #{multimodal_to_smiles_forward.6} parent=11 // pred_check_branch
          %593 = sbr.rel (%p591) target = $region44
        $region43: #{multimodal_to_smiles_forward.6} parent=11 // pred_region
          _
        $region44: #{multimodal_to_smiles_forward.6} parent=11 // pred_fallthru
          _
        // Predicated region
        $region45: #{multimodal_to_smiles_forward.6} parent=11 // pred_check
          %p594 = pneg %p298
        $region46: #{multimodal_to_smiles_forward.6} parent=11 // pred_check_branch
          %596 = sbr.rel (%p594) target = $region48
        $region47: #{multimodal_to_smiles_forward.6} parent=11 // pred_region
          _
        $region48: #{multimodal_to_smiles_forward.6} parent=11 // pred_fallthru
          _
        // Predicated region
        $region49: #{multimodal_to_smiles_forward.6} parent=11 // pred_check
          %p597 = pneg %p319
        $region50: #{multimodal_to_smiles_forward.6} parent=11 // pred_check_branch
          %599 = sbr.rel (%p597) target = $region52
        $region51: #{multimodal_to_smiles_forward.6} parent=11 // pred_region
          _
        $region52: #{multimodal_to_smiles_forward.6} parent=11 // pred_fallthru
          _
        // Predicated region
        $region53: #{multimodal_to_smiles_forward.6} parent=11 // pred_check
          %p600 = pneg %p340
        $region54: #{multimodal_to_smiles_forward.6} parent=11 // pred_check_branch
          %602 = sbr.rel (%p600) target = $region56
        $region55: #{multimodal_to_smiles_forward.6} parent=11 // pred_region
          _
        $region56: #{multimodal_to_smiles_forward.6} parent=11 // pred_fallthru
          _
        // Predicated region
        $region57: #{multimodal_to_smiles_forward.6} parent=11 // pred_check
          %p603 = pneg %p361
        $region58: #{multimodal_to_smiles_forward.6} parent=11 // pred_check_branch
          %605 = sbr.rel (%p603) target = $region60
        $region59: #{multimodal_to_smiles_forward.6} parent=11 // pred_region
          _
        $region60: #{multimodal_to_smiles_forward.6} parent=11 // pred_fallthru
          _
        // Predicated region
        $region61: #{multimodal_to_smiles_forward.6} parent=11 // pred_check
          %p606 = pneg %p382
        $region62: #{multimodal_to_smiles_forward.6} parent=11 // pred_check_branch
          %608 = sbr.rel (%p606) target = $region64
        $region63: #{multimodal_to_smiles_forward.6} parent=11 // pred_region
          _
        $region64: #{multimodal_to_smiles_forward.6} parent=11 // pred_fallthru
          _
        // Predicated region
        $region65: #{multimodal_to_smiles_forward.6} parent=11 // pred_check
          %p609 = pneg %p403
        $region66: #{multimodal_to_smiles_forward.6} parent=11 // pred_check_branch
          %611 = sbr.rel (%p609) target = $region68
        $region67: #{multimodal_to_smiles_forward.6} parent=11 // pred_region
          _
        $region68: #{multimodal_to_smiles_forward.6} parent=11 // pred_fallthru
          _
        // Predicated region
        $region69: #{multimodal_to_smiles_forward.6} parent=11 // pred_check
          %p612 = pneg %p424
        $region70: #{multimodal_to_smiles_forward.6} parent=11 // pred_check_branch
          %614 = sbr.rel (%p612) target = $region72
        $region71: #{multimodal_to_smiles_forward.6} parent=11 // pred_region
          _
        $region72: #{multimodal_to_smiles_forward.6} parent=11 // pred_fallthru
          _
        // Predicated region
        $region73: #{multimodal_to_smiles_forward.6} parent=11 // pred_check
          %p615 = pneg %p445
        $region74: #{multimodal_to_smiles_forward.6} parent=11 // pred_check_branch
          %617 = sbr.rel (%p615) target = $region76
        $region75: #{multimodal_to_smiles_forward.6} parent=11 // pred_region
          %619 = vsyncadd [#allocation3], 0
          %s621 = sshll.u32 %s18, 4
          %s622 = int_to_ptr.hbm [resolvable:$true] %s621
          %s623 = sshll.u32 [#allocation2], 4
          %s624 = int_to_ptr.vmem [resolvable:$true] %s623
          %626 = dma.hbm_to_vmem [thread:$0]  %s622, 16, %s624, [#allocation3]
        $region76: #{multimodal_to_smiles_forward.6} parent=11 // pred_fallthru
          _
        // Predicated region
        $region77: #{multimodal_to_smiles_forward.6} parent=11 // pred_check
          %p627 = pneg %p466
        $region78: #{multimodal_to_smiles_forward.6} parent=11 // pred_check_branch
          %629 = sbr.rel (%p627) target = $region80
        $region79: #{multimodal_to_smiles_forward.6} parent=11 // pred_region
          _
        $region80: #{multimodal_to_smiles_forward.6} parent=11 // pred_fallthru
          _
        // Predicated region
        $region81: #{multimodal_to_smiles_forward.6} parent=11 // pred_check
          %p630 = pneg %p487
        $region82: #{multimodal_to_smiles_forward.6} parent=11 // pred_check_branch
          %632 = sbr.rel (%p630) target = $region84
        $region83: #{multimodal_to_smiles_forward.6} parent=11 // pred_region
          %634 = vsyncadd [#allocation5], 0
          %s636 = sshll.u32 %s20, 4
          %s637 = int_to_ptr.hbm [resolvable:$true] %s636
          %s638 = sshll.u32 [#allocation4], 4
          %s639 = int_to_ptr.vmem [resolvable:$true] %s638
          %641 = dma.hbm_to_vmem [thread:$0]  %s637, 16, %s639, [#allocation5]
        $region84: #{multimodal_to_smiles_forward.6} parent=11 // pred_fallthru
          _
        // Predicated region
        $region85: #{multimodal_to_smiles_forward.6} parent=11 // pred_check
          %p642 = pneg %p508
        $region86: #{multimodal_to_smiles_forward.6} parent=11 // pred_check_branch
          %644 = sbr.rel (%p642) target = $region88
        $region87: #{multimodal_to_smiles_forward.6} parent=11 // pred_region
          _
        $region88: #{multimodal_to_smiles_forward.6} parent=11 // pred_fallthru
          _
        // Predicated region
        $region89: #{multimodal_to_smiles_forward.6} parent=11 // pred_check
          %p645 = pneg %p529
        $region90: #{multimodal_to_smiles_forward.6} parent=11 // pred_check_branch
          %647 = sbr.rel (%p645) target = $region92
        $region91: #{multimodal_to_smiles_forward.6} parent=11 // pred_region
          %649 = vsyncadd [#allocation5], 0
          %s651 = sshll.u32 %s22, 4
          %s652 = int_to_ptr.hbm [resolvable:$true] %s651
          %s653 = sshll.u32 [#allocation6], 4
          %s654 = int_to_ptr.vmem [resolvable:$true] %s653
          %656 = dma.hbm_to_vmem [thread:$0]  %s652, 16, %s654, [#allocation5]
        $region92: #{multimodal_to_smiles_forward.6} parent=11 // pred_fallthru
          _
      $region12: #{multimodal_to_smiles_forward.6} parent=5 // pred_fallthru
        _
      %p657 = scmp.lt.s32.totalorder %s31, 2
      // Predicated region
      $region93: #{multimodal_to_smiles_forward.6} parent=5 // pred_check
        %p658 = pneg %p657
      $region94: #{multimodal_to_smiles_forward.6} parent=5 // pred_check_branch
        %660 = sbr.rel (%p658) target = $region96
      $region95: #{multimodal_to_smiles_forward.6} parent=5 // pred_region
        // Predicated region
        $region97: #{multimodal_to_smiles_forward.6} parent=95 // pred_check
          %p661 = pneg %p51
        $region98: #{multimodal_to_smiles_forward.6} parent=95 // pred_check_branch
          %663 = sbr.rel (%p661) target = $region100
        $region99: #{multimodal_to_smiles_forward.6} parent=95 // pred_region
          %p664 = scmp.lt.s32.totalorder %s31, 1
          %s665 = scalar_select %p664, %s31, 1
          %s666 = smul.addr %s665, 4
          %s667 = scalar_lea.vmem %s0, %s666
        $region100: #{multimodal_to_smiles_forward.6} parent=95 // pred_fallthru
          _
        // Predicated region
        $region101: #{multimodal_to_smiles_forward.6} parent=95 // pred_check
          %p668 = pneg %p77
        $region102: #{multimodal_to_smiles_forward.6} parent=95 // pred_check_branch
          %670 = sbr.rel (%p668) target = $region104
        $region103: #{multimodal_to_smiles_forward.6} parent=95 // pred_region
          %p671 = scmp.lt.s32.totalorder %s31, 1
          %s672 = scalar_select %p671, %s31, 1
          %s673 = smul.addr %s672, 8
          %s674 = smul.addr %s673, 4
          %s675 = scalar_lea.vmem %s1, %s674
        $region104: #{multimodal_to_smiles_forward.6} parent=95 // pred_fallthru
          _
        // Predicated region
        $region105: #{multimodal_to_smiles_forward.6} parent=95 // pred_check
          %p676 = pneg %p103
        $region106: #{multimodal_to_smiles_forward.6} parent=95 // pred_check_branch
          %678 = sbr.rel (%p676) target = $region108
        $region107: #{multimodal_to_smiles_forward.6} parent=95 // pred_region
          %p679 = scmp.lt.s32.totalorder %s31, 1
          %s680 = scalar_select %p679, %s31, 1
          %s681 = scalar_lea.vmem %s2, %s680
        $region108: #{multimodal_to_smiles_forward.6} parent=95 // pred_fallthru
          _
      $region96: #{multimodal_to_smiles_forward.6} parent=5 // pred_fallthru
        _
      %p682 = scmp.le.s32.totalorder 1, %s31
      %p683 = scmp.lt.s32.totalorder %s31, 3
      %p684 = pnand %p682, %p683
      %p685 = pneg %p684
      // Predicated region
      $region109: #{multimodal_to_smiles_forward.6} parent=5 // pred_check
        _
      $region110: #{multimodal_to_smiles_forward.6} parent=5 // pred_check_branch
        %687 = sbr.rel (%p684) target = $region112
      $region111: #{multimodal_to_smiles_forward.6} parent=5 // pred_region
        %s688 = ssub.s32 %s31, 1
        // Predicated region
        $region113: #{multimodal_to_smiles_forward.6} parent=111 // pred_check
          %p689 = pneg %p445
        $region114: #{multimodal_to_smiles_forward.6} parent=111 // pred_check_branch
          %691 = sbr.rel (%p689) target = $region116
        $region115: #{multimodal_to_smiles_forward.6} parent=111 // pred_region
          %693 = dma.done [#allocation3], 16
        $region116: #{multimodal_to_smiles_forward.6} parent=111 // pred_fallthru
          _
        // Predicated region
        $region117: #{multimodal_to_smiles_forward.6} parent=111 // pred_check
          %p694 = pneg %p487
        $region118: #{multimodal_to_smiles_forward.6} parent=111 // pred_check_branch
          %696 = sbr.rel (%p694) target = $region120
        $region119: #{multimodal_to_smiles_forward.6} parent=111 // pred_region
          %698 = dma.done [#allocation5], 16
        $region120: #{multimodal_to_smiles_forward.6} parent=111 // pred_fallthru
          _
        // Predicated region
        $region121: #{multimodal_to_smiles_forward.6} parent=111 // pred_check
          %p699 = pneg %p529
        $region122: #{multimodal_to_smiles_forward.6} parent=111 // pred_check_branch
          %701 = sbr.rel (%p699) target = $region124
        $region123: #{multimodal_to_smiles_forward.6} parent=111 // pred_region
          %703 = dma.done [#allocation5], 16
        $region124: #{multimodal_to_smiles_forward.6} parent=111 // pred_fallthru
          _
        %p704 = scmp.lt.s32.totalorder %s36, 1
        %s705 = scalar_select %p704, %s36, 1
        %s706 = smul.addr %s705, 4
        %s707 = scalar_lea.vmem %s0, %s706
        %p708 = pneg %p57
        %p709 = pneg %p54
        %p710 = scmp.lt.s32.totalorder %s36, 1
        %s711 = scalar_select %p710, %s36, 1
        %s712 = smul.addr %s711, 8
        %s713 = smul.addr %s712, 4
        %s714 = scalar_lea.vmem %s1, %s713
        %p715 = pneg %p83
        %p716 = pneg %p80
        %p717 = scmp.lt.s32.totalorder %s36, 1
        %s718 = scalar_select %p717, %s36, 1
        %s719 = scalar_lea.vmem %s2, %s718
        %p720 = pneg %p109
        %p721 = pneg %p106
        %p722 = pneg %p130
        %p723 = pneg %p127
        %p724 = pneg %p151
        %p725 = pneg %p148
        %p726 = pneg %p172
        %p727 = pneg %p169
        %p728 = pneg %p193
        %p729 = pneg %p190
        %p730 = pneg %p214
        %p731 = pneg %p211
        %p732 = pneg %p235
        %p733 = pneg %p232
        %p734 = pneg %p256
        %p735 = pneg %p253
        %p736 = pneg %p277
        %p737 = pneg %p274
        %p738 = pneg %p298
        %p739 = pneg %p295
        %p740 = pneg %p319
        %p741 = pneg %p316
        %p742 = pneg %p340
        %p743 = pneg %p337
        %p744 = pneg %p361
        %p745 = pneg %p358
        %p746 = pneg %p382
        %p747 = pneg %p379
        %p748 = pneg %p403
        %p749 = pneg %p400
        %p750 = pneg %p424
        %p751 = pneg %p421
        %p752 = pneg %p445
        %p753 = pneg %p442
        %p754 = pneg %p466
        %p755 = pneg %p463
        %p756 = pneg %p487
        %p757 = pneg %p484
        %p758 = pneg %p508
        %p759 = pneg %p505
        %p760 = pneg %p529
        %p761 = pneg %p526
        %p762 = pneg %p555
        %p763 = pneg %p552
        %p764 = scmp.lt.s32.totalorder %s36, 1
        %s765 = scalar_select %p764, %s36, 1
        %s766 = smul.addr %s765, 4
        %s767 = scalar_lea.vmem %s23, %s766
        %p768 = scmp.lt.s32.totalorder %s36, 1
        %s769 = scalar_select %p768, %s36, 1
        %s770 = smul.addr %s769, 4
        %s771 = scalar_lea.vmem %s0, %s770
        %p772 = scmp.lt.s32.totalorder %s36, 1
        %s773 = scalar_select %p772, %s36, 1
        %s774 = smul.addr %s773, 8
        %s775 = smul.addr %s774, 4
        %s776 = scalar_lea.vmem %s1, %s775
        %p777 = scmp.lt.s32.totalorder %s36, 1
        %s778 = scalar_select %p777, %s36, 1
        %s779 = scalar_lea.vmem %s2, %s778
        %p780 = scmp.lt.s32.totalorder %s36, 1
        %s781 = scalar_select %p780, %s36, 1
        %s782 = smul.addr %s781, 4
        %s783 = scalar_lea.vmem %s23, %s782
        %v785 = vld [vmem:[%s771] sm:$0xf]
        %v786 = vunpack.c.l.bf16 %v785
        %v787 = vld [vmem:[%s776] sm:$0xf]
        %v788 = vld [vmem:[%s776 + $0x4] sm:$0xf]
        %v789 = vld [vmem:[%s776 + $0x8] sm:$0xf]
        %v790 = vld [vmem:[%s776 + $0xc] sm:$0xf]
        %v791 = vld [vmem:[%s776 + $0x10] sm:$0xf]
        %v792 = vld [vmem:[%s776 + $0x14] sm:$0xf]
        %v793 = vld [vmem:[%s776 + $0x18] sm:$0xf]
        %v794 = vld [vmem:[%s776 + $0x1c] sm:$0xf]
        %v795 = vlaneseq
        %v796 = vshrl.u32 %v795, 7
        %v797 = vlaneseq
        %v798 = vand.u32 %v797, 127
        %v799 = vld [vmem:[%s779] sm:$0x1]
        %v800 = vsub.f32 %v799, 1.0
        %v801 = vmul.f32 %v800, 1e+30
        %vm802 = vcmp.le.s32.totalorder %v798, %v796
        %v804 = vperm.slane %v801, 0
        %v806 = vsel %vm802, %v804, -1e+30
        %v807 = vld [vmem:[%s3] sm:$0x1]
        %v808 = vld [vmem:[%s4] sm:$0x1]
        %vm809 = vcmask 261120
        %v810 = vsel %vm809, %v786, 0.0
        %811 = vadd.xlane.f32.xlu0 %v810
        %v812 = vpop.xlane.xlu0 %811
        %v813 = vrcp.pop 32.0
        %v814 = vmul.f32 32.0, %v813
        %v815 = vsub.f32 1.0, %v814
        %v816 = vmul.f32 %v813, %v815
        %v817 = vadd.f32 %v813, %v816
        %vm818 = vweird.f32 %v813
        %v819 = vsel %vm818, %v813, %v817
        %v820 = vmul.f32 %v812, %v819
        %v821 = vsub.f32 %v786, %v820
        %v822 = vmul.f32 %v821, %v821
        %v823 = vsel %vm809, %v822, 0.0
        %824 = vadd.xlane.f32.xlu0 %v823
        %v825 = vpop.xlane.xlu0 %824
        %v826 = vmul.f32 %v825, %v819
        %v827 = vadd.f32 %v826, 1e-05
        %v828 = vrsqrt.pop %v827
        %v829 = vmul.f32 %v828, %v827
        %v830 = vmul.f32 %v829, %v828
        %v831 = vmul.f32 0.5, %v830
        %v832 = vsub.f32 1.5, %v831
        %v833 = vmul.f32 %v828, %v832
        %vm834 = vweird.f32 %v827
        %vm835 = vweird.f32 %v828
        %vm836 = vmor %vm834, %vm835
        %v837 = vsel %vm836, %v828, %v833
        %v838 = vmul.f32 %v821, %v837
        %v840 = vperm.slane %v807, 0
        %v842 = vmul.f32 %v838, %v840
        %v844 = vperm.slane %v808, 0
        %v846 = vadd.f32 %v842, %v844
        %v847 = vpack.c.bf16 %v846, %v846
        %v848 = vld [vmem:[%s5] sm:$0xf]
        %v849 = vld [vmem:[%s5 + $0x4] sm:$0xf]
        %v850 = vld [vmem:[%s5 + $0x8] sm:$0xf]
        %v851 = vld [vmem:[%s5 + $0xc] sm:$0xf]
        %v852 = vld [vmem:[%s6] sm:$0x1]
        %v854 = vperm.slane %v852, 0
        %v860 = vunpack.c.l.b16 %v848
        %v861 = vunpack.c.l.b16 %v849
        %v862 = vunpack.c.l.b16 %v850
        %v863 = vunpack.c.l.b16 %v851
        %v864 = vpack.c.b16 %v861, %v860
        %v865 = vpack.c.b16 %v863, %v862
        %v869 = vsel %vm809, %v847, 0
        %871 = vmatpush.bf16.msra.mxu0 0
        %872 = vmatpush.bf16.msra.mxu0 0
        %873 = vmatpush.bf16.msra.mxu0 0
        %874 = vmatpush.bf16.msra.mxu0 0
        %875 = vmatpush.bf16.msra.mxu0 0
        %876 = vmatpush.bf16.msra.mxu0 0
        %877 = vmatpush.bf16.msra.mxu0 %v865
        %878 = vmatpush.bf16.msra.mxu0 %v864
        %879 = vmatmul.bf16.gmra.mxu0 %v869
        %v880 = vpop.f32.mrf.mxu0
        %v881 = vadd.f32 %v854, %v880
        %v882 = vpop.f32.mrf.mxu0
        %883 = vdwg.mxu0
        %885 = vrot.lane.b32.xlu0 %v881, 96
        %v886 = vpop.permute.xlu0 %885
        %vm887 = vcmask 64512
        %v888 = vsel %vm887, %v881, 0
        %v890 = vsel %vm887, %v886, 0
        %892 = vmatpush.xpose.msra.mxu0 0.0
        %893 = vmatpush.xpose.msra.mxu0 0.0
        %894 = vmatpush.xpose.msra.mxu0 0.0
        %895 = vmatpush.xpose.msra.mxu0 0.0
        %896 = vmatpush.xpose.msra.mxu0 0.0
        %897 = vmatpush.xpose.msra.mxu0 0.0
        %898 = vmatpush.xpose.msra.mxu0 0.0
        %899 = vmatpush.xpose.msra.mxu0 0.0
        %900 = vmatpush.xpose.msra.mxu0 0.0
        %901 = vmatpush.xpose.msra.mxu0 0.0
        %902 = vmatpush.xpose.msra.mxu0 0.0
        %903 = vmatpush.xpose.msra.mxu0 0.0
        %904 = vmatpush.xpose.msra.mxu0 0.0
        %905 = vmatpush.xpose.msra.mxu0 0.0
        %906 = vmatpush.xpose.msra.mxu0 0.0
        %907 = vmatpush.xpose.msra.mxu0 %v890
        %908 = vmatmul.f32.gmra.mxu0 %v888
        %v909 = vpop.f32.mrf.mxu0
        %v910 = vadd.f32 %v806, %v909
        %911 = vdwg.mxu0
        %v912 = vsel %vm887, %v910, -inf
        %913 = vmax.xlane.f32.xlu0 %v912
        %v914 = vpop.xlane.xlu0 %913
        %v915 = vsub.f32 %v910, %v914
        %v916 = vmul.f32 %v915, 1.442695
        %v917 = vpow.pop %v916
        %v918 = vsel %vm887, %v917, 0.0
        %919 = vadd.xlane.f32.xlu0 %v918
        %v920 = vpop.xlane.xlu0 %919
        %v921 = vrcp.pop %v920
        %v922 = vmul.f32 %v917, %v921
        %923 = vrot.lane.b32.xlu0 %v881, 64
        %v924 = vpop.permute.xlu0 %923
        %v927 = vsel %vm887, %v922, 0
        %929 = vmatpush.msra.mxu0 0.0
        %930 = vmatpush.msra.mxu0 0.0
        %931 = vmatpush.msra.mxu0 0.0
        %932 = vmatpush.msra.mxu0 0.0
        %933 = vmatpush.msra.mxu0 0.0
        %934 = vmatpush.msra.mxu0 0.0
        %935 = vmatpush.msra.mxu0 0.0
        %936 = vmatpush.msra.mxu0 0.0
        %937 = vmatpush.msra.mxu0 0.0
        %938 = vmatpush.msra.mxu0 0.0
        %939 = vmatpush.msra.mxu0 0.0
        %940 = vmatpush.msra.mxu0 0.0
        %941 = vmatpush.msra.mxu0 0.0
        %942 = vmatpush.msra.mxu0 0.0
        %943 = vmatpush.msra.mxu0 0.0
        %944 = vmatpush.msra.mxu0 %v924
        %945 = vmatmul.f32.gmra.mxu0 %v927
        %v946 = vpop.f32.mrf.mxu0
        %v947 = vadd.f32 0.0, %v946
        %948 = vdwg.mxu0
        %949 = vrot.lane.b32.xlu0 %v881, 120
        %v950 = vpop.permute.xlu0 %949
        %951 = vrot.lane.b32.xlu0 %v881, 88
        %v952 = vpop.permute.xlu0 %951
        %v953 = vsel %vm887, %v950, 0
        %v955 = vsel %vm887, %v952, 0
        %957 = vmatpush.xpose.msra.mxu0 0.0
        %958 = vmatpush.xpose.msra.mxu0 0.0
        %959 = vmatpush.xpose.msra.mxu0 0.0
        %960 = vmatpush.xpose.msra.mxu0 0.0
        %961 = vmatpush.xpose.msra.mxu0 0.0
        %962 = vmatpush.xpose.msra.mxu0 0.0
        %963 = vmatpush.xpose.msra.mxu0 0.0
        %964 = vmatpush.xpose.msra.mxu0 0.0
        %965 = vmatpush.xpose.msra.mxu0 0.0
        %966 = vmatpush.xpose.msra.mxu0 0.0
        %967 = vmatpush.xpose.msra.mxu0 0.0
        %968 = vmatpush.xpose.msra.mxu0 0.0
        %969 = vmatpush.xpose.msra.mxu0 0.0
        %970 = vmatpush.xpose.msra.mxu0 0.0
        %971 = vmatpush.xpose.msra.mxu0 0.0
        %972 = vmatpush.xpose.msra.mxu0 %v955
        %973 = vmatmul.f32.gmra.mxu0 %v953
        %v974 = vpop.f32.mrf.mxu0
        %v975 = vadd.f32 %v806, %v974
        %976 = vdwg.mxu0
        %v977 = vsel %vm887, %v975, -inf
        %978 = vmax.xlane.f32.xlu0 %v977
        %v979 = vpop.xlane.xlu0 %978
        %v980 = vsub.f32 %v975, %v979
        %v981 = vmul.f32 %v980, 1.442695
        %v982 = vpow.pop %v981
        %v983 = vsel %vm887, %v982, 0.0
        %984 = vadd.xlane.f32.xlu0 %v983
        %v985 = vpop.xlane.xlu0 %984
        %v986 = vrcp.pop %v985
        %v987 = vmul.f32 %v982, %v986
        %988 = vrot.lane.b32.xlu0 %v881, 56
        %v989 = vpop.permute.xlu0 %988
        %v992 = vsel %vm887, %v987, 0
        %994 = vmatpush.msra.mxu0 0.0
        %995 = vmatpush.msra.mxu0 0.0
        %996 = vmatpush.msra.mxu0 0.0
        %997 = vmatpush.msra.mxu0 0.0
        %998 = vmatpush.msra.mxu0 0.0
        %999 = vmatpush.msra.mxu0 0.0
        %1000 = vmatpush.msra.mxu0 0.0
        %1001 = vmatpush.msra.mxu0 0.0
        %1002 = vmatpush.msra.mxu0 0.0
        %1003 = vmatpush.msra.mxu0 0.0
        %1004 = vmatpush.msra.mxu0 0.0
        %1005 = vmatpush.msra.mxu0 0.0
        %1006 = vmatpush.msra.mxu0 0.0
        %1007 = vmatpush.msra.mxu0 0.0
        %1008 = vmatpush.msra.mxu0 0.0
        %1009 = vmatpush.msra.mxu0 %v989
        %1010 = vmatmul.f32.gmra.mxu0 %v992
        %v1011 = vpop.f32.mrf.mxu0
        %v1012 = vadd.f32 0.0, %v1011
        %1013 = vdwg.mxu0
        %1014 = vrot.lane.b32.xlu0 %v881, 112
        %v1015 = vpop.permute.xlu0 %1014
        %1016 = vrot.lane.b32.xlu0 %v881, 80
        %v1017 = vpop.permute.xlu0 %1016
        %v1018 = vsel %vm887, %v1015, 0
        %v1020 = vsel %vm887, %v1017, 0
        %1022 = vmatpush.xpose.msra.mxu0 0.0
        %1023 = vmatpush.xpose.msra.mxu0 0.0
        %1024 = vmatpush.xpose.msra.mxu0 0.0
        %1025 = vmatpush.xpose.msra.mxu0 0.0
        %1026 = vmatpush.xpose.msra.mxu0 0.0
        %1027 = vmatpush.xpose.msra.mxu0 0.0
        %1028 = vmatpush.xpose.msra.mxu0 0.0
        %1029 = vmatpush.xpose.msra.mxu0 0.0
        %1030 = vmatpush.xpose.msra.mxu0 0.0
        %1031 = vmatpush.xpose.msra.mxu0 0.0
        %1032 = vmatpush.xpose.msra.mxu0 0.0
        %1033 = vmatpush.xpose.msra.mxu0 0.0
        %1034 = vmatpush.xpose.msra.mxu0 0.0
        %1035 = vmatpush.xpose.msra.mxu0 0.0
        %1036 = vmatpush.xpose.msra.mxu0 0.0
        %1037 = vmatpush.xpose.msra.mxu0 %v1020
        %1038 = vmatmul.f32.gmra.mxu0 %v1018
        %v1039 = vpop.f32.mrf.mxu0
        %v1040 = vadd.f32 %v806, %v1039
        %1041 = vdwg.mxu0
        %v1042 = vsel %vm887, %v1040, -inf
        %1043 = vmax.xlane.f32.xlu0 %v1042
        %v1044 = vpop.xlane.xlu0 %1043
        %v1045 = vsub.f32 %v1040, %v1044
        %v1046 = vmul.f32 %v1045, 1.442695
        %v1047 = vpow.pop %v1046
        %v1048 = vsel %vm887, %v1047, 0.0
        %1049 = vadd.xlane.f32.xlu0 %v1048
        %v1050 = vpop.xlane.xlu0 %1049
        %v1051 = vrcp.pop %v1050
        %v1052 = vmul.f32 %v1047, %v1051
        %1053 = vrot.lane.b32.xlu0 %v881, 48
        %v1054 = vpop.permute.xlu0 %1053
        %v1057 = vsel %vm887, %v1052, 0
        %1059 = vmatpush.msra.mxu0 0.0
        %1060 = vmatpush.msra.mxu0 0.0
        %1061 = vmatpush.msra.mxu0 0.0
        %1062 = vmatpush.msra.mxu0 0.0
        %1063 = vmatpush.msra.mxu0 0.0
        %1064 = vmatpush.msra.mxu0 0.0
        %1065 = vmatpush.msra.mxu0 0.0
        %1066 = vmatpush.msra.mxu0 0.0
        %1067 = vmatpush.msra.mxu0 0.0
        %1068 = vmatpush.msra.mxu0 0.0
        %1069 = vmatpush.msra.mxu0 0.0
        %1070 = vmatpush.msra.mxu0 0.0
        %1071 = vmatpush.msra.mxu0 0.0
        %1072 = vmatpush.msra.mxu0 0.0
        %1073 = vmatpush.msra.mxu0 0.0
        %1074 = vmatpush.msra.mxu0 %v1054
        %1075 = vmatmul.f32.gmra.mxu0 %v1057
        %v1076 = vpop.f32.mrf.mxu0
        %v1077 = vadd.f32 0.0, %v1076
        %1078 = vdwg.mxu0
        %1079 = vrot.lane.b32.xlu0 %v881, 104
        %v1080 = vpop.permute.xlu0 %1079
        %1081 = vrot.lane.b32.xlu0 %v881, 72
        %v1082 = vpop.permute.xlu0 %1081
        %v1083 = vsel %vm887, %v1080, 0
        %v1085 = vsel %vm887, %v1082, 0
        %1087 = vmatpush.xpose.msra.mxu0 0.0
        %1088 = vmatpush.xpose.msra.mxu0 0.0
        %1089 = vmatpush.xpose.msra.mxu0 0.0
        %1090 = vmatpush.xpose.msra.mxu0 0.0
        %1091 = vmatpush.xpose.msra.mxu0 0.0
        %1092 = vmatpush.xpose.msra.mxu0 0.0
        %1093 = vmatpush.xpose.msra.mxu0 0.0
        %1094 = vmatpush.xpose.msra.mxu0 0.0
        %1095 = vmatpush.xpose.msra.mxu0 0.0
        %1096 = vmatpush.xpose.msra.mxu0 0.0
        %1097 = vmatpush.xpose.msra.mxu0 0.0
        %1098 = vmatpush.xpose.msra.mxu0 0.0
        %1099 = vmatpush.xpose.msra.mxu0 0.0
        %1100 = vmatpush.xpose.msra.mxu0 0.0
        %1101 = vmatpush.xpose.msra.mxu0 0.0
        %1102 = vmatpush.xpose.msra.mxu0 %v1085
        %1103 = vmatmul.f32.gmra.mxu0 %v1083
        %v1104 = vpop.f32.mrf.mxu0
        %v1105 = vadd.f32 %v806, %v1104
        %1106 = vdwg.mxu0
        %v1107 = vsel %vm887, %v1105, -inf
        %1108 = vmax.xlane.f32.xlu0 %v1107
        %v1109 = vpop.xlane.xlu0 %1108
        %v1110 = vsub.f32 %v1105, %v1109
        %v1111 = vmul.f32 %v1110, 1.442695
        %v1112 = vpow.pop %v1111
        %v1113 = vsel %vm887, %v1112, 0.0
        %1114 = vadd.xlane.f32.xlu0 %v1113
        %v1115 = vpop.xlane.xlu0 %1114
        %v1116 = vrcp.pop %v1115
        %v1117 = vmul.f32 %v1112, %v1116
        %1118 = vrot.lane.b32.xlu0 %v881, 40
        %v1119 = vpop.permute.xlu0 %1118
        %v1122 = vsel %vm887, %v1117, 0
        %1124 = vmatpush.msra.mxu0 0.0
        %1125 = vmatpush.msra.mxu0 0.0
        %1126 = vmatpush.msra.mxu0 0.0
        %1127 = vmatpush.msra.mxu0 0.0
        %1128 = vmatpush.msra.mxu0 0.0
        %1129 = vmatpush.msra.mxu0 0.0
        %1130 = vmatpush.msra.mxu0 0.0
        %1131 = vmatpush.msra.mxu0 0.0
        %1132 = vmatpush.msra.mxu0 0.0
        %1133 = vmatpush.msra.mxu0 0.0
        %1134 = vmatpush.msra.mxu0 0.0
        %1135 = vmatpush.msra.mxu0 0.0
        %1136 = vmatpush.msra.mxu0 0.0
        %1137 = vmatpush.msra.mxu0 0.0
        %1138 = vmatpush.msra.mxu0 0.0
        %1139 = vmatpush.msra.mxu0 %v1119
        %1140 = vmatmul.f32.gmra.mxu0 %v1122
        %v1141 = vpop.f32.mrf.mxu0
        %v1142 = vadd.f32 0.0, %v1141
        %1143 = vdwg.mxu0
        %1145 = vrot.lane.b32.xlu0 %v1012, 8
        %v1146 = vpop.permute.xlu0 %1145
        %1149 = vrot.lane.b32.xlu0 %v1077, 16
        %v1150 = vpop.permute.xlu0 %1149
        %1153 = vrot.lane.b32.xlu0 %v1142, 24
        %v1154 = vpop.permute.xlu0 %1153
        %v1156 = vsel %vm887, %v947, %v1146
        %vm1157 = vcmask 130048
        %v1158 = vsel %vm1157, %v1156, %v1150
        %vm1159 = vcmask 195584
        %v1160 = vsel %vm1159, %v1158, %v1154
        %v1161 = vpack.c.bf16 %v1160, %v1160
        %v1162 = vld [vmem:[%s7] sm:$0xf]
        %v1163 = vld [vmem:[%s7 + $0x4] sm:$0xf]
        %v1164 = vld [vmem:[%s7 + $0x8] sm:$0xf]
        %v1165 = vld [vmem:[%s7 + $0xc] sm:$0xf]
        %v1166 = vld [vmem:[%s8] sm:$0x1]
        %v1168 = vperm.slane %v1166, 0
        %v1174 = vunpack.c.l.b16 %v1162
        %v1175 = vunpack.c.l.b16 %v1163
        %v1176 = vunpack.c.l.b16 %v1164
        %v1177 = vunpack.c.l.b16 %v1165
        %v1178 = vpack.c.b16 %v1175, %v1174
        %v1179 = vpack.c.b16 %v1177, %v1176
        %v1183 = vsel %vm809, %v1161, 0
        %1185 = vmatpush.bf16.msra.mxu0 0
        %1186 = vmatpush.bf16.msra.mxu0 0
        %1187 = vmatpush.bf16.msra.mxu0 0
        %1188 = vmatpush.bf16.msra.mxu0 0
        %1189 = vmatpush.bf16.msra.mxu0 0
        %1190 = vmatpush.bf16.msra.mxu0 0
        %1191 = vmatpush.bf16.msra.mxu0 %v1179
        %1192 = vmatpush.bf16.msra.mxu0 %v1178
        %1193 = vmatmul.bf16.gmra.mxu0 %v1183
        %v1194 = vpop.f32.mrf.mxu0
        %v1195 = vadd.f32 %v1168, %v1194
        %v1196 = vpop.f32.mrf.mxu0
        %1197 = vdwg.mxu0
        %v1198 = vadd.f32 %v786, %v1195
        %v1199 = vld [vmem:[%s9] sm:$0x1]
        %v1200 = vld [vmem:[%s10] sm:$0x1]
        %v1201 = vsel %vm809, %v1198, 0.0
        %1202 = vadd.xlane.f32.xlu0 %v1201
        %v1203 = vpop.xlane.xlu0 %1202
        %v1204 = vmul.f32 %v1203, %v819
        %v1205 = vsub.f32 %v1198, %v1204
        %v1206 = vmul.f32 %v1205, %v1205
        %v1207 = vsel %vm809, %v1206, 0.0
        %1208 = vadd.xlane.f32.xlu0 %v1207
        %v1209 = vpop.xlane.xlu0 %1208
        %v1210 = vmul.f32 %v1209, %v819
        %v1211 = vadd.f32 %v1210, 1e-05
        %v1212 = vrsqrt.pop %v1211
        %v1213 = vmul.f32 %v1212, %v1211
        %v1214 = vmul.f32 %v1213, %v1212
        %v1215 = vmul.f32 0.5, %v1214
        %v1216 = vsub.f32 1.5, %v1215
        %v1217 = vmul.f32 %v1212, %v1216
        %vm1218 = vweird.f32 %v1211
        %vm1219 = vweird.f32 %v1212
        %vm1220 = vmor %vm1218, %vm1219
        %v1221 = vsel %vm1220, %v1212, %v1217
        %v1222 = vmul.f32 %v1205, %v1221
        %v1224 = vperm.slane %v1199, 0
        %v1226 = vmul.f32 %v1222, %v1224
        %v1228 = vperm.slane %v1200, 0
        %v1230 = vadd.f32 %v1226, %v1228
        %v1231 = vpack.c.bf16 %v1230, %v1230
        %v1232 = vld [vmem:[%s11] sm:$0xf]
        %v1233 = vld [vmem:[%s11 + $0x4] sm:$0xf]
        %v1234 = vld [vmem:[%s11 + $0x8] sm:$0xf]
        %v1235 = vld [vmem:[%s11 + $0xc] sm:$0xf]
        %v1236 = vld [vmem:[%s12] sm:$0x1]
        %v1238 = vperm.slane %v1236, 0
        %v1244 = vunpack.c.l.b16 %v1232
        %v1245 = vunpack.c.l.b16 %v1233
        %v1246 = vunpack.c.l.b16 %v1234
        %v1247 = vunpack.c.l.b16 %v1235
        %v1248 = vpack.c.b16 %v1245, %v1244
        %v1249 = vpack.c.b16 %v1247, %v1246
        %v1253 = vsel %vm809, %v1231, 0
        %1255 = vmatpush.bf16.msra.mxu0 0
        %1256 = vmatpush.bf16.msra.mxu0 0
        %1257 = vmatpush.bf16.msra.mxu0 0
        %1258 = vmatpush.bf16.msra.mxu0 0
        %1259 = vmatpush.bf16.msra.mxu0 0
        %1260 = vmatpush.bf16.msra.mxu0 0
        %1261 = vmatpush.bf16.msra.mxu0 %v1249
        %1262 = vmatpush.bf16.msra.mxu0 %v1248
        %1263 = vmatmul.bf16.gmra.mxu0 %v1253
        %v1264 = vpop.f32.mrf.mxu0
        %v1265 = vadd.f32 %v1238, %v1264
        %v1266 = vpop.f32.mrf.mxu0
        %1267 = vdwg.mxu0
        %v1268 = vld [vmem:[%s13] sm:$0xf]
        %v1269 = vld [vmem:[%s13 + $0x4] sm:$0xf]
        %v1270 = vld [vmem:[%s13 + $0x8] sm:$0xf]
        %v1271 = vld [vmem:[%s13 + $0xc] sm:$0xf]
        %v1272 = vld [vmem:[%s14] sm:$0x1]
        %v1274 = vperm.slane %v1272, 0
        %v1284 = vunpack.c.l.b16 %v787
        %v1285 = vunpack.c.l.b16 %v788
        %v1286 = vunpack.c.l.b16 %v789
        %v1287 = vunpack.c.l.b16 %v790
        %v1288 = vunpack.c.l.b16 %v791
        %v1289 = vunpack.c.l.b16 %v792
        %v1290 = vunpack.c.l.b16 %v793
        %v1291 = vunpack.c.l.b16 %v794
        %v1292 = vpack.c.b16 %v1285, %v1284
        %v1293 = vpack.c.b16 %v1287, %v1286
        %v1294 = vpack.c.b16 %v1289, %v1288
        %v1295 = vpack.c.b16 %v1291, %v1290
        %v1300 = vunpack.c.l.b16 %v1268
        %v1301 = vunpack.c.l.b16 %v1269
        %v1302 = vunpack.c.l.b16 %v1270
        %v1303 = vunpack.c.l.b16 %v1271
        %v1304 = vpack.c.b16 %v1301, %v1300
        %v1305 = vpack.c.b16 %v1303, %v1302
        %v1309 = vsel %vm809, %v1292, 0
        %v1312 = vsel %vm809, %v1293, 0
        %v1315 = vsel %vm809, %v1294, 0
        %v1318 = vsel %vm809, %v1295, 0
        %1320 = vmatpush.bf16.msra.mxu0 0
        %1321 = vmatpush.bf16.msra.mxu0 0
        %1322 = vmatpush.bf16.msra.mxu0 0
        %1323 = vmatpush.bf16.msra.mxu0 0
        %1324 = vmatpush.bf16.msra.mxu0 0
        %1325 = vmatpush.bf16.msra.mxu0 0
        %1326 = vmatpush.bf16.msra.mxu0 %v1305
        %1327 = vmatpush.bf16.msra.mxu0 %v1304
        %1328 = vmatmul.bf16.gmra.mxu0 %v1309
        %v1329 = vpop.f32.mrf.mxu0
        %v1330 = vadd.f32 %v1274, %v1329
        %v1331 = vpop.f32.mrf.mxu0
        %v1332 = vadd.f32 %v1274, %v1331
        %1333 = vmatmul.bf16.gmra.mxu0 %v1312
        %v1334 = vpop.f32.mrf.mxu0
        %v1335 = vadd.f32 %v1274, %v1334
        %v1336 = vpop.f32.mrf.mxu0
        %v1337 = vadd.f32 %v1274, %v1336
        %1338 = vmatmul.bf16.gmra.mxu0 %v1315
        %v1339 = vpop.f32.mrf.mxu0
        %v1340 = vadd.f32 %v1274, %v1339
        %v1341 = vpop.f32.mrf.mxu0
        %v1342 = vadd.f32 %v1274, %v1341
        %1343 = vmatmul.bf16.gmra.mxu0 %v1318
        %v1344 = vpop.f32.mrf.mxu0
        %v1345 = vadd.f32 %v1274, %v1344
        %v1346 = vpop.f32.mrf.mxu0
        %v1347 = vadd.f32 %v1274, %v1346
        %1348 = vdwg.mxu0
        %v1350 = vsel %vm887, %v1265, 0
        %v1353 = vsel %vm887, %v1330, 0
        %v1356 = vsel %vm887, %v1332, 0
        %v1359 = vsel %vm887, %v1335, 0
        %v1362 = vsel %vm887, %v1337, 0
        %v1365 = vsel %vm887, %v1340, 0
        %v1368 = vsel %vm887, %v1342, 0
        %v1371 = vsel %vm887, %v1345, 0
        %v1374 = vsel %vm887, %v1347, 0
        %1376 = vmatpush.xpose.msra.mxu0 0.0
        %1377 = vmatpush.xpose.msra.mxu0 0.0
        %1378 = vmatpush.xpose.msra.mxu0 0.0
        %1379 = vmatpush.xpose.msra.mxu0 0.0
        %1380 = vmatpush.xpose.msra.mxu0 0.0
        %1381 = vmatpush.xpose.msra.mxu0 0.0
        %1382 = vmatpush.xpose.msra.mxu0 0.0
        %1383 = vmatpush.xpose.msra.mxu0 0.0
        %1384 = vmatpush.xpose.msra.mxu0 %v1374
        %1385 = vmatpush.xpose.msra.mxu0 %v1371
        %1386 = vmatpush.xpose.msra.mxu0 %v1368
        %1387 = vmatpush.xpose.msra.mxu0 %v1365
        %1388 = vmatpush.xpose.msra.mxu0 %v1362
        %1389 = vmatpush.xpose.msra.mxu0 %v1359
        %1390 = vmatpush.xpose.msra.mxu0 %v1356
        %1391 = vmatpush.xpose.msra.mxu0 %v1353
        %1392 = vmatmul.f32.gmra.mxu0 %v1350
        %v1393 = vpop.f32.mrf.mxu0
        %v1394 = vadd.f32 0.0, %v1393
        %1395 = vdwg.mxu0
        %vm1396 = vcmask 523264
        %v1397 = vsel %vm1396, %v1394, -inf
        %1398 = vmax.xlane.f32.xlu0 %v1397
        %v1399 = vpop.xlane.xlu0 %1398
        %v1400 = vsub.f32 %v1394, %v1399
        %v1401 = vmul.f32 %v1400, 1.442695
        %v1402 = vpow.pop %v1401
        %v1403 = vsel %vm1396, %v1402, 0.0
        %1404 = vadd.xlane.f32.xlu0 %v1403
        %v1405 = vpop.xlane.xlu0 %1404
        %v1406 = vrcp.pop %v1405
        %v1407 = vmul.f32 %v1402, %v1406
        %1408 = vrot.lane.b32.xlu0 %v1330, 96
        %v1409 = vpop.permute.xlu0 %1408
        %1410 = vrot.lane.b32.xlu0 %v1332, 96
        %v1411 = vpop.permute.xlu0 %1410
        %1412 = vrot.lane.b32.xlu0 %v1335, 96
        %v1413 = vpop.permute.xlu0 %1412
        %1414 = vrot.lane.b32.xlu0 %v1337, 96
        %v1415 = vpop.permute.xlu0 %1414
        %1416 = vrot.lane.b32.xlu0 %v1340, 96
        %v1417 = vpop.permute.xlu0 %1416
        %1418 = vrot.lane.b32.xlu0 %v1342, 96
        %v1419 = vpop.permute.xlu0 %1418
        %1420 = vrot.lane.b32.xlu0 %v1345, 96
        %v1421 = vpop.permute.xlu0 %1420
        %1422 = vrot.lane.b32.xlu0 %v1347, 96
        %v1423 = vpop.permute.xlu0 %1422
        %v1433 = vsel %vm1396, %v1407, 0
        %1435 = vmatpush.msra.mxu0 0.0
        %1436 = vmatpush.msra.mxu0 0.0
        %1437 = vmatpush.msra.mxu0 0.0
        %1438 = vmatpush.msra.mxu0 0.0
        %1439 = vmatpush.msra.mxu0 0.0
        %1440 = vmatpush.msra.mxu0 0.0
        %1441 = vmatpush.msra.mxu0 0.0
        %1442 = vmatpush.msra.mxu0 0.0
        %1443 = vmatpush.msra.mxu0 %v1423
        %1444 = vmatpush.msra.mxu0 %v1421
        %1445 = vmatpush.msra.mxu0 %v1419
        %1446 = vmatpush.msra.mxu0 %v1417
        %1447 = vmatpush.msra.mxu0 %v1415
        %1448 = vmatpush.msra.mxu0 %v1413
        %1449 = vmatpush.msra.mxu0 %v1411
        %1450 = vmatpush.msra.mxu0 %v1409
        %1451 = vmatmul.f32.gmra.mxu0 %v1433
        %v1452 = vpop.f32.mrf.mxu0
        %v1453 = vadd.f32 0.0, %v1452
        %1454 = vdwg.mxu0
        %1455 = vrot.lane.b32.xlu0 %v1265, 120
        %v1456 = vpop.permute.xlu0 %1455
        %1457 = vrot.lane.b32.xlu0 %v1330, 120
        %v1458 = vpop.permute.xlu0 %1457
        %1459 = vrot.lane.b32.xlu0 %v1332, 120
        %v1460 = vpop.permute.xlu0 %1459
        %1461 = vrot.lane.b32.xlu0 %v1335, 120
        %v1462 = vpop.permute.xlu0 %1461
        %1463 = vrot.lane.b32.xlu0 %v1337, 120
        %v1464 = vpop.permute.xlu0 %1463
        %1465 = vrot.lane.b32.xlu0 %v1340, 120
        %v1466 = vpop.permute.xlu0 %1465
        %1467 = vrot.lane.b32.xlu0 %v1342, 120
        %v1468 = vpop.permute.xlu0 %1467
        %1469 = vrot.lane.b32.xlu0 %v1345, 120
        %v1470 = vpop.permute.xlu0 %1469
        %1471 = vrot.lane.b32.xlu0 %v1347, 120
        %v1472 = vpop.permute.xlu0 %1471
        %v1473 = vsel %vm887, %v1456, 0
        %v1475 = vsel %vm887, %v1458, 0
        %v1477 = vsel %vm887, %v1460, 0
        %v1479 = vsel %vm887, %v1462, 0
        %v1481 = vsel %vm887, %v1464, 0
        %v1483 = vsel %vm887, %v1466, 0
        %v1485 = vsel %vm887, %v1468, 0
        %v1487 = vsel %vm887, %v1470, 0
        %v1489 = vsel %vm887, %v1472, 0
        %1491 = vmatpush.xpose.msra.mxu0 0.0
        %1492 = vmatpush.xpose.msra.mxu0 0.0
        %1493 = vmatpush.xpose.msra.mxu0 0.0
        %1494 = vmatpush.xpose.msra.mxu0 0.0
        %1495 = vmatpush.xpose.msra.mxu0 0.0
        %1496 = vmatpush.xpose.msra.mxu0 0.0
        %1497 = vmatpush.xpose.msra.mxu0 0.0
        %1498 = vmatpush.xpose.msra.mxu0 0.0
        %1499 = vmatpush.xpose.msra.mxu0 %v1489
        %1500 = vmatpush.xpose.msra.mxu0 %v1487
        %1501 = vmatpush.xpose.msra.mxu0 %v1485
        %1502 = vmatpush.xpose.msra.mxu0 %v1483
        %1503 = vmatpush.xpose.msra.mxu0 %v1481
        %1504 = vmatpush.xpose.msra.mxu0 %v1479
        %1505 = vmatpush.xpose.msra.mxu0 %v1477
        %1506 = vmatpush.xpose.msra.mxu0 %v1475
        %1507 = vmatmul.f32.gmra.mxu0 %v1473
        %v1508 = vpop.f32.mrf.mxu0
        %v1509 = vadd.f32 0.0, %v1508
        %1510 = vdwg.mxu0
        %v1511 = vsel %vm1396, %v1509, -inf
        %1512 = vmax.xlane.f32.xlu0 %v1511
        %v1513 = vpop.xlane.xlu0 %1512
        %v1514 = vsub.f32 %v1509, %v1513
        %v1515 = vmul.f32 %v1514, 1.442695
        %v1516 = vpow.pop %v1515
        %v1517 = vsel %vm1396, %v1516, 0.0
        %1518 = vadd.xlane.f32.xlu0 %v1517
        %v1519 = vpop.xlane.xlu0 %1518
        %v1520 = vrcp.pop %v1519
        %v1521 = vmul.f32 %v1516, %v1520
        %1522 = vrot.lane.b32.xlu0 %v1330, 88
        %v1523 = vpop.permute.xlu0 %1522
        %1524 = vrot.lane.b32.xlu0 %v1332, 88
        %v1525 = vpop.permute.xlu0 %1524
        %1526 = vrot.lane.b32.xlu0 %v1335, 88
        %v1527 = vpop.permute.xlu0 %1526
        %1528 = vrot.lane.b32.xlu0 %v1337, 88
        %v1529 = vpop.permute.xlu0 %1528
        %1530 = vrot.lane.b32.xlu0 %v1340, 88
        %v1531 = vpop.permute.xlu0 %1530
        %1532 = vrot.lane.b32.xlu0 %v1342, 88
        %v1533 = vpop.permute.xlu0 %1532
        %1534 = vrot.lane.b32.xlu0 %v1345, 88
        %v1535 = vpop.permute.xlu0 %1534
        %1536 = vrot.lane.b32.xlu0 %v1347, 88
        %v1537 = vpop.permute.xlu0 %1536
        %v1547 = vsel %vm1396, %v1521, 0
        %1549 = vmatpush.msra.mxu0 0.0
        %1550 = vmatpush.msra.mxu0 0.0
        %1551 = vmatpush.msra.mxu0 0.0
        %1552 = vmatpush.msra.mxu0 0.0
        %1553 = vmatpush.msra.mxu0 0.0
        %1554 = vmatpush.msra.mxu0 0.0
        %1555 = vmatpush.msra.mxu0 0.0
        %1556 = vmatpush.msra.mxu0 0.0
        %1557 = vmatpush.msra.mxu0 %v1537
        %1558 = vmatpush.msra.mxu0 %v1535
        %1559 = vmatpush.msra.mxu0 %v1533
        %1560 = vmatpush.msra.mxu0 %v1531
        %1561 = vmatpush.msra.mxu0 %v1529
        %1562 = vmatpush.msra.mxu0 %v1527
        %1563 = vmatpush.msra.mxu0 %v1525
        %1564 = vmatpush.msra.mxu0 %v1523
        %1565 = vmatmul.f32.gmra.mxu0 %v1547
        %v1566 = vpop.f32.mrf.mxu0
        %v1567 = vadd.f32 0.0, %v1566
        %1568 = vdwg.mxu0
        %1569 = vrot.lane.b32.xlu0 %v1265, 112
        %v1570 = vpop.permute.xlu0 %1569
        %1571 = vrot.lane.b32.xlu0 %v1330, 112
        %v1572 = vpop.permute.xlu0 %1571
        %1573 = vrot.lane.b32.xlu0 %v1332, 112
        %v1574 = vpop.permute.xlu0 %1573
        %1575 = vrot.lane.b32.xlu0 %v1335, 112
        %v1576 = vpop.permute.xlu0 %1575
        %1577 = vrot.lane.b32.xlu0 %v1337, 112
        %v1578 = vpop.permute.xlu0 %1577
        %1579 = vrot.lane.b32.xlu0 %v1340, 112
        %v1580 = vpop.permute.xlu0 %1579
        %1581 = vrot.lane.b32.xlu0 %v1342, 112
        %v1582 = vpop.permute.xlu0 %1581
        %1583 = vrot.lane.b32.xlu0 %v1345, 112
        %v1584 = vpop.permute.xlu0 %1583
        %1585 = vrot.lane.b32.xlu0 %v1347, 112
        %v1586 = vpop.permute.xlu0 %1585
        %v1587 = vsel %vm887, %v1570, 0
        %v1589 = vsel %vm887, %v1572, 0
        %v1591 = vsel %vm887, %v1574, 0
        %v1593 = vsel %vm887, %v1576, 0
        %v1595 = vsel %vm887, %v1578, 0
        %v1597 = vsel %vm887, %v1580, 0
        %v1599 = vsel %vm887, %v1582, 0
        %v1601 = vsel %vm887, %v1584, 0
        %v1603 = vsel %vm887, %v1586, 0
        %1605 = vmatpush.xpose.msra.mxu0 0.0
        %1606 = vmatpush.xpose.msra.mxu0 0.0
        %1607 = vmatpush.xpose.msra.mxu0 0.0
        %1608 = vmatpush.xpose.msra.mxu0 0.0
        %1609 = vmatpush.xpose.msra.mxu0 0.0
        %1610 = vmatpush.xpose.msra.mxu0 0.0
        %1611 = vmatpush.xpose.msra.mxu0 0.0
        %1612 = vmatpush.xpose.msra.mxu0 0.0
        %1613 = vmatpush.xpose.msra.mxu0 %v1603
        %1614 = vmatpush.xpose.msra.mxu0 %v1601
        %1615 = vmatpush.xpose.msra.mxu0 %v1599
        %1616 = vmatpush.xpose.msra.mxu0 %v1597
        %1617 = vmatpush.xpose.msra.mxu0 %v1595
        %1618 = vmatpush.xpose.msra.mxu0 %v1593
        %1619 = vmatpush.xpose.msra.mxu0 %v1591
        %1620 = vmatpush.xpose.msra.mxu0 %v1589
        %1621 = vmatmul.f32.gmra.mxu0 %v1587
        %v1622 = vpop.f32.mrf.mxu0
        %v1623 = vadd.f32 0.0, %v1622
        %1624 = vdwg.mxu0
        %v1625 = vsel %vm1396, %v1623, -inf
        %1626 = vmax.xlane.f32.xlu0 %v1625
        %v1627 = vpop.xlane.xlu0 %1626
        %v1628 = vsub.f32 %v1623, %v1627
        %v1629 = vmul.f32 %v1628, 1.442695
        %v1630 = vpow.pop %v1629
        %v1631 = vsel %vm1396, %v1630, 0.0
        %1632 = vadd.xlane.f32.xlu0 %v1631
        %v1633 = vpop.xlane.xlu0 %1632
        %v1634 = vrcp.pop %v1633
        %v1635 = vmul.f32 %v1630, %v1634
        %1636 = vrot.lane.b32.xlu0 %v1330, 80
        %v1637 = vpop.permute.xlu0 %1636
        %1638 = vrot.lane.b32.xlu0 %v1332, 80
        %v1639 = vpop.permute.xlu0 %1638
        %1640 = vrot.lane.b32.xlu0 %v1335, 80
        %v1641 = vpop.permute.xlu0 %1640
        %1642 = vrot.lane.b32.xlu0 %v1337, 80
        %v1643 = vpop.permute.xlu0 %1642
        %1644 = vrot.lane.b32.xlu0 %v1340, 80
        %v1645 = vpop.permute.xlu0 %1644
        %1646 = vrot.lane.b32.xlu0 %v1342, 80
        %v1647 = vpop.permute.xlu0 %1646
        %1648 = vrot.lane.b32.xlu0 %v1345, 80
        %v1649 = vpop.permute.xlu0 %1648
        %1650 = vrot.lane.b32.xlu0 %v1347, 80
        %v1651 = vpop.permute.xlu0 %1650
        %v1661 = vsel %vm1396, %v1635, 0
        %1663 = vmatpush.msra.mxu0 0.0
        %1664 = vmatpush.msra.mxu0 0.0
        %1665 = vmatpush.msra.mxu0 0.0
        %1666 = vmatpush.msra.mxu0 0.0
        %1667 = vmatpush.msra.mxu0 0.0
        %1668 = vmatpush.msra.mxu0 0.0
        %1669 = vmatpush.msra.mxu0 0.0
        %1670 = vmatpush.msra.mxu0 0.0
        %1671 = vmatpush.msra.mxu0 %v1651
        %1672 = vmatpush.msra.mxu0 %v1649
        %1673 = vmatpush.msra.mxu0 %v1647
        %1674 = vmatpush.msra.mxu0 %v1645
        %1675 = vmatpush.msra.mxu0 %v1643
        %1676 = vmatpush.msra.mxu0 %v1641
        %1677 = vmatpush.msra.mxu0 %v1639
        %1678 = vmatpush.msra.mxu0 %v1637
        %1679 = vmatmul.f32.gmra.mxu0 %v1661
        %v1680 = vpop.f32.mrf.mxu0
        %v1681 = vadd.f32 0.0, %v1680
        %1682 = vdwg.mxu0
        %1683 = vrot.lane.b32.xlu0 %v1265, 104
        %v1684 = vpop.permute.xlu0 %1683
        %1685 = vrot.lane.b32.xlu0 %v1330, 104
        %v1686 = vpop.permute.xlu0 %1685
        %1687 = vrot.lane.b32.xlu0 %v1332, 104
        %v1688 = vpop.permute.xlu0 %1687
        %1689 = vrot.lane.b32.xlu0 %v1335, 104
        %v1690 = vpop.permute.xlu0 %1689
        %1691 = vrot.lane.b32.xlu0 %v1337, 104
        %v1692 = vpop.permute.xlu0 %1691
        %1693 = vrot.lane.b32.xlu0 %v1340, 104
        %v1694 = vpop.permute.xlu0 %1693
        %1695 = vrot.lane.b32.xlu0 %v1342, 104
        %v1696 = vpop.permute.xlu0 %1695
        %1697 = vrot.lane.b32.xlu0 %v1345, 104
        %v1698 = vpop.permute.xlu0 %1697
        %1699 = vrot.lane.b32.xlu0 %v1347, 104
        %v1700 = vpop.permute.xlu0 %1699
        %v1701 = vsel %vm887, %v1684, 0
        %v1703 = vsel %vm887, %v1686, 0
        %v1705 = vsel %vm887, %v1688, 0
        %v1707 = vsel %vm887, %v1690, 0
        %v1709 = vsel %vm887, %v1692, 0
        %v1711 = vsel %vm887, %v1694, 0
        %v1713 = vsel %vm887, %v1696, 0
        %v1715 = vsel %vm887, %v1698, 0
        %v1717 = vsel %vm887, %v1700, 0
        %1719 = vmatpush.xpose.msra.mxu0 0.0
        %1720 = vmatpush.xpose.msra.mxu0 0.0
        %1721 = vmatpush.xpose.msra.mxu0 0.0
        %1722 = vmatpush.xpose.msra.mxu0 0.0
        %1723 = vmatpush.xpose.msra.mxu0 0.0
        %1724 = vmatpush.xpose.msra.mxu0 0.0
        %1725 = vmatpush.xpose.msra.mxu0 0.0
        %1726 = vmatpush.xpose.msra.mxu0 0.0
        %1727 = vmatpush.xpose.msra.mxu0 %v1717
        %1728 = vmatpush.xpose.msra.mxu0 %v1715
        %1729 = vmatpush.xpose.msra.mxu0 %v1713
        %1730 = vmatpush.xpose.msra.mxu0 %v1711
        %1731 = vmatpush.xpose.msra.mxu0 %v1709
        %1732 = vmatpush.xpose.msra.mxu0 %v1707
        %1733 = vmatpush.xpose.msra.mxu0 %v1705
        %1734 = vmatpush.xpose.msra.mxu0 %v1703
        %1735 = vmatmul.f32.gmra.mxu0 %v1701
        %v1736 = vpop.f32.mrf.mxu0
        %v1737 = vadd.f32 0.0, %v1736
        %1738 = vdwg.mxu0
        %v1739 = vsel %vm1396, %v1737, -inf
        %1740 = vmax.xlane.f32.xlu0 %v1739
        %v1741 = vpop.xlane.xlu0 %1740
        %v1742 = vsub.f32 %v1737, %v1741
        %v1743 = vmul.f32 %v1742, 1.442695
        %v1744 = vpow.pop %v1743
        %v1745 = vsel %vm1396, %v1744, 0.0
        %1746 = vadd.xlane.f32.xlu0 %v1745
        %v1747 = vpop.xlane.xlu0 %1746
        %v1748 = vrcp.pop %v1747
        %v1749 = vmul.f32 %v1744, %v1748
        %1750 = vrot.lane.b32.xlu0 %v1330, 72
        %v1751 = vpop.permute.xlu0 %1750
        %1752 = vrot.lane.b32.xlu0 %v1332, 72
        %v1753 = vpop.permute.xlu0 %1752
        %1754 = vrot.lane.b32.xlu0 %v1335, 72
        %v1755 = vpop.permute.xlu0 %1754
        %1756 = vrot.lane.b32.xlu0 %v1337, 72
        %v1757 = vpop.permute.xlu0 %1756
        %1758 = vrot.lane.b32.xlu0 %v1340, 72
        %v1759 = vpop.permute.xlu0 %1758
        %1760 = vrot.lane.b32.xlu0 %v1342, 72
        %v1761 = vpop.permute.xlu0 %1760
        %1762 = vrot.lane.b32.xlu0 %v1345, 72
        %v1763 = vpop.permute.xlu0 %1762
        %1764 = vrot.lane.b32.xlu0 %v1347, 72
        %v1765 = vpop.permute.xlu0 %1764
        %v1775 = vsel %vm1396, %v1749, 0
        %1777 = vmatpush.msra.mxu0 0.0
        %1778 = vmatpush.msra.mxu0 0.0
        %1779 = vmatpush.msra.mxu0 0.0
        %1780 = vmatpush.msra.mxu0 0.0
        %1781 = vmatpush.msra.mxu0 0.0
        %1782 = vmatpush.msra.mxu0 0.0
        %1783 = vmatpush.msra.mxu0 0.0
        %1784 = vmatpush.msra.mxu0 0.0
        %1785 = vmatpush.msra.mxu0 %v1765
        %1786 = vmatpush.msra.mxu0 %v1763
        %1787 = vmatpush.msra.mxu0 %v1761
        %1788 = vmatpush.msra.mxu0 %v1759
        %1789 = vmatpush.msra.mxu0 %v1757
        %1790 = vmatpush.msra.mxu0 %v1755
        %1791 = vmatpush.msra.mxu0 %v1753
        %1792 = vmatpush.msra.mxu0 %v1751
        %1793 = vmatmul.f32.gmra.mxu0 %v1775
        %v1794 = vpop.f32.mrf.mxu0
        %v1795 = vadd.f32 0.0, %v1794
        %1796 = vdwg.mxu0
        %1798 = vrot.lane.b32.xlu0 %v1567, 8
        %v1799 = vpop.permute.xlu0 %1798
        %1802 = vrot.lane.b32.xlu0 %v1681, 16
        %v1803 = vpop.permute.xlu0 %1802
        %1806 = vrot.lane.b32.xlu0 %v1795, 24
        %v1807 = vpop.permute.xlu0 %1806
        %v1809 = vsel %vm887, %v1453, %v1799
        %v1810 = vsel %vm1157, %v1809, %v1803
        %v1811 = vsel %vm1159, %v1810, %v1807
        %v1812 = vpack.c.bf16 %v1811, %v1811
        %v1813 = vld [vmem:[%s15] sm:$0xf]
        %v1814 = vld [vmem:[%s15 + $0x4] sm:$0xf]
        %v1815 = vld [vmem:[%s15 + $0x8] sm:$0xf]
        %v1816 = vld [vmem:[%s15 + $0xc] sm:$0xf]
        %v1821 = vunpack.c.l.b16 %v1813
        %v1822 = vunpack.c.l.b16 %v1814
        %v1823 = vunpack.c.l.b16 %v1815
        %v1824 = vunpack.c.l.b16 %v1816
        %v1825 = vpack.c.b16 %v1822, %v1821
        %v1826 = vpack.c.b16 %v1824, %v1823
        %v1830 = vsel %vm809, %v1812, 0
        %1832 = vmatpush.bf16.msra.mxu0 0
        %1833 = vmatpush.bf16.msra.mxu0 0
        %1834 = vmatpush.bf16.msra.mxu0 0
        %1835 = vmatpush.bf16.msra.mxu0 0
        %1836 = vmatpush.bf16.msra.mxu0 0
        %1837 = vmatpush.bf16.msra.mxu0 0
        %1838 = vmatpush.bf16.msra.mxu0 %v1826
        %1839 = vmatpush.bf16.msra.mxu0 %v1825
        %1840 = vmatmul.bf16.gmra.mxu0 %v1830
        %v1841 = vpop.f32.mrf.mxu0
        %v1842 = vadd.f32 0.0, %v1841
        %v1843 = vpop.f32.mrf.mxu0
        %1844 = vdwg.mxu0
        %v1845 = vadd.f32 %v1198, %v1842
        %v1846 = vld [vmem:[%s16] sm:$0x1]
        %v1848 = vperm.slane %v1846, 0
        %v1850 = vadd.f32 %v1845, %v1848
        %v1851 = vld [vmem:[%s17] sm:$0x1]
        %v1852 = vld [vmem:[#allocation2] sm:$0x1]
        %v1853 = vsel %vm809, %v1850, 0.0
        %1854 = vadd.xlane.f32.xlu0 %v1853
        %v1855 = vpop.xlane.xlu0 %1854
        %v1856 = vmul.f32 %v1855, %v819
        %v1857 = vsub.f32 %v1850, %v1856
        %v1858 = vmul.f32 %v1857, %v1857
        %v1859 = vsel %vm809, %v1858, 0.0
        %1860 = vadd.xlane.f32.xlu0 %v1859
        %v1861 = vpop.xlane.xlu0 %1860
        %v1862 = vmul.f32 %v1861, %v819
        %v1863 = vadd.f32 %v1862, 1e-05
        %v1864 = vrsqrt.pop %v1863
        %v1865 = vmul.f32 %v1864, %v1863
        %v1866 = vmul.f32 %v1865, %v1864
        %v1867 = vmul.f32 0.5, %v1866
        %v1868 = vsub.f32 1.5, %v1867
        %v1869 = vmul.f32 %v1864, %v1868
        %vm1870 = vweird.f32 %v1863
        %vm1871 = vweird.f32 %v1864
        %vm1872 = vmor %vm1870, %vm1871
        %v1873 = vsel %vm1872, %v1864, %v1869
        %v1874 = vmul.f32 %v1857, %v1873
        %v1876 = vperm.slane %v1851, 0
        %v1878 = vmul.f32 %v1874, %v1876
        %v1880 = vperm.slane %v1852, 0
        %v1882 = vadd.f32 %v1878, %v1880
        %v1883 = vpack.c.bf16 %v1882, %v1882
        %v1884 = vld [vmem:[%s19] sm:$0xf]
        %v1885 = vld [vmem:[%s19 + $0x4] sm:$0xf]
        %v1886 = vld [vmem:[%s19 + $0x8] sm:$0xf]
        %v1887 = vld [vmem:[%s19 + $0xc] sm:$0xf]
        %v1888 = vld [vmem:[#allocation4] sm:$0x1]
        %v1890 = vperm.slane %v1888, 0
        %v1896 = vunpack.c.l.b16 %v1884
        %v1897 = vunpack.c.l.b16 %v1885
        %v1898 = vunpack.c.l.b16 %v1886
        %v1899 = vunpack.c.l.b16 %v1887
        %v1900 = vpack.c.b16 %v1897, %v1896
        %v1901 = vpack.c.b16 %v1899, %v1898
        %v1905 = vsel %vm809, %v1883, 0
        %1907 = vmatpush.bf16.msra.mxu0 0
        %1908 = vmatpush.bf16.msra.mxu0 0
        %1909 = vmatpush.bf16.msra.mxu0 0
        %1910 = vmatpush.bf16.msra.mxu0 0
        %1911 = vmatpush.bf16.msra.mxu0 0
        %1912 = vmatpush.bf16.msra.mxu0 0
        %1913 = vmatpush.bf16.msra.mxu0 %v1901
        %1914 = vmatpush.bf16.msra.mxu0 %v1900
        %1915 = vmatmul.bf16.gmra.mxu0 %v1905
        %v1916 = vpop.f32.mrf.mxu0
        %v1917 = vadd.f32 %v1890, %v1916
        %v1918 = vpop.f32.mrf.mxu0
        %1919 = vdwg.mxu0
        %v1920 = vmul.f32 %v1917, 0.5
        %v1921 = vmul.f32 %v1917, 0.044715
        %v1922 = vmul.f32 %v1921, %v1917
        %v1923 = vmul.f32 %v1922, %v1917
        %v1924 = vadd.f32 %v1917, %v1923
        %v1925 = vmul.f32 %v1924, 0.7978846
        %v1926 = vtanh.pop %v1925
        %v1927 = vadd.f32 %v1926, 1.0
        %v1928 = vmul.f32 %v1920, %v1927
        %v1929 = vpack.c.bf16 %v1928, %v1928
        %v1930 = vld [vmem:[%s21] sm:$0xf]
        %v1931 = vld [vmem:[%s21 + $0x4] sm:$0xf]
        %v1932 = vld [vmem:[%s21 + $0x8] sm:$0xf]
        %v1933 = vld [vmem:[%s21 + $0xc] sm:$0xf]
        %v1934 = vld [vmem:[%s21 + $0x10] sm:$0xf]
        %v1935 = vld [vmem:[%s21 + $0x14] sm:$0xf]
        %v1936 = vld [vmem:[%s21 + $0x18] sm:$0xf]
        %v1937 = vld [vmem:[%s21 + $0x1c] sm:$0xf]
        %v1938 = vld [vmem:[%s21 + $0x20] sm:$0xf]
        %v1939 = vld [vmem:[%s21 + $0x24] sm:$0xf]
        %v1940 = vld [vmem:[%s21 + $0x28] sm:$0xf]
        %v1941 = vld [vmem:[%s21 + $0x2c] sm:$0xf]
        %v1942 = vld [vmem:[%s21 + $0x30] sm:$0xf]
        %v1943 = vld [vmem:[%s21 + $0x34] sm:$0xf]
        %v1944 = vld [vmem:[%s21 + $0x38] sm:$0xf]
        %v1945 = vld [vmem:[%s21 + $0x3c] sm:$0xf]
        %v1946 = vld [vmem:[#allocation6] sm:$0x1]
        %v1948 = vperm.slane %v1946, 0
        %v1966 = vunpack.c.l.b16 %v1930
        %v1967 = vunpack.c.l.b16 %v1931
        %v1968 = vunpack.c.l.b16 %v1932
        %v1969 = vunpack.c.l.b16 %v1933
        %v1970 = vunpack.c.l.b16 %v1934
        %v1971 = vunpack.c.l.b16 %v1935
        %v1972 = vunpack.c.l.b16 %v1936
        %v1973 = vunpack.c.l.b16 %v1937
        %v1974 = vunpack.c.l.b16 %v1938
        %v1975 = vunpack.c.l.b16 %v1939
        %v1976 = vunpack.c.l.b16 %v1940
        %v1977 = vunpack.c.l.b16 %v1941
        %v1978 = vunpack.c.l.b16 %v1942
        %v1979 = vunpack.c.l.b16 %v1943
        %v1980 = vunpack.c.l.b16 %v1944
        %v1981 = vunpack.c.l.b16 %v1945
        %v1982 = vpack.c.b16 %v1967, %v1966
        %v1983 = vpack.c.b16 %v1969, %v1968
        %v1984 = vpack.c.b16 %v1971, %v1970
        %v1985 = vpack.c.b16 %v1973, %v1972
        %v1986 = vpack.c.b16 %v1975, %v1974
        %v1987 = vpack.c.b16 %v1977, %v1976
        %v1988 = vpack.c.b16 %v1979, %v1978
        %v1989 = vpack.c.b16 %v1981, %v1980
        %1998 = vmatpush.bf16.msra.mxu0 %v1989
        %1999 = vmatpush.bf16.msra.mxu0 %v1988
        %2000 = vmatpush.bf16.msra.mxu0 %v1987
        %2001 = vmatpush.bf16.msra.mxu0 %v1986
        %2002 = vmatpush.bf16.msra.mxu0 %v1985
        %2003 = vmatpush.bf16.msra.mxu0 %v1984
        %2004 = vmatpush.bf16.msra.mxu0 %v1983
        %2005 = vmatpush.bf16.msra.mxu0 %v1982
        %2006 = vmatmul.bf16.gmra.mxu0 %v1929
        %v2007 = vpop.f32.mrf.mxu0
        %v2008 = vadd.f32 %v1948, %v2007
        %v2009 = vpop.f32.mrf.mxu0
        %2010 = vdwg.mxu0
        %v2011 = vadd.f32 %v1850, %v2008
        %v2012 = vpack.c.bf16 %v2011, %v2011
        %vm2013 = vcmask 257024
        %2014 = vst.msk [vmem:[%s783] sm:$0xf] %vm2013, %v2012
        %p2015 = scmp.lt.s32.totalorder %s36, 1
        %s2016 = scalar_select %p2015, %s36, 1
        %s2017 = smul.addr %s2016, 4
        %s2018 = scalar_lea.vmem %s23, %s2017
        // Predicated region
        $region125: #{multimodal_to_smiles_forward.6} parent=111 // pred_check
          %p2019 = pneg %p552
        $region126: #{multimodal_to_smiles_forward.6} parent=111 // pred_check_branch
          %2021 = sbr.rel (%p2019) target = $region128
        $region127: #{multimodal_to_smiles_forward.6} parent=111 // pred_region
          _
        $region128: #{multimodal_to_smiles_forward.6} parent=111 // pred_fallthru
          _
      $region112: #{multimodal_to_smiles_forward.6} parent=5 // pred_fallthru
        _
      %p2022 = scmp.le.s32.totalorder 2, %s31
      // Predicated region
      $region129: #{multimodal_to_smiles_forward.6} parent=5 // pred_check
        %p2023 = pneg %p2022
      $region130: #{multimodal_to_smiles_forward.6} parent=5 // pred_check_branch
        %2025 = sbr.rel (%p2023) target = $region132
      $region131: #{multimodal_to_smiles_forward.6} parent=5 // pred_region
        %s2026 = ssub.s32 %s31, 2
        // Predicated region
        $region133: #{multimodal_to_smiles_forward.6} parent=131 // pred_check
          %p2027 = pneg %p558
        $region134: #{multimodal_to_smiles_forward.6} parent=131 // pred_check_branch
          %2029 = sbr.rel (%p2027) target = $region136
        $region135: #{multimodal_to_smiles_forward.6} parent=131 // pred_region
          %p2030 = scmp.lt.s32.totalorder %s37, 1
          %s2031 = scalar_select %p2030, %s37, 1
          %s2032 = smul.addr %s2031, 4
          %s2033 = scalar_lea.vmem %s23, %s2032
        $region136: #{multimodal_to_smiles_forward.6} parent=131 // pred_fallthru
          _
      $region132: #{multimodal_to_smiles_forward.6} parent=5 // pred_fallthru
        _
    $region6: #{multimodal_to_smiles_forward.6} parent=1 // loop_footer
      %s35 = sadd.s32 1, %s31
    $region7: #{multimodal_to_smiles_forward.6} parent=1 // loop_footer_branch
      %30 = sbr.rel target = $region3
    $region8: #{multimodal_to_smiles_forward.6} parent=1 // loop_exit
      _
    %2034 = vsyncpa [#allocation3], 1
    %s2035 = scalar_lea.sflag [#allocation3], 1
    %2036 = vsyncpa %s2035, 1
    %2037 = vsyncpa [#allocation5], 1

// kernel: multimodal_to_smiles_forward.5
$region0: #{multimodal_to_smiles_forward.5}
  #allocation0 [shape = 'u32[]', space=smem, size = 0x4, offset = 0x4, fixed_abs, tag = 'smem constant byte address 0x4 - core index']
  #allocation1 [shape = 'u32[72,128]{1,0:T(1,128)}', space=vmem, size = 0x9000, scoped, tag = 'internal scratch']
  %s0 = inlined_call_operand.vmem [shape: bf16[2,8,32], index: 0, kind: input, shape index: {}]
  %s1 = inlined_call_operand.vmem [shape: bf16[2,64,32], index: 1, kind: input, shape index: {}]
  %s2 = inlined_call_operand.vmem [shape: f32[2,1,8], index: 2, kind: input, shape index: {}]
  %s3 = inlined_call_operand.vmem [shape: f32[1,32], index: 3, kind: input, shape index: {}]
  %s4 = inlined_call_operand.vmem [shape: f32[1,32], index: 4, kind: input, shape index: {}]
  %s5 = inlined_call_operand.vmem [shape: bf16[32,96], index: 5, kind: input, shape index: {}]
  %s6 = inlined_call_operand.vmem [shape: f32[1,96], index: 6, kind: input, shape index: {}]
  %s7 = inlined_call_operand.vmem [shape: bf16[32,32], index: 7, kind: input, shape index: {}]
  %s8 = inlined_call_operand.vmem [shape: f32[1,32], index: 8, kind: input, shape index: {}]
  %s9 = inlined_call_operand.vmem [shape: f32[1,32], index: 9, kind: input, shape index: {}]
  %s10 = inlined_call_operand.vmem [shape: f32[1,32], index: 10, kind: input, shape index: {}]
  %s11 = inlined_call_operand.vmem [shape: bf16[32,32], index: 11, kind: input, shape index: {}]
  %s12 = inlined_call_operand.vmem [shape: f32[1,32], index: 12, kind: input, shape index: {}]
  %s13 = inlined_call_operand.vmem [shape: bf16[32,64], index: 13, kind: input, shape index: {}]
  %s14 = inlined_call_operand.vmem [shape: f32[1,64], index: 14, kind: input, shape index: {}]
  %s15 = inlined_call_operand.vmem [shape: bf16[32,32], index: 15, kind: input, shape index: {}]
  %s16 = inlined_call_operand.vmem [shape: f32[1,32], index: 16, kind: input, shape index: {}]
  %s17 = inlined_call_operand.vmem [shape: f32[1,32], index: 17, kind: input, shape index: {}]
  %s18 = inlined_call_operand.vmem [shape: f32[1,32], index: 18, kind: input, shape index: {}]
  %s19 = inlined_call_operand.vmem [shape: bf16[32,128], index: 19, kind: input, shape index: {}]
  %s20 = inlined_call_operand.vmem [shape: f32[1,128], index: 20, kind: input, shape index: {}]
  %s21 = inlined_call_operand.vmem [shape: bf16[128,32], index: 21, kind: input, shape index: {}]
  %s22 = inlined_call_operand.vmem [shape: f32[1,32], index: 22, kind: input, shape index: {}]
  %s23 = inlined_call_operand.vmem [shape: bf16[2,8,32], index: 23, kind: output, shape index: {}]
  %s24 = sld [smem:[#allocation0]]
  $region125: #{multimodal_to_smiles_forward.5} parent=0
    _
  %s26 = ssub.s32 1, %s24
  %s27 = scalar_select 0, %s26, %s24
  loop: start=0, step=1, limit=4
  $region2: #{multimodal_to_smiles_forward.5} parent=0 // loop_pre_header
    _
  $region3: #{multimodal_to_smiles_forward.5} parent=0 // loop_header
    %s29 = sphi 0, %s33
    %p30 = scmp.ge.s32.totalorder %s29, 4
    %s39 = sphi 0, %s41
    %s42 = sphi 0, %s39
    %s43 = sphi 0, %s42
    %s59 = sphi 0, %s43
    %s65 = sphi 0, %s67
    %s68 = sphi 0, %s65
    %s69 = sphi 0, %s68
    %s85 = sphi 0, %s69
    %s91 = sphi 0, %s93
    %s94 = sphi 0, %s91
    %s95 = sphi 0, %s94
    %s111 = sphi 0, %s95
    %s115 = sphi 0, %s115
    %s117 = sphi 0, %s115
    %s118 = sphi 0, %s117
    %s132 = sphi 0, %s118
    %s136 = sphi 0, %s136
    %s138 = sphi 0, %s136
    %s139 = sphi 0, %s138
    %s153 = sphi 0, %s139
    %s157 = sphi 0, %s157
    %s159 = sphi 0, %s157
    %s160 = sphi 0, %s159
    %s174 = sphi 0, %s160
    %s178 = sphi 0, %s178
    %s180 = sphi 0, %s178
    %s181 = sphi 0, %s180
    %s195 = sphi 0, %s181
    %s199 = sphi 0, %s199
    %s201 = sphi 0, %s199
    %s202 = sphi 0, %s201
    %s216 = sphi 0, %s202
    %s220 = sphi 0, %s220
    %s222 = sphi 0, %s220
    %s223 = sphi 0, %s222
    %s237 = sphi 0, %s223
    %s241 = sphi 0, %s241
    %s243 = sphi 0, %s241
    %s244 = sphi 0, %s243
    %s258 = sphi 0, %s244
    %s262 = sphi 0, %s262
    %s264 = sphi 0, %s262
    %s265 = sphi 0, %s264
    %s279 = sphi 0, %s265
    %s283 = sphi 0, %s283
    %s285 = sphi 0, %s283
    %s286 = sphi 0, %s285
    %s300 = sphi 0, %s286
    %s304 = sphi 0, %s304
    %s306 = sphi 0, %s304
    %s307 = sphi 0, %s306
    %s321 = sphi 0, %s307
    %s325 = sphi 0, %s325
    %s327 = sphi 0, %s325
    %s328 = sphi 0, %s327
    %s342 = sphi 0, %s328
    %s346 = sphi 0, %s346
    %s348 = sphi 0, %s346
    %s349 = sphi 0, %s348
    %s363 = sphi 0, %s349
    %s367 = sphi 0, %s367
    %s369 = sphi 0, %s367
    %s370 = sphi 0, %s369
    %s384 = sphi 0, %s370
    %s388 = sphi 0, %s388
    %s390 = sphi 0, %s388
    %s391 = sphi 0, %s390
    %s405 = sphi 0, %s391
    %s409 = sphi 0, %s409
    %s411 = sphi 0, %s409
    %s412 = sphi 0, %s411
    %s426 = sphi 0, %s412
    %s430 = sphi 0, %s430
    %s432 = sphi 0, %s430
    %s433 = sphi 0, %s432
    %s447 = sphi 0, %s433
    %s451 = sphi 0, %s451
    %s453 = sphi 0, %s451
    %s454 = sphi 0, %s453
    %s468 = sphi 0, %s454
    %s472 = sphi 0, %s472
    %s474 = sphi 0, %s472
    %s475 = sphi 0, %s474
    %s489 = sphi 0, %s475
    %s493 = sphi 0, %s493
    %s495 = sphi 0, %s493
    %s496 = sphi 0, %s495
    %s510 = sphi 0, %s496
    %s514 = sphi 0, %s514
    %s516 = sphi 0, %s514
    %s517 = sphi 0, %s516
    %s531 = sphi 0, %s517
    %s537 = sphi 0, %s539
    %s540 = sphi 0, %s537
    %s541 = sphi 0, %s540
    %s557 = sphi 0, %s541
  $region4: #{multimodal_to_smiles_forward.5} parent=0 // loop_header_branch
    %32 = sbr.rel (%p30) target = $region8
  $region5: #{multimodal_to_smiles_forward.5} parent=0 // loop_body
    %s34 = ssub.s32 %s29, 1
    %s35 = ssub.s32 %s29, 2
    %s36 = sadd.s32 %s29, 1
    %s37 = ssub.s32 %s29, %s36
    %p38 = scmp.eq.s32.totalorder %s37, 0
    %s40 = sadd.s32 %s39, 1
    %s41 = scalar_select %p38, %s39, %s40
    %p44 = pneg %p38
    %p45 = scmp.eq.s32.totalorder %s29, 1
    %p46 = por %p44, %p45
    %p47 = scmp.ne.s32.totalorder %s39, %s42
    %p48 = scmp.eq.s32.totalorder %s29, 0
    %p49 = por %p47, %p48
    %p50 = scmp.ne.s32.totalorder %s39, %s42
    %p51 = scmp.eq.s32.totalorder %s34, 1
    %p52 = por %p50, %p51
    %p53 = scmp.ne.s32.totalorder %s42, %s43
    %p54 = scmp.eq.s32.totalorder %s34, 0
    %p55 = por %p53, %p54
    %p56 = scmp.ne.s32.totalorder %s42, %s43
    %p57 = scmp.eq.s32.totalorder %s35, 1
    %p58 = por %p56, %p57
    %p60 = scmp.ne.s32.totalorder %s43, %s59
    %p61 = scmp.eq.s32.totalorder %s35, 0
    %p62 = por %p60, %p61
    %s63 = ssub.s32 %s29, %s36
    %p64 = scmp.eq.s32.totalorder %s63, 0
    %s66 = sadd.s32 %s65, 1
    %s67 = scalar_select %p64, %s65, %s66
    %p70 = pneg %p64
    %p71 = scmp.eq.s32.totalorder %s29, 1
    %p72 = por %p70, %p71
    %p73 = scmp.ne.s32.totalorder %s65, %s68
    %p74 = scmp.eq.s32.totalorder %s29, 0
    %p75 = por %p73, %p74
    %p76 = scmp.ne.s32.totalorder %s65, %s68
    %p77 = scmp.eq.s32.totalorder %s34, 1
    %p78 = por %p76, %p77
    %p79 = scmp.ne.s32.totalorder %s68, %s69
    %p80 = scmp.eq.s32.totalorder %s34, 0
    %p81 = por %p79, %p80
    %p82 = scmp.ne.s32.totalorder %s68, %s69
    %p83 = scmp.eq.s32.totalorder %s35, 1
    %p84 = por %p82, %p83
    %p86 = scmp.ne.s32.totalorder %s69, %s85
    %p87 = scmp.eq.s32.totalorder %s35, 0
    %p88 = por %p86, %p87
    %s89 = ssub.s32 %s29, %s36
    %p90 = scmp.eq.s32.totalorder %s89, 0
    %s92 = sadd.s32 %s91, 1
    %s93 = scalar_select %p90, %s91, %s92
    %p96 = pneg %p90
    %p97 = scmp.eq.s32.totalorder %s29, 1
    %p98 = por %p96, %p97
    %p99 = scmp.ne.s32.totalorder %s91, %s94
    %p100 = scmp.eq.s32.totalorder %s29, 0
    %p101 = por %p99, %p100
    %p102 = scmp.ne.s32.totalorder %s91, %s94
    %p103 = scmp.eq.s32.totalorder %s34, 1
    %p104 = por %p102, %p103
    %p105 = scmp.ne.s32.totalorder %s94, %s95
    %p106 = scmp.eq.s32.totalorder %s34, 0
    %p107 = por %p105, %p106
    %p108 = scmp.ne.s32.totalorder %s94, %s95
    %p109 = scmp.eq.s32.totalorder %s35, 1
    %p110 = por %p108, %p109
    %p112 = scmp.ne.s32.totalorder %s95, %s111
    %p113 = scmp.eq.s32.totalorder %s35, 0
    %p114 = por %p112, %p113
    %s116 = sadd.s32 %s115, 1
    %p119 = scmp.eq.s32.totalorder %s29, 1
    %p120 = scmp.ne.s32.totalorder %s115, %s117
    %p121 = scmp.eq.s32.totalorder %s29, 0
    %p122 = por %p120, %p121
    %p123 = scmp.ne.s32.totalorder %s115, %s117
    %p124 = scmp.eq.s32.totalorder %s34, 1
    %p125 = por %p123, %p124
    %p126 = scmp.ne.s32.totalorder %s117, %s118
    %p127 = scmp.eq.s32.totalorder %s34, 0
    %p128 = por %p126, %p127
    %p129 = scmp.ne.s32.totalorder %s117, %s118
    %p130 = scmp.eq.s32.totalorder %s35, 1
    %p131 = por %p129, %p130
    %p133 = scmp.ne.s32.totalorder %s118, %s132
    %p134 = scmp.eq.s32.totalorder %s35, 0
    %p135 = por %p133, %p134
    %s137 = sadd.s32 %s136, 1
    %p140 = scmp.eq.s32.totalorder %s29, 1
    %p141 = scmp.ne.s32.totalorder %s136, %s138
    %p142 = scmp.eq.s32.totalorder %s29, 0
    %p143 = por %p141, %p142
    %p144 = scmp.ne.s32.totalorder %s136, %s138
    %p145 = scmp.eq.s32.totalorder %s34, 1
    %p146 = por %p144, %p145
    %p147 = scmp.ne.s32.totalorder %s138, %s139
    %p148 = scmp.eq.s32.totalorder %s34, 0
    %p149 = por %p147, %p148
    %p150 = scmp.ne.s32.totalorder %s138, %s139
    %p151 = scmp.eq.s32.totalorder %s35, 1
    %p152 = por %p150, %p151
    %p154 = scmp.ne.s32.totalorder %s139, %s153
    %p155 = scmp.eq.s32.totalorder %s35, 0
    %p156 = por %p154, %p155
    %s158 = sadd.s32 %s157, 1
    %p161 = scmp.eq.s32.totalorder %s29, 1
    %p162 = scmp.ne.s32.totalorder %s157, %s159
    %p163 = scmp.eq.s32.totalorder %s29, 0
    %p164 = por %p162, %p163
    %p165 = scmp.ne.s32.totalorder %s157, %s159
    %p166 = scmp.eq.s32.totalorder %s34, 1
    %p167 = por %p165, %p166
    %p168 = scmp.ne.s32.totalorder %s159, %s160
    %p169 = scmp.eq.s32.totalorder %s34, 0
    %p170 = por %p168, %p169
    %p171 = scmp.ne.s32.totalorder %s159, %s160
    %p172 = scmp.eq.s32.totalorder %s35, 1
    %p173 = por %p171, %p172
    %p175 = scmp.ne.s32.totalorder %s160, %s174
    %p176 = scmp.eq.s32.totalorder %s35, 0
    %p177 = por %p175, %p176
    %s179 = sadd.s32 %s178, 1
    %p182 = scmp.eq.s32.totalorder %s29, 1
    %p183 = scmp.ne.s32.totalorder %s178, %s180
    %p184 = scmp.eq.s32.totalorder %s29, 0
    %p185 = por %p183, %p184
    %p186 = scmp.ne.s32.totalorder %s178, %s180
    %p187 = scmp.eq.s32.totalorder %s34, 1
    %p188 = por %p186, %p187
    %p189 = scmp.ne.s32.totalorder %s180, %s181
    %p190 = scmp.eq.s32.totalorder %s34, 0
    %p191 = por %p189, %p190
    %p192 = scmp.ne.s32.totalorder %s180, %s181
    %p193 = scmp.eq.s32.totalorder %s35, 1
    %p194 = por %p192, %p193
    %p196 = scmp.ne.s32.totalorder %s181, %s195
    %p197 = scmp.eq.s32.totalorder %s35, 0
    %p198 = por %p196, %p197
    %s200 = sadd.s32 %s199, 1
    %p203 = scmp.eq.s32.totalorder %s29, 1
    %p204 = scmp.ne.s32.totalorder %s199, %s201
    %p205 = scmp.eq.s32.totalorder %s29, 0
    %p206 = por %p204, %p205
    %p207 = scmp.ne.s32.totalorder %s199, %s201
    %p208 = scmp.eq.s32.totalorder %s34, 1
    %p209 = por %p207, %p208
    %p210 = scmp.ne.s32.totalorder %s201, %s202
    %p211 = scmp.eq.s32.totalorder %s34, 0
    %p212 = por %p210, %p211
    %p213 = scmp.ne.s32.totalorder %s201, %s202
    %p214 = scmp.eq.s32.totalorder %s35, 1
    %p215 = por %p213, %p214
    %p217 = scmp.ne.s32.totalorder %s202, %s216
    %p218 = scmp.eq.s32.totalorder %s35, 0
    %p219 = por %p217, %p218
    %s221 = sadd.s32 %s220, 1
    %p224 = scmp.eq.s32.totalorder %s29, 1
    %p225 = scmp.ne.s32.totalorder %s220, %s222
    %p226 = scmp.eq.s32.totalorder %s29, 0
    %p227 = por %p225, %p226
    %p228 = scmp.ne.s32.totalorder %s220, %s222
    %p229 = scmp.eq.s32.totalorder %s34, 1
    %p230 = por %p228, %p229
    %p231 = scmp.ne.s32.totalorder %s222, %s223
    %p232 = scmp.eq.s32.totalorder %s34, 0
    %p233 = por %p231, %p232
    %p234 = scmp.ne.s32.totalorder %s222, %s223
    %p235 = scmp.eq.s32.totalorder %s35, 1
    %p236 = por %p234, %p235
    %p238 = scmp.ne.s32.totalorder %s223, %s237
    %p239 = scmp.eq.s32.totalorder %s35, 0
    %p240 = por %p238, %p239
    %s242 = sadd.s32 %s241, 1
    %p245 = scmp.eq.s32.totalorder %s29, 1
    %p246 = scmp.ne.s32.totalorder %s241, %s243
    %p247 = scmp.eq.s32.totalorder %s29, 0
    %p248 = por %p246, %p247
    %p249 = scmp.ne.s32.totalorder %s241, %s243
    %p250 = scmp.eq.s32.totalorder %s34, 1
    %p251 = por %p249, %p250
    %p252 = scmp.ne.s32.totalorder %s243, %s244
    %p253 = scmp.eq.s32.totalorder %s34, 0
    %p254 = por %p252, %p253
    %p255 = scmp.ne.s32.totalorder %s243, %s244
    %p256 = scmp.eq.s32.totalorder %s35, 1
    %p257 = por %p255, %p256
    %p259 = scmp.ne.s32.totalorder %s244, %s258
    %p260 = scmp.eq.s32.totalorder %s35, 0
    %p261 = por %p259, %p260
    %s263 = sadd.s32 %s262, 1
    %p266 = scmp.eq.s32.totalorder %s29, 1
    %p267 = scmp.ne.s32.totalorder %s262, %s264
    %p268 = scmp.eq.s32.totalorder %s29, 0
    %p269 = por %p267, %p268
    %p270 = scmp.ne.s32.totalorder %s262, %s264
    %p271 = scmp.eq.s32.totalorder %s34, 1
    %p272 = por %p270, %p271
    %p273 = scmp.ne.s32.totalorder %s264, %s265
    %p274 = scmp.eq.s32.totalorder %s34, 0
    %p275 = por %p273, %p274
    %p276 = scmp.ne.s32.totalorder %s264, %s265
    %p277 = scmp.eq.s32.totalorder %s35, 1
    %p278 = por %p276, %p277
    %p280 = scmp.ne.s32.totalorder %s265, %s279
    %p281 = scmp.eq.s32.totalorder %s35, 0
    %p282 = por %p280, %p281
    %s284 = sadd.s32 %s283, 1
    %p287 = scmp.eq.s32.totalorder %s29, 1
    %p288 = scmp.ne.s32.totalorder %s283, %s285
    %p289 = scmp.eq.s32.totalorder %s29, 0
    %p290 = por %p288, %p289
    %p291 = scmp.ne.s32.totalorder %s283, %s285
    %p292 = scmp.eq.s32.totalorder %s34, 1
    %p293 = por %p291, %p292
    %p294 = scmp.ne.s32.totalorder %s285, %s286
    %p295 = scmp.eq.s32.totalorder %s34, 0
    %p296 = por %p294, %p295
    %p297 = scmp.ne.s32.totalorder %s285, %s286
    %p298 = scmp.eq.s32.totalorder %s35, 1
    %p299 = por %p297, %p298
    %p301 = scmp.ne.s32.totalorder %s286, %s300
    %p302 = scmp.eq.s32.totalorder %s35, 0
    %p303 = por %p301, %p302
    %s305 = sadd.s32 %s304, 1
    %p308 = scmp.eq.s32.totalorder %s29, 1
    %p309 = scmp.ne.s32.totalorder %s304, %s306
    %p310 = scmp.eq.s32.totalorder %s29, 0
    %p311 = por %p309, %p310
    %p312 = scmp.ne.s32.totalorder %s304, %s306
    %p313 = scmp.eq.s32.totalorder %s34, 1
    %p314 = por %p312, %p313
    %p315 = scmp.ne.s32.totalorder %s306, %s307
    %p316 = scmp.eq.s32.totalorder %s34, 0
    %p317 = por %p315, %p316
    %p318 = scmp.ne.s32.totalorder %s306, %s307
    %p319 = scmp.eq.s32.totalorder %s35, 1
    %p320 = por %p318, %p319
    %p322 = scmp.ne.s32.totalorder %s307, %s321
    %p323 = scmp.eq.s32.totalorder %s35, 0
    %p324 = por %p322, %p323
    %s326 = sadd.s32 %s325, 1
    %p329 = scmp.eq.s32.totalorder %s29, 1
    %p330 = scmp.ne.s32.totalorder %s325, %s327
    %p331 = scmp.eq.s32.totalorder %s29, 0
    %p332 = por %p330, %p331
    %p333 = scmp.ne.s32.totalorder %s325, %s327
    %p334 = scmp.eq.s32.totalorder %s34, 1
    %p335 = por %p333, %p334
    %p336 = scmp.ne.s32.totalorder %s327, %s328
    %p337 = scmp.eq.s32.totalorder %s34, 0
    %p338 = por %p336, %p337
    %p339 = scmp.ne.s32.totalorder %s327, %s328
    %p340 = scmp.eq.s32.totalorder %s35, 1
    %p341 = por %p339, %p340
    %p343 = scmp.ne.s32.totalorder %s328, %s342
    %p344 = scmp.eq.s32.totalorder %s35, 0
    %p345 = por %p343, %p344
    %s347 = sadd.s32 %s346, 1
    %p350 = scmp.eq.s32.totalorder %s29, 1
    %p351 = scmp.ne.s32.totalorder %s346, %s348
    %p352 = scmp.eq.s32.totalorder %s29, 0
    %p353 = por %p351, %p352
    %p354 = scmp.ne.s32.totalorder %s346, %s348
    %p355 = scmp.eq.s32.totalorder %s34, 1
    %p356 = por %p354, %p355
    %p357 = scmp.ne.s32.totalorder %s348, %s349
    %p358 = scmp.eq.s32.totalorder %s34, 0
    %p359 = por %p357, %p358
    %p360 = scmp.ne.s32.totalorder %s348, %s349
    %p361 = scmp.eq.s32.totalorder %s35, 1
    %p362 = por %p360, %p361
    %p364 = scmp.ne.s32.totalorder %s349, %s363
    %p365 = scmp.eq.s32.totalorder %s35, 0
    %p366 = por %p364, %p365
    %s368 = sadd.s32 %s367, 1
    %p371 = scmp.eq.s32.totalorder %s29, 1
    %p372 = scmp.ne.s32.totalorder %s367, %s369
    %p373 = scmp.eq.s32.totalorder %s29, 0
    %p374 = por %p372, %p373
    %p375 = scmp.ne.s32.totalorder %s367, %s369
    %p376 = scmp.eq.s32.totalorder %s34, 1
    %p377 = por %p375, %p376
    %p378 = scmp.ne.s32.totalorder %s369, %s370
    %p379 = scmp.eq.s32.totalorder %s34, 0
    %p380 = por %p378, %p379
    %p381 = scmp.ne.s32.totalorder %s369, %s370
    %p382 = scmp.eq.s32.totalorder %s35, 1
    %p383 = por %p381, %p382
    %p385 = scmp.ne.s32.totalorder %s370, %s384
    %p386 = scmp.eq.s32.totalorder %s35, 0
    %p387 = por %p385, %p386
    %s389 = sadd.s32 %s388, 1
    %p392 = scmp.eq.s32.totalorder %s29, 1
    %p393 = scmp.ne.s32.totalorder %s388, %s390
    %p394 = scmp.eq.s32.totalorder %s29, 0
    %p395 = por %p393, %p394
    %p396 = scmp.ne.s32.totalorder %s388, %s390
    %p397 = scmp.eq.s32.totalorder %s34, 1
    %p398 = por %p396, %p397
    %p399 = scmp.ne.s32.totalorder %s390, %s391
    %p400 = scmp.eq.s32.totalorder %s34, 0
    %p401 = por %p399, %p400
    %p402 = scmp.ne.s32.totalorder %s390, %s391
    %p403 = scmp.eq.s32.totalorder %s35, 1
    %p404 = por %p402, %p403
    %p406 = scmp.ne.s32.totalorder %s391, %s405
    %p407 = scmp.eq.s32.totalorder %s35, 0
    %p408 = por %p406, %p407
    %s410 = sadd.s32 %s409, 1
    %p413 = scmp.eq.s32.totalorder %s29, 1
    %p414 = scmp.ne.s32.totalorder %s409, %s411
    %p415 = scmp.eq.s32.totalorder %s29, 0
    %p416 = por %p414, %p415
    %p417 = scmp.ne.s32.totalorder %s409, %s411
    %p418 = scmp.eq.s32.totalorder %s34, 1
    %p419 = por %p417, %p418
    %p420 = scmp.ne.s32.totalorder %s411, %s412
    %p421 = scmp.eq.s32.totalorder %s34, 0
    %p422 = por %p420, %p421
    %p423 = scmp.ne.s32.totalorder %s411, %s412
    %p424 = scmp.eq.s32.totalorder %s35, 1
    %p425 = por %p423, %p424
    %p427 = scmp.ne.s32.totalorder %s412, %s426
    %p428 = scmp.eq.s32.totalorder %s35, 0
    %p429 = por %p427, %p428
    %s431 = sadd.s32 %s430, 1
    %p434 = scmp.eq.s32.totalorder %s29, 1
    %p435 = scmp.ne.s32.totalorder %s430, %s432
    %p436 = scmp.eq.s32.totalorder %s29, 0
    %p437 = por %p435, %p436
    %p438 = scmp.ne.s32.totalorder %s430, %s432
    %p439 = scmp.eq.s32.totalorder %s34, 1
    %p440 = por %p438, %p439
    %p441 = scmp.ne.s32.totalorder %s432, %s433
    %p442 = scmp.eq.s32.totalorder %s34, 0
    %p443 = por %p441, %p442
    %p444 = scmp.ne.s32.totalorder %s432, %s433
    %p445 = scmp.eq.s32.totalorder %s35, 1
    %p446 = por %p444, %p445
    %p448 = scmp.ne.s32.totalorder %s433, %s447
    %p449 = scmp.eq.s32.totalorder %s35, 0
    %p450 = por %p448, %p449
    %s452 = sadd.s32 %s451, 1
    %p455 = scmp.eq.s32.totalorder %s29, 1
    %p456 = scmp.ne.s32.totalorder %s451, %s453
    %p457 = scmp.eq.s32.totalorder %s29, 0
    %p458 = por %p456, %p457
    %p459 = scmp.ne.s32.totalorder %s451, %s453
    %p460 = scmp.eq.s32.totalorder %s34, 1
    %p461 = por %p459, %p460
    %p462 = scmp.ne.s32.totalorder %s453, %s454
    %p463 = scmp.eq.s32.totalorder %s34, 0
    %p464 = por %p462, %p463
    %p465 = scmp.ne.s32.totalorder %s453, %s454
    %p466 = scmp.eq.s32.totalorder %s35, 1
    %p467 = por %p465, %p466
    %p469 = scmp.ne.s32.totalorder %s454, %s468
    %p470 = scmp.eq.s32.totalorder %s35, 0
    %p471 = por %p469, %p470
    %s473 = sadd.s32 %s472, 1
    %p476 = scmp.eq.s32.totalorder %s29, 1
    %p477 = scmp.ne.s32.totalorder %s472, %s474
    %p478 = scmp.eq.s32.totalorder %s29, 0
    %p479 = por %p477, %p478
    %p480 = scmp.ne.s32.totalorder %s472, %s474
    %p481 = scmp.eq.s32.totalorder %s34, 1
    %p482 = por %p480, %p481
    %p483 = scmp.ne.s32.totalorder %s474, %s475
    %p484 = scmp.eq.s32.totalorder %s34, 0
    %p485 = por %p483, %p484
    %p486 = scmp.ne.s32.totalorder %s474, %s475
    %p487 = scmp.eq.s32.totalorder %s35, 1
    %p488 = por %p486, %p487
    %p490 = scmp.ne.s32.totalorder %s475, %s489
    %p491 = scmp.eq.s32.totalorder %s35, 0
    %p492 = por %p490, %p491
    %s494 = sadd.s32 %s493, 1
    %p497 = scmp.eq.s32.totalorder %s29, 1
    %p498 = scmp.ne.s32.totalorder %s493, %s495
    %p499 = scmp.eq.s32.totalorder %s29, 0
    %p500 = por %p498, %p499
    %p501 = scmp.ne.s32.totalorder %s493, %s495
    %p502 = scmp.eq.s32.totalorder %s34, 1
    %p503 = por %p501, %p502
    %p504 = scmp.ne.s32.totalorder %s495, %s496
    %p505 = scmp.eq.s32.totalorder %s34, 0
    %p506 = por %p504, %p505
    %p507 = scmp.ne.s32.totalorder %s495, %s496
    %p508 = scmp.eq.s32.totalorder %s35, 1
    %p509 = por %p507, %p508
    %p511 = scmp.ne.s32.totalorder %s496, %s510
    %p512 = scmp.eq.s32.totalorder %s35, 0
    %p513 = por %p511, %p512
    %s515 = sadd.s32 %s514, 1
    %p518 = scmp.eq.s32.totalorder %s29, 1
    %p519 = scmp.ne.s32.totalorder %s514, %s516
    %p520 = scmp.eq.s32.totalorder %s29, 0
    %p521 = por %p519, %p520
    %p522 = scmp.ne.s32.totalorder %s514, %s516
    %p523 = scmp.eq.s32.totalorder %s34, 1
    %p524 = por %p522, %p523
    %p525 = scmp.ne.s32.totalorder %s516, %s517
    %p526 = scmp.eq.s32.totalorder %s34, 0
    %p527 = por %p525, %p526
    %p528 = scmp.ne.s32.totalorder %s516, %s517
    %p529 = scmp.eq.s32.totalorder %s35, 1
    %p530 = por %p528, %p529
    %p532 = scmp.ne.s32.totalorder %s517, %s531
    %p533 = scmp.eq.s32.totalorder %s35, 0
    %p534 = por %p532, %p533
    %s535 = ssub.s32 %s29, %s36
    %p536 = scmp.eq.s32.totalorder %s535, 0
    %s538 = sadd.s32 %s537, 1
    %s539 = scalar_select %p536, %s537, %s538
    %p542 = pneg %p536
    %p543 = scmp.eq.s32.totalorder %s29, 1
    %p544 = por %p542, %p543
    %p545 = scmp.ne.s32.totalorder %s537, %s540
    %p546 = scmp.eq.s32.totalorder %s29, 0
    %p547 = por %p545, %p546
    %p548 = scmp.ne.s32.totalorder %s537, %s540
    %p549 = scmp.eq.s32.totalorder %s34, 1
    %p550 = por %p548, %p549
    %p551 = scmp.ne.s32.totalorder %s540, %s541
    %p552 = scmp.eq.s32.totalorder %s34, 0
    %p553 = por %p551, %p552
    %p554 = scmp.ne.s32.totalorder %s540, %s541
    %p555 = scmp.eq.s32.totalorder %s35, 1
    %p556 = por %p554, %p555
    %p558 = scmp.ne.s32.totalorder %s541, %s557
    %p559 = scmp.eq.s32.totalorder %s35, 0
    %p560 = por %p558, %p559
    %p561 = scmp.le.s32.totalorder 1, %s29
    %p562 = scmp.lt.s32.totalorder %s29, 3
    %p563 = pnand %p561, %p562
    %p564 = pneg %p563
    // Predicated region
    $region9: #{multimodal_to_smiles_forward.5} parent=5 // pred_check
      _
    $region10: #{multimodal_to_smiles_forward.5} parent=5 // pred_check_branch
      %566 = sbr.rel (%p563) target = $region12
    $region11: #{multimodal_to_smiles_forward.5} parent=5 // pred_region
      %s567 = ssub.s32 %s29, 1
      // Predicated region
      $region13: #{multimodal_to_smiles_forward.5} parent=11 // pred_check
        %p568 = pneg %p128
      $region14: #{multimodal_to_smiles_forward.5} parent=11 // pred_check_branch
        %570 = sbr.rel (%p568) target = $region16
      $region15: #{multimodal_to_smiles_forward.5} parent=11 // pred_region
        _
      $region16: #{multimodal_to_smiles_forward.5} parent=11 // pred_fallthru
        _
      // Predicated region
      $region17: #{multimodal_to_smiles_forward.5} parent=11 // pred_check
        %p571 = pneg %p149
      $region18: #{multimodal_to_smiles_forward.5} parent=11 // pred_check_branch
        %573 = sbr.rel (%p571) target = $region20
      $region19: #{multimodal_to_smiles_forward.5} parent=11 // pred_region
        _
      $region20: #{multimodal_to_smiles_forward.5} parent=11 // pred_fallthru
        _
      // Predicated region
      $region21: #{multimodal_to_smiles_forward.5} parent=11 // pred_check
        %p574 = pneg %p170
      $region22: #{multimodal_to_smiles_forward.5} parent=11 // pred_check_branch
        %576 = sbr.rel (%p574) target = $region24
      $region23: #{multimodal_to_smiles_forward.5} parent=11 // pred_region
        _
      $region24: #{multimodal_to_smiles_forward.5} parent=11 // pred_fallthru
        _
      // Predicated region
      $region25: #{multimodal_to_smiles_forward.5} parent=11 // pred_check
        %p577 = pneg %p191
      $region26: #{multimodal_to_smiles_forward.5} parent=11 // pred_check_branch
        %579 = sbr.rel (%p577) target = $region28
      $region27: #{multimodal_to_smiles_forward.5} parent=11 // pred_region
        _
      $region28: #{multimodal_to_smiles_forward.5} parent=11 // pred_fallthru
        _
      // Predicated region
      $region29: #{multimodal_to_smiles_forward.5} parent=11 // pred_check
        %p580 = pneg %p212
      $region30: #{multimodal_to_smiles_forward.5} parent=11 // pred_check_branch
        %582 = sbr.rel (%p580) target = $region32
      $region31: #{multimodal_to_smiles_forward.5} parent=11 // pred_region
        _
      $region32: #{multimodal_to_smiles_forward.5} parent=11 // pred_fallthru
        _
      // Predicated region
      $region33: #{multimodal_to_smiles_forward.5} parent=11 // pred_check
        %p583 = pneg %p233
      $region34: #{multimodal_to_smiles_forward.5} parent=11 // pred_check_branch
        %585 = sbr.rel (%p583) target = $region36
      $region35: #{multimodal_to_smiles_forward.5} parent=11 // pred_region
        _
      $region36: #{multimodal_to_smiles_forward.5} parent=11 // pred_fallthru
        _
      // Predicated region
      $region37: #{multimodal_to_smiles_forward.5} parent=11 // pred_check
        %p586 = pneg %p254
      $region38: #{multimodal_to_smiles_forward.5} parent=11 // pred_check_branch
        %588 = sbr.rel (%p586) target = $region40
      $region39: #{multimodal_to_smiles_forward.5} parent=11 // pred_region
        _
      $region40: #{multimodal_to_smiles_forward.5} parent=11 // pred_fallthru
        _
      // Predicated region
      $region41: #{multimodal_to_smiles_forward.5} parent=11 // pred_check
        %p589 = pneg %p275
      $region42: #{multimodal_to_smiles_forward.5} parent=11 // pred_check_branch
        %591 = sbr.rel (%p589) target = $region44
      $region43: #{multimodal_to_smiles_forward.5} parent=11 // pred_region
        _
      $region44: #{multimodal_to_smiles_forward.5} parent=11 // pred_fallthru
        _
      // Predicated region
      $region45: #{multimodal_to_smiles_forward.5} parent=11 // pred_check
        %p592 = pneg %p296
      $region46: #{multimodal_to_smiles_forward.5} parent=11 // pred_check_branch
        %594 = sbr.rel (%p592) target = $region48
      $region47: #{multimodal_to_smiles_forward.5} parent=11 // pred_region
        _
      $region48: #{multimodal_to_smiles_forward.5} parent=11 // pred_fallthru
        _
      // Predicated region
      $region49: #{multimodal_to_smiles_forward.5} parent=11 // pred_check
        %p595 = pneg %p317
      $region50: #{multimodal_to_smiles_forward.5} parent=11 // pred_check_branch
        %597 = sbr.rel (%p595) target = $region52
      $region51: #{multimodal_to_smiles_forward.5} parent=11 // pred_region
        _
      $region52: #{multimodal_to_smiles_forward.5} parent=11 // pred_fallthru
        _
      // Predicated region
      $region53: #{multimodal_to_smiles_forward.5} parent=11 // pred_check
        %p598 = pneg %p338
      $region54: #{multimodal_to_smiles_forward.5} parent=11 // pred_check_branch
        %600 = sbr.rel (%p598) target = $region56
      $region55: #{multimodal_to_smiles_forward.5} parent=11 // pred_region
        _
      $region56: #{multimodal_to_smiles_forward.5} parent=11 // pred_fallthru
        _
      // Predicated region
      $region57: #{multimodal_to_smiles_forward.5} parent=11 // pred_check
        %p601 = pneg %p359
      $region58: #{multimodal_to_smiles_forward.5} parent=11 // pred_check_branch
        %603 = sbr.rel (%p601) target = $region60
      $region59: #{multimodal_to_smiles_forward.5} parent=11 // pred_region
        _
      $region60: #{multimodal_to_smiles_forward.5} parent=11 // pred_fallthru
        _
      // Predicated region
      $region61: #{multimodal_to_smiles_forward.5} parent=11 // pred_check
        %p604 = pneg %p380
      $region62: #{multimodal_to_smiles_forward.5} parent=11 // pred_check_branch
        %606 = sbr.rel (%p604) target = $region64
      $region63: #{multimodal_to_smiles_forward.5} parent=11 // pred_region
        _
      $region64: #{multimodal_to_smiles_forward.5} parent=11 // pred_fallthru
        _
      // Predicated region
      $region65: #{multimodal_to_smiles_forward.5} parent=11 // pred_check
        %p607 = pneg %p401
      $region66: #{multimodal_to_smiles_forward.5} parent=11 // pred_check_branch
        %609 = sbr.rel (%p607) target = $region68
      $region67: #{multimodal_to_smiles_forward.5} parent=11 // pred_region
        _
      $region68: #{multimodal_to_smiles_forward.5} parent=11 // pred_fallthru
        _
      // Predicated region
      $region69: #{multimodal_to_smiles_forward.5} parent=11 // pred_check
        %p610 = pneg %p422
      $region70: #{multimodal_to_smiles_forward.5} parent=11 // pred_check_branch
        %612 = sbr.rel (%p610) target = $region72
      $region71: #{multimodal_to_smiles_forward.5} parent=11 // pred_region
        _
      $region72: #{multimodal_to_smiles_forward.5} parent=11 // pred_fallthru
        _
      // Predicated region
      $region73: #{multimodal_to_smiles_forward.5} parent=11 // pred_check
        %p613 = pneg %p443
      $region74: #{multimodal_to_smiles_forward.5} parent=11 // pred_check_branch
        %615 = sbr.rel (%p613) target = $region76
      $region75: #{multimodal_to_smiles_forward.5} parent=11 // pred_region
        _
      $region76: #{multimodal_to_smiles_forward.5} parent=11 // pred_fallthru
        _
      // Predicated region
      $region77: #{multimodal_to_smiles_forward.5} parent=11 // pred_check
        %p616 = pneg %p464
      $region78: #{multimodal_to_smiles_forward.5} parent=11 // pred_check_branch
        %618 = sbr.rel (%p616) target = $region80
      $region79: #{multimodal_to_smiles_forward.5} parent=11 // pred_region
        _
      $region80: #{multimodal_to_smiles_forward.5} parent=11 // pred_fallthru
        _
      // Predicated region
      $region81: #{multimodal_to_smiles_forward.5} parent=11 // pred_check
        %p619 = pneg %p485
      $region82: #{multimodal_to_smiles_forward.5} parent=11 // pred_check_branch
        %621 = sbr.rel (%p619) target = $region84
      $region83: #{multimodal_to_smiles_forward.5} parent=11 // pred_region
        _
      $region84: #{multimodal_to_smiles_forward.5} parent=11 // pred_fallthru
        _
      // Predicated region
      $region85: #{multimodal_to_smiles_forward.5} parent=11 // pred_check
        %p622 = pneg %p506
      $region86: #{multimodal_to_smiles_forward.5} parent=11 // pred_check_branch
        %624 = sbr.rel (%p622) target = $region88
      $region87: #{multimodal_to_smiles_forward.5} parent=11 // pred_region
        _
      $region88: #{multimodal_to_smiles_forward.5} parent=11 // pred_fallthru
        _
      // Predicated region
      $region89: #{multimodal_to_smiles_forward.5} parent=11 // pred_check
        %p625 = pneg %p527
      $region90: #{multimodal_to_smiles_forward.5} parent=11 // pred_check_branch
        %627 = sbr.rel (%p625) target = $region92
      $region91: #{multimodal_to_smiles_forward.5} parent=11 // pred_region
        _
      $region92: #{multimodal_to_smiles_forward.5} parent=11 // pred_fallthru
        _
    $region12: #{multimodal_to_smiles_forward.5} parent=5 // pred_fallthru
      _
    %p628 = scmp.lt.s32.totalorder %s29, 2
    // Predicated region
    $region93: #{multimodal_to_smiles_forward.5} parent=5 // pred_check
      %p629 = pneg %p628
    $region94: #{multimodal_to_smiles_forward.5} parent=5 // pred_check_branch
      %631 = sbr.rel (%p629) target = $region96
    $region95: #{multimodal_to_smiles_forward.5} parent=5 // pred_region
      // Predicated region
      $region97: #{multimodal_to_smiles_forward.5} parent=95 // pred_check
        %p632 = pneg %p49
      $region98: #{multimodal_to_smiles_forward.5} parent=95 // pred_check_branch
        %634 = sbr.rel (%p632) target = $region100
      $region99: #{multimodal_to_smiles_forward.5} parent=95 // pred_region
        %p635 = scmp.lt.s32.totalorder %s29, 1
        %s636 = scalar_select %p635, %s29, 1
        %s637 = smul.addr %s636, 4
        %s638 = scalar_lea.vmem %s0, %s637
      $region100: #{multimodal_to_smiles_forward.5} parent=95 // pred_fallthru
        _
      // Predicated region
      $region101: #{multimodal_to_smiles_forward.5} parent=95 // pred_check
        %p639 = pneg %p75
      $region102: #{multimodal_to_smiles_forward.5} parent=95 // pred_check_branch
        %641 = sbr.rel (%p639) target = $region104
      $region103: #{multimodal_to_smiles_forward.5} parent=95 // pred_region
        %p642 = scmp.lt.s32.totalorder %s29, 1
        %s643 = scalar_select %p642, %s29, 1
        %s644 = smul.addr %s643, 8
        %s645 = smul.addr %s644, 4
        %s646 = scalar_lea.vmem %s1, %s645
      $region104: #{multimodal_to_smiles_forward.5} parent=95 // pred_fallthru
        _
      // Predicated region
      $region105: #{multimodal_to_smiles_forward.5} parent=95 // pred_check
        %p647 = pneg %p101
      $region106: #{multimodal_to_smiles_forward.5} parent=95 // pred_check_branch
        %649 = sbr.rel (%p647) target = $region108
      $region107: #{multimodal_to_smiles_forward.5} parent=95 // pred_region
        %p650 = scmp.lt.s32.totalorder %s29, 1
        %s651 = scalar_select %p650, %s29, 1
        %s652 = scalar_lea.vmem %s2, %s651
      $region108: #{multimodal_to_smiles_forward.5} parent=95 // pred_fallthru
        _
    $region96: #{multimodal_to_smiles_forward.5} parent=5 // pred_fallthru
      _
    %p653 = scmp.le.s32.totalorder 1, %s29
    %p654 = scmp.lt.s32.totalorder %s29, 3
    %p655 = pnand %p653, %p654
    %p656 = pneg %p655
    // Predicated region
    $region109: #{multimodal_to_smiles_forward.5} parent=5 // pred_check
      _
    $region110: #{multimodal_to_smiles_forward.5} parent=5 // pred_check_branch
      %658 = sbr.rel (%p655) target = $region112
    $region111: #{multimodal_to_smiles_forward.5} parent=5 // pred_region
      %s659 = ssub.s32 %s29, 1
      %p660 = scmp.lt.s32.totalorder %s34, 1
      %s661 = scalar_select %p660, %s34, 1
      %s662 = smul.addr %s661, 4
      %s663 = scalar_lea.vmem %s0, %s662
      %p664 = pneg %p55
      %p665 = pneg %p52
      %p666 = scmp.lt.s32.totalorder %s34, 1
      %s667 = scalar_select %p666, %s34, 1
      %s668 = smul.addr %s667, 8
      %s669 = smul.addr %s668, 4
      %s670 = scalar_lea.vmem %s1, %s669
      %p671 = pneg %p81
      %p672 = pneg %p78
      %p673 = scmp.lt.s32.totalorder %s34, 1
      %s674 = scalar_select %p673, %s34, 1
      %s675 = scalar_lea.vmem %s2, %s674
      %p676 = pneg %p107
      %p677 = pneg %p104
      %p678 = pneg %p128
      %p679 = pneg %p125
      %p680 = pneg %p149
      %p681 = pneg %p146
      %p682 = pneg %p170
      %p683 = pneg %p167
      %p684 = pneg %p191
      %p685 = pneg %p188
      %p686 = pneg %p212
      %p687 = pneg %p209
      %p688 = pneg %p233
      %p689 = pneg %p230
      %p690 = pneg %p254
      %p691 = pneg %p251
      %p692 = pneg %p275
      %p693 = pneg %p272
      %p694 = pneg %p296
      %p695 = pneg %p293
      %p696 = pneg %p317
      %p697 = pneg %p314
      %p698 = pneg %p338
      %p699 = pneg %p335
      %p700 = pneg %p359
      %p701 = pneg %p356
      %p702 = pneg %p380
      %p703 = pneg %p377
      %p704 = pneg %p401
      %p705 = pneg %p398
      %p706 = pneg %p422
      %p707 = pneg %p419
      %p708 = pneg %p443
      %p709 = pneg %p440
      %p710 = pneg %p464
      %p711 = pneg %p461
      %p712 = pneg %p485
      %p713 = pneg %p482
      %p714 = pneg %p506
      %p715 = pneg %p503
      %p716 = pneg %p527
      %p717 = pneg %p524
      %p718 = pneg %p553
      %p719 = pneg %p550
      %p720 = scmp.lt.s32.totalorder %s34, 1
      %s721 = scalar_select %p720, %s34, 1
      %s722 = smul.addr %s721, 4
      %s723 = scalar_lea.vmem %s23, %s722
      %p724 = scmp.lt.s32.totalorder %s34, 1
      %s725 = scalar_select %p724, %s34, 1
      %s726 = smul.addr %s725, 4
      %s727 = scalar_lea.vmem %s0, %s726
      %p728 = scmp.lt.s32.totalorder %s34, 1
      %s729 = scalar_select %p728, %s34, 1
      %s730 = smul.addr %s729, 8
      %s731 = smul.addr %s730, 4
      %s732 = scalar_lea.vmem %s1, %s731
      %p733 = scmp.lt.s32.totalorder %s34, 1
      %s734 = scalar_select %p733, %s34, 1
      %s735 = scalar_lea.vmem %s2, %s734
      %p736 = scmp.lt.s32.totalorder %s34, 1
      %s737 = scalar_select %p736, %s34, 1
      %s738 = smul.addr %s737, 4
      %s739 = scalar_lea.vmem %s23, %s738
      %v741 = vld [vmem:[%s727] sm:$0xf]
      %v742 = vunpack.c.l.bf16 %v741
      %v743 = vld [vmem:[%s732] sm:$0xf]
      %v744 = vld [vmem:[%s732 + $0x4] sm:$0xf]
      %v745 = vld [vmem:[%s732 + $0x8] sm:$0xf]
      %v746 = vld [vmem:[%s732 + $0xc] sm:$0xf]
      %v747 = vld [vmem:[%s732 + $0x10] sm:$0xf]
      %v748 = vld [vmem:[%s732 + $0x14] sm:$0xf]
      %v749 = vld [vmem:[%s732 + $0x18] sm:$0xf]
      %v750 = vld [vmem:[%s732 + $0x1c] sm:$0xf]
      %v751 = vlaneseq
      %v752 = vshrl.u32 %v751, 7
      %v753 = vlaneseq
      %v754 = vand.u32 %v753, 127
      %v755 = vld [vmem:[%s735] sm:$0x1]
      %v756 = vsub.f32 %v755, 1.0
      %v757 = vmul.f32 %v756, 1e+30
      %vm758 = vcmp.le.s32.totalorder %v754, %v752
      %v760 = vperm.slane %v757, 0
      %v762 = vsel %vm758, %v760, -1e+30
      %v763 = vld [vmem:[%s3] sm:$0x1]
      %v764 = vld [vmem:[%s4] sm:$0x1]
      %vm765 = vcmask 261120
      %v766 = vsel %vm765, %v742, 0.0
      %767 = vadd.xlane.f32.xlu0 %v766
      %v768 = vpop.xlane.xlu0 %767
      %v769 = vrcp.pop 32.0
      %v770 = vmul.f32 32.0, %v769
      %v771 = vsub.f32 1.0, %v770
      %v772 = vmul.f32 %v769, %v771
      %v773 = vadd.f32 %v769, %v772
      %vm774 = vweird.f32 %v769
      %v775 = vsel %vm774, %v769, %v773
      %v776 = vmul.f32 %v768, %v775
      %v777 = vsub.f32 %v742, %v776
      %v778 = vmul.f32 %v777, %v777
      %v779 = vsel %vm765, %v778, 0.0
      %780 = vadd.xlane.f32.xlu0 %v779
      %v781 = vpop.xlane.xlu0 %780
      %v782 = vmul.f32 %v781, %v775
      %v783 = vadd.f32 %v782, 1e-05
      %v784 = vrsqrt.pop %v783
      %v785 = vmul.f32 %v784, %v783
      %v786 = vmul.f32 %v785, %v784
      %v787 = vmul.f32 0.5, %v786
      %v788 = vsub.f32 1.5, %v787
      %v789 = vmul.f32 %v784, %v788
      %vm790 = vweird.f32 %v783
      %vm791 = vweird.f32 %v784
      %vm792 = vmor %vm790, %vm791
      %v793 = vsel %vm792, %v784, %v789
      %v794 = vmul.f32 %v777, %v793
      %v796 = vperm.slane %v763, 0
      %v798 = vmul.f32 %v794, %v796
      %v800 = vperm.slane %v764, 0
      %v802 = vadd.f32 %v798, %v800
      %v803 = vpack.c.bf16 %v802, %v802
      %v804 = vld [vmem:[%s5] sm:$0xf]
      %v805 = vld [vmem:[%s5 + $0x4] sm:$0xf]
      %v806 = vld [vmem:[%s5 + $0x8] sm:$0xf]
      %v807 = vld [vmem:[%s5 + $0xc] sm:$0xf]
      %v808 = vld [vmem:[%s6] sm:$0x1]
      %v810 = vperm.slane %v808, 0
      %v816 = vunpack.c.l.b16 %v804
      %v817 = vunpack.c.l.b16 %v805
      %v818 = vunpack.c.l.b16 %v806
      %v819 = vunpack.c.l.b16 %v807
      %v820 = vpack.c.b16 %v817, %v816
      %v821 = vpack.c.b16 %v819, %v818
      %v825 = vsel %vm765, %v803, 0
      %827 = vmatpush.bf16.msra.mxu0 0
      %828 = vmatpush.bf16.msra.mxu0 0
      %829 = vmatpush.bf16.msra.mxu0 0
      %830 = vmatpush.bf16.msra.mxu0 0
      %831 = vmatpush.bf16.msra.mxu0 0
      %832 = vmatpush.bf16.msra.mxu0 0
      %833 = vmatpush.bf16.msra.mxu0 %v821
      %834 = vmatpush.bf16.msra.mxu0 %v820
      %835 = vmatmul.bf16.gmra.mxu0 %v825
      %v836 = vpop.f32.mrf.mxu0
      %v837 = vadd.f32 %v810, %v836
      %v838 = vpop.f32.mrf.mxu0
      %839 = vdwg.mxu0
      %841 = vrot.lane.b32.xlu0 %v837, 96
      %v842 = vpop.permute.xlu0 %841
      %vm843 = vcmask 64512
      %v844 = vsel %vm843, %v837, 0
      %v846 = vsel %vm843, %v842, 0
      %848 = vmatpush.xpose.msra.mxu0 0.0
      %849 = vmatpush.xpose.msra.mxu0 0.0
      %850 = vmatpush.xpose.msra.mxu0 0.0
      %851 = vmatpush.xpose.msra.mxu0 0.0
      %852 = vmatpush.xpose.msra.mxu0 0.0
      %853 = vmatpush.xpose.msra.mxu0 0.0
      %854 = vmatpush.xpose.msra.mxu0 0.0
      %855 = vmatpush.xpose.msra.mxu0 0.0
      %856 = vmatpush.xpose.msra.mxu0 0.0
      %857 = vmatpush.xpose.msra.mxu0 0.0
      %858 = vmatpush.xpose.msra.mxu0 0.0
      %859 = vmatpush.xpose.msra.mxu0 0.0
      %860 = vmatpush.xpose.msra.mxu0 0.0
      %861 = vmatpush.xpose.msra.mxu0 0.0
      %862 = vmatpush.xpose.msra.mxu0 0.0
      %863 = vmatpush.xpose.msra.mxu0 %v846
      %864 = vmatmul.f32.gmra.mxu0 %v844
      %v865 = vpop.f32.mrf.mxu0
      %v866 = vadd.f32 %v762, %v865
      %867 = vdwg.mxu0
      %v868 = vsel %vm843, %v866, -inf
      %869 = vmax.xlane.f32.xlu0 %v868
      %v870 = vpop.xlane.xlu0 %869
      %v871 = vsub.f32 %v866, %v870
      %v872 = vmul.f32 %v871, 1.442695
      %v873 = vpow.pop %v872
      %v874 = vsel %vm843, %v873, 0.0
      %875 = vadd.xlane.f32.xlu0 %v874
      %v876 = vpop.xlane.xlu0 %875
      %v877 = vrcp.pop %v876
      %v878 = vmul.f32 %v873, %v877
      %879 = vrot.lane.b32.xlu0 %v837, 64
      %v880 = vpop.permute.xlu0 %879
      %v883 = vsel %vm843, %v878, 0
      %885 = vmatpush.msra.mxu0 0.0
      %886 = vmatpush.msra.mxu0 0.0
      %887 = vmatpush.msra.mxu0 0.0
      %888 = vmatpush.msra.mxu0 0.0
      %889 = vmatpush.msra.mxu0 0.0
      %890 = vmatpush.msra.mxu0 0.0
      %891 = vmatpush.msra.mxu0 0.0
      %892 = vmatpush.msra.mxu0 0.0
      %893 = vmatpush.msra.mxu0 0.0
      %894 = vmatpush.msra.mxu0 0.0
      %895 = vmatpush.msra.mxu0 0.0
      %896 = vmatpush.msra.mxu0 0.0
      %897 = vmatpush.msra.mxu0 0.0
      %898 = vmatpush.msra.mxu0 0.0
      %899 = vmatpush.msra.mxu0 0.0
      %900 = vmatpush.msra.mxu0 %v880
      %901 = vmatmul.f32.gmra.mxu0 %v883
      %v902 = vpop.f32.mrf.mxu0
      %v903 = vadd.f32 0.0, %v902
      %904 = vdwg.mxu0
      %905 = vrot.lane.b32.xlu0 %v837, 120
      %v906 = vpop.permute.xlu0 %905
      %907 = vrot.lane.b32.xlu0 %v837, 88
      %v908 = vpop.permute.xlu0 %907
      %v909 = vsel %vm843, %v906, 0
      %v911 = vsel %vm843, %v908, 0
      %913 = vmatpush.xpose.msra.mxu0 0.0
      %914 = vmatpush.xpose.msra.mxu0 0.0
      %915 = vmatpush.xpose.msra.mxu0 0.0
      %916 = vmatpush.xpose.msra.mxu0 0.0
      %917 = vmatpush.xpose.msra.mxu0 0.0
      %918 = vmatpush.xpose.msra.mxu0 0.0
      %919 = vmatpush.xpose.msra.mxu0 0.0
      %920 = vmatpush.xpose.msra.mxu0 0.0
      %921 = vmatpush.xpose.msra.mxu0 0.0
      %922 = vmatpush.xpose.msra.mxu0 0.0
      %923 = vmatpush.xpose.msra.mxu0 0.0
      %924 = vmatpush.xpose.msra.mxu0 0.0
      %925 = vmatpush.xpose.msra.mxu0 0.0
      %926 = vmatpush.xpose.msra.mxu0 0.0
      %927 = vmatpush.xpose.msra.mxu0 0.0
      %928 = vmatpush.xpose.msra.mxu0 %v911
      %929 = vmatmul.f32.gmra.mxu0 %v909
      %v930 = vpop.f32.mrf.mxu0
      %v931 = vadd.f32 %v762, %v930
      %932 = vdwg.mxu0
      %v933 = vsel %vm843, %v931, -inf
      %934 = vmax.xlane.f32.xlu0 %v933
      %v935 = vpop.xlane.xlu0 %934
      %v936 = vsub.f32 %v931, %v935
      %v937 = vmul.f32 %v936, 1.442695
      %v938 = vpow.pop %v937
      %v939 = vsel %vm843, %v938, 0.0
      %940 = vadd.xlane.f32.xlu0 %v939
      %v941 = vpop.xlane.xlu0 %940
      %v942 = vrcp.pop %v941
      %v943 = vmul.f32 %v938, %v942
      %944 = vrot.lane.b32.xlu0 %v837, 56
      %v945 = vpop.permute.xlu0 %944
      %v948 = vsel %vm843, %v943, 0
      %950 = vmatpush.msra.mxu0 0.0
      %951 = vmatpush.msra.mxu0 0.0
      %952 = vmatpush.msra.mxu0 0.0
      %953 = vmatpush.msra.mxu0 0.0
      %954 = vmatpush.msra.mxu0 0.0
      %955 = vmatpush.msra.mxu0 0.0
      %956 = vmatpush.msra.mxu0 0.0
      %957 = vmatpush.msra.mxu0 0.0
      %958 = vmatpush.msra.mxu0 0.0
      %959 = vmatpush.msra.mxu0 0.0
      %960 = vmatpush.msra.mxu0 0.0
      %961 = vmatpush.msra.mxu0 0.0
      %962 = vmatpush.msra.mxu0 0.0
      %963 = vmatpush.msra.mxu0 0.0
      %964 = vmatpush.msra.mxu0 0.0
      %965 = vmatpush.msra.mxu0 %v945
      %966 = vmatmul.f32.gmra.mxu0 %v948
      %v967 = vpop.f32.mrf.mxu0
      %v968 = vadd.f32 0.0, %v967
      %969 = vdwg.mxu0
      %970 = vrot.lane.b32.xlu0 %v837, 112
      %v971 = vpop.permute.xlu0 %970
      %972 = vrot.lane.b32.xlu0 %v837, 80
      %v973 = vpop.permute.xlu0 %972
      %v974 = vsel %vm843, %v971, 0
      %v976 = vsel %vm843, %v973, 0
      %978 = vmatpush.xpose.msra.mxu0 0.0
      %979 = vmatpush.xpose.msra.mxu0 0.0
      %980 = vmatpush.xpose.msra.mxu0 0.0
      %981 = vmatpush.xpose.msra.mxu0 0.0
      %982 = vmatpush.xpose.msra.mxu0 0.0
      %983 = vmatpush.xpose.msra.mxu0 0.0
      %984 = vmatpush.xpose.msra.mxu0 0.0
      %985 = vmatpush.xpose.msra.mxu0 0.0
      %986 = vmatpush.xpose.msra.mxu0 0.0
      %987 = vmatpush.xpose.msra.mxu0 0.0
      %988 = vmatpush.xpose.msra.mxu0 0.0
      %989 = vmatpush.xpose.msra.mxu0 0.0
      %990 = vmatpush.xpose.msra.mxu0 0.0
      %991 = vmatpush.xpose.msra.mxu0 0.0
      %992 = vmatpush.xpose.msra.mxu0 0.0
      %993 = vmatpush.xpose.msra.mxu0 %v976
      %994 = vmatmul.f32.gmra.mxu0 %v974
      %v995 = vpop.f32.mrf.mxu0
      %v996 = vadd.f32 %v762, %v995
      %997 = vdwg.mxu0
      %v998 = vsel %vm843, %v996, -inf
      %999 = vmax.xlane.f32.xlu0 %v998
      %v1000 = vpop.xlane.xlu0 %999
      %v1001 = vsub.f32 %v996, %v1000
      %v1002 = vmul.f32 %v1001, 1.442695
      %v1003 = vpow.pop %v1002
      %v1004 = vsel %vm843, %v1003, 0.0
      %1005 = vadd.xlane.f32.xlu0 %v1004
      %v1006 = vpop.xlane.xlu0 %1005
      %v1007 = vrcp.pop %v1006
      %v1008 = vmul.f32 %v1003, %v1007
      %1009 = vrot.lane.b32.xlu0 %v837, 48
      %v1010 = vpop.permute.xlu0 %1009
      %v1013 = vsel %vm843, %v1008, 0
      %1015 = vmatpush.msra.mxu0 0.0
      %1016 = vmatpush.msra.mxu0 0.0
      %1017 = vmatpush.msra.mxu0 0.0
      %1018 = vmatpush.msra.mxu0 0.0
      %1019 = vmatpush.msra.mxu0 0.0
      %1020 = vmatpush.msra.mxu0 0.0
      %1021 = vmatpush.msra.mxu0 0.0
      %1022 = vmatpush.msra.mxu0 0.0
      %1023 = vmatpush.msra.mxu0 0.0
      %1024 = vmatpush.msra.mxu0 0.0
      %1025 = vmatpush.msra.mxu0 0.0
      %1026 = vmatpush.msra.mxu0 0.0
      %1027 = vmatpush.msra.mxu0 0.0
      %1028 = vmatpush.msra.mxu0 0.0
      %1029 = vmatpush.msra.mxu0 0.0
      %1030 = vmatpush.msra.mxu0 %v1010
      %1031 = vmatmul.f32.gmra.mxu0 %v1013
      %v1032 = vpop.f32.mrf.mxu0
      %v1033 = vadd.f32 0.0, %v1032
      %1034 = vdwg.mxu0
      %1035 = vrot.lane.b32.xlu0 %v837, 104
      %v1036 = vpop.permute.xlu0 %1035
      %1037 = vrot.lane.b32.xlu0 %v837, 72
      %v1038 = vpop.permute.xlu0 %1037
      %v1039 = vsel %vm843, %v1036, 0
      %v1041 = vsel %vm843, %v1038, 0
      %1043 = vmatpush.xpose.msra.mxu0 0.0
      %1044 = vmatpush.xpose.msra.mxu0 0.0
      %1045 = vmatpush.xpose.msra.mxu0 0.0
      %1046 = vmatpush.xpose.msra.mxu0 0.0
      %1047 = vmatpush.xpose.msra.mxu0 0.0
      %1048 = vmatpush.xpose.msra.mxu0 0.0
      %1049 = vmatpush.xpose.msra.mxu0 0.0
      %1050 = vmatpush.xpose.msra.mxu0 0.0
      %1051 = vmatpush.xpose.msra.mxu0 0.0
      %1052 = vmatpush.xpose.msra.mxu0 0.0
      %1053 = vmatpush.xpose.msra.mxu0 0.0
      %1054 = vmatpush.xpose.msra.mxu0 0.0
      %1055 = vmatpush.xpose.msra.mxu0 0.0
      %1056 = vmatpush.xpose.msra.mxu0 0.0
      %1057 = vmatpush.xpose.msra.mxu0 0.0
      %1058 = vmatpush.xpose.msra.mxu0 %v1041
      %1059 = vmatmul.f32.gmra.mxu0 %v1039
      %v1060 = vpop.f32.mrf.mxu0
      %v1061 = vadd.f32 %v762, %v1060
      %1062 = vdwg.mxu0
      %v1063 = vsel %vm843, %v1061, -inf
      %1064 = vmax.xlane.f32.xlu0 %v1063
      %v1065 = vpop.xlane.xlu0 %1064
      %v1066 = vsub.f32 %v1061, %v1065
      %v1067 = vmul.f32 %v1066, 1.442695
      %v1068 = vpow.pop %v1067
      %v1069 = vsel %vm843, %v1068, 0.0
      %1070 = vadd.xlane.f32.xlu0 %v1069
      %v1071 = vpop.xlane.xlu0 %1070
      %v1072 = vrcp.pop %v1071
      %v1073 = vmul.f32 %v1068, %v1072
      %1074 = vrot.lane.b32.xlu0 %v837, 40
      %v1075 = vpop.permute.xlu0 %1074
      %v1078 = vsel %vm843, %v1073, 0
      %1080 = vmatpush.msra.mxu0 0.0
      %1081 = vmatpush.msra.mxu0 0.0
      %1082 = vmatpush.msra.mxu0 0.0
      %1083 = vmatpush.msra.mxu0 0.0
      %1084 = vmatpush.msra.mxu0 0.0
      %1085 = vmatpush.msra.mxu0 0.0
      %1086 = vmatpush.msra.mxu0 0.0
      %1087 = vmatpush.msra.mxu0 0.0
      %1088 = vmatpush.msra.mxu0 0.0
      %1089 = vmatpush.msra.mxu0 0.0
      %1090 = vmatpush.msra.mxu0 0.0
      %1091 = vmatpush.msra.mxu0 0.0
      %1092 = vmatpush.msra.mxu0 0.0
      %1093 = vmatpush.msra.mxu0 0.0
      %1094 = vmatpush.msra.mxu0 0.0
      %1095 = vmatpush.msra.mxu0 %v1075
      %1096 = vmatmul.f32.gmra.mxu0 %v1078
      %v1097 = vpop.f32.mrf.mxu0
      %v1098 = vadd.f32 0.0, %v1097
      %1099 = vdwg.mxu0
      %1101 = vrot.lane.b32.xlu0 %v968, 8
      %v1102 = vpop.permute.xlu0 %1101
      %1105 = vrot.lane.b32.xlu0 %v1033, 16
      %v1106 = vpop.permute.xlu0 %1105
      %1109 = vrot.lane.b32.xlu0 %v1098, 24
      %v1110 = vpop.permute.xlu0 %1109
      %v1112 = vsel %vm843, %v903, %v1102
      %vm1113 = vcmask 130048
      %v1114 = vsel %vm1113, %v1112, %v1106
      %vm1115 = vcmask 195584
      %v1116 = vsel %vm1115, %v1114, %v1110
      %v1117 = vpack.c.bf16 %v1116, %v1116
      %v1118 = vld [vmem:[%s7] sm:$0xf]
      %v1119 = vld [vmem:[%s7 + $0x4] sm:$0xf]
      %v1120 = vld [vmem:[%s7 + $0x8] sm:$0xf]
      %v1121 = vld [vmem:[%s7 + $0xc] sm:$0xf]
      %v1122 = vld [vmem:[%s8] sm:$0x1]
      %v1124 = vperm.slane %v1122, 0
      %v1130 = vunpack.c.l.b16 %v1118
      %v1131 = vunpack.c.l.b16 %v1119
      %v1132 = vunpack.c.l.b16 %v1120
      %v1133 = vunpack.c.l.b16 %v1121
      %v1134 = vpack.c.b16 %v1131, %v1130
      %v1135 = vpack.c.b16 %v1133, %v1132
      %v1139 = vsel %vm765, %v1117, 0
      %1141 = vmatpush.bf16.msra.mxu0 0
      %1142 = vmatpush.bf16.msra.mxu0 0
      %1143 = vmatpush.bf16.msra.mxu0 0
      %1144 = vmatpush.bf16.msra.mxu0 0
      %1145 = vmatpush.bf16.msra.mxu0 0
      %1146 = vmatpush.bf16.msra.mxu0 0
      %1147 = vmatpush.bf16.msra.mxu0 %v1135
      %1148 = vmatpush.bf16.msra.mxu0 %v1134
      %1149 = vmatmul.bf16.gmra.mxu0 %v1139
      %v1150 = vpop.f32.mrf.mxu0
      %v1151 = vadd.f32 %v1124, %v1150
      %v1152 = vpop.f32.mrf.mxu0
      %1153 = vdwg.mxu0
      %v1154 = vadd.f32 %v742, %v1151
      %v1155 = vld [vmem:[%s9] sm:$0x1]
      %v1156 = vld [vmem:[%s10] sm:$0x1]
      %v1157 = vsel %vm765, %v1154, 0.0
      %1158 = vadd.xlane.f32.xlu0 %v1157
      %v1159 = vpop.xlane.xlu0 %1158
      %v1160 = vmul.f32 %v1159, %v775
      %v1161 = vsub.f32 %v1154, %v1160
      %v1162 = vmul.f32 %v1161, %v1161
      %v1163 = vsel %vm765, %v1162, 0.0
      %1164 = vadd.xlane.f32.xlu0 %v1163
      %v1165 = vpop.xlane.xlu0 %1164
      %v1166 = vmul.f32 %v1165, %v775
      %v1167 = vadd.f32 %v1166, 1e-05
      %v1168 = vrsqrt.pop %v1167
      %v1169 = vmul.f32 %v1168, %v1167
      %v1170 = vmul.f32 %v1169, %v1168
      %v1171 = vmul.f32 0.5, %v1170
      %v1172 = vsub.f32 1.5, %v1171
      %v1173 = vmul.f32 %v1168, %v1172
      %vm1174 = vweird.f32 %v1167
      %vm1175 = vweird.f32 %v1168
      %vm1176 = vmor %vm1174, %vm1175
      %v1177 = vsel %vm1176, %v1168, %v1173
      %v1178 = vmul.f32 %v1161, %v1177
      %v1180 = vperm.slane %v1155, 0
      %v1182 = vmul.f32 %v1178, %v1180
      %v1184 = vperm.slane %v1156, 0
      %v1186 = vadd.f32 %v1182, %v1184
      %v1187 = vpack.c.bf16 %v1186, %v1186
      %v1188 = vld [vmem:[%s11] sm:$0xf]
      %v1189 = vld [vmem:[%s11 + $0x4] sm:$0xf]
      %v1190 = vld [vmem:[%s11 + $0x8] sm:$0xf]
      %v1191 = vld [vmem:[%s11 + $0xc] sm:$0xf]
      %v1192 = vld [vmem:[%s12] sm:$0x1]
      %v1194 = vperm.slane %v1192, 0
      %v1200 = vunpack.c.l.b16 %v1188
      %v1201 = vunpack.c.l.b16 %v1189
      %v1202 = vunpack.c.l.b16 %v1190
      %v1203 = vunpack.c.l.b16 %v1191
      %v1204 = vpack.c.b16 %v1201, %v1200
      %v1205 = vpack.c.b16 %v1203, %v1202
      %v1209 = vsel %vm765, %v1187, 0
      %1211 = vmatpush.bf16.msra.mxu0 0
      %1212 = vmatpush.bf16.msra.mxu0 0
      %1213 = vmatpush.bf16.msra.mxu0 0
      %1214 = vmatpush.bf16.msra.mxu0 0
      %1215 = vmatpush.bf16.msra.mxu0 0
      %1216 = vmatpush.bf16.msra.mxu0 0
      %1217 = vmatpush.bf16.msra.mxu0 %v1205
      %1218 = vmatpush.bf16.msra.mxu0 %v1204
      %1219 = vmatmul.bf16.gmra.mxu0 %v1209
      %v1220 = vpop.f32.mrf.mxu0
      %v1221 = vadd.f32 %v1194, %v1220
      %v1222 = vpop.f32.mrf.mxu0
      %1223 = vdwg.mxu0
      %v1224 = vld [vmem:[%s13] sm:$0xf]
      %v1225 = vld [vmem:[%s13 + $0x4] sm:$0xf]
      %v1226 = vld [vmem:[%s13 + $0x8] sm:$0xf]
      %v1227 = vld [vmem:[%s13 + $0xc] sm:$0xf]
      %v1228 = vld [vmem:[%s14] sm:$0x1]
      %v1230 = vperm.slane %v1228, 0
      %v1240 = vunpack.c.l.b16 %v743
      %v1241 = vunpack.c.l.b16 %v744
      %v1242 = vunpack.c.l.b16 %v745
      %v1243 = vunpack.c.l.b16 %v746
      %v1244 = vunpack.c.l.b16 %v747
      %v1245 = vunpack.c.l.b16 %v748
      %v1246 = vunpack.c.l.b16 %v749
      %v1247 = vunpack.c.l.b16 %v750
      %v1248 = vpack.c.b16 %v1241, %v1240
      %v1249 = vpack.c.b16 %v1243, %v1242
      %v1250 = vpack.c.b16 %v1245, %v1244
      %v1251 = vpack.c.b16 %v1247, %v1246
      %v1256 = vunpack.c.l.b16 %v1224
      %v1257 = vunpack.c.l.b16 %v1225
      %v1258 = vunpack.c.l.b16 %v1226
      %v1259 = vunpack.c.l.b16 %v1227
      %v1260 = vpack.c.b16 %v1257, %v1256
      %v1261 = vpack.c.b16 %v1259, %v1258
      %v1265 = vsel %vm765, %v1248, 0
      %v1268 = vsel %vm765, %v1249, 0
      %v1271 = vsel %vm765, %v1250, 0
      %v1274 = vsel %vm765, %v1251, 0
      %1276 = vmatpush.bf16.msra.mxu0 0
      %1277 = vmatpush.bf16.msra.mxu0 0
      %1278 = vmatpush.bf16.msra.mxu0 0
      %1279 = vmatpush.bf16.msra.mxu0 0
      %1280 = vmatpush.bf16.msra.mxu0 0
      %1281 = vmatpush.bf16.msra.mxu0 0
      %1282 = vmatpush.bf16.msra.mxu0 %v1261
      %1283 = vmatpush.bf16.msra.mxu0 %v1260
      %1284 = vmatmul.bf16.gmra.mxu0 %v1265
      %v1285 = vpop.f32.mrf.mxu0
      %v1286 = vadd.f32 %v1230, %v1285
      %v1287 = vpop.f32.mrf.mxu0
      %v1288 = vadd.f32 %v1230, %v1287
      %1289 = vmatmul.bf16.gmra.mxu0 %v1268
      %v1290 = vpop.f32.mrf.mxu0
      %v1291 = vadd.f32 %v1230, %v1290
      %v1292 = vpop.f32.mrf.mxu0
      %v1293 = vadd.f32 %v1230, %v1292
      %1294 = vmatmul.bf16.gmra.mxu0 %v1271
      %v1295 = vpop.f32.mrf.mxu0
      %v1296 = vadd.f32 %v1230, %v1295
      %v1297 = vpop.f32.mrf.mxu0
      %v1298 = vadd.f32 %v1230, %v1297
      %1299 = vmatmul.bf16.gmra.mxu0 %v1274
      %v1300 = vpop.f32.mrf.mxu0
      %v1301 = vadd.f32 %v1230, %v1300
      %v1302 = vpop.f32.mrf.mxu0
      %v1303 = vadd.f32 %v1230, %v1302
      %1304 = vdwg.mxu0
      %v1306 = vsel %vm843, %v1221, 0
      %v1309 = vsel %vm843, %v1286, 0
      %v1312 = vsel %vm843, %v1288, 0
      %v1315 = vsel %vm843, %v1291, 0
      %v1318 = vsel %vm843, %v1293, 0
      %v1321 = vsel %vm843, %v1296, 0
      %v1324 = vsel %vm843, %v1298, 0
      %v1327 = vsel %vm843, %v1301, 0
      %v1330 = vsel %vm843, %v1303, 0
      %1332 = vmatpush.xpose.msra.mxu0 0.0
      %1333 = vmatpush.xpose.msra.mxu0 0.0
      %1334 = vmatpush.xpose.msra.mxu0 0.0
      %1335 = vmatpush.xpose.msra.mxu0 0.0
      %1336 = vmatpush.xpose.msra.mxu0 0.0
      %1337 = vmatpush.xpose.msra.mxu0 0.0
      %1338 = vmatpush.xpose.msra.mxu0 0.0
      %1339 = vmatpush.xpose.msra.mxu0 0.0
      %1340 = vmatpush.xpose.msra.mxu0 %v1330
      %1341 = vmatpush.xpose.msra.mxu0 %v1327
      %1342 = vmatpush.xpose.msra.mxu0 %v1324
      %1343 = vmatpush.xpose.msra.mxu0 %v1321
      %1344 = vmatpush.xpose.msra.mxu0 %v1318
      %1345 = vmatpush.xpose.msra.mxu0 %v1315
      %1346 = vmatpush.xpose.msra.mxu0 %v1312
      %1347 = vmatpush.xpose.msra.mxu0 %v1309
      %1348 = vmatmul.f32.gmra.mxu0 %v1306
      %v1349 = vpop.f32.mrf.mxu0
      %v1350 = vadd.f32 0.0, %v1349
      %1351 = vdwg.mxu0
      %vm1352 = vcmask 523264
      %v1353 = vsel %vm1352, %v1350, -inf
      %1354 = vmax.xlane.f32.xlu0 %v1353
      %v1355 = vpop.xlane.xlu0 %1354
      %v1356 = vsub.f32 %v1350, %v1355
      %v1357 = vmul.f32 %v1356, 1.442695
      %v1358 = vpow.pop %v1357
      %v1359 = vsel %vm1352, %v1358, 0.0
      %1360 = vadd.xlane.f32.xlu0 %v1359
      %v1361 = vpop.xlane.xlu0 %1360
      %v1362 = vrcp.pop %v1361
      %v1363 = vmul.f32 %v1358, %v1362
      %1364 = vrot.lane.b32.xlu0 %v1286, 96
      %v1365 = vpop.permute.xlu0 %1364
      %1366 = vrot.lane.b32.xlu0 %v1288, 96
      %v1367 = vpop.permute.xlu0 %1366
      %1368 = vrot.lane.b32.xlu0 %v1291, 96
      %v1369 = vpop.permute.xlu0 %1368
      %1370 = vrot.lane.b32.xlu0 %v1293, 96
      %v1371 = vpop.permute.xlu0 %1370
      %1372 = vrot.lane.b32.xlu0 %v1296, 96
      %v1373 = vpop.permute.xlu0 %1372
      %1374 = vrot.lane.b32.xlu0 %v1298, 96
      %v1375 = vpop.permute.xlu0 %1374
      %1376 = vrot.lane.b32.xlu0 %v1301, 96
      %v1377 = vpop.permute.xlu0 %1376
      %1378 = vrot.lane.b32.xlu0 %v1303, 96
      %v1379 = vpop.permute.xlu0 %1378
      %v1389 = vsel %vm1352, %v1363, 0
      %1391 = vmatpush.msra.mxu0 0.0
      %1392 = vmatpush.msra.mxu0 0.0
      %1393 = vmatpush.msra.mxu0 0.0
      %1394 = vmatpush.msra.mxu0 0.0
      %1395 = vmatpush.msra.mxu0 0.0
      %1396 = vmatpush.msra.mxu0 0.0
      %1397 = vmatpush.msra.mxu0 0.0
      %1398 = vmatpush.msra.mxu0 0.0
      %1399 = vmatpush.msra.mxu0 %v1379
      %1400 = vmatpush.msra.mxu0 %v1377
      %1401 = vmatpush.msra.mxu0 %v1375
      %1402 = vmatpush.msra.mxu0 %v1373
      %1403 = vmatpush.msra.mxu0 %v1371
      %1404 = vmatpush.msra.mxu0 %v1369
      %1405 = vmatpush.msra.mxu0 %v1367
      %1406 = vmatpush.msra.mxu0 %v1365
      %1407 = vmatmul.f32.gmra.mxu0 %v1389
      %v1408 = vpop.f32.mrf.mxu0
      %v1409 = vadd.f32 0.0, %v1408
      %1410 = vdwg.mxu0
      %1411 = vrot.lane.b32.xlu0 %v1221, 120
      %v1412 = vpop.permute.xlu0 %1411
      %1413 = vrot.lane.b32.xlu0 %v1286, 120
      %v1414 = vpop.permute.xlu0 %1413
      %1415 = vrot.lane.b32.xlu0 %v1288, 120
      %v1416 = vpop.permute.xlu0 %1415
      %1417 = vrot.lane.b32.xlu0 %v1291, 120
      %v1418 = vpop.permute.xlu0 %1417
      %1419 = vrot.lane.b32.xlu0 %v1293, 120
      %v1420 = vpop.permute.xlu0 %1419
      %1421 = vrot.lane.b32.xlu0 %v1296, 120
      %v1422 = vpop.permute.xlu0 %1421
      %1423 = vrot.lane.b32.xlu0 %v1298, 120
      %v1424 = vpop.permute.xlu0 %1423
      %1425 = vrot.lane.b32.xlu0 %v1301, 120
      %v1426 = vpop.permute.xlu0 %1425
      %1427 = vrot.lane.b32.xlu0 %v1303, 120
      %v1428 = vpop.permute.xlu0 %1427
      %v1429 = vsel %vm843, %v1412, 0
      %v1431 = vsel %vm843, %v1414, 0
      %v1433 = vsel %vm843, %v1416, 0
      %v1435 = vsel %vm843, %v1418, 0
      %v1437 = vsel %vm843, %v1420, 0
      %v1439 = vsel %vm843, %v1422, 0
      %v1441 = vsel %vm843, %v1424, 0
      %v1443 = vsel %vm843, %v1426, 0
      %v1445 = vsel %vm843, %v1428, 0
      %1447 = vmatpush.xpose.msra.mxu0 0.0
      %1448 = vmatpush.xpose.msra.mxu0 0.0
      %1449 = vmatpush.xpose.msra.mxu0 0.0
      %1450 = vmatpush.xpose.msra.mxu0 0.0
      %1451 = vmatpush.xpose.msra.mxu0 0.0
      %1452 = vmatpush.xpose.msra.mxu0 0.0
      %1453 = vmatpush.xpose.msra.mxu0 0.0
      %1454 = vmatpush.xpose.msra.mxu0 0.0
      %1455 = vmatpush.xpose.msra.mxu0 %v1445
      %1456 = vmatpush.xpose.msra.mxu0 %v1443
      %1457 = vmatpush.xpose.msra.mxu0 %v1441
      %1458 = vmatpush.xpose.msra.mxu0 %v1439
      %1459 = vmatpush.xpose.msra.mxu0 %v1437
      %1460 = vmatpush.xpose.msra.mxu0 %v1435
      %1461 = vmatpush.xpose.msra.mxu0 %v1433
      %1462 = vmatpush.xpose.msra.mxu0 %v1431
      %1463 = vmatmul.f32.gmra.mxu0 %v1429
      %v1464 = vpop.f32.mrf.mxu0
      %v1465 = vadd.f32 0.0, %v1464
      %1466 = vdwg.mxu0
      %v1467 = vsel %vm1352, %v1465, -inf
      %1468 = vmax.xlane.f32.xlu0 %v1467
      %v1469 = vpop.xlane.xlu0 %1468
      %v1470 = vsub.f32 %v1465, %v1469
      %v1471 = vmul.f32 %v1470, 1.442695
      %v1472 = vpow.pop %v1471
      %v1473 = vsel %vm1352, %v1472, 0.0
      %1474 = vadd.xlane.f32.xlu0 %v1473
      %v1475 = vpop.xlane.xlu0 %1474
      %v1476 = vrcp.pop %v1475
      %v1477 = vmul.f32 %v1472, %v1476
      %1478 = vrot.lane.b32.xlu0 %v1286, 88
      %v1479 = vpop.permute.xlu0 %1478
      %1480 = vrot.lane.b32.xlu0 %v1288, 88
      %v1481 = vpop.permute.xlu0 %1480
      %1482 = vrot.lane.b32.xlu0 %v1291, 88
      %v1483 = vpop.permute.xlu0 %1482
      %1484 = vrot.lane.b32.xlu0 %v1293, 88
      %v1485 = vpop.permute.xlu0 %1484
      %1486 = vrot.lane.b32.xlu0 %v1296, 88
      %v1487 = vpop.permute.xlu0 %1486
      %1488 = vrot.lane.b32.xlu0 %v1298, 88
      %v1489 = vpop.permute.xlu0 %1488
      %1490 = vrot.lane.b32.xlu0 %v1301, 88
      %v1491 = vpop.permute.xlu0 %1490
      %1492 = vrot.lane.b32.xlu0 %v1303, 88
      %v1493 = vpop.permute.xlu0 %1492
      %v1503 = vsel %vm1352, %v1477, 0
      %1505 = vmatpush.msra.mxu0 0.0
      %1506 = vmatpush.msra.mxu0 0.0
      %1507 = vmatpush.msra.mxu0 0.0
      %1508 = vmatpush.msra.mxu0 0.0
      %1509 = vmatpush.msra.mxu0 0.0
      %1510 = vmatpush.msra.mxu0 0.0
      %1511 = vmatpush.msra.mxu0 0.0
      %1512 = vmatpush.msra.mxu0 0.0
      %1513 = vmatpush.msra.mxu0 %v1493
      %1514 = vmatpush.msra.mxu0 %v1491
      %1515 = vmatpush.msra.mxu0 %v1489
      %1516 = vmatpush.msra.mxu0 %v1487
      %1517 = vmatpush.msra.mxu0 %v1485
      %1518 = vmatpush.msra.mxu0 %v1483
      %1519 = vmatpush.msra.mxu0 %v1481
      %1520 = vmatpush.msra.mxu0 %v1479
      %1521 = vmatmul.f32.gmra.mxu0 %v1503
      %v1522 = vpop.f32.mrf.mxu0
      %v1523 = vadd.f32 0.0, %v1522
      %1524 = vdwg.mxu0
      %1525 = vrot.lane.b32.xlu0 %v1221, 112
      %v1526 = vpop.permute.xlu0 %1525
      %1527 = vrot.lane.b32.xlu0 %v1286, 112
      %v1528 = vpop.permute.xlu0 %1527
      %1529 = vrot.lane.b32.xlu0 %v1288, 112
      %v1530 = vpop.permute.xlu0 %1529
      %1531 = vrot.lane.b32.xlu0 %v1291, 112
      %v1532 = vpop.permute.xlu0 %1531
      %1533 = vrot.lane.b32.xlu0 %v1293, 112
      %v1534 = vpop.permute.xlu0 %1533
      %1535 = vrot.lane.b32.xlu0 %v1296, 112
      %v1536 = vpop.permute.xlu0 %1535
      %1537 = vrot.lane.b32.xlu0 %v1298, 112
      %v1538 = vpop.permute.xlu0 %1537
      %1539 = vrot.lane.b32.xlu0 %v1301, 112
      %v1540 = vpop.permute.xlu0 %1539
      %1541 = vrot.lane.b32.xlu0 %v1303, 112
      %v1542 = vpop.permute.xlu0 %1541
      %v1543 = vsel %vm843, %v1526, 0
      %v1545 = vsel %vm843, %v1528, 0
      %v1547 = vsel %vm843, %v1530, 0
      %v1549 = vsel %vm843, %v1532, 0
      %v1551 = vsel %vm843, %v1534, 0
      %v1553 = vsel %vm843, %v1536, 0
      %v1555 = vsel %vm843, %v1538, 0
      %v1557 = vsel %vm843, %v1540, 0
      %v1559 = vsel %vm843, %v1542, 0
      %1561 = vmatpush.xpose.msra.mxu0 0.0
      %1562 = vmatpush.xpose.msra.mxu0 0.0
      %1563 = vmatpush.xpose.msra.mxu0 0.0
      %1564 = vmatpush.xpose.msra.mxu0 0.0
      %1565 = vmatpush.xpose.msra.mxu0 0.0
      %1566 = vmatpush.xpose.msra.mxu0 0.0
      %1567 = vmatpush.xpose.msra.mxu0 0.0
      %1568 = vmatpush.xpose.msra.mxu0 0.0
      %1569 = vmatpush.xpose.msra.mxu0 %v1559
      %1570 = vmatpush.xpose.msra.mxu0 %v1557
      %1571 = vmatpush.xpose.msra.mxu0 %v1555
      %1572 = vmatpush.xpose.msra.mxu0 %v1553
      %1573 = vmatpush.xpose.msra.mxu0 %v1551
      %1574 = vmatpush.xpose.msra.mxu0 %v1549
      %1575 = vmatpush.xpose.msra.mxu0 %v1547
      %1576 = vmatpush.xpose.msra.mxu0 %v1545
      %1577 = vmatmul.f32.gmra.mxu0 %v1543
      %v1578 = vpop.f32.mrf.mxu0
      %v1579 = vadd.f32 0.0, %v1578
      %1580 = vdwg.mxu0
      %v1581 = vsel %vm1352, %v1579, -inf
      %1582 = vmax.xlane.f32.xlu0 %v1581
      %v1583 = vpop.xlane.xlu0 %1582
      %v1584 = vsub.f32 %v1579, %v1583
      %v1585 = vmul.f32 %v1584, 1.442695
      %v1586 = vpow.pop %v1585
      %v1587 = vsel %vm1352, %v1586, 0.0
      %1588 = vadd.xlane.f32.xlu0 %v1587
      %v1589 = vpop.xlane.xlu0 %1588
      %v1590 = vrcp.pop %v1589
      %v1591 = vmul.f32 %v1586, %v1590
      %1592 = vrot.lane.b32.xlu0 %v1286, 80
      %v1593 = vpop.permute.xlu0 %1592
      %1594 = vrot.lane.b32.xlu0 %v1288, 80
      %v1595 = vpop.permute.xlu0 %1594
      %1596 = vrot.lane.b32.xlu0 %v1291, 80
      %v1597 = vpop.permute.xlu0 %1596
      %1598 = vrot.lane.b32.xlu0 %v1293, 80
      %v1599 = vpop.permute.xlu0 %1598
      %1600 = vrot.lane.b32.xlu0 %v1296, 80
      %v1601 = vpop.permute.xlu0 %1600
      %1602 = vrot.lane.b32.xlu0 %v1298, 80
      %v1603 = vpop.permute.xlu0 %1602
      %1604 = vrot.lane.b32.xlu0 %v1301, 80
      %v1605 = vpop.permute.xlu0 %1604
      %1606 = vrot.lane.b32.xlu0 %v1303, 80
      %v1607 = vpop.permute.xlu0 %1606
      %v1617 = vsel %vm1352, %v1591, 0
      %1619 = vmatpush.msra.mxu0 0.0
      %1620 = vmatpush.msra.mxu0 0.0
      %1621 = vmatpush.msra.mxu0 0.0
      %1622 = vmatpush.msra.mxu0 0.0
      %1623 = vmatpush.msra.mxu0 0.0
      %1624 = vmatpush.msra.mxu0 0.0
      %1625 = vmatpush.msra.mxu0 0.0
      %1626 = vmatpush.msra.mxu0 0.0
      %1627 = vmatpush.msra.mxu0 %v1607
      %1628 = vmatpush.msra.mxu0 %v1605
      %1629 = vmatpush.msra.mxu0 %v1603
      %1630 = vmatpush.msra.mxu0 %v1601
      %1631 = vmatpush.msra.mxu0 %v1599
      %1632 = vmatpush.msra.mxu0 %v1597
      %1633 = vmatpush.msra.mxu0 %v1595
      %1634 = vmatpush.msra.mxu0 %v1593
      %1635 = vmatmul.f32.gmra.mxu0 %v1617
      %v1636 = vpop.f32.mrf.mxu0
      %v1637 = vadd.f32 0.0, %v1636
      %1638 = vdwg.mxu0
      %1639 = vrot.lane.b32.xlu0 %v1221, 104
      %v1640 = vpop.permute.xlu0 %1639
      %1641 = vrot.lane.b32.xlu0 %v1286, 104
      %v1642 = vpop.permute.xlu0 %1641
      %1643 = vrot.lane.b32.xlu0 %v1288, 104
      %v1644 = vpop.permute.xlu0 %1643
      %1645 = vrot.lane.b32.xlu0 %v1291, 104
      %v1646 = vpop.permute.xlu0 %1645
      %1647 = vrot.lane.b32.xlu0 %v1293, 104
      %v1648 = vpop.permute.xlu0 %1647
      %1649 = vrot.lane.b32.xlu0 %v1296, 104
      %v1650 = vpop.permute.xlu0 %1649
      %1651 = vrot.lane.b32.xlu0 %v1298, 104
      %v1652 = vpop.permute.xlu0 %1651
      %1653 = vrot.lane.b32.xlu0 %v1301, 104
      %v1654 = vpop.permute.xlu0 %1653
      %1655 = vrot.lane.b32.xlu0 %v1303, 104
      %v1656 = vpop.permute.xlu0 %1655
      %v1657 = vsel %vm843, %v1640, 0
      %v1659 = vsel %vm843, %v1642, 0
      %v1661 = vsel %vm843, %v1644, 0
      %v1663 = vsel %vm843, %v1646, 0
      %v1665 = vsel %vm843, %v1648, 0
      %v1667 = vsel %vm843, %v1650, 0
      %v1669 = vsel %vm843, %v1652, 0
      %v1671 = vsel %vm843, %v1654, 0
      %v1673 = vsel %vm843, %v1656, 0
      %1675 = vmatpush.xpose.msra.mxu0 0.0
      %1676 = vmatpush.xpose.msra.mxu0 0.0
      %1677 = vmatpush.xpose.msra.mxu0 0.0
      %1678 = vmatpush.xpose.msra.mxu0 0.0
      %1679 = vmatpush.xpose.msra.mxu0 0.0
      %1680 = vmatpush.xpose.msra.mxu0 0.0
      %1681 = vmatpush.xpose.msra.mxu0 0.0
      %1682 = vmatpush.xpose.msra.mxu0 0.0
      %1683 = vmatpush.xpose.msra.mxu0 %v1673
      %1684 = vmatpush.xpose.msra.mxu0 %v1671
      %1685 = vmatpush.xpose.msra.mxu0 %v1669
      %1686 = vmatpush.xpose.msra.mxu0 %v1667
      %1687 = vmatpush.xpose.msra.mxu0 %v1665
      %1688 = vmatpush.xpose.msra.mxu0 %v1663
      %1689 = vmatpush.xpose.msra.mxu0 %v1661
      %1690 = vmatpush.xpose.msra.mxu0 %v1659
      %1691 = vmatmul.f32.gmra.mxu0 %v1657
      %v1692 = vpop.f32.mrf.mxu0
      %v1693 = vadd.f32 0.0, %v1692
      %1694 = vdwg.mxu0
      %v1695 = vsel %vm1352, %v1693, -inf
      %1696 = vmax.xlane.f32.xlu0 %v1695
      %v1697 = vpop.xlane.xlu0 %1696
      %v1698 = vsub.f32 %v1693, %v1697
      %v1699 = vmul.f32 %v1698, 1.442695
      %v1700 = vpow.pop %v1699
      %v1701 = vsel %vm1352, %v1700, 0.0
      %1702 = vadd.xlane.f32.xlu0 %v1701
      %v1703 = vpop.xlane.xlu0 %1702
      %v1704 = vrcp.pop %v1703
      %v1705 = vmul.f32 %v1700, %v1704
      %1706 = vrot.lane.b32.xlu0 %v1286, 72
      %v1707 = vpop.permute.xlu0 %1706
      %1708 = vrot.lane.b32.xlu0 %v1288, 72
      %v1709 = vpop.permute.xlu0 %1708
      %1710 = vrot.lane.b32.xlu0 %v1291, 72
      %v1711 = vpop.permute.xlu0 %1710
      %1712 = vrot.lane.b32.xlu0 %v1293, 72
      %v1713 = vpop.permute.xlu0 %1712
      %1714 = vrot.lane.b32.xlu0 %v1296, 72
      %v1715 = vpop.permute.xlu0 %1714
      %1716 = vrot.lane.b32.xlu0 %v1298, 72
      %v1717 = vpop.permute.xlu0 %1716
      %1718 = vrot.lane.b32.xlu0 %v1301, 72
      %v1719 = vpop.permute.xlu0 %1718
      %1720 = vrot.lane.b32.xlu0 %v1303, 72
      %v1721 = vpop.permute.xlu0 %1720
      %v1731 = vsel %vm1352, %v1705, 0
      %1733 = vmatpush.msra.mxu0 0.0
      %1734 = vmatpush.msra.mxu0 0.0
      %1735 = vmatpush.msra.mxu0 0.0
      %1736 = vmatpush.msra.mxu0 0.0
      %1737 = vmatpush.msra.mxu0 0.0
      %1738 = vmatpush.msra.mxu0 0.0
      %1739 = vmatpush.msra.mxu0 0.0
      %1740 = vmatpush.msra.mxu0 0.0
      %1741 = vmatpush.msra.mxu0 %v1721
      %1742 = vmatpush.msra.mxu0 %v1719
      %1743 = vmatpush.msra.mxu0 %v1717
      %1744 = vmatpush.msra.mxu0 %v1715
      %1745 = vmatpush.msra.mxu0 %v1713
      %1746 = vmatpush.msra.mxu0 %v1711
      %1747 = vmatpush.msra.mxu0 %v1709
      %1748 = vmatpush.msra.mxu0 %v1707
      %1749 = vmatmul.f32.gmra.mxu0 %v1731
      %v1750 = vpop.f32.mrf.mxu0
      %v1751 = vadd.f32 0.0, %v1750
      %1752 = vdwg.mxu0
      %1754 = vrot.lane.b32.xlu0 %v1523, 8
      %v1755 = vpop.permute.xlu0 %1754
      %1758 = vrot.lane.b32.xlu0 %v1637, 16
      %v1759 = vpop.permute.xlu0 %1758
      %1762 = vrot.lane.b32.xlu0 %v1751, 24
      %v1763 = vpop.permute.xlu0 %1762
      %v1765 = vsel %vm843, %v1409, %v1755
      %v1766 = vsel %vm1113, %v1765, %v1759
      %v1767 = vsel %vm1115, %v1766, %v1763
      %v1768 = vpack.c.bf16 %v1767, %v1767
      %v1769 = vld [vmem:[%s15] sm:$0xf]
      %v1770 = vld [vmem:[%s15 + $0x4] sm:$0xf]
      %v1771 = vld [vmem:[%s15 + $0x8] sm:$0xf]
      %v1772 = vld [vmem:[%s15 + $0xc] sm:$0xf]
      %v1777 = vunpack.c.l.b16 %v1769
      %v1778 = vunpack.c.l.b16 %v1770
      %v1779 = vunpack.c.l.b16 %v1771
      %v1780 = vunpack.c.l.b16 %v1772
      %v1781 = vpack.c.b16 %v1778, %v1777
      %v1782 = vpack.c.b16 %v1780, %v1779
      %v1786 = vsel %vm765, %v1768, 0
      %1788 = vmatpush.bf16.msra.mxu0 0
      %1789 = vmatpush.bf16.msra.mxu0 0
      %1790 = vmatpush.bf16.msra.mxu0 0
      %1791 = vmatpush.bf16.msra.mxu0 0
      %1792 = vmatpush.bf16.msra.mxu0 0
      %1793 = vmatpush.bf16.msra.mxu0 0
      %1794 = vmatpush.bf16.msra.mxu0 %v1782
      %1795 = vmatpush.bf16.msra.mxu0 %v1781
      %1796 = vmatmul.bf16.gmra.mxu0 %v1786
      %v1797 = vpop.f32.mrf.mxu0
      %v1798 = vadd.f32 0.0, %v1797
      %v1799 = vpop.f32.mrf.mxu0
      %1800 = vdwg.mxu0
      %v1801 = vadd.f32 %v1154, %v1798
      %v1802 = vld [vmem:[%s16] sm:$0x1]
      %v1804 = vperm.slane %v1802, 0
      %v1806 = vadd.f32 %v1801, %v1804
      %v1807 = vld [vmem:[%s17] sm:$0x1]
      %v1808 = vld [vmem:[%s18] sm:$0x1]
      %v1809 = vsel %vm765, %v1806, 0.0
      %1810 = vadd.xlane.f32.xlu0 %v1809
      %v1811 = vpop.xlane.xlu0 %1810
      %v1812 = vmul.f32 %v1811, %v775
      %v1813 = vsub.f32 %v1806, %v1812
      %v1814 = vmul.f32 %v1813, %v1813
      %v1815 = vsel %vm765, %v1814, 0.0
      %1816 = vadd.xlane.f32.xlu0 %v1815
      %v1817 = vpop.xlane.xlu0 %1816
      %v1818 = vmul.f32 %v1817, %v775
      %v1819 = vadd.f32 %v1818, 1e-05
      %v1820 = vrsqrt.pop %v1819
      %v1821 = vmul.f32 %v1820, %v1819
      %v1822 = vmul.f32 %v1821, %v1820
      %v1823 = vmul.f32 0.5, %v1822
      %v1824 = vsub.f32 1.5, %v1823
      %v1825 = vmul.f32 %v1820, %v1824
      %vm1826 = vweird.f32 %v1819
      %vm1827 = vweird.f32 %v1820
      %vm1828 = vmor %vm1826, %vm1827
      %v1829 = vsel %vm1828, %v1820, %v1825
      %v1830 = vmul.f32 %v1813, %v1829
      %v1832 = vperm.slane %v1807, 0
      %v1834 = vmul.f32 %v1830, %v1832
      %v1836 = vperm.slane %v1808, 0
      %v1838 = vadd.f32 %v1834, %v1836
      %v1839 = vpack.c.bf16 %v1838, %v1838
      %v1840 = vld [vmem:[%s19] sm:$0xf]
      %v1841 = vld [vmem:[%s19 + $0x4] sm:$0xf]
      %v1842 = vld [vmem:[%s19 + $0x8] sm:$0xf]
      %v1843 = vld [vmem:[%s19 + $0xc] sm:$0xf]
      %v1844 = vld [vmem:[%s20] sm:$0x1]
      %v1846 = vperm.slane %v1844, 0
      %v1852 = vunpack.c.l.b16 %v1840
      %v1853 = vunpack.c.l.b16 %v1841
      %v1854 = vunpack.c.l.b16 %v1842
      %v1855 = vunpack.c.l.b16 %v1843
      %v1856 = vpack.c.b16 %v1853, %v1852
      %v1857 = vpack.c.b16 %v1855, %v1854
      %v1861 = vsel %vm765, %v1839, 0
      %1863 = vmatpush.bf16.msra.mxu0 0
      %1864 = vmatpush.bf16.msra.mxu0 0
      %1865 = vmatpush.bf16.msra.mxu0 0
      %1866 = vmatpush.bf16.msra.mxu0 0
      %1867 = vmatpush.bf16.msra.mxu0 0
      %1868 = vmatpush.bf16.msra.mxu0 0
      %1869 = vmatpush.bf16.msra.mxu0 %v1857
      %1870 = vmatpush.bf16.msra.mxu0 %v1856
      %1871 = vmatmul.bf16.gmra.mxu0 %v1861
      %v1872 = vpop.f32.mrf.mxu0
      %v1873 = vadd.f32 %v1846, %v1872
      %v1874 = vpop.f32.mrf.mxu0
      %1875 = vdwg.mxu0
      %v1876 = vmul.f32 %v1873, 0.5
      %v1877 = vmul.f32 %v1873, 0.044715
      %v1878 = vmul.f32 %v1877, %v1873
      %v1879 = vmul.f32 %v1878, %v1873
      %v1880 = vadd.f32 %v1873, %v1879
      %v1881 = vmul.f32 %v1880, 0.7978846
      %v1882 = vtanh.pop %v1881
      %v1883 = vadd.f32 %v1882, 1.0
      %v1884 = vmul.f32 %v1876, %v1883
      %v1885 = vpack.c.bf16 %v1884, %v1884
      %v1886 = vld [vmem:[%s21] sm:$0xf]
      %v1887 = vld [vmem:[%s21 + $0x4] sm:$0xf]
      %v1888 = vld [vmem:[%s21 + $0x8] sm:$0xf]
      %v1889 = vld [vmem:[%s21 + $0xc] sm:$0xf]
      %v1890 = vld [vmem:[%s21 + $0x10] sm:$0xf]
      %v1891 = vld [vmem:[%s21 + $0x14] sm:$0xf]
      %v1892 = vld [vmem:[%s21 + $0x18] sm:$0xf]
      %v1893 = vld [vmem:[%s21 + $0x1c] sm:$0xf]
      %v1894 = vld [vmem:[%s21 + $0x20] sm:$0xf]
      %v1895 = vld [vmem:[%s21 + $0x24] sm:$0xf]
      %v1896 = vld [vmem:[%s21 + $0x28] sm:$0xf]
      %v1897 = vld [vmem:[%s21 + $0x2c] sm:$0xf]
      %v1898 = vld [vmem:[%s21 + $0x30] sm:$0xf]
      %v1899 = vld [vmem:[%s21 + $0x34] sm:$0xf]
      %v1900 = vld [vmem:[%s21 + $0x38] sm:$0xf]
      %v1901 = vld [vmem:[%s21 + $0x3c] sm:$0xf]
      %v1902 = vld [vmem:[%s22] sm:$0x1]
      %v1904 = vperm.slane %v1902, 0
      %v1922 = vunpack.c.l.b16 %v1886
      %v1923 = vunpack.c.l.b16 %v1887
      %v1924 = vunpack.c.l.b16 %v1888
      %v1925 = vunpack.c.l.b16 %v1889
      %v1926 = vunpack.c.l.b16 %v1890
      %v1927 = vunpack.c.l.b16 %v1891
      %v1928 = vunpack.c.l.b16 %v1892
      %v1929 = vunpack.c.l.b16 %v1893
      %v1930 = vunpack.c.l.b16 %v1894
      %v1931 = vunpack.c.l.b16 %v1895
      %v1932 = vunpack.c.l.b16 %v1896
      %v1933 = vunpack.c.l.b16 %v1897
      %v1934 = vunpack.c.l.b16 %v1898
      %v1935 = vunpack.c.l.b16 %v1899
      %v1936 = vunpack.c.l.b16 %v1900
      %v1937 = vunpack.c.l.b16 %v1901
      %v1938 = vpack.c.b16 %v1923, %v1922
      %v1939 = vpack.c.b16 %v1925, %v1924
      %v1940 = vpack.c.b16 %v1927, %v1926
      %v1941 = vpack.c.b16 %v1929, %v1928
      %v1942 = vpack.c.b16 %v1931, %v1930
      %v1943 = vpack.c.b16 %v1933, %v1932
      %v1944 = vpack.c.b16 %v1935, %v1934
      %v1945 = vpack.c.b16 %v1937, %v1936
      %1954 = vmatpush.bf16.msra.mxu0 %v1945
      %1955 = vmatpush.bf16.msra.mxu0 %v1944
      %1956 = vmatpush.bf16.msra.mxu0 %v1943
      %1957 = vmatpush.bf16.msra.mxu0 %v1942
      %1958 = vmatpush.bf16.msra.mxu0 %v1941
      %1959 = vmatpush.bf16.msra.mxu0 %v1940
      %1960 = vmatpush.bf16.msra.mxu0 %v1939
      %1961 = vmatpush.bf16.msra.mxu0 %v1938
      %1962 = vmatmul.bf16.gmra.mxu0 %v1885
      %v1963 = vpop.f32.mrf.mxu0
      %v1964 = vadd.f32 %v1904, %v1963
      %v1965 = vpop.f32.mrf.mxu0
      %1966 = vdwg.mxu0
      %v1967 = vadd.f32 %v1806, %v1964
      %v1968 = vpack.c.bf16 %v1967, %v1967
      %vm1969 = vcmask 257024
      %1970 = vst.msk [vmem:[%s739] sm:$0xf] %vm1969, %v1968
      %p1971 = scmp.lt.s32.totalorder %s34, 1
      %s1972 = scalar_select %p1971, %s34, 1
      %s1973 = smul.addr %s1972, 4
      %s1974 = scalar_lea.vmem %s23, %s1973
      // Predicated region
      $region113: #{multimodal_to_smiles_forward.5} parent=111 // pred_check
        %p1975 = pneg %p550
      $region114: #{multimodal_to_smiles_forward.5} parent=111 // pred_check_branch
        %1977 = sbr.rel (%p1975) target = $region116
      $region115: #{multimodal_to_smiles_forward.5} parent=111 // pred_region
        _
      $region116: #{multimodal_to_smiles_forward.5} parent=111 // pred_fallthru
        _
    $region112: #{multimodal_to_smiles_forward.5} parent=5 // pred_fallthru
      _
    %p1978 = scmp.le.s32.totalorder 2, %s29
    // Predicated region
    $region117: #{multimodal_to_smiles_forward.5} parent=5 // pred_check
      %p1979 = pneg %p1978
    $region118: #{multimodal_to_smiles_forward.5} parent=5 // pred_check_branch
      %1981 = sbr.rel (%p1979) target = $region120
    $region119: #{multimodal_to_smiles_forward.5} parent=5 // pred_region
      %s1982 = ssub.s32 %s29, 2
      // Predicated region
      $region121: #{multimodal_to_smiles_forward.5} parent=119 // pred_check
        %p1983 = pneg %p556
      $region122: #{multimodal_to_smiles_forward.5} parent=119 // pred_check_branch
        %1985 = sbr.rel (%p1983) target = $region124
      $region123: #{multimodal_to_smiles_forward.5} parent=119 // pred_region
        %p1986 = scmp.lt.s32.totalorder %s35, 1
        %s1987 = scalar_select %p1986, %s35, 1
        %s1988 = smul.addr %s1987, 4
        %s1989 = scalar_lea.vmem %s23, %s1988
      $region124: #{multimodal_to_smiles_forward.5} parent=119 // pred_fallthru
        _
    $region120: #{multimodal_to_smiles_forward.5} parent=5 // pred_fallthru
      _
  $region6: #{multimodal_to_smiles_forward.5} parent=0 // loop_footer
    %s33 = sadd.s32 1, %s29
  $region7: #{multimodal_to_smiles_forward.5} parent=0 // loop_footer_branch
    %28 = sbr.rel target = $region3
  $region8: #{multimodal_to_smiles_forward.5} parent=0 // loop_exit
    _

</llo_original>
